<compile_context>
chip_gen: v6e
topology: v6e:2x2x1
jax: 0.10.0
libtpu: 0.0.40
codegen_flags: <defaults>
</compile_context>

<pallas_src>
from functools import partial

import jax
import jax.numpy as jnp
from jax.experimental import pallas as pl
from jax.experimental.pallas import tpu as pltpu  # noqa: F401  (TPU backend)

BN_EPS = 1e-5
LANE = 128


# ------------------------------ helpers ------------------------------------ #

def _pad_up(n, m=LANE):
    return ((n + m - 1) // m) * m


def _full_spec(shape):
    # Whole-array block (no grid): block_shape == array shape is always legal.
    return pl.BlockSpec(shape, lambda: (0,) * len(shape))


def _bn_relu(h, gamma, beta):
    # Training-mode BatchNorm1d (batch statistics, biased variance) + ReLU.
    # NOTE: rsqrt(var+eps) vs PyTorch's sqrt-then-divide differs by ~1 ulp.
    mean = jnp.mean(h, axis=0, keepdims=True)
    diff = h - mean
    var = jnp.mean(diff * diff, axis=0, keepdims=True)
    hn = diff * jax.lax.rsqrt(var + BN_EPS)
    return jnp.maximum(hn * gamma + beta, 0.0)


def _dot_bf16(h_f32, w_bf16):
    # bf16 x bf16 MXU matmul, f32 accumulation.
    return jnp.dot(h_f32.astype(jnp.bfloat16), w_bf16,
                   preferred_element_type=jnp.float32)


# ------------------------------- kernel ------------------------------------ #

def _make_vae_kernel(n_enc, n_dec, latent_pad):
    """Fused: [Linear+BN+ReLU]*n_enc -> (mu|logvar) -> reparam ->
    [Linear+BN+ReLU]*n_dec -> final Linear."""

    def kernel(*refs):
        idx = 0
        x_ref = refs[idx]; idx += 1
        eps_ref = refs[idx]; idx += 1
        enc_refs = refs[idx: idx + 4 * n_enc]; idx += 4 * n_enc
        w_mlv_ref = refs[idx]; b_mlv_ref = refs[idx + 1]; idx += 2
        dec_refs = refs[idx: idx + 4 * n_dec]; idx += 4 * n_dec
        w_fin_ref = refs[idx]; b_fin_ref = refs[idx + 1]; idx += 2
        out_ref, mu_ref, lv_ref = refs[idx: idx + 3]

        # ------------------------- encoder ------------------------- #
        h = x_ref[...]                                     # (B, D0_pad) f32
        for l in range(n_enc):                             # static unroll
            w, b, g, bt = enc_refs[4 * l: 4 * l + 4]
            h = _bn_relu(_dot_bf16(h, w[...]) + b[...], g[...], bt[...])

        # One MXU pass for both heads: W = [W_mu | W_logvar] (K, 2*latent_pad)
        mlv = _dot_bf16(h, w_mlv_ref[...]) + b_mlv_ref[...]
        mu = mlv[:, :latent_pad]
        logvar = mlv[:, latent_pad:]
        std = jnp.exp(0.5 * logvar)                        # EUP slot
        z = mu + eps_ref[...] * std
        mu_ref[...] = mu
        lv_ref[...] = logvar

        # ------------------------- decoder ------------------------- #
        h = z
        for l in range(n_dec):
            w, b, g, bt = dec_refs[4 * l: 4 * l + 4]
            h = _bn_relu(_dot_bf16(h, w[...]) + b[...], g[...], bt[...])
        out_ref[...] = _dot_bf16(h, w_fin_ref[...]) + b_fin_ref[...]

    return kernel


# ------------------------------ wrapper ------------------------------------- #

def vae_fused(x_p, eps_p, params, latent_pad, out_pad):
    B = x_p.shape[0]
    enc, dec = params["encoder"], params["decoder"]
    n_enc, n_dec = len(enc), len(dec)

    flat_enc = [t for layer in enc for t in layer]
    flat_dec = [t for layer in dec for t in layer]
    args = ([x_p, eps_p] + flat_enc + [params["w_mulv"], params["b_mulv"]]
            + flat_dec + [params["w_final"], params["b_final"]])

    out_shape = (jax.ShapeDtypeStruct((B, out_pad), jnp.float32),     # recon
                 jax.ShapeDtypeStruct((B, latent_pad), jnp.float32),  # mu
                 jax.ShapeDtypeStruct((B, latent_pad), jnp.float32))  # logvar

    return pl.pallas_call(
        _make_vae_kernel(n_enc, n_dec, latent_pad),
        out_shape=out_shape,
        in_specs=[_full_spec(a.shape) for a in args],
        out_specs=tuple(_full_spec(s.shape) for s in out_shape),
    )(*args)


# ------------------------- parameter construction --------------------------- #

def init_linear(key, out_f, in_f):
    # nn.Linear default init: U(-1/sqrt(in_f), 1/sqrt(in_f)) for W and b.
    k1, k2 = jax.random.split(key)
    bound = 1.0 / jnp.sqrt(jnp.float32(in_f))
    w = jax.random.uniform(k1, (out_f, in_f), jnp.float32, -bound, bound)
    b = jax.random.uniform(k2, (out_f,), jnp.float32, -bound, bound)
    return w, b


def pack_linear(w, b):
    """PyTorch (N, K) weight -> pre-transposed, lane-padded (K_pad, N_pad) bf16."""
    N, K = w.shape
    kp, np_ = _pad_up(K), _pad_up(N)
    w_p = (jnp.zeros((kp, np_), jnp.float32).at[:K, :N].set(w.T)
           .astype(jnp.bfloat16))                      # bf16 weights, zero pads
    b_p = jnp.zeros((1, np_), jnp.float32).at[0, :N].set(b)
    return w_p, b_p


def pack_bn(n):
    np_ = _pad_up(n)
    gamma = jnp.zeros((1, np_), jnp.float32).at[0, :n].set(1.0)
    beta = jnp.zeros((1, np_), jnp.float32)
    return gamma, beta


def init_vae_params(key, input_dim, latent_dim, dims):
    # Done ONCE, outside the jitted forward (packing/casting off the hot path).
    params = {"encoder": [], "decoder": []}

    # encoder: Linear(dims[i] -> dims[i+1]) + BN + ReLU
    for i in range(len(dims) - 1):
        key, sub = jax.random.split(key)
        w, b = init_linear(sub, dims[i + 1], dims[i])
        w_p, b_p = pack_linear(w, b)
        g_p, bt_p = pack_bn(dims[i + 1])
        params["encoder"].append((w_p, b_p, g_p, bt_p))

    # fc_mu / fc_logvar fused into one concatenated (K_pad, 2*latent_pad) weight
    key, k_mu, k_lv = jax.random.split(key, 3)
    w_mu, b_mu = init_linear(k_mu, latent_dim, dims[-1])
    w_lv, b_lv = init_linear(k_lv, latent_dim, dims[-1])
    w_mu_p, b_mu_p = pack_linear(w_mu, b_mu)
    w_lv_p, b_lv_p = pack_linear(w_lv, b_lv)
    params["w_mulv"] = jnp.concatenate([w_mu_p, w_lv_p], axis=1)
    params["b_mulv"] = jnp.concatenate([b_mu_p, b_lv_p], axis=1)

    # decoder: Linear(dims[i+1] -> dims[i]) + BN + ReLU for i = len-2 .. 0,
    # then a plain Linear(input_dim, input_dim) with no activation
    # (matches the PyTorch module exactly, incl. BN+ReLU on the last hidden).
    for i in range(len(dims) - 2, -1, -1):
        key, sub = jax.random.split(key)
        w, b = init_linear(sub, dims[i], dims[i + 1])
        w_p, b_p = pack_linear(w, b)
        g_p, bt_p = pack_bn(dims[i])
        params["decoder"].append((w_p, b_p, g_p, bt_p))
    key, k_fin = jax.random.split(key)
    w_fin, b_fin = init_linear(k_fin, input_dim, input_dim)
    params["w_final"], params["b_final"] = pack_linear(w_fin, b_fin)
    return params


# -------------------------------- forward ----------------------------------- #

@partial(jax.jit, static_argnames=("input_dim", "latent_dim"))
def vae_forward(params, x, eps, input_dim, latent_dim):
    d0_pad = _pad_up(input_dim)
    lat_pad = _pad_up(latent_dim)

    # Lane-pad inputs with jnp.pad (pad lanes multiply zero weight rows,
    # so they never affect real columns).
    x_p = jnp.pad(x, ((0, 0), (0, d0_pad - input_dim)))
    eps_p = jnp.pad(eps, ((0, 0), (0, lat_pad - latent_dim)))

    out_p, mu_p, lv_p = vae_fused(x_p, eps_p, params, lat_pad, d0_pad)

    return (out_p[:, :input_dim],
            mu_p[:, :latent_dim],
            lv_p[:, :latent_dim])


# ---------------------------------- main ------------------------------------ #

if __name__ == "__main__":
    # Scaled-down dims mirroring [input_dim, 12000, 10000, 8000, 4000, 2000,
    # latent, latent] from the original module.
    input_dim = 32
    latent_dim = 24
    dims = [input_dim, 120, 104, 80, 48, 40, latent_dim, latent_dim]
    batch = 256          # large-M batch per the perf review (MXU occupancy)

    key = jax.random.PRNGKey(0)
    key, k_params, k_x, k_eps = jax.random.split(key, 4)

    params = init_vae_params(k_params, input_dim, latent_dim, dims)

    # `scaled_data * 5` -> synthetic input scaled by 5
    x = jax.random.normal(k_x, (batch, input_dim), jnp.float32) * 5.0
    # torch.randn_like(std) noise supplied explicitly for determinism.
    eps = jax.random.normal(k_eps, (batch, latent_dim), jnp.float32)

    out, mu, logvar = vae_forward(params, x, eps, input_dim, latent_dim)
    jax.block_until_ready((out, mu, logvar))

    assert out.shape == (batch, input_dim)
    assert mu.shape == (batch, latent_dim)
    assert logvar.shape == (batch, latent_dim)
    assert bool(jnp.all(jnp.isfinite(out)))
    assert bool(jnp.all(jnp.isfinite(mu)))
    assert bool(jnp.all(jnp.isfinite(logvar)))
    print("KERNEL_OK")
</pallas_src>

<mosaic_0001>
module attributes {stable_mosaic.version = 11 : i64} {
  func.func @kernel(%arg0: memref<256x128xf32, #tpu.memory_space<vmem>>, %arg1: memref<256x128xf32, #tpu.memory_space<vmem>>, %arg2: memref<128x128xbf16, #tpu.memory_space<vmem>>, %arg3: memref<1x128xf32, #tpu.memory_space<vmem>>, %arg4: memref<1x128xf32, #tpu.memory_space<vmem>>, %arg5: memref<1x128xf32, #tpu.memory_space<vmem>>, %arg6: memref<128x128xbf16, #tpu.memory_space<vmem>>, %arg7: memref<1x128xf32, #tpu.memory_space<vmem>>, %arg8: memref<1x128xf32, #tpu.memory_space<vmem>>, %arg9: memref<1x128xf32, #tpu.memory_space<vmem>>, %arg10: memref<128x128xbf16, #tpu.memory_space<vmem>>, %arg11: memref<1x128xf32, #tpu.memory_space<vmem>>, %arg12: memref<1x128xf32, #tpu.memory_space<vmem>>, %arg13: memref<1x128xf32, #tpu.memory_space<vmem>>, %arg14: memref<128x128xbf16, #tpu.memory_space<vmem>>, %arg15: memref<1x128xf32, #tpu.memory_space<vmem>>, %arg16: memref<1x128xf32, #tpu.memory_space<vmem>>, %arg17: memref<1x128xf32, #tpu.memory_space<vmem>>, %arg18: memref<128x128xbf16, #tpu.memory_space<vmem>>, %arg19: memref<1x128xf32, #tpu.memory_space<vmem>>, %arg20: memref<1x128xf32, #tpu.memory_space<vmem>>, %arg21: memref<1x128xf32, #tpu.memory_space<vmem>>, %arg22: memref<128x128xbf16, #tpu.memory_space<vmem>>, %arg23: memref<1x128xf32, #tpu.memory_space<vmem>>, %arg24: memref<1x128xf32, #tpu.memory_space<vmem>>, %arg25: memref<1x128xf32, #tpu.memory_space<vmem>>, %arg26: memref<128x128xbf16, #tpu.memory_space<vmem>>, %arg27: memref<1x128xf32, #tpu.memory_space<vmem>>, %arg28: memref<1x128xf32, #tpu.memory_space<vmem>>, %arg29: memref<1x128xf32, #tpu.memory_space<vmem>>, %arg30: memref<128x256xbf16, #tpu.memory_space<vmem>>, %arg31: memref<1x256xf32, #tpu.memory_space<vmem>>, %arg32: memref<128x128xbf16, #tpu.memory_space<vmem>>, %arg33: memref<1x128xf32, #tpu.memory_space<vmem>>, %arg34: memref<1x128xf32, #tpu.memory_space<vmem>>, %arg35: memref<1x128xf32, #tpu.memory_space<vmem>>, %arg36: memref<128x128xbf16, #tpu.memory_space<vmem>>, %arg37: memref<1x128xf32, #tpu.memory_space<vmem>>, %arg38: memref<1x128xf32, #tpu.memory_space<vmem>>, %arg39: memref<1x128xf32, #tpu.memory_space<vmem>>, %arg40: memref<128x128xbf16, #tpu.memory_space<vmem>>, %arg41: memref<1x128xf32, #tpu.memory_space<vmem>>, %arg42: memref<1x128xf32, #tpu.memory_space<vmem>>, %arg43: memref<1x128xf32, #tpu.memory_space<vmem>>, %arg44: memref<128x128xbf16, #tpu.memory_space<vmem>>, %arg45: memref<1x128xf32, #tpu.memory_space<vmem>>, %arg46: memref<1x128xf32, #tpu.memory_space<vmem>>, %arg47: memref<1x128xf32, #tpu.memory_space<vmem>>, %arg48: memref<128x128xbf16, #tpu.memory_space<vmem>>, %arg49: memref<1x128xf32, #tpu.memory_space<vmem>>, %arg50: memref<1x128xf32, #tpu.memory_space<vmem>>, %arg51: memref<1x128xf32, #tpu.memory_space<vmem>>, %arg52: memref<128x128xbf16, #tpu.memory_space<vmem>>, %arg53: memref<1x128xf32, #tpu.memory_space<vmem>>, %arg54: memref<1x128xf32, #tpu.memory_space<vmem>>, %arg55: memref<1x128xf32, #tpu.memory_space<vmem>>, %arg56: memref<128x128xbf16, #tpu.memory_space<vmem>>, %arg57: memref<1x128xf32, #tpu.memory_space<vmem>>, %arg58: memref<1x128xf32, #tpu.memory_space<vmem>>, %arg59: memref<1x128xf32, #tpu.memory_space<vmem>>, %arg60: memref<128x128xbf16, #tpu.memory_space<vmem>>, %arg61: memref<1x128xf32, #tpu.memory_space<vmem>>, %arg62: memref<256x128xf32, #tpu.memory_space<vmem>>, %arg63: memref<256x128xf32, #tpu.memory_space<vmem>>, %arg64: memref<256x128xf32, #tpu.memory_space<vmem>>) attributes {dimension_semantics = [], scalar_prefetch = 0 : i64, scratch_operands = 0 : i64, tpu.core_type = #tpu.core_type<tc>} {
    %c0 = arith.constant 0 : index
    %c0_0 = arith.constant 0 : index
    %0 = vector.load %arg0[%c0, %c0_0] : memref<256x128xf32, #tpu.memory_space<vmem>>, vector<256x128xf32>
    %c0_1 = arith.constant 0 : index
    %c0_2 = arith.constant 0 : index
    %1 = vector.load %arg2[%c0_1, %c0_2] : memref<128x128xbf16, #tpu.memory_space<vmem>>, vector<128x128xbf16>
    %2 = arith.truncf %0 : vector<256x128xf32> to vector<256x128xbf16>
    %cst = arith.constant dense<0.000000e+00> : vector<256x128xf32>
    %3 = tpu.matmul %2, %1, %cst {dimension_numbers = #tpu.dot_dimension_numbers<[1], [0], [0], [1], [0, 0, 1, 1], [], []>} : vector<256x128xbf16>, vector<128x128xbf16>, vector<256x128xf32> -> vector<256x128xf32>
    %c0_3 = arith.constant 0 : index
    %c0_4 = arith.constant 0 : index
    %4 = vector.load %arg3[%c0_3, %c0_4] : memref<1x128xf32, #tpu.memory_space<vmem>>, vector<1x128xf32>
    %5 = vector.broadcast %4 : vector<1x128xf32> to vector<256x128xf32>
    %6 = arith.addf %3, %5 : vector<256x128xf32>
    %c0_5 = arith.constant 0 : index
    %c0_6 = arith.constant 0 : index
    %7 = vector.load %arg4[%c0_5, %c0_6] : memref<1x128xf32, #tpu.memory_space<vmem>>, vector<1x128xf32>
    %c0_7 = arith.constant 0 : index
    %c0_8 = arith.constant 0 : index
    %8 = vector.load %arg5[%c0_7, %c0_8] : memref<1x128xf32, #tpu.memory_space<vmem>>, vector<1x128xf32>
    %cst_9 = arith.constant dense<0.000000e+00> : vector<128xf32>
    %9 = vector.multi_reduction <add>, %6, %cst_9 [0] : vector<256x128xf32> to vector<128xf32>
    %10 = vector.shape_cast %9 : vector<128xf32> to vector<1x128xf32>
    %cst_10 = arith.constant 2.560000e+02 : f32
    %11 = vector.broadcast %cst_10 : f32 to vector<1x128xf32>
    %12 = arith.divf %10, %11 : vector<1x128xf32>
    %13 = vector.broadcast %12 : vector<1x128xf32> to vector<256x128xf32>
    %14 = arith.subf %6, %13 : vector<256x128xf32>
    %15 = arith.mulf %14, %14 : vector<256x128xf32>
    %cst_11 = arith.constant dense<0.000000e+00> : vector<128xf32>
    %16 = vector.multi_reduction <add>, %15, %cst_11 [0] : vector<256x128xf32> to vector<128xf32>
    %17 = vector.shape_cast %16 : vector<128xf32> to vector<1x128xf32>
    %cst_12 = arith.constant 2.560000e+02 : f32
    %18 = vector.broadcast %cst_12 : f32 to vector<1x128xf32>
    %19 = arith.divf %17, %18 : vector<1x128xf32>
    %cst_13 = arith.constant 9.99999974E-6 : f32
    %20 = vector.broadcast %cst_13 : f32 to vector<1x128xf32>
    %21 = arith.addf %19, %20 : vector<1x128xf32>
    %22 = math.rsqrt %21 : vector<1x128xf32>
    %23 = vector.broadcast %22 : vector<1x128xf32> to vector<256x128xf32>
    %24 = arith.mulf %14, %23 : vector<256x128xf32>
    %25 = vector.broadcast %7 : vector<1x128xf32> to vector<256x128xf32>
    %26 = arith.mulf %24, %25 : vector<256x128xf32>
    %27 = vector.broadcast %8 : vector<1x128xf32> to vector<256x128xf32>
    %28 = arith.addf %26, %27 : vector<256x128xf32>
    %cst_14 = arith.constant 0.000000e+00 : f32
    %29 = vector.broadcast %cst_14 : f32 to vector<256x128xf32>
    %30 = arith.maximumf %28, %29 : vector<256x128xf32>
    %c0_15 = arith.constant 0 : index
    %c0_16 = arith.constant 0 : index
    %31 = vector.load %arg6[%c0_15, %c0_16] : memref<128x128xbf16, #tpu.memory_space<vmem>>, vector<128x128xbf16>
    %32 = arith.truncf %30 : vector<256x128xf32> to vector<256x128xbf16>
    %cst_17 = arith.constant dense<0.000000e+00> : vector<256x128xf32>
    %33 = tpu.matmul %32, %31, %cst_17 {dimension_numbers = #tpu.dot_dimension_numbers<[1], [0], [0], [1], [0, 0, 1, 1], [], []>} : vector<256x128xbf16>, vector<128x128xbf16>, vector<256x128xf32> -> vector<256x128xf32>
    %c0_18 = arith.constant 0 : index
    %c0_19 = arith.constant 0 : index
    %34 = vector.load %arg7[%c0_18, %c0_19] : memref<1x128xf32, #tpu.memory_space<vmem>>, vector<1x128xf32>
    %35 = vector.broadcast %34 : vector<1x128xf32> to vector<256x128xf32>
    %36 = arith.addf %33, %35 : vector<256x128xf32>
    %c0_20 = arith.constant 0 : index
    %c0_21 = arith.constant 0 : index
    %37 = vector.load %arg8[%c0_20, %c0_21] : memref<1x128xf32, #tpu.memory_space<vmem>>, vector<1x128xf32>
    %c0_22 = arith.constant 0 : index
    %c0_23 = arith.constant 0 : index
    %38 = vector.load %arg9[%c0_22, %c0_23] : memref<1x128xf32, #tpu.memory_space<vmem>>, vector<1x128xf32>
    %cst_24 = arith.constant dense<0.000000e+00> : vector<128xf32>
    %39 = vector.multi_reduction <add>, %36, %cst_24 [0] : vector<256x128xf32> to vector<128xf32>
    %40 = vector.shape_cast %39 : vector<128xf32> to vector<1x128xf32>
    %cst_25 = arith.constant 2.560000e+02 : f32
    %41 = vector.broadcast %cst_25 : f32 to vector<1x128xf32>
    %42 = arith.divf %40, %41 : vector<1x128xf32>
    %43 = vector.broadcast %42 : vector<1x128xf32> to vector<256x128xf32>
    %44 = arith.subf %36, %43 : vector<256x128xf32>
    %45 = arith.mulf %44, %44 : vector<256x128xf32>
    %cst_26 = arith.constant dense<0.000000e+00> : vector<128xf32>
    %46 = vector.multi_reduction <add>, %45, %cst_26 [0] : vector<256x128xf32> to vector<128xf32>
    %47 = vector.shape_cast %46 : vector<128xf32> to vector<1x128xf32>
    %cst_27 = arith.constant 2.560000e+02 : f32
    %48 = vector.broadcast %cst_27 : f32 to vector<1x128xf32>
    %49 = arith.divf %47, %48 : vector<1x128xf32>
    %cst_28 = arith.constant 9.99999974E-6 : f32
    %50 = vector.broadcast %cst_28 : f32 to vector<1x128xf32>
    %51 = arith.addf %49, %50 : vector<1x128xf32>
    %52 = math.rsqrt %51 : vector<1x128xf32>
    %53 = vector.broadcast %52 : vector<1x128xf32> to vector<256x128xf32>
    %54 = arith.mulf %44, %53 : vector<256x128xf32>
    %55 = vector.broadcast %37 : vector<1x128xf32> to vector<256x128xf32>
    %56 = arith.mulf %54, %55 : vector<256x128xf32>
    %57 = vector.broadcast %38 : vector<1x128xf32> to vector<256x128xf32>
    %58 = arith.addf %56, %57 : vector<256x128xf32>
    %cst_29 = arith.constant 0.000000e+00 : f32
    %59 = vector.broadcast %cst_29 : f32 to vector<256x128xf32>
    %60 = arith.maximumf %58, %59 : vector<256x128xf32>
    %c0_30 = arith.constant 0 : index
    %c0_31 = arith.constant 0 : index
    %61 = vector.load %arg10[%c0_30, %c0_31] : memref<128x128xbf16, #tpu.memory_space<vmem>>, vector<128x128xbf16>
    %62 = arith.truncf %60 : vector<256x128xf32> to vector<256x128xbf16>
    %cst_32 = arith.constant dense<0.000000e+00> : vector<256x128xf32>
    %63 = tpu.matmul %62, %61, %cst_32 {dimension_numbers = #tpu.dot_dimension_numbers<[1], [0], [0], [1], [0, 0, 1, 1], [], []>} : vector<256x128xbf16>, vector<128x128xbf16>, vector<256x128xf32> -> vector<256x128xf32>
    %c0_33 = arith.constant 0 : index
    %c0_34 = arith.constant 0 : index
    %64 = vector.load %arg11[%c0_33, %c0_34] : memref<1x128xf32, #tpu.memory_space<vmem>>, vector<1x128xf32>
    %65 = vector.broadcast %64 : vector<1x128xf32> to vector<256x128xf32>
    %66 = arith.addf %63, %65 : vector<256x128xf32>
    %c0_35 = arith.constant 0 : index
    %c0_36 = arith.constant 0 : index
    %67 = vector.load %arg12[%c0_35, %c0_36] : memref<1x128xf32, #tpu.memory_space<vmem>>, vector<1x128xf32>
    %c0_37 = arith.constant 0 : index
    %c0_38 = arith.constant 0 : index
    %68 = vector.load %arg13[%c0_37, %c0_38] : memref<1x128xf32, #tpu.memory_space<vmem>>, vector<1x128xf32>
    %cst_39 = arith.constant dense<0.000000e+00> : vector<128xf32>
    %69 = vector.multi_reduction <add>, %66, %cst_39 [0] : vector<256x128xf32> to vector<128xf32>
    %70 = vector.shape_cast %69 : vector<128xf32> to vector<1x128xf32>
    %cst_40 = arith.constant 2.560000e+02 : f32
    %71 = vector.broadcast %cst_40 : f32 to vector<1x128xf32>
    %72 = arith.divf %70, %71 : vector<1x128xf32>
    %73 = vector.broadcast %72 : vector<1x128xf32> to vector<256x128xf32>
    %74 = arith.subf %66, %73 : vector<256x128xf32>
    %75 = arith.mulf %74, %74 : vector<256x128xf32>
    %cst_41 = arith.constant dense<0.000000e+00> : vector<128xf32>
    %76 = vector.multi_reduction <add>, %75, %cst_41 [0] : vector<256x128xf32> to vector<128xf32>
    %77 = vector.shape_cast %76 : vector<128xf32> to vector<1x128xf32>
    %cst_42 = arith.constant 2.560000e+02 : f32
    %78 = vector.broadcast %cst_42 : f32 to vector<1x128xf32>
    %79 = arith.divf %77, %78 : vector<1x128xf32>
    %cst_43 = arith.constant 9.99999974E-6 : f32
    %80 = vector.broadcast %cst_43 : f32 to vector<1x128xf32>
    %81 = arith.addf %79, %80 : vector<1x128xf32>
    %82 = math.rsqrt %81 : vector<1x128xf32>
    %83 = vector.broadcast %82 : vector<1x128xf32> to vector<256x128xf32>
    %84 = arith.mulf %74, %83 : vector<256x128xf32>
    %85 = vector.broadcast %67 : vector<1x128xf32> to vector<256x128xf32>
    %86 = arith.mulf %84, %85 : vector<256x128xf32>
    %87 = vector.broadcast %68 : vector<1x128xf32> to vector<256x128xf32>
    %88 = arith.addf %86, %87 : vector<256x128xf32>
    %cst_44 = arith.constant 0.000000e+00 : f32
    %89 = vector.broadcast %cst_44 : f32 to vector<256x128xf32>
    %90 = arith.maximumf %88, %89 : vector<256x128xf32>
    %c0_45 = arith.constant 0 : index
    %c0_46 = arith.constant 0 : index
    %91 = vector.load %arg14[%c0_45, %c0_46] : memref<128x128xbf16, #tpu.memory_space<vmem>>, vector<128x128xbf16>
    %92 = arith.truncf %90 : vector<256x128xf32> to vector<256x128xbf16>
    %cst_47 = arith.constant dense<0.000000e+00> : vector<256x128xf32>
    %93 = tpu.matmul %92, %91, %cst_47 {dimension_numbers = #tpu.dot_dimension_numbers<[1], [0], [0], [1], [0, 0, 1, 1], [], []>} : vector<256x128xbf16>, vector<128x128xbf16>, vector<256x128xf32> -> vector<256x128xf32>
    %c0_48 = arith.constant 0 : index
    %c0_49 = arith.constant 0 : index
    %94 = vector.load %arg15[%c0_48, %c0_49] : memref<1x128xf32, #tpu.memory_space<vmem>>, vector<1x128xf32>
    %95 = vector.broadcast %94 : vector<1x128xf32> to vector<256x128xf32>
    %96 = arith.addf %93, %95 : vector<256x128xf32>
    %c0_50 = arith.constant 0 : index
    %c0_51 = arith.constant 0 : index
    %97 = vector.load %arg16[%c0_50, %c0_51] : memref<1x128xf32, #tpu.memory_space<vmem>>, vector<1x128xf32>
    %c0_52 = arith.constant 0 : index
    %c0_53 = arith.constant 0 : index
    %98 = vector.load %arg17[%c0_52, %c0_53] : memref<1x128xf32, #tpu.memory_space<vmem>>, vector<1x128xf32>
    %cst_54 = arith.constant dense<0.000000e+00> : vector<128xf32>
    %99 = vector.multi_reduction <add>, %96, %cst_54 [0] : vector<256x128xf32> to vector<128xf32>
    %100 = vector.shape_cast %99 : vector<128xf32> to vector<1x128xf32>
    %cst_55 = arith.constant 2.560000e+02 : f32
    %101 = vector.broadcast %cst_55 : f32 to vector<1x128xf32>
    %102 = arith.divf %100, %101 : vector<1x128xf32>
    %103 = vector.broadcast %102 : vector<1x128xf32> to vector<256x128xf32>
    %104 = arith.subf %96, %103 : vector<256x128xf32>
    %105 = arith.mulf %104, %104 : vector<256x128xf32>
    %cst_56 = arith.constant dense<0.000000e+00> : vector<128xf32>
    %106 = vector.multi_reduction <add>, %105, %cst_56 [0] : vector<256x128xf32> to vector<128xf32>
    %107 = vector.shape_cast %106 : vector<128xf32> to vector<1x128xf32>
    %cst_57 = arith.constant 2.560000e+02 : f32
    %108 = vector.broadcast %cst_57 : f32 to vector<1x128xf32>
    %109 = arith.divf %107, %108 : vector<1x128xf32>
    %cst_58 = arith.constant 9.99999974E-6 : f32
    %110 = vector.broadcast %cst_58 : f32 to vector<1x128xf32>
    %111 = arith.addf %109, %110 : vector<1x128xf32>
    %112 = math.rsqrt %111 : vector<1x128xf32>
    %113 = vector.broadcast %112 : vector<1x128xf32> to vector<256x128xf32>
    %114 = arith.mulf %104, %113 : vector<256x128xf32>
    %115 = vector.broadcast %97 : vector<1x128xf32> to vector<256x128xf32>
    %116 = arith.mulf %114, %115 : vector<256x128xf32>
    %117 = vector.broadcast %98 : vector<1x128xf32> to vector<256x128xf32>
    %118 = arith.addf %116, %117 : vector<256x128xf32>
    %cst_59 = arith.constant 0.000000e+00 : f32
    %119 = vector.broadcast %cst_59 : f32 to vector<256x128xf32>
    %120 = arith.maximumf %118, %119 : vector<256x128xf32>
    %c0_60 = arith.constant 0 : index
    %c0_61 = arith.constant 0 : index
    %121 = vector.load %arg18[%c0_60, %c0_61] : memref<128x128xbf16, #tpu.memory_space<vmem>>, vector<128x128xbf16>
    %122 = arith.truncf %120 : vector<256x128xf32> to vector<256x128xbf16>
    %cst_62 = arith.constant dense<0.000000e+00> : vector<256x128xf32>
    %123 = tpu.matmul %122, %121, %cst_62 {dimension_numbers = #tpu.dot_dimension_numbers<[1], [0], [0], [1], [0, 0, 1, 1], [], []>} : vector<256x128xbf16>, vector<128x128xbf16>, vector<256x128xf32> -> vector<256x128xf32>
    %c0_63 = arith.constant 0 : index
    %c0_64 = arith.constant 0 : index
    %124 = vector.load %arg19[%c0_63, %c0_64] : memref<1x128xf32, #tpu.memory_space<vmem>>, vector<1x128xf32>
    %125 = vector.broadcast %124 : vector<1x128xf32> to vector<256x128xf32>
    %126 = arith.addf %123, %125 : vector<256x128xf32>
    %c0_65 = arith.constant 0 : index
    %c0_66 = arith.constant 0 : index
    %127 = vector.load %arg20[%c0_65, %c0_66] : memref<1x128xf32, #tpu.memory_space<vmem>>, vector<1x128xf32>
    %c0_67 = arith.constant 0 : index
    %c0_68 = arith.constant 0 : index
    %128 = vector.load %arg21[%c0_67, %c0_68] : memref<1x128xf32, #tpu.memory_space<vmem>>, vector<1x128xf32>
    %cst_69 = arith.constant dense<0.000000e+00> : vector<128xf32>
    %129 = vector.multi_reduction <add>, %126, %cst_69 [0] : vector<256x128xf32> to vector<128xf32>
    %130 = vector.shape_cast %129 : vector<128xf32> to vector<1x128xf32>
    %cst_70 = arith.constant 2.560000e+02 : f32
    %131 = vector.broadcast %cst_70 : f32 to vector<1x128xf32>
    %132 = arith.divf %130, %131 : vector<1x128xf32>
    %133 = vector.broadcast %132 : vector<1x128xf32> to vector<256x128xf32>
    %134 = arith.subf %126, %133 : vector<256x128xf32>
    %135 = arith.mulf %134, %134 : vector<256x128xf32>
    %cst_71 = arith.constant dense<0.000000e+00> : vector<128xf32>
    %136 = vector.multi_reduction <add>, %135, %cst_71 [0] : vector<256x128xf32> to vector<128xf32>
    %137 = vector.shape_cast %136 : vector<128xf32> to vector<1x128xf32>
    %cst_72 = arith.constant 2.560000e+02 : f32
    %138 = vector.broadcast %cst_72 : f32 to vector<1x128xf32>
    %139 = arith.divf %137, %138 : vector<1x128xf32>
    %cst_73 = arith.constant 9.99999974E-6 : f32
    %140 = vector.broadcast %cst_73 : f32 to vector<1x128xf32>
    %141 = arith.addf %139, %140 : vector<1x128xf32>
    %142 = math.rsqrt %141 : vector<1x128xf32>
    %143 = vector.broadcast %142 : vector<1x128xf32> to vector<256x128xf32>
    %144 = arith.mulf %134, %143 : vector<256x128xf32>
    %145 = vector.broadcast %127 : vector<1x128xf32> to vector<256x128xf32>
    %146 = arith.mulf %144, %145 : vector<256x128xf32>
    %147 = vector.broadcast %128 : vector<1x128xf32> to vector<256x128xf32>
    %148 = arith.addf %146, %147 : vector<256x128xf32>
    %cst_74 = arith.constant 0.000000e+00 : f32
    %149 = vector.broadcast %cst_74 : f32 to vector<256x128xf32>
    %150 = arith.maximumf %148, %149 : vector<256x128xf32>
    %c0_75 = arith.constant 0 : index
    %c0_76 = arith.constant 0 : index
    %151 = vector.load %arg22[%c0_75, %c0_76] : memref<128x128xbf16, #tpu.memory_space<vmem>>, vector<128x128xbf16>
    %152 = arith.truncf %150 : vector<256x128xf32> to vector<256x128xbf16>
    %cst_77 = arith.constant dense<0.000000e+00> : vector<256x128xf32>
    %153 = tpu.matmul %152, %151, %cst_77 {dimension_numbers = #tpu.dot_dimension_numbers<[1], [0], [0], [1], [0, 0, 1, 1], [], []>} : vector<256x128xbf16>, vector<128x128xbf16>, vector<256x128xf32> -> vector<256x128xf32>
    %c0_78 = arith.constant 0 : index
    %c0_79 = arith.constant 0 : index
    %154 = vector.load %arg23[%c0_78, %c0_79] : memref<1x128xf32, #tpu.memory_space<vmem>>, vector<1x128xf32>
    %155 = vector.broadcast %154 : vector<1x128xf32> to vector<256x128xf32>
    %156 = arith.addf %153, %155 : vector<256x128xf32>
    %c0_80 = arith.constant 0 : index
    %c0_81 = arith.constant 0 : index
    %157 = vector.load %arg24[%c0_80, %c0_81] : memref<1x128xf32, #tpu.memory_space<vmem>>, vector<1x128xf32>
    %c0_82 = arith.constant 0 : index
    %c0_83 = arith.constant 0 : index
    %158 = vector.load %arg25[%c0_82, %c0_83] : memref<1x128xf32, #tpu.memory_space<vmem>>, vector<1x128xf32>
    %cst_84 = arith.constant dense<0.000000e+00> : vector<128xf32>
    %159 = vector.multi_reduction <add>, %156, %cst_84 [0] : vector<256x128xf32> to vector<128xf32>
    %160 = vector.shape_cast %159 : vector<128xf32> to vector<1x128xf32>
    %cst_85 = arith.constant 2.560000e+02 : f32
    %161 = vector.broadcast %cst_85 : f32 to vector<1x128xf32>
    %162 = arith.divf %160, %161 : vector<1x128xf32>
    %163 = vector.broadcast %162 : vector<1x128xf32> to vector<256x128xf32>
    %164 = arith.subf %156, %163 : vector<256x128xf32>
    %165 = arith.mulf %164, %164 : vector<256x128xf32>
    %cst_86 = arith.constant dense<0.000000e+00> : vector<128xf32>
    %166 = vector.multi_reduction <add>, %165, %cst_86 [0] : vector<256x128xf32> to vector<128xf32>
    %167 = vector.shape_cast %166 : vector<128xf32> to vector<1x128xf32>
    %cst_87 = arith.constant 2.560000e+02 : f32
    %168 = vector.broadcast %cst_87 : f32 to vector<1x128xf32>
    %169 = arith.divf %167, %168 : vector<1x128xf32>
    %cst_88 = arith.constant 9.99999974E-6 : f32
    %170 = vector.broadcast %cst_88 : f32 to vector<1x128xf32>
    %171 = arith.addf %169, %170 : vector<1x128xf32>
    %172 = math.rsqrt %171 : vector<1x128xf32>
    %173 = vector.broadcast %172 : vector<1x128xf32> to vector<256x128xf32>
    %174 = arith.mulf %164, %173 : vector<256x128xf32>
    %175 = vector.broadcast %157 : vector<1x128xf32> to vector<256x128xf32>
    %176 = arith.mulf %174, %175 : vector<256x128xf32>
    %177 = vector.broadcast %158 : vector<1x128xf32> to vector<256x128xf32>
    %178 = arith.addf %176, %177 : vector<256x128xf32>
    %cst_89 = arith.constant 0.000000e+00 : f32
    %179 = vector.broadcast %cst_89 : f32 to vector<256x128xf32>
    %180 = arith.maximumf %178, %179 : vector<256x128xf32>
    %c0_90 = arith.constant 0 : index
    %c0_91 = arith.constant 0 : index
    %181 = vector.load %arg26[%c0_90, %c0_91] : memref<128x128xbf16, #tpu.memory_space<vmem>>, vector<128x128xbf16>
    %182 = arith.truncf %180 : vector<256x128xf32> to vector<256x128xbf16>
    %cst_92 = arith.constant dense<0.000000e+00> : vector<256x128xf32>
    %183 = tpu.matmul %182, %181, %cst_92 {dimension_numbers = #tpu.dot_dimension_numbers<[1], [0], [0], [1], [0, 0, 1, 1], [], []>} : vector<256x128xbf16>, vector<128x128xbf16>, vector<256x128xf32> -> vector<256x128xf32>
    %c0_93 = arith.constant 0 : index
    %c0_94 = arith.constant 0 : index
    %184 = vector.load %arg27[%c0_93, %c0_94] : memref<1x128xf32, #tpu.memory_space<vmem>>, vector<1x128xf32>
    %185 = vector.broadcast %184 : vector<1x128xf32> to vector<256x128xf32>
    %186 = arith.addf %183, %185 : vector<256x128xf32>
    %c0_95 = arith.constant 0 : index
    %c0_96 = arith.constant 0 : index
    %187 = vector.load %arg28[%c0_95, %c0_96] : memref<1x128xf32, #tpu.memory_space<vmem>>, vector<1x128xf32>
    %c0_97 = arith.constant 0 : index
    %c0_98 = arith.constant 0 : index
    %188 = vector.load %arg29[%c0_97, %c0_98] : memref<1x128xf32, #tpu.memory_space<vmem>>, vector<1x128xf32>
    %cst_99 = arith.constant dense<0.000000e+00> : vector<128xf32>
    %189 = vector.multi_reduction <add>, %186, %cst_99 [0] : vector<256x128xf32> to vector<128xf32>
    %190 = vector.shape_cast %189 : vector<128xf32> to vector<1x128xf32>
    %cst_100 = arith.constant 2.560000e+02 : f32
    %191 = vector.broadcast %cst_100 : f32 to vector<1x128xf32>
    %192 = arith.divf %190, %191 : vector<1x128xf32>
    %193 = vector.broadcast %192 : vector<1x128xf32> to vector<256x128xf32>
    %194 = arith.subf %186, %193 : vector<256x128xf32>
    %195 = arith.mulf %194, %194 : vector<256x128xf32>
    %cst_101 = arith.constant dense<0.000000e+00> : vector<128xf32>
    %196 = vector.multi_reduction <add>, %195, %cst_101 [0] : vector<256x128xf32> to vector<128xf32>
    %197 = vector.shape_cast %196 : vector<128xf32> to vector<1x128xf32>
    %cst_102 = arith.constant 2.560000e+02 : f32
    %198 = vector.broadcast %cst_102 : f32 to vector<1x128xf32>
    %199 = arith.divf %197, %198 : vector<1x128xf32>
    %cst_103 = arith.constant 9.99999974E-6 : f32
    %200 = vector.broadcast %cst_103 : f32 to vector<1x128xf32>
    %201 = arith.addf %199, %200 : vector<1x128xf32>
    %202 = math.rsqrt %201 : vector<1x128xf32>
    %203 = vector.broadcast %202 : vector<1x128xf32> to vector<256x128xf32>
    %204 = arith.mulf %194, %203 : vector<256x128xf32>
    %205 = vector.broadcast %187 : vector<1x128xf32> to vector<256x128xf32>
    %206 = arith.mulf %204, %205 : vector<256x128xf32>
    %207 = vector.broadcast %188 : vector<1x128xf32> to vector<256x128xf32>
    %208 = arith.addf %206, %207 : vector<256x128xf32>
    %cst_104 = arith.constant 0.000000e+00 : f32
    %209 = vector.broadcast %cst_104 : f32 to vector<256x128xf32>
    %210 = arith.maximumf %208, %209 : vector<256x128xf32>
    %c0_105 = arith.constant 0 : index
    %c0_106 = arith.constant 0 : index
    %211 = vector.load %arg30[%c0_105, %c0_106] : memref<128x256xbf16, #tpu.memory_space<vmem>>, vector<128x256xbf16>
    %212 = arith.truncf %210 : vector<256x128xf32> to vector<256x128xbf16>
    %cst_107 = arith.constant dense<0.000000e+00> : vector<256x256xf32>
    %213 = tpu.matmul %212, %211, %cst_107 {dimension_numbers = #tpu.dot_dimension_numbers<[1], [0], [0], [1], [0, 0, 1, 1], [], []>} : vector<256x128xbf16>, vector<128x256xbf16>, vector<256x256xf32> -> vector<256x256xf32>
    %c0_108 = arith.constant 0 : index
    %c0_109 = arith.constant 0 : index
    %214 = vector.load %arg31[%c0_108, %c0_109] : memref<1x256xf32, #tpu.memory_space<vmem>>, vector<1x256xf32>
    %215 = vector.broadcast %214 : vector<1x256xf32> to vector<256x256xf32>
    %216 = arith.addf %213, %215 : vector<256x256xf32>
    %217 = vector.extract_strided_slice %216 {offsets = [0, 0], sizes = [256, 128], strides = [1, 1]} : vector<256x256xf32> to vector<256x128xf32>
    %218 = vector.extract_strided_slice %216 {offsets = [0, 128], sizes = [256, 128], strides = [1, 1]} : vector<256x256xf32> to vector<256x128xf32>
    %cst_110 = arith.constant 5.000000e-01 : f32
    %219 = vector.broadcast %cst_110 : f32 to vector<256x128xf32>
    %220 = arith.mulf %219, %218 : vector<256x128xf32>
    %221 = math.exp %220 : vector<256x128xf32>
    %c0_111 = arith.constant 0 : index
    %c0_112 = arith.constant 0 : index
    %222 = vector.load %arg1[%c0_111, %c0_112] : memref<256x128xf32, #tpu.memory_space<vmem>>, vector<256x128xf32>
    %223 = arith.mulf %222, %221 : vector<256x128xf32>
    %224 = arith.addf %217, %223 : vector<256x128xf32>
    %c0_113 = arith.constant 0 : index
    %c0_114 = arith.constant 0 : index
    %225 = vector.load %arg63[%c0_113, %c0_114] : memref<256x128xf32, #tpu.memory_space<vmem>>, vector<256x128xf32>
    tpu.vector_store %arg63[%c0_113, %c0_114], %217 {strides = array<i32>} : memref<256x128xf32, #tpu.memory_space<vmem>>, vector<256x128xf32>,
    %c0_115 = arith.constant 0 : index
    %c0_116 = arith.constant 0 : index
    %226 = vector.load %arg64[%c0_115, %c0_116] : memref<256x128xf32, #tpu.memory_space<vmem>>, vector<256x128xf32>
    tpu.vector_store %arg64[%c0_115, %c0_116], %218 {strides = array<i32>} : memref<256x128xf32, #tpu.memory_space<vmem>>, vector<256x128xf32>,
    %c0_117 = arith.constant 0 : index
    %c0_118 = arith.constant 0 : index
    %227 = vector.load %arg32[%c0_117, %c0_118] : memref<128x128xbf16, #tpu.memory_space<vmem>>, vector<128x128xbf16>
    %228 = arith.truncf %224 : vector<256x128xf32> to vector<256x128xbf16>
    %cst_119 = arith.constant dense<0.000000e+00> : vector<256x128xf32>
    %229 = tpu.matmul %228, %227, %cst_119 {dimension_numbers = #tpu.dot_dimension_numbers<[1], [0], [0], [1], [0, 0, 1, 1], [], []>} : vector<256x128xbf16>, vector<128x128xbf16>, vector<256x128xf32> -> vector<256x128xf32>
    %c0_120 = arith.constant 0 : index
    %c0_121 = arith.constant 0 : index
    %230 = vector.load %arg33[%c0_120, %c0_121] : memref<1x128xf32, #tpu.memory_space<vmem>>, vector<1x128xf32>
    %231 = vector.broadcast %230 : vector<1x128xf32> to vector<256x128xf32>
    %232 = arith.addf %229, %231 : vector<256x128xf32>
    %c0_122 = arith.constant 0 : index
    %c0_123 = arith.constant 0 : index
    %233 = vector.load %arg34[%c0_122, %c0_123] : memref<1x128xf32, #tpu.memory_space<vmem>>, vector<1x128xf32>
    %c0_124 = arith.constant 0 : index
    %c0_125 = arith.constant 0 : index
    %234 = vector.load %arg35[%c0_124, %c0_125] : memref<1x128xf32, #tpu.memory_space<vmem>>, vector<1x128xf32>
    %cst_126 = arith.constant dense<0.000000e+00> : vector<128xf32>
    %235 = vector.multi_reduction <add>, %232, %cst_126 [0] : vector<256x128xf32> to vector<128xf32>
    %236 = vector.shape_cast %235 : vector<128xf32> to vector<1x128xf32>
    %cst_127 = arith.constant 2.560000e+02 : f32
    %237 = vector.broadcast %cst_127 : f32 to vector<1x128xf32>
    %238 = arith.divf %236, %237 : vector<1x128xf32>
    %239 = vector.broadcast %238 : vector<1x128xf32> to vector<256x128xf32>
    %240 = arith.subf %232, %239 : vector<256x128xf32>
    %241 = arith.mulf %240, %240 : vector<256x128xf32>
    %cst_128 = arith.constant dense<0.000000e+00> : vector<128xf32>
    %242 = vector.multi_reduction <add>, %241, %cst_128 [0] : vector<256x128xf32> to vector<128xf32>
    %243 = vector.shape_cast %242 : vector<128xf32> to vector<1x128xf32>
    %cst_129 = arith.constant 2.560000e+02 : f32
    %244 = vector.broadcast %cst_129 : f32 to vector<1x128xf32>
    %245 = arith.divf %243, %244 : vector<1x128xf32>
    %cst_130 = arith.constant 9.99999974E-6 : f32
    %246 = vector.broadcast %cst_130 : f32 to vector<1x128xf32>
    %247 = arith.addf %245, %246 : vector<1x128xf32>
    %248 = math.rsqrt %247 : vector<1x128xf32>
    %249 = vector.broadcast %248 : vector<1x128xf32> to vector<256x128xf32>
    %250 = arith.mulf %240, %249 : vector<256x128xf32>
    %251 = vector.broadcast %233 : vector<1x128xf32> to vector<256x128xf32>
    %252 = arith.mulf %250, %251 : vector<256x128xf32>
    %253 = vector.broadcast %234 : vector<1x128xf32> to vector<256x128xf32>
    %254 = arith.addf %252, %253 : vector<256x128xf32>
    %cst_131 = arith.constant 0.000000e+00 : f32
    %255 = vector.broadcast %cst_131 : f32 to vector<256x128xf32>
    %256 = arith.maximumf %254, %255 : vector<256x128xf32>
    %c0_132 = arith.constant 0 : index
    %c0_133 = arith.constant 0 : index
    %257 = vector.load %arg36[%c0_132, %c0_133] : memref<128x128xbf16, #tpu.memory_space<vmem>>, vector<128x128xbf16>
    %258 = arith.truncf %256 : vector<256x128xf32> to vector<256x128xbf16>
    %cst_134 = arith.constant dense<0.000000e+00> : vector<256x128xf32>
    %259 = tpu.matmul %258, %257, %cst_134 {dimension_numbers = #tpu.dot_dimension_numbers<[1], [0], [0], [1], [0, 0, 1, 1], [], []>} : vector<256x128xbf16>, vector<128x128xbf16>, vector<256x128xf32> -> vector<256x128xf32>
    %c0_135 = arith.constant 0 : index
    %c0_136 = arith.constant 0 : index
    %260 = vector.load %arg37[%c0_135, %c0_136] : memref<1x128xf32, #tpu.memory_space<vmem>>, vector<1x128xf32>
    %261 = vector.broadcast %260 : vector<1x128xf32> to vector<256x128xf32>
    %262 = arith.addf %259, %261 : vector<256x128xf32>
    %c0_137 = arith.constant 0 : index
    %c0_138 = arith.constant 0 : index
    %263 = vector.load %arg38[%c0_137, %c0_138] : memref<1x128xf32, #tpu.memory_space<vmem>>, vector<1x128xf32>
    %c0_139 = arith.constant 0 : index
    %c0_140 = arith.constant 0 : index
    %264 = vector.load %arg39[%c0_139, %c0_140] : memref<1x128xf32, #tpu.memory_space<vmem>>, vector<1x128xf32>
    %cst_141 = arith.constant dense<0.000000e+00> : vector<128xf32>
    %265 = vector.multi_reduction <add>, %262, %cst_141 [0] : vector<256x128xf32> to vector<128xf32>
    %266 = vector.shape_cast %265 : vector<128xf32> to vector<1x128xf32>
    %cst_142 = arith.constant 2.560000e+02 : f32
    %267 = vector.broadcast %cst_142 : f32 to vector<1x128xf32>
    %268 = arith.divf %266, %267 : vector<1x128xf32>
    %269 = vector.broadcast %268 : vector<1x128xf32> to vector<256x128xf32>
    %270 = arith.subf %262, %269 : vector<256x128xf32>
    %271 = arith.mulf %270, %270 : vector<256x128xf32>
    %cst_143 = arith.constant dense<0.000000e+00> : vector<128xf32>
    %272 = vector.multi_reduction <add>, %271, %cst_143 [0] : vector<256x128xf32> to vector<128xf32>
    %273 = vector.shape_cast %272 : vector<128xf32> to vector<1x128xf32>
    %cst_144 = arith.constant 2.560000e+02 : f32
    %274 = vector.broadcast %cst_144 : f32 to vector<1x128xf32>
    %275 = arith.divf %273, %274 : vector<1x128xf32>
    %cst_145 = arith.constant 9.99999974E-6 : f32
    %276 = vector.broadcast %cst_145 : f32 to vector<1x128xf32>
    %277 = arith.addf %275, %276 : vector<1x128xf32>
    %278 = math.rsqrt %277 : vector<1x128xf32>
    %279 = vector.broadcast %278 : vector<1x128xf32> to vector<256x128xf32>
    %280 = arith.mulf %270, %279 : vector<256x128xf32>
    %281 = vector.broadcast %263 : vector<1x128xf32> to vector<256x128xf32>
    %282 = arith.mulf %280, %281 : vector<256x128xf32>
    %283 = vector.broadcast %264 : vector<1x128xf32> to vector<256x128xf32>
    %284 = arith.addf %282, %283 : vector<256x128xf32>
    %cst_146 = arith.constant 0.000000e+00 : f32
    %285 = vector.broadcast %cst_146 : f32 to vector<256x128xf32>
    %286 = arith.maximumf %284, %285 : vector<256x128xf32>
    %c0_147 = arith.constant 0 : index
    %c0_148 = arith.constant 0 : index
    %287 = vector.load %arg40[%c0_147, %c0_148] : memref<128x128xbf16, #tpu.memory_space<vmem>>, vector<128x128xbf16>
    %288 = arith.truncf %286 : vector<256x128xf32> to vector<256x128xbf16>
    %cst_149 = arith.constant dense<0.000000e+00> : vector<256x128xf32>
    %289 = tpu.matmul %288, %287, %cst_149 {dimension_numbers = #tpu.dot_dimension_numbers<[1], [0], [0], [1], [0, 0, 1, 1], [], []>} : vector<256x128xbf16>, vector<128x128xbf16>, vector<256x128xf32> -> vector<256x128xf32>
    %c0_150 = arith.constant 0 : index
    %c0_151 = arith.constant 0 : index
    %290 = vector.load %arg41[%c0_150, %c0_151] : memref<1x128xf32, #tpu.memory_space<vmem>>, vector<1x128xf32>
    %291 = vector.broadcast %290 : vector<1x128xf32> to vector<256x128xf32>
    %292 = arith.addf %289, %291 : vector<256x128xf32>
    %c0_152 = arith.constant 0 : index
    %c0_153 = arith.constant 0 : index
    %293 = vector.load %arg42[%c0_152, %c0_153] : memref<1x128xf32, #tpu.memory_space<vmem>>, vector<1x128xf32>
    %c0_154 = arith.constant 0 : index
    %c0_155 = arith.constant 0 : index
    %294 = vector.load %arg43[%c0_154, %c0_155] : memref<1x128xf32, #tpu.memory_space<vmem>>, vector<1x128xf32>
    %cst_156 = arith.constant dense<0.000000e+00> : vector<128xf32>
    %295 = vector.multi_reduction <add>, %292, %cst_156 [0] : vector<256x128xf32> to vector<128xf32>
    %296 = vector.shape_cast %295 : vector<128xf32> to vector<1x128xf32>
    %cst_157 = arith.constant 2.560000e+02 : f32
    %297 = vector.broadcast %cst_157 : f32 to vector<1x128xf32>
    %298 = arith.divf %296, %297 : vector<1x128xf32>
    %299 = vector.broadcast %298 : vector<1x128xf32> to vector<256x128xf32>
    %300 = arith.subf %292, %299 : vector<256x128xf32>
    %301 = arith.mulf %300, %300 : vector<256x128xf32>
    %cst_158 = arith.constant dense<0.000000e+00> : vector<128xf32>
    %302 = vector.multi_reduction <add>, %301, %cst_158 [0] : vector<256x128xf32> to vector<128xf32>
    %303 = vector.shape_cast %302 : vector<128xf32> to vector<1x128xf32>
    %cst_159 = arith.constant 2.560000e+02 : f32
    %304 = vector.broadcast %cst_159 : f32 to vector<1x128xf32>
    %305 = arith.divf %303, %304 : vector<1x128xf32>
    %cst_160 = arith.constant 9.99999974E-6 : f32
    %306 = vector.broadcast %cst_160 : f32 to vector<1x128xf32>
    %307 = arith.addf %305, %306 : vector<1x128xf32>
    %308 = math.rsqrt %307 : vector<1x128xf32>
    %309 = vector.broadcast %308 : vector<1x128xf32> to vector<256x128xf32>
    %310 = arith.mulf %300, %309 : vector<256x128xf32>
    %311 = vector.broadcast %293 : vector<1x128xf32> to vector<256x128xf32>
    %312 = arith.mulf %310, %311 : vector<256x128xf32>
    %313 = vector.broadcast %294 : vector<1x128xf32> to vector<256x128xf32>
    %314 = arith.addf %312, %313 : vector<256x128xf32>
    %cst_161 = arith.constant 0.000000e+00 : f32
    %315 = vector.broadcast %cst_161 : f32 to vector<256x128xf32>
    %316 = arith.maximumf %314, %315 : vector<256x128xf32>
    %c0_162 = arith.constant 0 : index
    %c0_163 = arith.constant 0 : index
    %317 = vector.load %arg44[%c0_162, %c0_163] : memref<128x128xbf16, #tpu.memory_space<vmem>>, vector<128x128xbf16>
    %318 = arith.truncf %316 : vector<256x128xf32> to vector<256x128xbf16>
    %cst_164 = arith.constant dense<0.000000e+00> : vector<256x128xf32>
    %319 = tpu.matmul %318, %317, %cst_164 {dimension_numbers = #tpu.dot_dimension_numbers<[1], [0], [0], [1], [0, 0, 1, 1], [], []>} : vector<256x128xbf16>, vector<128x128xbf16>, vector<256x128xf32> -> vector<256x128xf32>
    %c0_165 = arith.constant 0 : index
    %c0_166 = arith.constant 0 : index
    %320 = vector.load %arg45[%c0_165, %c0_166] : memref<1x128xf32, #tpu.memory_space<vmem>>, vector<1x128xf32>
    %321 = vector.broadcast %320 : vector<1x128xf32> to vector<256x128xf32>
    %322 = arith.addf %319, %321 : vector<256x128xf32>
    %c0_167 = arith.constant 0 : index
    %c0_168 = arith.constant 0 : index
    %323 = vector.load %arg46[%c0_167, %c0_168] : memref<1x128xf32, #tpu.memory_space<vmem>>, vector<1x128xf32>
    %c0_169 = arith.constant 0 : index
    %c0_170 = arith.constant 0 : index
    %324 = vector.load %arg47[%c0_169, %c0_170] : memref<1x128xf32, #tpu.memory_space<vmem>>, vector<1x128xf32>
    %cst_171 = arith.constant dense<0.000000e+00> : vector<128xf32>
    %325 = vector.multi_reduction <add>, %322, %cst_171 [0] : vector<256x128xf32> to vector<128xf32>
    %326 = vector.shape_cast %325 : vector<128xf32> to vector<1x128xf32>
    %cst_172 = arith.constant 2.560000e+02 : f32
    %327 = vector.broadcast %cst_172 : f32 to vector<1x128xf32>
    %328 = arith.divf %326, %327 : vector<1x128xf32>
    %329 = vector.broadcast %328 : vector<1x128xf32> to vector<256x128xf32>
    %330 = arith.subf %322, %329 : vector<256x128xf32>
    %331 = arith.mulf %330, %330 : vector<256x128xf32>
    %cst_173 = arith.constant dense<0.000000e+00> : vector<128xf32>
    %332 = vector.multi_reduction <add>, %331, %cst_173 [0] : vector<256x128xf32> to vector<128xf32>
    %333 = vector.shape_cast %332 : vector<128xf32> to vector<1x128xf32>
    %cst_174 = arith.constant 2.560000e+02 : f32
    %334 = vector.broadcast %cst_174 : f32 to vector<1x128xf32>
    %335 = arith.divf %333, %334 : vector<1x128xf32>
    %cst_175 = arith.constant 9.99999974E-6 : f32
    %336 = vector.broadcast %cst_175 : f32 to vector<1x128xf32>
    %337 = arith.addf %335, %336 : vector<1x128xf32>
    %338 = math.rsqrt %337 : vector<1x128xf32>
    %339 = vector.broadcast %338 : vector<1x128xf32> to vector<256x128xf32>
    %340 = arith.mulf %330, %339 : vector<256x128xf32>
    %341 = vector.broadcast %323 : vector<1x128xf32> to vector<256x128xf32>
    %342 = arith.mulf %340, %341 : vector<256x128xf32>
    %343 = vector.broadcast %324 : vector<1x128xf32> to vector<256x128xf32>
    %344 = arith.addf %342, %343 : vector<256x128xf32>
    %cst_176 = arith.constant 0.000000e+00 : f32
    %345 = vector.broadcast %cst_176 : f32 to vector<256x128xf32>
    %346 = arith.maximumf %344, %345 : vector<256x128xf32>
    %c0_177 = arith.constant 0 : index
    %c0_178 = arith.constant 0 : index
    %347 = vector.load %arg48[%c0_177, %c0_178] : memref<128x128xbf16, #tpu.memory_space<vmem>>, vector<128x128xbf16>
    %348 = arith.truncf %346 : vector<256x128xf32> to vector<256x128xbf16>
    %cst_179 = arith.constant dense<0.000000e+00> : vector<256x128xf32>
    %349 = tpu.matmul %348, %347, %cst_179 {dimension_numbers = #tpu.dot_dimension_numbers<[1], [0], [0], [1], [0, 0, 1, 1], [], []>} : vector<256x128xbf16>, vector<128x128xbf16>, vector<256x128xf32> -> vector<256x128xf32>
    %c0_180 = arith.constant 0 : index
    %c0_181 = arith.constant 0 : index
    %350 = vector.load %arg49[%c0_180, %c0_181] : memref<1x128xf32, #tpu.memory_space<vmem>>, vector<1x128xf32>
    %351 = vector.broadcast %350 : vector<1x128xf32> to vector<256x128xf32>
    %352 = arith.addf %349, %351 : vector<256x128xf32>
    %c0_182 = arith.constant 0 : index
    %c0_183 = arith.constant 0 : index
    %353 = vector.load %arg50[%c0_182, %c0_183] : memref<1x128xf32, #tpu.memory_space<vmem>>, vector<1x128xf32>
    %c0_184 = arith.constant 0 : index
    %c0_185 = arith.constant 0 : index
    %354 = vector.load %arg51[%c0_184, %c0_185] : memref<1x128xf32, #tpu.memory_space<vmem>>, vector<1x128xf32>
    %cst_186 = arith.constant dense<0.000000e+00> : vector<128xf32>
    %355 = vector.multi_reduction <add>, %352, %cst_186 [0] : vector<256x128xf32> to vector<128xf32>
    %356 = vector.shape_cast %355 : vector<128xf32> to vector<1x128xf32>
    %cst_187 = arith.constant 2.560000e+02 : f32
    %357 = vector.broadcast %cst_187 : f32 to vector<1x128xf32>
    %358 = arith.divf %356, %357 : vector<1x128xf32>
    %359 = vector.broadcast %358 : vector<1x128xf32> to vector<256x128xf32>
    %360 = arith.subf %352, %359 : vector<256x128xf32>
    %361 = arith.mulf %360, %360 : vector<256x128xf32>
    %cst_188 = arith.constant dense<0.000000e+00> : vector<128xf32>
    %362 = vector.multi_reduction <add>, %361, %cst_188 [0] : vector<256x128xf32> to vector<128xf32>
    %363 = vector.shape_cast %362 : vector<128xf32> to vector<1x128xf32>
    %cst_189 = arith.constant 2.560000e+02 : f32
    %364 = vector.broadcast %cst_189 : f32 to vector<1x128xf32>
    %365 = arith.divf %363, %364 : vector<1x128xf32>
    %cst_190 = arith.constant 9.99999974E-6 : f32
    %366 = vector.broadcast %cst_190 : f32 to vector<1x128xf32>
    %367 = arith.addf %365, %366 : vector<1x128xf32>
    %368 = math.rsqrt %367 : vector<1x128xf32>
    %369 = vector.broadcast %368 : vector<1x128xf32> to vector<256x128xf32>
    %370 = arith.mulf %360, %369 : vector<256x128xf32>
    %371 = vector.broadcast %353 : vector<1x128xf32> to vector<256x128xf32>
    %372 = arith.mulf %370, %371 : vector<256x128xf32>
    %373 = vector.broadcast %354 : vector<1x128xf32> to vector<256x128xf32>
    %374 = arith.addf %372, %373 : vector<256x128xf32>
    %cst_191 = arith.constant 0.000000e+00 : f32
    %375 = vector.broadcast %cst_191 : f32 to vector<256x128xf32>
    %376 = arith.maximumf %374, %375 : vector<256x128xf32>
    %c0_192 = arith.constant 0 : index
    %c0_193 = arith.constant 0 : index
    %377 = vector.load %arg52[%c0_192, %c0_193] : memref<128x128xbf16, #tpu.memory_space<vmem>>, vector<128x128xbf16>
    %378 = arith.truncf %376 : vector<256x128xf32> to vector<256x128xbf16>
    %cst_194 = arith.constant dense<0.000000e+00> : vector<256x128xf32>
    %379 = tpu.matmul %378, %377, %cst_194 {dimension_numbers = #tpu.dot_dimension_numbers<[1], [0], [0], [1], [0, 0, 1, 1], [], []>} : vector<256x128xbf16>, vector<128x128xbf16>, vector<256x128xf32> -> vector<256x128xf32>
    %c0_195 = arith.constant 0 : index
    %c0_196 = arith.constant 0 : index
    %380 = vector.load %arg53[%c0_195, %c0_196] : memref<1x128xf32, #tpu.memory_space<vmem>>, vector<1x128xf32>
    %381 = vector.broadcast %380 : vector<1x128xf32> to vector<256x128xf32>
    %382 = arith.addf %379, %381 : vector<256x128xf32>
    %c0_197 = arith.constant 0 : index
    %c0_198 = arith.constant 0 : index
    %383 = vector.load %arg54[%c0_197, %c0_198] : memref<1x128xf32, #tpu.memory_space<vmem>>, vector<1x128xf32>
    %c0_199 = arith.constant 0 : index
    %c0_200 = arith.constant 0 : index
    %384 = vector.load %arg55[%c0_199, %c0_200] : memref<1x128xf32, #tpu.memory_space<vmem>>, vector<1x128xf32>
    %cst_201 = arith.constant dense<0.000000e+00> : vector<128xf32>
    %385 = vector.multi_reduction <add>, %382, %cst_201 [0] : vector<256x128xf32> to vector<128xf32>
    %386 = vector.shape_cast %385 : vector<128xf32> to vector<1x128xf32>
    %cst_202 = arith.constant 2.560000e+02 : f32
    %387 = vector.broadcast %cst_202 : f32 to vector<1x128xf32>
    %388 = arith.divf %386, %387 : vector<1x128xf32>
    %389 = vector.broadcast %388 : vector<1x128xf32> to vector<256x128xf32>
    %390 = arith.subf %382, %389 : vector<256x128xf32>
    %391 = arith.mulf %390, %390 : vector<256x128xf32>
    %cst_203 = arith.constant dense<0.000000e+00> : vector<128xf32>
    %392 = vector.multi_reduction <add>, %391, %cst_203 [0] : vector<256x128xf32> to vector<128xf32>
    %393 = vector.shape_cast %392 : vector<128xf32> to vector<1x128xf32>
    %cst_204 = arith.constant 2.560000e+02 : f32
    %394 = vector.broadcast %cst_204 : f32 to vector<1x128xf32>
    %395 = arith.divf %393, %394 : vector<1x128xf32>
    %cst_205 = arith.constant 9.99999974E-6 : f32
    %396 = vector.broadcast %cst_205 : f32 to vector<1x128xf32>
    %397 = arith.addf %395, %396 : vector<1x128xf32>
    %398 = math.rsqrt %397 : vector<1x128xf32>
    %399 = vector.broadcast %398 : vector<1x128xf32> to vector<256x128xf32>
    %400 = arith.mulf %390, %399 : vector<256x128xf32>
    %401 = vector.broadcast %383 : vector<1x128xf32> to vector<256x128xf32>
    %402 = arith.mulf %400, %401 : vector<256x128xf32>
    %403 = vector.broadcast %384 : vector<1x128xf32> to vector<256x128xf32>
    %404 = arith.addf %402, %403 : vector<256x128xf32>
    %cst_206 = arith.constant 0.000000e+00 : f32
    %405 = vector.broadcast %cst_206 : f32 to vector<256x128xf32>
    %406 = arith.maximumf %404, %405 : vector<256x128xf32>
    %c0_207 = arith.constant 0 : index
    %c0_208 = arith.constant 0 : index
    %407 = vector.load %arg56[%c0_207, %c0_208] : memref<128x128xbf16, #tpu.memory_space<vmem>>, vector<128x128xbf16>
    %408 = arith.truncf %406 : vector<256x128xf32> to vector<256x128xbf16>
    %cst_209 = arith.constant dense<0.000000e+00> : vector<256x128xf32>
    %409 = tpu.matmul %408, %407, %cst_209 {dimension_numbers = #tpu.dot_dimension_numbers<[1], [0], [0], [1], [0, 0, 1, 1], [], []>} : vector<256x128xbf16>, vector<128x128xbf16>, vector<256x128xf32> -> vector<256x128xf32>
    %c0_210 = arith.constant 0 : index
    %c0_211 = arith.constant 0 : index
    %410 = vector.load %arg57[%c0_210, %c0_211] : memref<1x128xf32, #tpu.memory_space<vmem>>, vector<1x128xf32>
    %411 = vector.broadcast %410 : vector<1x128xf32> to vector<256x128xf32>
    %412 = arith.addf %409, %411 : vector<256x128xf32>
    %c0_212 = arith.constant 0 : index
    %c0_213 = arith.constant 0 : index
    %413 = vector.load %arg58[%c0_212, %c0_213] : memref<1x128xf32, #tpu.memory_space<vmem>>, vector<1x128xf32>
    %c0_214 = arith.constant 0 : index
    %c0_215 = arith.constant 0 : index
    %414 = vector.load %arg59[%c0_214, %c0_215] : memref<1x128xf32, #tpu.memory_space<vmem>>, vector<1x128xf32>
    %cst_216 = arith.constant dense<0.000000e+00> : vector<128xf32>
    %415 = vector.multi_reduction <add>, %412, %cst_216 [0] : vector<256x128xf32> to vector<128xf32>
    %416 = vector.shape_cast %415 : vector<128xf32> to vector<1x128xf32>
    %cst_217 = arith.constant 2.560000e+02 : f32
    %417 = vector.broadcast %cst_217 : f32 to vector<1x128xf32>
    %418 = arith.divf %416, %417 : vector<1x128xf32>
    %419 = vector.broadcast %418 : vector<1x128xf32> to vector<256x128xf32>
    %420 = arith.subf %412, %419 : vector<256x128xf32>
    %421 = arith.mulf %420, %420 : vector<256x128xf32>
    %cst_218 = arith.constant dense<0.000000e+00> : vector<128xf32>
    %422 = vector.multi_reduction <add>, %421, %cst_218 [0] : vector<256x128xf32> to vector<128xf32>
    %423 = vector.shape_cast %422 : vector<128xf32> to vector<1x128xf32>
    %cst_219 = arith.constant 2.560000e+02 : f32
    %424 = vector.broadcast %cst_219 : f32 to vector<1x128xf32>
    %425 = arith.divf %423, %424 : vector<1x128xf32>
    %cst_220 = arith.constant 9.99999974E-6 : f32
    %426 = vector.broadcast %cst_220 : f32 to vector<1x128xf32>
    %427 = arith.addf %425, %426 : vector<1x128xf32>
    %428 = math.rsqrt %427 : vector<1x128xf32>
    %429 = vector.broadcast %428 : vector<1x128xf32> to vector<256x128xf32>
    %430 = arith.mulf %420, %429 : vector<256x128xf32>
    %431 = vector.broadcast %413 : vector<1x128xf32> to vector<256x128xf32>
    %432 = arith.mulf %430, %431 : vector<256x128xf32>
    %433 = vector.broadcast %414 : vector<1x128xf32> to vector<256x128xf32>
    %434 = arith.addf %432, %433 : vector<256x128xf32>
    %cst_221 = arith.constant 0.000000e+00 : f32
    %435 = vector.broadcast %cst_221 : f32 to vector<256x128xf32>
    %436 = arith.maximumf %434, %435 : vector<256x128xf32>
    %c0_222 = arith.constant 0 : index
    %c0_223 = arith.constant 0 : index
    %437 = vector.load %arg60[%c0_222, %c0_223] : memref<128x128xbf16, #tpu.memory_space<vmem>>, vector<128x128xbf16>
    %438 = arith.truncf %436 : vector<256x128xf32> to vector<256x128xbf16>
    %cst_224 = arith.constant dense<0.000000e+00> : vector<256x128xf32>
    %439 = tpu.matmul %438, %437, %cst_224 {dimension_numbers = #tpu.dot_dimension_numbers<[1], [0], [0], [1], [0, 0, 1, 1], [], []>} : vector<256x128xbf16>, vector<128x128xbf16>, vector<256x128xf32> -> vector<256x128xf32>
    %c0_225 = arith.constant 0 : index
    %c0_226 = arith.constant 0 : index
    %440 = vector.load %arg61[%c0_225, %c0_226] : memref<1x128xf32, #tpu.memory_space<vmem>>, vector<1x128xf32>
    %441 = vector.broadcast %440 : vector<1x128xf32> to vector<256x128xf32>
    %442 = arith.addf %439, %441 : vector<256x128xf32>
    %c0_227 = arith.constant 0 : index
    %c0_228 = arith.constant 0 : index
    %443 = vector.load %arg62[%c0_227, %c0_228] : memref<256x128xf32, #tpu.memory_space<vmem>>, vector<256x128xf32>
    tpu.vector_store %arg62[%c0_227, %c0_228], %442 {strides = array<i32>} : memref<256x128xf32, #tpu.memory_space<vmem>>, vector<256x128xf32>,
    return
  }
}

</mosaic_0001>

<llo_original>
// kernel: vae_forward.1
$region0: #{vae_forward.1}
  #allocation0 [shape = 'u32[]', space=smem, size = 0x4, offset = 0x4, fixed_abs, tag = 'smem constant byte address 0x4 - core index']
  #allocation1 [shape = 'u32[144,128]{1,0:T(1,128)}', space=vmem, size = 0x12000, scoped, tag = 'internal scratch']
  %s0 = inlined_call_operand.smem [shape: u32[65], index: -1, kind: input, shape index: {}]
  %s1 = sld [smem:[%s0]]
  %s2 = scalar_lea.smem %s0, 1
  %s3 = sld [smem:[%s2]]
  %s4 = scalar_lea.smem %s0, 2
  %s5 = sld [smem:[%s4]]
  %s6 = scalar_lea.smem %s0, 3
  %s7 = sld [smem:[%s6]]
  %s8 = scalar_lea.smem %s0, 4
  %s9 = sld [smem:[%s8]]
  %s10 = scalar_lea.smem %s0, 5
  %s11 = sld [smem:[%s10]]
  %s12 = scalar_lea.smem %s0, 6
  %s13 = sld [smem:[%s12]]
  %s14 = scalar_lea.smem %s0, 7
  %s15 = sld [smem:[%s14]]
  %s16 = scalar_lea.smem %s0, 8
  %s17 = sld [smem:[%s16]]
  %s18 = scalar_lea.smem %s0, 9
  %s19 = sld [smem:[%s18]]
  %s20 = scalar_lea.smem %s0, 10
  %s21 = sld [smem:[%s20]]
  %s22 = scalar_lea.smem %s0, 11
  %s23 = sld [smem:[%s22]]
  %s24 = scalar_lea.smem %s0, 12
  %s25 = sld [smem:[%s24]]
  %s26 = scalar_lea.smem %s0, 13
  %s27 = sld [smem:[%s26]]
  %s28 = scalar_lea.smem %s0, 14
  %s29 = sld [smem:[%s28]]
  %s30 = scalar_lea.smem %s0, 15
  %s31 = sld [smem:[%s30]]
  %s32 = scalar_lea.smem %s0, 16
  %s33 = sld [smem:[%s32]]
  %s34 = scalar_lea.smem %s0, 17
  %s35 = sld [smem:[%s34]]
  %s36 = scalar_lea.smem %s0, 18
  %s37 = sld [smem:[%s36]]
  %s38 = scalar_lea.smem %s0, 19
  %s39 = sld [smem:[%s38]]
  %s40 = scalar_lea.smem %s0, 20
  %s41 = sld [smem:[%s40]]
  %s42 = scalar_lea.smem %s0, 21
  %s43 = sld [smem:[%s42]]
  %s44 = scalar_lea.smem %s0, 22
  %s45 = sld [smem:[%s44]]
  %s46 = scalar_lea.smem %s0, 23
  %s47 = sld [smem:[%s46]]
  %s48 = scalar_lea.smem %s0, 24
  %s49 = sld [smem:[%s48]]
  %s50 = scalar_lea.smem %s0, 25
  %s51 = sld [smem:[%s50]]
  %s52 = scalar_lea.smem %s0, 26
  %s53 = sld [smem:[%s52]]
  %s54 = scalar_lea.smem %s0, 27
  %s55 = sld [smem:[%s54]]
  %s56 = scalar_lea.smem %s0, 28
  %s57 = sld [smem:[%s56]]
  %s58 = scalar_lea.smem %s0, 29
  %s59 = sld [smem:[%s58]]
  %s60 = scalar_lea.smem %s0, 30
  %s61 = sld [smem:[%s60]]
  %s62 = scalar_lea.smem %s0, 31
  %s63 = sld [smem:[%s62]]
  %s64 = scalar_lea.smem %s0, 32
  %s65 = sld [smem:[%s64]]
  %s66 = scalar_lea.smem %s0, 33
  %s67 = sld [smem:[%s66]]
  %s68 = scalar_lea.smem %s0, 34
  %s69 = sld [smem:[%s68]]
  %s70 = scalar_lea.smem %s0, 35
  %s71 = sld [smem:[%s70]]
  %s72 = scalar_lea.smem %s0, 36
  %s73 = sld [smem:[%s72]]
  %s74 = scalar_lea.smem %s0, 37
  %s75 = sld [smem:[%s74]]
  %s76 = scalar_lea.smem %s0, 38
  %s77 = sld [smem:[%s76]]
  %s78 = scalar_lea.smem %s0, 39
  %s79 = sld [smem:[%s78]]
  %s80 = scalar_lea.smem %s0, 40
  %s81 = sld [smem:[%s80]]
  %s82 = scalar_lea.smem %s0, 41
  %s83 = sld [smem:[%s82]]
  %s84 = scalar_lea.smem %s0, 42
  %s85 = sld [smem:[%s84]]
  %s86 = scalar_lea.smem %s0, 43
  %s87 = sld [smem:[%s86]]
  %s88 = scalar_lea.smem %s0, 44
  %s89 = sld [smem:[%s88]]
  %s90 = scalar_lea.smem %s0, 45
  %s91 = sld [smem:[%s90]]
  %s92 = scalar_lea.smem %s0, 46
  %s93 = sld [smem:[%s92]]
  %s94 = scalar_lea.smem %s0, 47
  %s95 = sld [smem:[%s94]]
  %s96 = scalar_lea.smem %s0, 48
  %s97 = sld [smem:[%s96]]
  %s98 = scalar_lea.smem %s0, 49
  %s99 = sld [smem:[%s98]]
  %s100 = scalar_lea.smem %s0, 50
  %s101 = sld [smem:[%s100]]
  %s102 = scalar_lea.smem %s0, 51
  %s103 = sld [smem:[%s102]]
  %s104 = scalar_lea.smem %s0, 52
  %s105 = sld [smem:[%s104]]
  %s106 = scalar_lea.smem %s0, 53
  %s107 = sld [smem:[%s106]]
  %s108 = scalar_lea.smem %s0, 54
  %s109 = sld [smem:[%s108]]
  %s110 = scalar_lea.smem %s0, 55
  %s111 = sld [smem:[%s110]]
  %s112 = scalar_lea.smem %s0, 56
  %s113 = sld [smem:[%s112]]
  %s114 = scalar_lea.smem %s0, 57
  %s115 = sld [smem:[%s114]]
  %s116 = scalar_lea.smem %s0, 58
  %s117 = sld [smem:[%s116]]
  %s118 = scalar_lea.smem %s0, 59
  %s119 = sld [smem:[%s118]]
  %s120 = scalar_lea.smem %s0, 60
  %s121 = sld [smem:[%s120]]
  %s122 = scalar_lea.smem %s0, 61
  %s123 = sld [smem:[%s122]]
  %s124 = scalar_lea.smem %s0, 62
  %s125 = sld [smem:[%s124]]
  %s126 = scalar_lea.smem %s0, 63
  %s127 = sld [smem:[%s126]]
  %s128 = scalar_lea.smem %s0, 64
  %s129 = sld [smem:[%s128]]
  %130 = xla_tuple %s125, %s127, %s129
  %s131 = sld [smem:[#allocation0]]
  $region358: #{vae_forward.1} parent=0
    _
  %s133 = ssub.s32 1, %s131
  %s134 = scalar_select 0, %s133, %s131
  $region1: #{vae_forward.1} parent=0
    #allocation2 [shape = 'u8[512]{0}', space=vmem, size = 0x400, scoped, tag = 'input window, operand 34, single buffered']
    #allocation3 [shape = 's32[1]{0}', space=sflag, size = 0x4, scoped, tag = 'scoped memory for vae_forward.1']
    #allocation4 [shape = 'u8[512]{0}', space=vmem, size = 0x400, scoped, tag = 'input window, operand 35, single buffered']
    #allocation5 [shape = 's32[1]{0}', space=sflag, size = 0x4, scoped, tag = 'scoped memory for vae_forward.1']
    #allocation6 [shape = 'u8[512]{0}', space=vmem, size = 0x400, scoped, tag = 'input window, operand 37, single buffered']
    #allocation7 [shape = 'u8[512]{0}', space=vmem, size = 0x400, scoped, tag = 'input window, operand 38, single buffered']
    #allocation8 [shape = 's32[1]{0}', space=sflag, size = 0x4, scoped, tag = 'scoped memory for vae_forward.1']
    #allocation9 [shape = 'u8[512]{0}', space=vmem, size = 0x400, scoped, tag = 'input window, operand 39, single buffered']
    #allocation10 [shape = 'u8[512]{0}', space=vmem, size = 0x400, scoped, tag = 'input window, operand 41, single buffered']
    #allocation11 [shape = 's32[1]{0}', space=sflag, size = 0x4, scoped, tag = 'scoped memory for vae_forward.1']
    #allocation12 [shape = 'u8[512]{0}', space=vmem, size = 0x400, scoped, tag = 'input window, operand 42, single buffered']
    #allocation13 [shape = 'u8[512]{0}', space=vmem, size = 0x400, scoped, tag = 'input window, operand 43, single buffered']
    #allocation14 [shape = 's32[1]{0}', space=sflag, size = 0x4, scoped, tag = 'scoped memory for vae_forward.1']
    #allocation15 [shape = 'u8[512]{0}', space=vmem, size = 0x400, scoped, tag = 'input window, operand 45, single buffered']
    #allocation16 [shape = 'u8[512]{0}', space=vmem, size = 0x400, scoped, tag = 'input window, operand 46, single buffered']
    #allocation17 [shape = 's32[1]{0}', space=sflag, size = 0x4, scoped, tag = 'scoped memory for vae_forward.1']
    #allocation18 [shape = 'u8[512]{0}', space=vmem, size = 0x400, scoped, tag = 'input window, operand 47, single buffered']
    #allocation19 [shape = 'u8[512]{0}', space=vmem, size = 0x400, scoped, tag = 'input window, operand 49, single buffered']
    #allocation20 [shape = 's32[1]{0}', space=sflag, size = 0x4, scoped, tag = 'scoped memory for vae_forward.1']
    #allocation21 [shape = 'u8[512]{0}', space=vmem, size = 0x400, scoped, tag = 'input window, operand 50, single buffered']
    #allocation22 [shape = 'u8[512]{0}', space=vmem, size = 0x400, scoped, tag = 'input window, operand 51, single buffered']
    #allocation23 [shape = 's32[1]{0}', space=sflag, size = 0x4, scoped, tag = 'scoped memory for vae_forward.1']
    #allocation24 [shape = 'u8[512]{0}', space=vmem, size = 0x400, scoped, tag = 'input window, operand 53, single buffered']
    #allocation25 [shape = 'u8[512]{0}', space=vmem, size = 0x400, scoped, tag = 'input window, operand 54, single buffered']
    #allocation26 [shape = 's32[1]{0}', space=sflag, size = 0x4, scoped, tag = 'scoped memory for vae_forward.1']
    #allocation27 [shape = 'u8[512]{0}', space=vmem, size = 0x400, scoped, tag = 'input window, operand 55, single buffered']
    #allocation28 [shape = 'u8[512]{0}', space=vmem, size = 0x400, scoped, tag = 'input window, operand 57, single buffered']
    #allocation29 [shape = 's32[1]{0}', space=sflag, size = 0x4, scoped, tag = 'scoped memory for vae_forward.1']
    #allocation30 [shape = 'u8[512]{0}', space=vmem, size = 0x400, scoped, tag = 'input window, operand 58, single buffered']
    #allocation31 [shape = 'u8[512]{0}', space=vmem, size = 0x400, scoped, tag = 'input window, operand 59, single buffered']
    #allocation32 [shape = 's32[1]{0}', space=sflag, size = 0x4, scoped, tag = 'scoped memory for vae_forward.1']
    #allocation33 [shape = 'u8[512]{0}', space=vmem, size = 0x400, scoped, tag = 'input window, operand 61, single buffered']
    %135 = vsyncpa [#allocation3], 0
    %136 = vsyncpa [#allocation5], 0
    %137 = vsyncpa [#allocation8], 0
    %138 = vsyncpa [#allocation11], 0
    %139 = vsyncpa [#allocation14], 0
    %140 = vsyncpa [#allocation17], 0
    %141 = vsyncpa [#allocation20], 0
    %142 = vsyncpa [#allocation23], 0
    %143 = vsyncpa [#allocation26], 0
    %144 = vsyncpa [#allocation29], 0
    %145 = vsyncpa [#allocation32], 0
    // Predicated region
    $region2: #{vae_forward.1} parent=1 // pred_check
      _
    $region3: #{vae_forward.1} parent=1 // pred_check_branch
      %147 = sbr.rel (0) target = $region5
    $region4: #{vae_forward.1} parent=1 // pred_region
      _
    $region5: #{vae_forward.1} parent=1 // pred_fallthru
      _
    // Predicated region
    $region6: #{vae_forward.1} parent=1 // pred_check
      _
    $region7: #{vae_forward.1} parent=1 // pred_check_branch
      %149 = sbr.rel (0) target = $region9
    $region8: #{vae_forward.1} parent=1 // pred_region
      _
    $region9: #{vae_forward.1} parent=1 // pred_fallthru
      _
    // Predicated region
    $region10: #{vae_forward.1} parent=1 // pred_check
      _
    $region11: #{vae_forward.1} parent=1 // pred_check_branch
      %151 = sbr.rel (0) target = $region13
    $region12: #{vae_forward.1} parent=1 // pred_region
      _
    $region13: #{vae_forward.1} parent=1 // pred_fallthru
      _
    // Predicated region
    $region14: #{vae_forward.1} parent=1 // pred_check
      _
    $region15: #{vae_forward.1} parent=1 // pred_check_branch
      %153 = sbr.rel (0) target = $region17
    $region16: #{vae_forward.1} parent=1 // pred_region
      _
    $region17: #{vae_forward.1} parent=1 // pred_fallthru
      _
    // Predicated region
    $region18: #{vae_forward.1} parent=1 // pred_check
      _
    $region19: #{vae_forward.1} parent=1 // pred_check_branch
      %155 = sbr.rel (0) target = $region21
    $region20: #{vae_forward.1} parent=1 // pred_region
      _
    $region21: #{vae_forward.1} parent=1 // pred_fallthru
      _
    // Predicated region
    $region22: #{vae_forward.1} parent=1 // pred_check
      _
    $region23: #{vae_forward.1} parent=1 // pred_check_branch
      %157 = sbr.rel (0) target = $region25
    $region24: #{vae_forward.1} parent=1 // pred_region
      _
    $region25: #{vae_forward.1} parent=1 // pred_fallthru
      _
    // Predicated region
    $region26: #{vae_forward.1} parent=1 // pred_check
      _
    $region27: #{vae_forward.1} parent=1 // pred_check_branch
      %159 = sbr.rel (0) target = $region29
    $region28: #{vae_forward.1} parent=1 // pred_region
      _
    $region29: #{vae_forward.1} parent=1 // pred_fallthru
      _
    // Predicated region
    $region30: #{vae_forward.1} parent=1 // pred_check
      _
    $region31: #{vae_forward.1} parent=1 // pred_check_branch
      %161 = sbr.rel (0) target = $region33
    $region32: #{vae_forward.1} parent=1 // pred_region
      _
    $region33: #{vae_forward.1} parent=1 // pred_fallthru
      _
    // Predicated region
    $region34: #{vae_forward.1} parent=1 // pred_check
      _
    $region35: #{vae_forward.1} parent=1 // pred_check_branch
      %163 = sbr.rel (0) target = $region37
    $region36: #{vae_forward.1} parent=1 // pred_region
      _
    $region37: #{vae_forward.1} parent=1 // pred_fallthru
      _
    // Predicated region
    $region38: #{vae_forward.1} parent=1 // pred_check
      _
    $region39: #{vae_forward.1} parent=1 // pred_check_branch
      %165 = sbr.rel (0) target = $region41
    $region40: #{vae_forward.1} parent=1 // pred_region
      _
    $region41: #{vae_forward.1} parent=1 // pred_fallthru
      _
    // Predicated region
    $region42: #{vae_forward.1} parent=1 // pred_check
      _
    $region43: #{vae_forward.1} parent=1 // pred_check_branch
      %167 = sbr.rel (0) target = $region45
    $region44: #{vae_forward.1} parent=1 // pred_region
      _
    $region45: #{vae_forward.1} parent=1 // pred_fallthru
      _
    // Predicated region
    $region46: #{vae_forward.1} parent=1 // pred_check
      _
    $region47: #{vae_forward.1} parent=1 // pred_check_branch
      %169 = sbr.rel (0) target = $region49
    $region48: #{vae_forward.1} parent=1 // pred_region
      _
    $region49: #{vae_forward.1} parent=1 // pred_fallthru
      _
    // Predicated region
    $region50: #{vae_forward.1} parent=1 // pred_check
      _
    $region51: #{vae_forward.1} parent=1 // pred_check_branch
      %171 = sbr.rel (0) target = $region53
    $region52: #{vae_forward.1} parent=1 // pred_region
      _
    $region53: #{vae_forward.1} parent=1 // pred_fallthru
      _
    // Predicated region
    $region54: #{vae_forward.1} parent=1 // pred_check
      _
    $region55: #{vae_forward.1} parent=1 // pred_check_branch
      %173 = sbr.rel (0) target = $region57
    $region56: #{vae_forward.1} parent=1 // pred_region
      _
    $region57: #{vae_forward.1} parent=1 // pred_fallthru
      _
    // Predicated region
    $region58: #{vae_forward.1} parent=1 // pred_check
      _
    $region59: #{vae_forward.1} parent=1 // pred_check_branch
      %175 = sbr.rel (0) target = $region61
    $region60: #{vae_forward.1} parent=1 // pred_region
      _
    $region61: #{vae_forward.1} parent=1 // pred_fallthru
      _
    // Predicated region
    $region62: #{vae_forward.1} parent=1 // pred_check
      _
    $region63: #{vae_forward.1} parent=1 // pred_check_branch
      %177 = sbr.rel (0) target = $region65
    $region64: #{vae_forward.1} parent=1 // pred_region
      _
    $region65: #{vae_forward.1} parent=1 // pred_fallthru
      _
    // Predicated region
    $region66: #{vae_forward.1} parent=1 // pred_check
      _
    $region67: #{vae_forward.1} parent=1 // pred_check_branch
      %179 = sbr.rel (0) target = $region69
    $region68: #{vae_forward.1} parent=1 // pred_region
      _
    $region69: #{vae_forward.1} parent=1 // pred_fallthru
      _
    // Predicated region
    $region70: #{vae_forward.1} parent=1 // pred_check
      _
    $region71: #{vae_forward.1} parent=1 // pred_check_branch
      %181 = sbr.rel (0) target = $region73
    $region72: #{vae_forward.1} parent=1 // pred_region
      _
    $region73: #{vae_forward.1} parent=1 // pred_fallthru
      _
    // Predicated region
    $region74: #{vae_forward.1} parent=1 // pred_check
      _
    $region75: #{vae_forward.1} parent=1 // pred_check_branch
      %183 = sbr.rel (0) target = $region77
    $region76: #{vae_forward.1} parent=1 // pred_region
      _
    $region77: #{vae_forward.1} parent=1 // pred_fallthru
      _
    // Predicated region
    $region78: #{vae_forward.1} parent=1 // pred_check
      _
    $region79: #{vae_forward.1} parent=1 // pred_check_branch
      %185 = sbr.rel (0) target = $region81
    $region80: #{vae_forward.1} parent=1 // pred_region
      _
    $region81: #{vae_forward.1} parent=1 // pred_fallthru
      _
    // Predicated region
    $region82: #{vae_forward.1} parent=1 // pred_check
      _
    $region83: #{vae_forward.1} parent=1 // pred_check_branch
      %187 = sbr.rel (0) target = $region85
    $region84: #{vae_forward.1} parent=1 // pred_region
      _
    $region85: #{vae_forward.1} parent=1 // pred_fallthru
      _
    // Predicated region
    $region86: #{vae_forward.1} parent=1 // pred_check
      _
    $region87: #{vae_forward.1} parent=1 // pred_check_branch
      %189 = sbr.rel (0) target = $region89
    $region88: #{vae_forward.1} parent=1 // pred_region
      _
    $region89: #{vae_forward.1} parent=1 // pred_fallthru
      _
    // Predicated region
    $region90: #{vae_forward.1} parent=1 // pred_check
      _
    $region91: #{vae_forward.1} parent=1 // pred_check_branch
      %191 = sbr.rel (0) target = $region93
    $region92: #{vae_forward.1} parent=1 // pred_region
      _
    $region93: #{vae_forward.1} parent=1 // pred_fallthru
      _
    // Predicated region
    $region94: #{vae_forward.1} parent=1 // pred_check
      _
    $region95: #{vae_forward.1} parent=1 // pred_check_branch
      %193 = sbr.rel (0) target = $region97
    $region96: #{vae_forward.1} parent=1 // pred_region
      _
    $region97: #{vae_forward.1} parent=1 // pred_fallthru
      _
    // Predicated region
    $region98: #{vae_forward.1} parent=1 // pred_check
      _
    $region99: #{vae_forward.1} parent=1 // pred_check_branch
      %195 = sbr.rel (0) target = $region101
    $region100: #{vae_forward.1} parent=1 // pred_region
      _
    $region101: #{vae_forward.1} parent=1 // pred_fallthru
      _
    // Predicated region
    $region102: #{vae_forward.1} parent=1 // pred_check
      _
    $region103: #{vae_forward.1} parent=1 // pred_check_branch
      %197 = sbr.rel (0) target = $region105
    $region104: #{vae_forward.1} parent=1 // pred_region
      _
    $region105: #{vae_forward.1} parent=1 // pred_fallthru
      _
    // Predicated region
    $region106: #{vae_forward.1} parent=1 // pred_check
      _
    $region107: #{vae_forward.1} parent=1 // pred_check_branch
      %199 = sbr.rel (0) target = $region109
    $region108: #{vae_forward.1} parent=1 // pred_region
      _
    $region109: #{vae_forward.1} parent=1 // pred_fallthru
      _
    // Predicated region
    $region110: #{vae_forward.1} parent=1 // pred_check
      _
    $region111: #{vae_forward.1} parent=1 // pred_check_branch
      %201 = sbr.rel (0) target = $region113
    $region112: #{vae_forward.1} parent=1 // pred_region
      _
    $region113: #{vae_forward.1} parent=1 // pred_fallthru
      _
    // Predicated region
    $region114: #{vae_forward.1} parent=1 // pred_check
      _
    $region115: #{vae_forward.1} parent=1 // pred_check_branch
      %203 = sbr.rel (0) target = $region117
    $region116: #{vae_forward.1} parent=1 // pred_region
      _
    $region117: #{vae_forward.1} parent=1 // pred_fallthru
      _
    // Predicated region
    $region118: #{vae_forward.1} parent=1 // pred_check
      _
    $region119: #{vae_forward.1} parent=1 // pred_check_branch
      %205 = sbr.rel (0) target = $region121
    $region120: #{vae_forward.1} parent=1 // pred_region
      _
    $region121: #{vae_forward.1} parent=1 // pred_fallthru
      _
    // Predicated region
    $region122: #{vae_forward.1} parent=1 // pred_check
      _
    $region123: #{vae_forward.1} parent=1 // pred_check_branch
      %207 = sbr.rel (0) target = $region125
    $region124: #{vae_forward.1} parent=1 // pred_region
      _
    $region125: #{vae_forward.1} parent=1 // pred_fallthru
      _
    // Predicated region
    $region126: #{vae_forward.1} parent=1 // pred_check
      _
    $region127: #{vae_forward.1} parent=1 // pred_check_branch
      %209 = sbr.rel (0) target = $region129
    $region128: #{vae_forward.1} parent=1 // pred_region
      _
    $region129: #{vae_forward.1} parent=1 // pred_fallthru
      _
    // Predicated region
    $region130: #{vae_forward.1} parent=1 // pred_check
      _
    $region131: #{vae_forward.1} parent=1 // pred_check_branch
      %211 = sbr.rel (0) target = $region133
    $region132: #{vae_forward.1} parent=1 // pred_region
      _
    $region133: #{vae_forward.1} parent=1 // pred_fallthru
      _
    // Predicated region
    $region134: #{vae_forward.1} parent=1 // pred_check
      _
    $region135: #{vae_forward.1} parent=1 // pred_check_branch
      %213 = sbr.rel (0) target = $region137
    $region136: #{vae_forward.1} parent=1 // pred_region
      _
    $region137: #{vae_forward.1} parent=1 // pred_fallthru
      _
    // Predicated region
    $region138: #{vae_forward.1} parent=1 // pred_check
      _
    $region139: #{vae_forward.1} parent=1 // pred_check_branch
      %215 = sbr.rel (0) target = $region141
    $region140: #{vae_forward.1} parent=1 // pred_region
      %s217 = ssub.s32 16, 16
      %218 = vsyncadd [#allocation3], %s217
      %s220 = sshll.u32 [#allocation2], 4
      %s221 = int_to_ptr.vmem [resolvable:$true] %s220
      %223 = dma.hbm_to_vmem [thread:$0]  %s69, 16, %s221, [#allocation3]
    $region141: #{vae_forward.1} parent=1 // pred_fallthru
      _
    // Predicated region
    $region142: #{vae_forward.1} parent=1 // pred_check
      _
    $region143: #{vae_forward.1} parent=1 // pred_check_branch
      %225 = sbr.rel (0) target = $region145
    $region144: #{vae_forward.1} parent=1 // pred_region
      %s227 = ssub.s32 16, 16
      %228 = vsyncadd [#allocation5], %s227
      %s230 = sshll.u32 [#allocation4], 4
      %s231 = int_to_ptr.vmem [resolvable:$true] %s230
      %233 = dma.hbm_to_vmem [thread:$0]  %s71, 16, %s231, [#allocation5]
    $region145: #{vae_forward.1} parent=1 // pred_fallthru
      _
    // Predicated region
    $region146: #{vae_forward.1} parent=1 // pred_check
      _
    $region147: #{vae_forward.1} parent=1 // pred_check_branch
      %235 = sbr.rel (0) target = $region149
    $region148: #{vae_forward.1} parent=1 // pred_region
      _
    $region149: #{vae_forward.1} parent=1 // pred_fallthru
      _
    // Predicated region
    $region150: #{vae_forward.1} parent=1 // pred_check
      _
    $region151: #{vae_forward.1} parent=1 // pred_check_branch
      %237 = sbr.rel (0) target = $region153
    $region152: #{vae_forward.1} parent=1 // pred_region
      %s239 = ssub.s32 16, 16
      %240 = vsyncadd [#allocation5], %s239
      %s242 = sshll.u32 [#allocation6], 4
      %s243 = int_to_ptr.vmem [resolvable:$true] %s242
      %245 = dma.hbm_to_vmem [thread:$0]  %s75, 16, %s243, [#allocation5]
    $region153: #{vae_forward.1} parent=1 // pred_fallthru
      _
    // Predicated region
    $region154: #{vae_forward.1} parent=1 // pred_check
      _
    $region155: #{vae_forward.1} parent=1 // pred_check_branch
      %247 = sbr.rel (0) target = $region157
    $region156: #{vae_forward.1} parent=1 // pred_region
      %s249 = ssub.s32 16, 16
      %250 = vsyncadd [#allocation8], %s249
      %s252 = sshll.u32 [#allocation7], 4
      %s253 = int_to_ptr.vmem [resolvable:$true] %s252
      %255 = dma.hbm_to_vmem [thread:$0]  %s77, 16, %s253, [#allocation8]
    $region157: #{vae_forward.1} parent=1 // pred_fallthru
      _
    // Predicated region
    $region158: #{vae_forward.1} parent=1 // pred_check
      _
    $region159: #{vae_forward.1} parent=1 // pred_check_branch
      %257 = sbr.rel (0) target = $region161
    $region160: #{vae_forward.1} parent=1 // pred_region
      %s259 = ssub.s32 16, 16
      %260 = vsyncadd [#allocation8], %s259
      %s262 = sshll.u32 [#allocation9], 4
      %s263 = int_to_ptr.vmem [resolvable:$true] %s262
      %265 = dma.hbm_to_vmem [thread:$0]  %s79, 16, %s263, [#allocation8]
    $region161: #{vae_forward.1} parent=1 // pred_fallthru
      _
    // Predicated region
    $region162: #{vae_forward.1} parent=1 // pred_check
      _
    $region163: #{vae_forward.1} parent=1 // pred_check_branch
      %267 = sbr.rel (0) target = $region165
    $region164: #{vae_forward.1} parent=1 // pred_region
      _
    $region165: #{vae_forward.1} parent=1 // pred_fallthru
      _
    // Predicated region
    $region166: #{vae_forward.1} parent=1 // pred_check
      _
    $region167: #{vae_forward.1} parent=1 // pred_check_branch
      %269 = sbr.rel (0) target = $region169
    $region168: #{vae_forward.1} parent=1 // pred_region
      %s271 = ssub.s32 16, 16
      %272 = vsyncadd [#allocation11], %s271
      %s274 = sshll.u32 [#allocation10], 4
      %s275 = int_to_ptr.vmem [resolvable:$true] %s274
      %277 = dma.hbm_to_vmem [thread:$0]  %s83, 16, %s275, [#allocation11]
    $region169: #{vae_forward.1} parent=1 // pred_fallthru
      _
    // Predicated region
    $region170: #{vae_forward.1} parent=1 // pred_check
      _
    $region171: #{vae_forward.1} parent=1 // pred_check_branch
      %279 = sbr.rel (0) target = $region173
    $region172: #{vae_forward.1} parent=1 // pred_region
      %s281 = ssub.s32 16, 16
      %282 = vsyncadd [#allocation11], %s281
      %s284 = sshll.u32 [#allocation12], 4
      %s285 = int_to_ptr.vmem [resolvable:$true] %s284
      %287 = dma.hbm_to_vmem [thread:$0]  %s85, 16, %s285, [#allocation11]
    $region173: #{vae_forward.1} parent=1 // pred_fallthru
      _
    // Predicated region
    $region174: #{vae_forward.1} parent=1 // pred_check
      _
    $region175: #{vae_forward.1} parent=1 // pred_check_branch
      %289 = sbr.rel (0) target = $region177
    $region176: #{vae_forward.1} parent=1 // pred_region
      %s291 = ssub.s32 16, 16
      %292 = vsyncadd [#allocation14], %s291
      %s294 = sshll.u32 [#allocation13], 4
      %s295 = int_to_ptr.vmem [resolvable:$true] %s294
      %297 = dma.hbm_to_vmem [thread:$0]  %s87, 16, %s295, [#allocation14]
    $region177: #{vae_forward.1} parent=1 // pred_fallthru
      _
    // Predicated region
    $region178: #{vae_forward.1} parent=1 // pred_check
      _
    $region179: #{vae_forward.1} parent=1 // pred_check_branch
      %299 = sbr.rel (0) target = $region181
    $region180: #{vae_forward.1} parent=1 // pred_region
      _
    $region181: #{vae_forward.1} parent=1 // pred_fallthru
      _
    // Predicated region
    $region182: #{vae_forward.1} parent=1 // pred_check
      _
    $region183: #{vae_forward.1} parent=1 // pred_check_branch
      %301 = sbr.rel (0) target = $region185
    $region184: #{vae_forward.1} parent=1 // pred_region
      %s303 = ssub.s32 16, 16
      %304 = vsyncadd [#allocation14], %s303
      %s306 = sshll.u32 [#allocation15], 4
      %s307 = int_to_ptr.vmem [resolvable:$true] %s306
      %309 = dma.hbm_to_vmem [thread:$0]  %s91, 16, %s307, [#allocation14]
    $region185: #{vae_forward.1} parent=1 // pred_fallthru
      _
    // Predicated region
    $region186: #{vae_forward.1} parent=1 // pred_check
      _
    $region187: #{vae_forward.1} parent=1 // pred_check_branch
      %311 = sbr.rel (0) target = $region189
    $region188: #{vae_forward.1} parent=1 // pred_region
      %s313 = ssub.s32 16, 16
      %314 = vsyncadd [#allocation17], %s313
      %s316 = sshll.u32 [#allocation16], 4
      %s317 = int_to_ptr.vmem [resolvable:$true] %s316
      %319 = dma.hbm_to_vmem [thread:$0]  %s93, 16, %s317, [#allocation17]
    $region189: #{vae_forward.1} parent=1 // pred_fallthru
      _
    // Predicated region
    $region190: #{vae_forward.1} parent=1 // pred_check
      _
    $region191: #{vae_forward.1} parent=1 // pred_check_branch
      %321 = sbr.rel (0) target = $region193
    $region192: #{vae_forward.1} parent=1 // pred_region
      %s323 = ssub.s32 16, 16
      %324 = vsyncadd [#allocation17], %s323
      %s326 = sshll.u32 [#allocation18], 4
      %s327 = int_to_ptr.vmem [resolvable:$true] %s326
      %329 = dma.hbm_to_vmem [thread:$0]  %s95, 16, %s327, [#allocation17]
    $region193: #{vae_forward.1} parent=1 // pred_fallthru
      _
    // Predicated region
    $region194: #{vae_forward.1} parent=1 // pred_check
      _
    $region195: #{vae_forward.1} parent=1 // pred_check_branch
      %331 = sbr.rel (0) target = $region197
    $region196: #{vae_forward.1} parent=1 // pred_region
      _
    $region197: #{vae_forward.1} parent=1 // pred_fallthru
      _
    // Predicated region
    $region198: #{vae_forward.1} parent=1 // pred_check
      _
    $region199: #{vae_forward.1} parent=1 // pred_check_branch
      %333 = sbr.rel (0) target = $region201
    $region200: #{vae_forward.1} parent=1 // pred_region
      %s335 = ssub.s32 16, 16
      %336 = vsyncadd [#allocation20], %s335
      %s338 = sshll.u32 [#allocation19], 4
      %s339 = int_to_ptr.vmem [resolvable:$true] %s338
      %341 = dma.hbm_to_vmem [thread:$0]  %s99, 16, %s339, [#allocation20]
    $region201: #{vae_forward.1} parent=1 // pred_fallthru
      _
    // Predicated region
    $region202: #{vae_forward.1} parent=1 // pred_check
      _
    $region203: #{vae_forward.1} parent=1 // pred_check_branch
      %343 = sbr.rel (0) target = $region205
    $region204: #{vae_forward.1} parent=1 // pred_region
      %s345 = ssub.s32 16, 16
      %346 = vsyncadd [#allocation20], %s345
      %s348 = sshll.u32 [#allocation21], 4
      %s349 = int_to_ptr.vmem [resolvable:$true] %s348
      %351 = dma.hbm_to_vmem [thread:$0]  %s101, 16, %s349, [#allocation20]
    $region205: #{vae_forward.1} parent=1 // pred_fallthru
      _
    // Predicated region
    $region206: #{vae_forward.1} parent=1 // pred_check
      _
    $region207: #{vae_forward.1} parent=1 // pred_check_branch
      %353 = sbr.rel (0) target = $region209
    $region208: #{vae_forward.1} parent=1 // pred_region
      %s355 = ssub.s32 16, 16
      %356 = vsyncadd [#allocation23], %s355
      %s358 = sshll.u32 [#allocation22], 4
      %s359 = int_to_ptr.vmem [resolvable:$true] %s358
      %361 = dma.hbm_to_vmem [thread:$0]  %s103, 16, %s359, [#allocation23]
    $region209: #{vae_forward.1} parent=1 // pred_fallthru
      _
    // Predicated region
    $region210: #{vae_forward.1} parent=1 // pred_check
      _
    $region211: #{vae_forward.1} parent=1 // pred_check_branch
      %363 = sbr.rel (0) target = $region213
    $region212: #{vae_forward.1} parent=1 // pred_region
      _
    $region213: #{vae_forward.1} parent=1 // pred_fallthru
      _
    // Predicated region
    $region214: #{vae_forward.1} parent=1 // pred_check
      _
    $region215: #{vae_forward.1} parent=1 // pred_check_branch
      %365 = sbr.rel (0) target = $region217
    $region216: #{vae_forward.1} parent=1 // pred_region
      %s367 = ssub.s32 16, 16
      %368 = vsyncadd [#allocation23], %s367
      %s370 = sshll.u32 [#allocation24], 4
      %s371 = int_to_ptr.vmem [resolvable:$true] %s370
      %373 = dma.hbm_to_vmem [thread:$0]  %s107, 16, %s371, [#allocation23]
    $region217: #{vae_forward.1} parent=1 // pred_fallthru
      _
    // Predicated region
    $region218: #{vae_forward.1} parent=1 // pred_check
      _
    $region219: #{vae_forward.1} parent=1 // pred_check_branch
      %375 = sbr.rel (0) target = $region221
    $region220: #{vae_forward.1} parent=1 // pred_region
      %s377 = ssub.s32 16, 16
      %378 = vsyncadd [#allocation26], %s377
      %s380 = sshll.u32 [#allocation25], 4
      %s381 = int_to_ptr.vmem [resolvable:$true] %s380
      %383 = dma.hbm_to_vmem [thread:$0]  %s109, 16, %s381, [#allocation26]
    $region221: #{vae_forward.1} parent=1 // pred_fallthru
      _
    // Predicated region
    $region222: #{vae_forward.1} parent=1 // pred_check
      _
    $region223: #{vae_forward.1} parent=1 // pred_check_branch
      %385 = sbr.rel (0) target = $region225
    $region224: #{vae_forward.1} parent=1 // pred_region
      %s387 = ssub.s32 16, 16
      %388 = vsyncadd [#allocation26], %s387
      %s390 = sshll.u32 [#allocation27], 4
      %s391 = int_to_ptr.vmem [resolvable:$true] %s390
      %393 = dma.hbm_to_vmem [thread:$0]  %s111, 16, %s391, [#allocation26]
    $region225: #{vae_forward.1} parent=1 // pred_fallthru
      _
    // Predicated region
    $region226: #{vae_forward.1} parent=1 // pred_check
      _
    $region227: #{vae_forward.1} parent=1 // pred_check_branch
      %395 = sbr.rel (0) target = $region229
    $region228: #{vae_forward.1} parent=1 // pred_region
      _
    $region229: #{vae_forward.1} parent=1 // pred_fallthru
      _
    // Predicated region
    $region230: #{vae_forward.1} parent=1 // pred_check
      _
    $region231: #{vae_forward.1} parent=1 // pred_check_branch
      %397 = sbr.rel (0) target = $region233
    $region232: #{vae_forward.1} parent=1 // pred_region
      %s399 = ssub.s32 16, 16
      %400 = vsyncadd [#allocation29], %s399
      %s402 = sshll.u32 [#allocation28], 4
      %s403 = int_to_ptr.vmem [resolvable:$true] %s402
      %405 = dma.hbm_to_vmem [thread:$0]  %s115, 16, %s403, [#allocation29]
    $region233: #{vae_forward.1} parent=1 // pred_fallthru
      _
    // Predicated region
    $region234: #{vae_forward.1} parent=1 // pred_check
      _
    $region235: #{vae_forward.1} parent=1 // pred_check_branch
      %407 = sbr.rel (0) target = $region237
    $region236: #{vae_forward.1} parent=1 // pred_region
      %s409 = ssub.s32 16, 16
      %410 = vsyncadd [#allocation29], %s409
      %s412 = sshll.u32 [#allocation30], 4
      %s413 = int_to_ptr.vmem [resolvable:$true] %s412
      %415 = dma.hbm_to_vmem [thread:$0]  %s117, 16, %s413, [#allocation29]
    $region237: #{vae_forward.1} parent=1 // pred_fallthru
      _
    // Predicated region
    $region238: #{vae_forward.1} parent=1 // pred_check
      _
    $region239: #{vae_forward.1} parent=1 // pred_check_branch
      %417 = sbr.rel (0) target = $region241
    $region240: #{vae_forward.1} parent=1 // pred_region
      %s419 = ssub.s32 16, 16
      %420 = vsyncadd [#allocation32], %s419
      %s422 = sshll.u32 [#allocation31], 4
      %s423 = int_to_ptr.vmem [resolvable:$true] %s422
      %425 = dma.hbm_to_vmem [thread:$0]  %s119, 16, %s423, [#allocation32]
    $region241: #{vae_forward.1} parent=1 // pred_fallthru
      _
    // Predicated region
    $region242: #{vae_forward.1} parent=1 // pred_check
      _
    $region243: #{vae_forward.1} parent=1 // pred_check_branch
      %427 = sbr.rel (0) target = $region245
    $region244: #{vae_forward.1} parent=1 // pred_region
      _
    $region245: #{vae_forward.1} parent=1 // pred_fallthru
      _
    // Predicated region
    $region246: #{vae_forward.1} parent=1 // pred_check
      _
    $region247: #{vae_forward.1} parent=1 // pred_check_branch
      %429 = sbr.rel (0) target = $region249
    $region248: #{vae_forward.1} parent=1 // pred_region
      %s431 = ssub.s32 16, 16
      %432 = vsyncadd [#allocation32], %s431
      %s434 = sshll.u32 [#allocation33], 4
      %s435 = int_to_ptr.vmem [resolvable:$true] %s434
      %437 = dma.hbm_to_vmem [thread:$0]  %s123, 16, %s435, [#allocation32]
    $region249: #{vae_forward.1} parent=1 // pred_fallthru
      _
    // Predicated region
    $region250: #{vae_forward.1} parent=1 // pred_check
      _
    $region251: #{vae_forward.1} parent=1 // pred_check_branch
      %439 = sbr.rel (0) target = $region253
    $region252: #{vae_forward.1} parent=1 // pred_region
      %440 = dma.done [#allocation3], 16
    $region253: #{vae_forward.1} parent=1 // pred_fallthru
      _
    // Predicated region
    $region254: #{vae_forward.1} parent=1 // pred_check
      _
    $region255: #{vae_forward.1} parent=1 // pred_check_branch
      %442 = sbr.rel (0) target = $region257
    $region256: #{vae_forward.1} parent=1 // pred_region
      %443 = dma.done [#allocation5], 16
    $region257: #{vae_forward.1} parent=1 // pred_fallthru
      _
    // Predicated region
    $region258: #{vae_forward.1} parent=1 // pred_check
      _
    $region259: #{vae_forward.1} parent=1 // pred_check_branch
      %445 = sbr.rel (0) target = $region261
    $region260: #{vae_forward.1} parent=1 // pred_region
      %446 = dma.done [#allocation5], 16
    $region261: #{vae_forward.1} parent=1 // pred_fallthru
      _
    // Predicated region
    $region262: #{vae_forward.1} parent=1 // pred_check
      _
    $region263: #{vae_forward.1} parent=1 // pred_check_branch
      %448 = sbr.rel (0) target = $region265
    $region264: #{vae_forward.1} parent=1 // pred_region
      %449 = dma.done [#allocation8], 16
    $region265: #{vae_forward.1} parent=1 // pred_fallthru
      _
    // Predicated region
    $region266: #{vae_forward.1} parent=1 // pred_check
      _
    $region267: #{vae_forward.1} parent=1 // pred_check_branch
      %451 = sbr.rel (0) target = $region269
    $region268: #{vae_forward.1} parent=1 // pred_region
      %452 = dma.done [#allocation8], 16
    $region269: #{vae_forward.1} parent=1 // pred_fallthru
      _
    // Predicated region
    $region270: #{vae_forward.1} parent=1 // pred_check
      _
    $region271: #{vae_forward.1} parent=1 // pred_check_branch
      %454 = sbr.rel (0) target = $region273
    $region272: #{vae_forward.1} parent=1 // pred_region
      %455 = dma.done [#allocation11], 16
    $region273: #{vae_forward.1} parent=1 // pred_fallthru
      _
    // Predicated region
    $region274: #{vae_forward.1} parent=1 // pred_check
      _
    $region275: #{vae_forward.1} parent=1 // pred_check_branch
      %457 = sbr.rel (0) target = $region277
    $region276: #{vae_forward.1} parent=1 // pred_region
      %458 = dma.done [#allocation11], 16
    $region277: #{vae_forward.1} parent=1 // pred_fallthru
      _
    // Predicated region
    $region278: #{vae_forward.1} parent=1 // pred_check
      _
    $region279: #{vae_forward.1} parent=1 // pred_check_branch
      %460 = sbr.rel (0) target = $region281
    $region280: #{vae_forward.1} parent=1 // pred_region
      %461 = dma.done [#allocation14], 16
    $region281: #{vae_forward.1} parent=1 // pred_fallthru
      _
    // Predicated region
    $region282: #{vae_forward.1} parent=1 // pred_check
      _
    $region283: #{vae_forward.1} parent=1 // pred_check_branch
      %463 = sbr.rel (0) target = $region285
    $region284: #{vae_forward.1} parent=1 // pred_region
      %464 = dma.done [#allocation14], 16
    $region285: #{vae_forward.1} parent=1 // pred_fallthru
      _
    // Predicated region
    $region286: #{vae_forward.1} parent=1 // pred_check
      _
    $region287: #{vae_forward.1} parent=1 // pred_check_branch
      %466 = sbr.rel (0) target = $region289
    $region288: #{vae_forward.1} parent=1 // pred_region
      %467 = dma.done [#allocation17], 16
    $region289: #{vae_forward.1} parent=1 // pred_fallthru
      _
    // Predicated region
    $region290: #{vae_forward.1} parent=1 // pred_check
      _
    $region291: #{vae_forward.1} parent=1 // pred_check_branch
      %469 = sbr.rel (0) target = $region293
    $region292: #{vae_forward.1} parent=1 // pred_region
      %470 = dma.done [#allocation17], 16
    $region293: #{vae_forward.1} parent=1 // pred_fallthru
      _
    // Predicated region
    $region294: #{vae_forward.1} parent=1 // pred_check
      _
    $region295: #{vae_forward.1} parent=1 // pred_check_branch
      %472 = sbr.rel (0) target = $region297
    $region296: #{vae_forward.1} parent=1 // pred_region
      %473 = dma.done [#allocation20], 16
    $region297: #{vae_forward.1} parent=1 // pred_fallthru
      _
    // Predicated region
    $region298: #{vae_forward.1} parent=1 // pred_check
      _
    $region299: #{vae_forward.1} parent=1 // pred_check_branch
      %475 = sbr.rel (0) target = $region301
    $region300: #{vae_forward.1} parent=1 // pred_region
      %476 = dma.done [#allocation20], 16
    $region301: #{vae_forward.1} parent=1 // pred_fallthru
      _
    // Predicated region
    $region302: #{vae_forward.1} parent=1 // pred_check
      _
    $region303: #{vae_forward.1} parent=1 // pred_check_branch
      %478 = sbr.rel (0) target = $region305
    $region304: #{vae_forward.1} parent=1 // pred_region
      %479 = dma.done [#allocation23], 16
    $region305: #{vae_forward.1} parent=1 // pred_fallthru
      _
    // Predicated region
    $region306: #{vae_forward.1} parent=1 // pred_check
      _
    $region307: #{vae_forward.1} parent=1 // pred_check_branch
      %481 = sbr.rel (0) target = $region309
    $region308: #{vae_forward.1} parent=1 // pred_region
      %482 = dma.done [#allocation23], 16
    $region309: #{vae_forward.1} parent=1 // pred_fallthru
      _
    // Predicated region
    $region310: #{vae_forward.1} parent=1 // pred_check
      _
    $region311: #{vae_forward.1} parent=1 // pred_check_branch
      %484 = sbr.rel (0) target = $region313
    $region312: #{vae_forward.1} parent=1 // pred_region
      %485 = dma.done [#allocation26], 16
    $region313: #{vae_forward.1} parent=1 // pred_fallthru
      _
    // Predicated region
    $region314: #{vae_forward.1} parent=1 // pred_check
      _
    $region315: #{vae_forward.1} parent=1 // pred_check_branch
      %487 = sbr.rel (0) target = $region317
    $region316: #{vae_forward.1} parent=1 // pred_region
      %488 = dma.done [#allocation26], 16
    $region317: #{vae_forward.1} parent=1 // pred_fallthru
      _
    // Predicated region
    $region318: #{vae_forward.1} parent=1 // pred_check
      _
    $region319: #{vae_forward.1} parent=1 // pred_check_branch
      %490 = sbr.rel (0) target = $region321
    $region320: #{vae_forward.1} parent=1 // pred_region
      %491 = dma.done [#allocation29], 16
    $region321: #{vae_forward.1} parent=1 // pred_fallthru
      _
    // Predicated region
    $region322: #{vae_forward.1} parent=1 // pred_check
      _
    $region323: #{vae_forward.1} parent=1 // pred_check_branch
      %493 = sbr.rel (0) target = $region325
    $region324: #{vae_forward.1} parent=1 // pred_region
      %494 = dma.done [#allocation29], 16
    $region325: #{vae_forward.1} parent=1 // pred_fallthru
      _
    // Predicated region
    $region326: #{vae_forward.1} parent=1 // pred_check
      _
    $region327: #{vae_forward.1} parent=1 // pred_check_branch
      %496 = sbr.rel (0) target = $region329
    $region328: #{vae_forward.1} parent=1 // pred_region
      %497 = dma.done [#allocation32], 16
    $region329: #{vae_forward.1} parent=1 // pred_fallthru
      _
    // Predicated region
    $region330: #{vae_forward.1} parent=1 // pred_check
      _
    $region331: #{vae_forward.1} parent=1 // pred_check_branch
      %499 = sbr.rel (0) target = $region333
    $region332: #{vae_forward.1} parent=1 // pred_region
      %500 = dma.done [#allocation32], 16
    $region333: #{vae_forward.1} parent=1 // pred_fallthru
      _
    %v502 = vld [vmem:[%s1] sm:$0xff]
    %v503 = vld [vmem:[%s1 + $0x8] sm:$0xff]
    %v504 = vld [vmem:[%s1 + $0x10] sm:$0xff]
    %v505 = vld [vmem:[%s1 + $0x18] sm:$0xff]
    %v506 = vld [vmem:[%s1 + $0x20] sm:$0xff]
    %v507 = vld [vmem:[%s1 + $0x28] sm:$0xff]
    %v508 = vld [vmem:[%s1 + $0x30] sm:$0xff]
    %v509 = vld [vmem:[%s1 + $0x38] sm:$0xff]
    %v510 = vld [vmem:[%s1 + $0x40] sm:$0xff]
    %v511 = vld [vmem:[%s1 + $0x48] sm:$0xff]
    %v512 = vld [vmem:[%s1 + $0x50] sm:$0xff]
    %v513 = vld [vmem:[%s1 + $0x58] sm:$0xff]
    %v514 = vld [vmem:[%s1 + $0x60] sm:$0xff]
    %v515 = vld [vmem:[%s1 + $0x68] sm:$0xff]
    %v516 = vld [vmem:[%s1 + $0x70] sm:$0xff]
    %v517 = vld [vmem:[%s1 + $0x78] sm:$0xff]
    %v518 = vld [vmem:[%s1 + $0x80] sm:$0xff]
    %v519 = vld [vmem:[%s1 + $0x88] sm:$0xff]
    %v520 = vld [vmem:[%s1 + $0x90] sm:$0xff]
    %v521 = vld [vmem:[%s1 + $0x98] sm:$0xff]
    %v522 = vld [vmem:[%s1 + $0xa0] sm:$0xff]
    %v523 = vld [vmem:[%s1 + $0xa8] sm:$0xff]
    %v524 = vld [vmem:[%s1 + $0xb0] sm:$0xff]
    %v525 = vld [vmem:[%s1 + $0xb8] sm:$0xff]
    %v526 = vld [vmem:[%s1 + $0xc0] sm:$0xff]
    %v527 = vld [vmem:[%s1 + $0xc8] sm:$0xff]
    %v528 = vld [vmem:[%s1 + $0xd0] sm:$0xff]
    %v529 = vld [vmem:[%s1 + $0xd8] sm:$0xff]
    %v530 = vld [vmem:[%s1 + $0xe0] sm:$0xff]
    %v531 = vld [vmem:[%s1 + $0xe8] sm:$0xff]
    %v532 = vld [vmem:[%s1 + $0xf0] sm:$0xff]
    %v533 = vld [vmem:[%s1 + $0xf8] sm:$0xff]
    %v534 = vld [vmem:[%s5] sm:$0xf]
    %v535 = vld [vmem:[%s5 + $0x4] sm:$0xf]
    %v536 = vld [vmem:[%s5 + $0x8] sm:$0xf]
    %v537 = vld [vmem:[%s5 + $0xc] sm:$0xf]
    %v538 = vld [vmem:[%s5 + $0x10] sm:$0xf]
    %v539 = vld [vmem:[%s5 + $0x14] sm:$0xf]
    %v540 = vld [vmem:[%s5 + $0x18] sm:$0xf]
    %v541 = vld [vmem:[%s5 + $0x1c] sm:$0xf]
    %v542 = vld [vmem:[%s5 + $0x20] sm:$0xf]
    %v543 = vld [vmem:[%s5 + $0x24] sm:$0xf]
    %v544 = vld [vmem:[%s5 + $0x28] sm:$0xf]
    %v545 = vld [vmem:[%s5 + $0x2c] sm:$0xf]
    %v546 = vld [vmem:[%s5 + $0x30] sm:$0xf]
    %v547 = vld [vmem:[%s5 + $0x34] sm:$0xf]
    %v548 = vld [vmem:[%s5 + $0x38] sm:$0xf]
    %v549 = vld [vmem:[%s5 + $0x3c] sm:$0xf]
    %v550 = vpack.c.bf16 %v503, %v502
    %v551 = vpack.c.bf16 %v505, %v504
    %v552 = vpack.c.bf16 %v507, %v506
    %v553 = vpack.c.bf16 %v509, %v508
    %v554 = vpack.c.bf16 %v511, %v510
    %v555 = vpack.c.bf16 %v513, %v512
    %v556 = vpack.c.bf16 %v515, %v514
    %v557 = vpack.c.bf16 %v517, %v516
    %v558 = vpack.c.bf16 %v519, %v518
    %v559 = vpack.c.bf16 %v521, %v520
    %v560 = vpack.c.bf16 %v523, %v522
    %v561 = vpack.c.bf16 %v525, %v524
    %v562 = vpack.c.bf16 %v527, %v526
    %v563 = vpack.c.bf16 %v529, %v528
    %v564 = vpack.c.bf16 %v531, %v530
    %v565 = vpack.c.bf16 %v533, %v532
    %v566 = vld [vmem:[%s7] sm:$0x1]
    %v568 = vlaneseq
    %v569 = vshrl.u32 %v568, 7
    %v570 = vsub.s32 0, %v569
    %v571 = vrot.slane %v566, %v570
    %v589 = vunpack.c.l.b16 %v534
    %v590 = vunpack.c.l.b16 %v535
    %v591 = vunpack.c.l.b16 %v536
    %v592 = vunpack.c.l.b16 %v537
    %v593 = vunpack.c.l.b16 %v538
    %v594 = vunpack.c.l.b16 %v539
    %v595 = vunpack.c.l.b16 %v540
    %v596 = vunpack.c.l.b16 %v541
    %v597 = vunpack.c.l.b16 %v542
    %v598 = vunpack.c.l.b16 %v543
    %v599 = vunpack.c.l.b16 %v544
    %v600 = vunpack.c.l.b16 %v545
    %v601 = vunpack.c.l.b16 %v546
    %v602 = vunpack.c.l.b16 %v547
    %v603 = vunpack.c.l.b16 %v548
    %v604 = vunpack.c.l.b16 %v549
    %v605 = vpack.c.b16 %v590, %v589
    %v606 = vpack.c.b16 %v592, %v591
    %v607 = vpack.c.b16 %v594, %v593
    %v608 = vpack.c.b16 %v596, %v595
    %v609 = vpack.c.b16 %v598, %v597
    %v610 = vpack.c.b16 %v600, %v599
    %v611 = vpack.c.b16 %v602, %v601
    %v612 = vpack.c.b16 %v604, %v603
    %621 = vmatprep.subr.bf16.mxu0 0
    %622 = vmatpush1.bf16.msra.mxu0 %v612
    %623 = vmatprep.subr.bf16.mxu0 0
    %624 = vmatpush1.bf16.msra.mxu0 %v611
    %625 = vmatprep.subr.bf16.mxu0 0
    %626 = vmatpush1.bf16.msra.mxu0 %v610
    %627 = vmatprep.subr.bf16.mxu0 0
    %628 = vmatpush1.bf16.msra.mxu0 %v609
    %629 = vmatprep.subr.bf16.mxu0 0
    %630 = vmatpush1.bf16.msra.mxu0 %v608
    %631 = vmatprep.subr.bf16.mxu0 0
    %632 = vmatpush1.bf16.msra.mxu0 %v607
    %633 = vmatprep.subr.bf16.mxu0 0
    %634 = vmatpush1.bf16.msra.mxu0 %v606
    %635 = vmatprep.subr.bf16.mxu0 0
    %636 = vmatpush1.bf16.msra.mxu0 %v605
    %637 = vmatprep.subr.bf16.mxu0 0
    %638 = vmatpush2.bf16.msra.mxu0 0
    %639 = vmatprep.subr.bf16.mxu0 0
    %640 = vmatpush2.bf16.msra.mxu0 0
    %641 = vmatprep.subr.bf16.mxu0 0
    %642 = vmatpush2.bf16.msra.mxu0 0
    %643 = vmatprep.subr.bf16.mxu0 0
    %644 = vmatpush2.bf16.msra.mxu0 0
    %645 = vmatprep.subr.bf16.mxu0 0
    %646 = vmatpush2.bf16.msra.mxu0 0
    %647 = vmatprep.subr.bf16.mxu0 0
    %648 = vmatpush2.bf16.msra.mxu0 0
    %649 = vmatprep.subr.bf16.mxu0 0
    %650 = vmatpush2.bf16.msra.mxu0 0
    %651 = vmatprep.subr.bf16.mxu0 0
    %652 = vmatpush2.bf16.msra.mxu0 0
    %653 = vmatprep.mubr.bf16.mxu0 0
    %654 = vmatmul.mubr.bf16.gmra.mxu0 %v550
    %v655 = vpop.f32.mrf.mxu0
    %v656 = vadd.f32 %v571, %v655
    %v657 = vpop.f32.mrf.mxu0
    %v658 = vpop.f32.mrf.mxu0
    %v659 = vadd.f32 %v571, %v658
    %v660 = vpop.f32.mrf.mxu0
    %661 = vmatprep.mubr.bf16.mxu0 0
    %662 = vmatmul.mubr.bf16.gmra.mxu0 %v551
    %v663 = vpop.f32.mrf.mxu0
    %v664 = vadd.f32 %v571, %v663
    %v665 = vpop.f32.mrf.mxu0
    %v666 = vpop.f32.mrf.mxu0
    %v667 = vadd.f32 %v571, %v666
    %v668 = vpop.f32.mrf.mxu0
    %669 = vmatprep.mubr.bf16.mxu0 0
    %670 = vmatmul.mubr.bf16.gmra.mxu0 %v552
    %v671 = vpop.f32.mrf.mxu0
    %v672 = vadd.f32 %v571, %v671
    %v673 = vpop.f32.mrf.mxu0
    %v674 = vpop.f32.mrf.mxu0
    %v675 = vadd.f32 %v571, %v674
    %v676 = vpop.f32.mrf.mxu0
    %677 = vmatprep.mubr.bf16.mxu0 0
    %678 = vmatmul.mubr.bf16.gmra.mxu0 %v553
    %v679 = vpop.f32.mrf.mxu0
    %v680 = vadd.f32 %v571, %v679
    %v681 = vpop.f32.mrf.mxu0
    %v682 = vpop.f32.mrf.mxu0
    %v683 = vadd.f32 %v571, %v682
    %v684 = vpop.f32.mrf.mxu0
    %685 = vmatprep.mubr.bf16.mxu0 0
    %686 = vmatmul.mubr.bf16.gmra.mxu0 %v554
    %v687 = vpop.f32.mrf.mxu0
    %v688 = vadd.f32 %v571, %v687
    %v689 = vpop.f32.mrf.mxu0
    %v690 = vpop.f32.mrf.mxu0
    %v691 = vadd.f32 %v571, %v690
    %v692 = vpop.f32.mrf.mxu0
    %693 = vmatprep.mubr.bf16.mxu0 0
    %694 = vmatmul.mubr.bf16.gmra.mxu0 %v555
    %v695 = vpop.f32.mrf.mxu0
    %v696 = vadd.f32 %v571, %v695
    %v697 = vpop.f32.mrf.mxu0
    %v698 = vpop.f32.mrf.mxu0
    %v699 = vadd.f32 %v571, %v698
    %v700 = vpop.f32.mrf.mxu0
    %701 = vmatprep.mubr.bf16.mxu0 0
    %702 = vmatmul.mubr.bf16.gmra.mxu0 %v556
    %v703 = vpop.f32.mrf.mxu0
    %v704 = vadd.f32 %v571, %v703
    %v705 = vpop.f32.mrf.mxu0
    %v706 = vpop.f32.mrf.mxu0
    %v707 = vadd.f32 %v571, %v706
    %v708 = vpop.f32.mrf.mxu0
    %709 = vmatprep.mubr.bf16.mxu0 0
    %710 = vmatmul.mubr.bf16.gmra.mxu0 %v557
    %v711 = vpop.f32.mrf.mxu0
    %v712 = vadd.f32 %v571, %v711
    %v713 = vpop.f32.mrf.mxu0
    %v714 = vpop.f32.mrf.mxu0
    %v715 = vadd.f32 %v571, %v714
    %v716 = vpop.f32.mrf.mxu0
    %717 = vmatprep.mubr.bf16.mxu0 0
    %718 = vmatmul.mubr.bf16.gmra.mxu0 %v558
    %v719 = vpop.f32.mrf.mxu0
    %v720 = vadd.f32 %v571, %v719
    %v721 = vpop.f32.mrf.mxu0
    %v722 = vpop.f32.mrf.mxu0
    %v723 = vadd.f32 %v571, %v722
    %v724 = vpop.f32.mrf.mxu0
    %725 = vmatprep.mubr.bf16.mxu0 0
    %726 = vmatmul.mubr.bf16.gmra.mxu0 %v559
    %v727 = vpop.f32.mrf.mxu0
    %v728 = vadd.f32 %v571, %v727
    %v729 = vpop.f32.mrf.mxu0
    %v730 = vpop.f32.mrf.mxu0
    %v731 = vadd.f32 %v571, %v730
    %v732 = vpop.f32.mrf.mxu0
    %733 = vmatprep.mubr.bf16.mxu0 0
    %734 = vmatmul.mubr.bf16.gmra.mxu0 %v560
    %v735 = vpop.f32.mrf.mxu0
    %v736 = vadd.f32 %v571, %v735
    %v737 = vpop.f32.mrf.mxu0
    %v738 = vpop.f32.mrf.mxu0
    %v739 = vadd.f32 %v571, %v738
    %v740 = vpop.f32.mrf.mxu0
    %741 = vmatprep.mubr.bf16.mxu0 0
    %742 = vmatmul.mubr.bf16.gmra.mxu0 %v561
    %v743 = vpop.f32.mrf.mxu0
    %v744 = vadd.f32 %v571, %v743
    %v745 = vpop.f32.mrf.mxu0
    %v746 = vpop.f32.mrf.mxu0
    %v747 = vadd.f32 %v571, %v746
    %v748 = vpop.f32.mrf.mxu0
    %749 = vmatprep.mubr.bf16.mxu0 0
    %750 = vmatmul.mubr.bf16.gmra.mxu0 %v562
    %v751 = vpop.f32.mrf.mxu0
    %v752 = vadd.f32 %v571, %v751
    %v753 = vpop.f32.mrf.mxu0
    %v754 = vpop.f32.mrf.mxu0
    %v755 = vadd.f32 %v571, %v754
    %v756 = vpop.f32.mrf.mxu0
    %757 = vmatprep.mubr.bf16.mxu0 0
    %758 = vmatmul.mubr.bf16.gmra.mxu0 %v563
    %v759 = vpop.f32.mrf.mxu0
    %v760 = vadd.f32 %v571, %v759
    %v761 = vpop.f32.mrf.mxu0
    %v762 = vpop.f32.mrf.mxu0
    %v763 = vadd.f32 %v571, %v762
    %v764 = vpop.f32.mrf.mxu0
    %765 = vmatprep.mubr.bf16.mxu0 0
    %766 = vmatmul.mubr.bf16.gmra.mxu0 %v564
    %v767 = vpop.f32.mrf.mxu0
    %v768 = vadd.f32 %v571, %v767
    %v769 = vpop.f32.mrf.mxu0
    %v770 = vpop.f32.mrf.mxu0
    %v771 = vadd.f32 %v571, %v770
    %v772 = vpop.f32.mrf.mxu0
    %773 = vmatprep.mubr.bf16.mxu0 0
    %774 = vmatmul.mubr.bf16.gmra.mxu0 %v565
    %v775 = vpop.f32.mrf.mxu0
    %v776 = vadd.f32 %v571, %v775
    %v777 = vpop.f32.mrf.mxu0
    %v778 = vpop.f32.mrf.mxu0
    %v779 = vadd.f32 %v571, %v778
    %v780 = vpop.f32.mrf.mxu0
    %781 = vdwg.mxu0
    %v782 = vld [vmem:[%s9] sm:$0x1]
    %v783 = vld [vmem:[%s11] sm:$0x1]
    %v784 = vadd.f32 %v656, %v659
    %v785 = vadd.f32 %v784, %v664
    %v786 = vadd.f32 %v785, %v667
    %v787 = vadd.f32 %v786, %v672
    %v788 = vadd.f32 %v787, %v675
    %v789 = vadd.f32 %v788, %v680
    %v790 = vadd.f32 %v789, %v683
    %v791 = vadd.f32 %v790, %v688
    %v792 = vadd.f32 %v791, %v691
    %v793 = vadd.f32 %v792, %v696
    %v794 = vadd.f32 %v793, %v699
    %v795 = vadd.f32 %v794, %v704
    %v796 = vadd.f32 %v795, %v707
    %v797 = vadd.f32 %v796, %v712
    %v798 = vadd.f32 %v797, %v715
    %v799 = vadd.f32 %v798, %v720
    %v800 = vadd.f32 %v799, %v723
    %v801 = vadd.f32 %v800, %v728
    %v802 = vadd.f32 %v801, %v731
    %v803 = vadd.f32 %v802, %v736
    %v804 = vadd.f32 %v803, %v739
    %v805 = vadd.f32 %v804, %v744
    %v806 = vadd.f32 %v805, %v747
    %v807 = vadd.f32 %v806, %v752
    %v808 = vadd.f32 %v807, %v755
    %v809 = vadd.f32 %v808, %v760
    %v810 = vadd.f32 %v809, %v763
    %v811 = vadd.f32 %v810, %v768
    %v812 = vadd.f32 %v811, %v771
    %v813 = vadd.f32 %v812, %v776
    %v814 = vadd.f32 %v813, %v779
    %v815 = vrot.slane %v814, 4
    %v816 = vadd.f32 %v814, %v815
    %v817 = vrot.slane %v816, 2
    %v818 = vadd.f32 %v816, %v817
    %v819 = vrot.slane %v818, 1
    %v820 = vadd.f32 %v818, %v819
    %v821 = vrcp.pop 256.0
    %v822 = vmul.f32 %v820, %v821
    %v823 = vsub.f32 %v656, %v822
    %v824 = vsub.f32 %v659, %v822
    %v825 = vsub.f32 %v664, %v822
    %v826 = vsub.f32 %v667, %v822
    %v827 = vsub.f32 %v672, %v822
    %v828 = vsub.f32 %v675, %v822
    %v829 = vsub.f32 %v680, %v822
    %v830 = vsub.f32 %v683, %v822
    %v831 = vsub.f32 %v688, %v822
    %v832 = vsub.f32 %v691, %v822
    %v833 = vsub.f32 %v696, %v822
    %v834 = vsub.f32 %v699, %v822
    %v835 = vsub.f32 %v704, %v822
    %v836 = vsub.f32 %v707, %v822
    %v837 = vsub.f32 %v712, %v822
    %v838 = vsub.f32 %v715, %v822
    %v839 = vsub.f32 %v720, %v822
    %v840 = vsub.f32 %v723, %v822
    %v841 = vsub.f32 %v728, %v822
    %v842 = vsub.f32 %v731, %v822
    %v843 = vsub.f32 %v736, %v822
    %v844 = vsub.f32 %v739, %v822
    %v845 = vsub.f32 %v744, %v822
    %v846 = vsub.f32 %v747, %v822
    %v847 = vsub.f32 %v752, %v822
    %v848 = vsub.f32 %v755, %v822
    %v849 = vsub.f32 %v760, %v822
    %v850 = vsub.f32 %v763, %v822
    %v851 = vsub.f32 %v768, %v822
    %v852 = vsub.f32 %v771, %v822
    %v853 = vsub.f32 %v776, %v822
    %v854 = vsub.f32 %v779, %v822
    %v855 = vmul.f32 %v823, %v823
    %v856 = vmul.f32 %v824, %v824
    %v857 = vmul.f32 %v825, %v825
    %v858 = vmul.f32 %v826, %v826
    %v859 = vmul.f32 %v827, %v827
    %v860 = vmul.f32 %v828, %v828
    %v861 = vmul.f32 %v829, %v829
    %v862 = vmul.f32 %v830, %v830
    %v863 = vmul.f32 %v831, %v831
    %v864 = vmul.f32 %v832, %v832
    %v865 = vmul.f32 %v833, %v833
    %v866 = vmul.f32 %v834, %v834
    %v867 = vmul.f32 %v835, %v835
    %v868 = vmul.f32 %v836, %v836
    %v869 = vmul.f32 %v837, %v837
    %v870 = vmul.f32 %v838, %v838
    %v871 = vmul.f32 %v839, %v839
    %v872 = vmul.f32 %v840, %v840
    %v873 = vmul.f32 %v841, %v841
    %v874 = vmul.f32 %v842, %v842
    %v875 = vmul.f32 %v843, %v843
    %v876 = vmul.f32 %v844, %v844
    %v877 = vmul.f32 %v845, %v845
    %v878 = vmul.f32 %v846, %v846
    %v879 = vmul.f32 %v847, %v847
    %v880 = vmul.f32 %v848, %v848
    %v881 = vmul.f32 %v849, %v849
    %v882 = vmul.f32 %v850, %v850
    %v883 = vmul.f32 %v851, %v851
    %v884 = vmul.f32 %v852, %v852
    %v885 = vmul.f32 %v853, %v853
    %v886 = vmul.f32 %v854, %v854
    %v887 = vadd.f32 %v855, %v856
    %v888 = vadd.f32 %v887, %v857
    %v889 = vadd.f32 %v888, %v858
    %v890 = vadd.f32 %v889, %v859
    %v891 = vadd.f32 %v890, %v860
    %v892 = vadd.f32 %v891, %v861
    %v893 = vadd.f32 %v892, %v862
    %v894 = vadd.f32 %v893, %v863
    %v895 = vadd.f32 %v894, %v864
    %v896 = vadd.f32 %v895, %v865
    %v897 = vadd.f32 %v896, %v866
    %v898 = vadd.f32 %v897, %v867
    %v899 = vadd.f32 %v898, %v868
    %v900 = vadd.f32 %v899, %v869
    %v901 = vadd.f32 %v900, %v870
    %v902 = vadd.f32 %v901, %v871
    %v903 = vadd.f32 %v902, %v872
    %v904 = vadd.f32 %v903, %v873
    %v905 = vadd.f32 %v904, %v874
    %v906 = vadd.f32 %v905, %v875
    %v907 = vadd.f32 %v906, %v876
    %v908 = vadd.f32 %v907, %v877
    %v909 = vadd.f32 %v908, %v878
    %v910 = vadd.f32 %v909, %v879
    %v911 = vadd.f32 %v910, %v880
    %v912 = vadd.f32 %v911, %v881
    %v913 = vadd.f32 %v912, %v882
    %v914 = vadd.f32 %v913, %v883
    %v915 = vadd.f32 %v914, %v884
    %v916 = vadd.f32 %v915, %v885
    %v917 = vadd.f32 %v916, %v886
    %v918 = vrot.slane %v917, 4
    %v919 = vadd.f32 %v917, %v918
    %v920 = vrot.slane %v919, 2
    %v921 = vadd.f32 %v919, %v920
    %v922 = vrot.slane %v921, 1
    %v923 = vadd.f32 %v921, %v922
    %v924 = vmul.f32 %v923, %v821
    %v925 = vadd.f32 %v924, 1e-05
    %v926 = vrsqrt.pop %v925
    %v927 = vmul.f32 %v823, %v926
    %v928 = vmul.f32 %v824, %v926
    %v929 = vmul.f32 %v825, %v926
    %v930 = vmul.f32 %v826, %v926
    %v931 = vmul.f32 %v827, %v926
    %v932 = vmul.f32 %v828, %v926
    %v933 = vmul.f32 %v829, %v926
    %v934 = vmul.f32 %v830, %v926
    %v935 = vmul.f32 %v831, %v926
    %v936 = vmul.f32 %v832, %v926
    %v937 = vmul.f32 %v833, %v926
    %v938 = vmul.f32 %v834, %v926
    %v939 = vmul.f32 %v835, %v926
    %v940 = vmul.f32 %v836, %v926
    %v941 = vmul.f32 %v837, %v926
    %v942 = vmul.f32 %v838, %v926
    %v943 = vmul.f32 %v839, %v926
    %v944 = vmul.f32 %v840, %v926
    %v945 = vmul.f32 %v841, %v926
    %v946 = vmul.f32 %v842, %v926
    %v947 = vmul.f32 %v843, %v926
    %v948 = vmul.f32 %v844, %v926
    %v949 = vmul.f32 %v845, %v926
    %v950 = vmul.f32 %v846, %v926
    %v951 = vmul.f32 %v847, %v926
    %v952 = vmul.f32 %v848, %v926
    %v953 = vmul.f32 %v849, %v926
    %v954 = vmul.f32 %v850, %v926
    %v955 = vmul.f32 %v851, %v926
    %v956 = vmul.f32 %v852, %v926
    %v957 = vmul.f32 %v853, %v926
    %v958 = vmul.f32 %v854, %v926
    %v960 = vlaneseq
    %v961 = vshrl.u32 %v960, 7
    %v962 = vsub.s32 0, %v961
    %v963 = vrot.slane %v782, %v962
    %v965 = vmul.f32 %v927, %v963
    %v966 = vmul.f32 %v928, %v963
    %v967 = vmul.f32 %v929, %v963
    %v968 = vmul.f32 %v930, %v963
    %v969 = vmul.f32 %v931, %v963
    %v970 = vmul.f32 %v932, %v963
    %v971 = vmul.f32 %v933, %v963
    %v972 = vmul.f32 %v934, %v963
    %v973 = vmul.f32 %v935, %v963
    %v974 = vmul.f32 %v936, %v963
    %v975 = vmul.f32 %v937, %v963
    %v976 = vmul.f32 %v938, %v963
    %v977 = vmul.f32 %v939, %v963
    %v978 = vmul.f32 %v940, %v963
    %v979 = vmul.f32 %v941, %v963
    %v980 = vmul.f32 %v942, %v963
    %v981 = vmul.f32 %v943, %v963
    %v982 = vmul.f32 %v944, %v963
    %v983 = vmul.f32 %v945, %v963
    %v984 = vmul.f32 %v946, %v963
    %v985 = vmul.f32 %v947, %v963
    %v986 = vmul.f32 %v948, %v963
    %v987 = vmul.f32 %v949, %v963
    %v988 = vmul.f32 %v950, %v963
    %v989 = vmul.f32 %v951, %v963
    %v990 = vmul.f32 %v952, %v963
    %v991 = vmul.f32 %v953, %v963
    %v992 = vmul.f32 %v954, %v963
    %v993 = vmul.f32 %v955, %v963
    %v994 = vmul.f32 %v956, %v963
    %v995 = vmul.f32 %v957, %v963
    %v996 = vmul.f32 %v958, %v963
    %v998 = vlaneseq
    %v999 = vshrl.u32 %v998, 7
    %v1000 = vsub.s32 0, %v999
    %v1001 = vrot.slane %v783, %v1000
    %v1003 = vadd.f32 %v965, %v1001
    %v1004 = vadd.f32 %v966, %v1001
    %v1005 = vadd.f32 %v967, %v1001
    %v1006 = vadd.f32 %v968, %v1001
    %v1007 = vadd.f32 %v969, %v1001
    %v1008 = vadd.f32 %v970, %v1001
    %v1009 = vadd.f32 %v971, %v1001
    %v1010 = vadd.f32 %v972, %v1001
    %v1011 = vadd.f32 %v973, %v1001
    %v1012 = vadd.f32 %v974, %v1001
    %v1013 = vadd.f32 %v975, %v1001
    %v1014 = vadd.f32 %v976, %v1001
    %v1015 = vadd.f32 %v977, %v1001
    %v1016 = vadd.f32 %v978, %v1001
    %v1017 = vadd.f32 %v979, %v1001
    %v1018 = vadd.f32 %v980, %v1001
    %v1019 = vadd.f32 %v981, %v1001
    %v1020 = vadd.f32 %v982, %v1001
    %v1021 = vadd.f32 %v983, %v1001
    %v1022 = vadd.f32 %v984, %v1001
    %v1023 = vadd.f32 %v985, %v1001
    %v1024 = vadd.f32 %v986, %v1001
    %v1025 = vadd.f32 %v987, %v1001
    %v1026 = vadd.f32 %v988, %v1001
    %v1027 = vadd.f32 %v989, %v1001
    %v1028 = vadd.f32 %v990, %v1001
    %v1029 = vadd.f32 %v991, %v1001
    %v1030 = vadd.f32 %v992, %v1001
    %v1031 = vadd.f32 %v993, %v1001
    %v1032 = vadd.f32 %v994, %v1001
    %v1033 = vadd.f32 %v995, %v1001
    %v1034 = vadd.f32 %v996, %v1001
    %v1035 = vmax.f32 %v1003, 0.0
    %v1036 = vmax.f32 %v1004, 0.0
    %v1037 = vmax.f32 %v1005, 0.0
    %v1038 = vmax.f32 %v1006, 0.0
    %v1039 = vmax.f32 %v1007, 0.0
    %v1040 = vmax.f32 %v1008, 0.0
    %v1041 = vmax.f32 %v1009, 0.0
    %v1042 = vmax.f32 %v1010, 0.0
    %v1043 = vmax.f32 %v1011, 0.0
    %v1044 = vmax.f32 %v1012, 0.0
    %v1045 = vmax.f32 %v1013, 0.0
    %v1046 = vmax.f32 %v1014, 0.0
    %v1047 = vmax.f32 %v1015, 0.0
    %v1048 = vmax.f32 %v1016, 0.0
    %v1049 = vmax.f32 %v1017, 0.0
    %v1050 = vmax.f32 %v1018, 0.0
    %v1051 = vmax.f32 %v1019, 0.0
    %v1052 = vmax.f32 %v1020, 0.0
    %v1053 = vmax.f32 %v1021, 0.0
    %v1054 = vmax.f32 %v1022, 0.0
    %v1055 = vmax.f32 %v1023, 0.0
    %v1056 = vmax.f32 %v1024, 0.0
    %v1057 = vmax.f32 %v1025, 0.0
    %v1058 = vmax.f32 %v1026, 0.0
    %v1059 = vmax.f32 %v1027, 0.0
    %v1060 = vmax.f32 %v1028, 0.0
    %v1061 = vmax.f32 %v1029, 0.0
    %v1062 = vmax.f32 %v1030, 0.0
    %v1063 = vmax.f32 %v1031, 0.0
    %v1064 = vmax.f32 %v1032, 0.0
    %v1065 = vmax.f32 %v1033, 0.0
    %v1066 = vmax.f32 %v1034, 0.0
    %v1067 = vld [vmem:[%s13] sm:$0xf]
    %v1068 = vld [vmem:[%s13 + $0x4] sm:$0xf]
    %v1069 = vld [vmem:[%s13 + $0x8] sm:$0xf]
    %v1070 = vld [vmem:[%s13 + $0xc] sm:$0xf]
    %v1071 = vld [vmem:[%s13 + $0x10] sm:$0xf]
    %v1072 = vld [vmem:[%s13 + $0x14] sm:$0xf]
    %v1073 = vld [vmem:[%s13 + $0x18] sm:$0xf]
    %v1074 = vld [vmem:[%s13 + $0x1c] sm:$0xf]
    %v1075 = vld [vmem:[%s13 + $0x20] sm:$0xf]
    %v1076 = vld [vmem:[%s13 + $0x24] sm:$0xf]
    %v1077 = vld [vmem:[%s13 + $0x28] sm:$0xf]
    %v1078 = vld [vmem:[%s13 + $0x2c] sm:$0xf]
    %v1079 = vld [vmem:[%s13 + $0x30] sm:$0xf]
    %v1080 = vld [vmem:[%s13 + $0x34] sm:$0xf]
    %v1081 = vld [vmem:[%s13 + $0x38] sm:$0xf]
    %v1082 = vld [vmem:[%s13 + $0x3c] sm:$0xf]
    %v1083 = vpack.c.bf16 %v1036, %v1035
    %v1084 = vpack.c.bf16 %v1038, %v1037
    %v1085 = vpack.c.bf16 %v1040, %v1039
    %v1086 = vpack.c.bf16 %v1042, %v1041
    %v1087 = vpack.c.bf16 %v1044, %v1043
    %v1088 = vpack.c.bf16 %v1046, %v1045
    %v1089 = vpack.c.bf16 %v1048, %v1047
    %v1090 = vpack.c.bf16 %v1050, %v1049
    %v1091 = vpack.c.bf16 %v1052, %v1051
    %v1092 = vpack.c.bf16 %v1054, %v1053
    %v1093 = vpack.c.bf16 %v1056, %v1055
    %v1094 = vpack.c.bf16 %v1058, %v1057
    %v1095 = vpack.c.bf16 %v1060, %v1059
    %v1096 = vpack.c.bf16 %v1062, %v1061
    %v1097 = vpack.c.bf16 %v1064, %v1063
    %v1098 = vpack.c.bf16 %v1066, %v1065
    %v1099 = vld [vmem:[%s15] sm:$0x1]
    %v1101 = vlaneseq
    %v1102 = vshrl.u32 %v1101, 7
    %v1103 = vsub.s32 0, %v1102
    %v1104 = vrot.slane %v1099, %v1103
    %v1122 = vunpack.c.l.b16 %v1067
    %v1123 = vunpack.c.l.b16 %v1068
    %v1124 = vunpack.c.l.b16 %v1069
    %v1125 = vunpack.c.l.b16 %v1070
    %v1126 = vunpack.c.l.b16 %v1071
    %v1127 = vunpack.c.l.b16 %v1072
    %v1128 = vunpack.c.l.b16 %v1073
    %v1129 = vunpack.c.l.b16 %v1074
    %v1130 = vunpack.c.l.b16 %v1075
    %v1131 = vunpack.c.l.b16 %v1076
    %v1132 = vunpack.c.l.b16 %v1077
    %v1133 = vunpack.c.l.b16 %v1078
    %v1134 = vunpack.c.l.b16 %v1079
    %v1135 = vunpack.c.l.b16 %v1080
    %v1136 = vunpack.c.l.b16 %v1081
    %v1137 = vunpack.c.l.b16 %v1082
    %v1138 = vpack.c.b16 %v1123, %v1122
    %v1139 = vpack.c.b16 %v1125, %v1124
    %v1140 = vpack.c.b16 %v1127, %v1126
    %v1141 = vpack.c.b16 %v1129, %v1128
    %v1142 = vpack.c.b16 %v1131, %v1130
    %v1143 = vpack.c.b16 %v1133, %v1132
    %v1144 = vpack.c.b16 %v1135, %v1134
    %v1145 = vpack.c.b16 %v1137, %v1136
    %1154 = vmatprep.subr.bf16.mxu0 0
    %1155 = vmatpush1.bf16.msra.mxu0 %v1145
    %1156 = vmatprep.subr.bf16.mxu0 0
    %1157 = vmatpush1.bf16.msra.mxu0 %v1144
    %1158 = vmatprep.subr.bf16.mxu0 0
    %1159 = vmatpush1.bf16.msra.mxu0 %v1143
    %1160 = vmatprep.subr.bf16.mxu0 0
    %1161 = vmatpush1.bf16.msra.mxu0 %v1142
    %1162 = vmatprep.subr.bf16.mxu0 0
    %1163 = vmatpush1.bf16.msra.mxu0 %v1141
    %1164 = vmatprep.subr.bf16.mxu0 0
    %1165 = vmatpush1.bf16.msra.mxu0 %v1140
    %1166 = vmatprep.subr.bf16.mxu0 0
    %1167 = vmatpush1.bf16.msra.mxu0 %v1139
    %1168 = vmatprep.subr.bf16.mxu0 0
    %1169 = vmatpush1.bf16.msra.mxu0 %v1138
    %1170 = vmatprep.subr.bf16.mxu0 0
    %1171 = vmatpush2.bf16.msra.mxu0 0
    %1172 = vmatprep.subr.bf16.mxu0 0
    %1173 = vmatpush2.bf16.msra.mxu0 0
    %1174 = vmatprep.subr.bf16.mxu0 0
    %1175 = vmatpush2.bf16.msra.mxu0 0
    %1176 = vmatprep.subr.bf16.mxu0 0
    %1177 = vmatpush2.bf16.msra.mxu0 0
    %1178 = vmatprep.subr.bf16.mxu0 0
    %1179 = vmatpush2.bf16.msra.mxu0 0
    %1180 = vmatprep.subr.bf16.mxu0 0
    %1181 = vmatpush2.bf16.msra.mxu0 0
    %1182 = vmatprep.subr.bf16.mxu0 0
    %1183 = vmatpush2.bf16.msra.mxu0 0
    %1184 = vmatprep.subr.bf16.mxu0 0
    %1185 = vmatpush2.bf16.msra.mxu0 0
    %1186 = vmatprep.mubr.bf16.mxu0 0
    %1187 = vmatmul.mubr.bf16.gmra.mxu0 %v1083
    %v1188 = vpop.f32.mrf.mxu0
    %v1189 = vadd.f32 %v1104, %v1188
    %v1190 = vpop.f32.mrf.mxu0
    %v1191 = vpop.f32.mrf.mxu0
    %v1192 = vadd.f32 %v1104, %v1191
    %v1193 = vpop.f32.mrf.mxu0
    %1194 = vmatprep.mubr.bf16.mxu0 0
    %1195 = vmatmul.mubr.bf16.gmra.mxu0 %v1084
    %v1196 = vpop.f32.mrf.mxu0
    %v1197 = vadd.f32 %v1104, %v1196
    %v1198 = vpop.f32.mrf.mxu0
    %v1199 = vpop.f32.mrf.mxu0
    %v1200 = vadd.f32 %v1104, %v1199
    %v1201 = vpop.f32.mrf.mxu0
    %1202 = vmatprep.mubr.bf16.mxu0 0
    %1203 = vmatmul.mubr.bf16.gmra.mxu0 %v1085
    %v1204 = vpop.f32.mrf.mxu0
    %v1205 = vadd.f32 %v1104, %v1204
    %v1206 = vpop.f32.mrf.mxu0
    %v1207 = vpop.f32.mrf.mxu0
    %v1208 = vadd.f32 %v1104, %v1207
    %v1209 = vpop.f32.mrf.mxu0
    %1210 = vmatprep.mubr.bf16.mxu0 0
    %1211 = vmatmul.mubr.bf16.gmra.mxu0 %v1086
    %v1212 = vpop.f32.mrf.mxu0
    %v1213 = vadd.f32 %v1104, %v1212
    %v1214 = vpop.f32.mrf.mxu0
    %v1215 = vpop.f32.mrf.mxu0
    %v1216 = vadd.f32 %v1104, %v1215
    %v1217 = vpop.f32.mrf.mxu0
    %1218 = vmatprep.mubr.bf16.mxu0 0
    %1219 = vmatmul.mubr.bf16.gmra.mxu0 %v1087
    %v1220 = vpop.f32.mrf.mxu0
    %v1221 = vadd.f32 %v1104, %v1220
    %v1222 = vpop.f32.mrf.mxu0
    %v1223 = vpop.f32.mrf.mxu0
    %v1224 = vadd.f32 %v1104, %v1223
    %v1225 = vpop.f32.mrf.mxu0
    %1226 = vmatprep.mubr.bf16.mxu0 0
    %1227 = vmatmul.mubr.bf16.gmra.mxu0 %v1088
    %v1228 = vpop.f32.mrf.mxu0
    %v1229 = vadd.f32 %v1104, %v1228
    %v1230 = vpop.f32.mrf.mxu0
    %v1231 = vpop.f32.mrf.mxu0
    %v1232 = vadd.f32 %v1104, %v1231
    %v1233 = vpop.f32.mrf.mxu0
    %1234 = vmatprep.mubr.bf16.mxu0 0
    %1235 = vmatmul.mubr.bf16.gmra.mxu0 %v1089
    %v1236 = vpop.f32.mrf.mxu0
    %v1237 = vadd.f32 %v1104, %v1236
    %v1238 = vpop.f32.mrf.mxu0
    %v1239 = vpop.f32.mrf.mxu0
    %v1240 = vadd.f32 %v1104, %v1239
    %v1241 = vpop.f32.mrf.mxu0
    %1242 = vmatprep.mubr.bf16.mxu0 0
    %1243 = vmatmul.mubr.bf16.gmra.mxu0 %v1090
    %v1244 = vpop.f32.mrf.mxu0
    %v1245 = vadd.f32 %v1104, %v1244
    %v1246 = vpop.f32.mrf.mxu0
    %v1247 = vpop.f32.mrf.mxu0
    %v1248 = vadd.f32 %v1104, %v1247
    %v1249 = vpop.f32.mrf.mxu0
    %1250 = vmatprep.mubr.bf16.mxu0 0
    %1251 = vmatmul.mubr.bf16.gmra.mxu0 %v1091
    %v1252 = vpop.f32.mrf.mxu0
    %v1253 = vadd.f32 %v1104, %v1252
    %v1254 = vpop.f32.mrf.mxu0
    %v1255 = vpop.f32.mrf.mxu0
    %v1256 = vadd.f32 %v1104, %v1255
    %v1257 = vpop.f32.mrf.mxu0
    %1258 = vmatprep.mubr.bf16.mxu0 0
    %1259 = vmatmul.mubr.bf16.gmra.mxu0 %v1092
    %v1260 = vpop.f32.mrf.mxu0
    %v1261 = vadd.f32 %v1104, %v1260
    %v1262 = vpop.f32.mrf.mxu0
    %v1263 = vpop.f32.mrf.mxu0
    %v1264 = vadd.f32 %v1104, %v1263
    %v1265 = vpop.f32.mrf.mxu0
    %1266 = vmatprep.mubr.bf16.mxu0 0
    %1267 = vmatmul.mubr.bf16.gmra.mxu0 %v1093
    %v1268 = vpop.f32.mrf.mxu0
    %v1269 = vadd.f32 %v1104, %v1268
    %v1270 = vpop.f32.mrf.mxu0
    %v1271 = vpop.f32.mrf.mxu0
    %v1272 = vadd.f32 %v1104, %v1271
    %v1273 = vpop.f32.mrf.mxu0
    %1274 = vmatprep.mubr.bf16.mxu0 0
    %1275 = vmatmul.mubr.bf16.gmra.mxu0 %v1094
    %v1276 = vpop.f32.mrf.mxu0
    %v1277 = vadd.f32 %v1104, %v1276
    %v1278 = vpop.f32.mrf.mxu0
    %v1279 = vpop.f32.mrf.mxu0
    %v1280 = vadd.f32 %v1104, %v1279
    %v1281 = vpop.f32.mrf.mxu0
    %1282 = vmatprep.mubr.bf16.mxu0 0
    %1283 = vmatmul.mubr.bf16.gmra.mxu0 %v1095
    %v1284 = vpop.f32.mrf.mxu0
    %v1285 = vadd.f32 %v1104, %v1284
    %v1286 = vpop.f32.mrf.mxu0
    %v1287 = vpop.f32.mrf.mxu0
    %v1288 = vadd.f32 %v1104, %v1287
    %v1289 = vpop.f32.mrf.mxu0
    %1290 = vmatprep.mubr.bf16.mxu0 0
    %1291 = vmatmul.mubr.bf16.gmra.mxu0 %v1096
    %v1292 = vpop.f32.mrf.mxu0
    %v1293 = vadd.f32 %v1104, %v1292
    %v1294 = vpop.f32.mrf.mxu0
    %v1295 = vpop.f32.mrf.mxu0
    %v1296 = vadd.f32 %v1104, %v1295
    %v1297 = vpop.f32.mrf.mxu0
    %1298 = vmatprep.mubr.bf16.mxu0 0
    %1299 = vmatmul.mubr.bf16.gmra.mxu0 %v1097
    %v1300 = vpop.f32.mrf.mxu0
    %v1301 = vadd.f32 %v1104, %v1300
    %v1302 = vpop.f32.mrf.mxu0
    %v1303 = vpop.f32.mrf.mxu0
    %v1304 = vadd.f32 %v1104, %v1303
    %v1305 = vpop.f32.mrf.mxu0
    %1306 = vmatprep.mubr.bf16.mxu0 0
    %1307 = vmatmul.mubr.bf16.gmra.mxu0 %v1098
    %v1308 = vpop.f32.mrf.mxu0
    %v1309 = vadd.f32 %v1104, %v1308
    %v1310 = vpop.f32.mrf.mxu0
    %v1311 = vpop.f32.mrf.mxu0
    %v1312 = vadd.f32 %v1104, %v1311
    %v1313 = vpop.f32.mrf.mxu0
    %1314 = vdwg.mxu0
    %v1315 = vld [vmem:[%s17] sm:$0x1]
    %v1316 = vld [vmem:[%s19] sm:$0x1]
    %v1317 = vadd.f32 %v1189, %v1192
    %v1318 = vadd.f32 %v1317, %v1197
    %v1319 = vadd.f32 %v1318, %v1200
    %v1320 = vadd.f32 %v1319, %v1205
    %v1321 = vadd.f32 %v1320, %v1208
    %v1322 = vadd.f32 %v1321, %v1213
    %v1323 = vadd.f32 %v1322, %v1216
    %v1324 = vadd.f32 %v1323, %v1221
    %v1325 = vadd.f32 %v1324, %v1224
    %v1326 = vadd.f32 %v1325, %v1229
    %v1327 = vadd.f32 %v1326, %v1232
    %v1328 = vadd.f32 %v1327, %v1237
    %v1329 = vadd.f32 %v1328, %v1240
    %v1330 = vadd.f32 %v1329, %v1245
    %v1331 = vadd.f32 %v1330, %v1248
    %v1332 = vadd.f32 %v1331, %v1253
    %v1333 = vadd.f32 %v1332, %v1256
    %v1334 = vadd.f32 %v1333, %v1261
    %v1335 = vadd.f32 %v1334, %v1264
    %v1336 = vadd.f32 %v1335, %v1269
    %v1337 = vadd.f32 %v1336, %v1272
    %v1338 = vadd.f32 %v1337, %v1277
    %v1339 = vadd.f32 %v1338, %v1280
    %v1340 = vadd.f32 %v1339, %v1285
    %v1341 = vadd.f32 %v1340, %v1288
    %v1342 = vadd.f32 %v1341, %v1293
    %v1343 = vadd.f32 %v1342, %v1296
    %v1344 = vadd.f32 %v1343, %v1301
    %v1345 = vadd.f32 %v1344, %v1304
    %v1346 = vadd.f32 %v1345, %v1309
    %v1347 = vadd.f32 %v1346, %v1312
    %v1348 = vrot.slane %v1347, 4
    %v1349 = vadd.f32 %v1347, %v1348
    %v1350 = vrot.slane %v1349, 2
    %v1351 = vadd.f32 %v1349, %v1350
    %v1352 = vrot.slane %v1351, 1
    %v1353 = vadd.f32 %v1351, %v1352
    %v1354 = vmul.f32 %v1353, %v821
    %v1355 = vsub.f32 %v1189, %v1354
    %v1356 = vsub.f32 %v1192, %v1354
    %v1357 = vsub.f32 %v1197, %v1354
    %v1358 = vsub.f32 %v1200, %v1354
    %v1359 = vsub.f32 %v1205, %v1354
    %v1360 = vsub.f32 %v1208, %v1354
    %v1361 = vsub.f32 %v1213, %v1354
    %v1362 = vsub.f32 %v1216, %v1354
    %v1363 = vsub.f32 %v1221, %v1354
    %v1364 = vsub.f32 %v1224, %v1354
    %v1365 = vsub.f32 %v1229, %v1354
    %v1366 = vsub.f32 %v1232, %v1354
    %v1367 = vsub.f32 %v1237, %v1354
    %v1368 = vsub.f32 %v1240, %v1354
    %v1369 = vsub.f32 %v1245, %v1354
    %v1370 = vsub.f32 %v1248, %v1354
    %v1371 = vsub.f32 %v1253, %v1354
    %v1372 = vsub.f32 %v1256, %v1354
    %v1373 = vsub.f32 %v1261, %v1354
    %v1374 = vsub.f32 %v1264, %v1354
    %v1375 = vsub.f32 %v1269, %v1354
    %v1376 = vsub.f32 %v1272, %v1354
    %v1377 = vsub.f32 %v1277, %v1354
    %v1378 = vsub.f32 %v1280, %v1354
    %v1379 = vsub.f32 %v1285, %v1354
    %v1380 = vsub.f32 %v1288, %v1354
    %v1381 = vsub.f32 %v1293, %v1354
    %v1382 = vsub.f32 %v1296, %v1354
    %v1383 = vsub.f32 %v1301, %v1354
    %v1384 = vsub.f32 %v1304, %v1354
    %v1385 = vsub.f32 %v1309, %v1354
    %v1386 = vsub.f32 %v1312, %v1354
    %v1387 = vmul.f32 %v1355, %v1355
    %v1388 = vmul.f32 %v1356, %v1356
    %v1389 = vmul.f32 %v1357, %v1357
    %v1390 = vmul.f32 %v1358, %v1358
    %v1391 = vmul.f32 %v1359, %v1359
    %v1392 = vmul.f32 %v1360, %v1360
    %v1393 = vmul.f32 %v1361, %v1361
    %v1394 = vmul.f32 %v1362, %v1362
    %v1395 = vmul.f32 %v1363, %v1363
    %v1396 = vmul.f32 %v1364, %v1364
    %v1397 = vmul.f32 %v1365, %v1365
    %v1398 = vmul.f32 %v1366, %v1366
    %v1399 = vmul.f32 %v1367, %v1367
    %v1400 = vmul.f32 %v1368, %v1368
    %v1401 = vmul.f32 %v1369, %v1369
    %v1402 = vmul.f32 %v1370, %v1370
    %v1403 = vmul.f32 %v1371, %v1371
    %v1404 = vmul.f32 %v1372, %v1372
    %v1405 = vmul.f32 %v1373, %v1373
    %v1406 = vmul.f32 %v1374, %v1374
    %v1407 = vmul.f32 %v1375, %v1375
    %v1408 = vmul.f32 %v1376, %v1376
    %v1409 = vmul.f32 %v1377, %v1377
    %v1410 = vmul.f32 %v1378, %v1378
    %v1411 = vmul.f32 %v1379, %v1379
    %v1412 = vmul.f32 %v1380, %v1380
    %v1413 = vmul.f32 %v1381, %v1381
    %v1414 = vmul.f32 %v1382, %v1382
    %v1415 = vmul.f32 %v1383, %v1383
    %v1416 = vmul.f32 %v1384, %v1384
    %v1417 = vmul.f32 %v1385, %v1385
    %v1418 = vmul.f32 %v1386, %v1386
    %v1419 = vadd.f32 %v1387, %v1388
    %v1420 = vadd.f32 %v1419, %v1389
    %v1421 = vadd.f32 %v1420, %v1390
    %v1422 = vadd.f32 %v1421, %v1391
    %v1423 = vadd.f32 %v1422, %v1392
    %v1424 = vadd.f32 %v1423, %v1393
    %v1425 = vadd.f32 %v1424, %v1394
    %v1426 = vadd.f32 %v1425, %v1395
    %v1427 = vadd.f32 %v1426, %v1396
    %v1428 = vadd.f32 %v1427, %v1397
    %v1429 = vadd.f32 %v1428, %v1398
    %v1430 = vadd.f32 %v1429, %v1399
    %v1431 = vadd.f32 %v1430, %v1400
    %v1432 = vadd.f32 %v1431, %v1401
    %v1433 = vadd.f32 %v1432, %v1402
    %v1434 = vadd.f32 %v1433, %v1403
    %v1435 = vadd.f32 %v1434, %v1404
    %v1436 = vadd.f32 %v1435, %v1405
    %v1437 = vadd.f32 %v1436, %v1406
    %v1438 = vadd.f32 %v1437, %v1407
    %v1439 = vadd.f32 %v1438, %v1408
    %v1440 = vadd.f32 %v1439, %v1409
    %v1441 = vadd.f32 %v1440, %v1410
    %v1442 = vadd.f32 %v1441, %v1411
    %v1443 = vadd.f32 %v1442, %v1412
    %v1444 = vadd.f32 %v1443, %v1413
    %v1445 = vadd.f32 %v1444, %v1414
    %v1446 = vadd.f32 %v1445, %v1415
    %v1447 = vadd.f32 %v1446, %v1416
    %v1448 = vadd.f32 %v1447, %v1417
    %v1449 = vadd.f32 %v1448, %v1418
    %v1450 = vrot.slane %v1449, 4
    %v1451 = vadd.f32 %v1449, %v1450
    %v1452 = vrot.slane %v1451, 2
    %v1453 = vadd.f32 %v1451, %v1452
    %v1454 = vrot.slane %v1453, 1
    %v1455 = vadd.f32 %v1453, %v1454
    %v1456 = vmul.f32 %v1455, %v821
    %v1457 = vadd.f32 %v1456, 1e-05
    %v1458 = vrsqrt.pop %v1457
    %v1459 = vmul.f32 %v1355, %v1458
    %v1460 = vmul.f32 %v1356, %v1458
    %v1461 = vmul.f32 %v1357, %v1458
    %v1462 = vmul.f32 %v1358, %v1458
    %v1463 = vmul.f32 %v1359, %v1458
    %v1464 = vmul.f32 %v1360, %v1458
    %v1465 = vmul.f32 %v1361, %v1458
    %v1466 = vmul.f32 %v1362, %v1458
    %v1467 = vmul.f32 %v1363, %v1458
    %v1468 = vmul.f32 %v1364, %v1458
    %v1469 = vmul.f32 %v1365, %v1458
    %v1470 = vmul.f32 %v1366, %v1458
    %v1471 = vmul.f32 %v1367, %v1458
    %v1472 = vmul.f32 %v1368, %v1458
    %v1473 = vmul.f32 %v1369, %v1458
    %v1474 = vmul.f32 %v1370, %v1458
    %v1475 = vmul.f32 %v1371, %v1458
    %v1476 = vmul.f32 %v1372, %v1458
    %v1477 = vmul.f32 %v1373, %v1458
    %v1478 = vmul.f32 %v1374, %v1458
    %v1479 = vmul.f32 %v1375, %v1458
    %v1480 = vmul.f32 %v1376, %v1458
    %v1481 = vmul.f32 %v1377, %v1458
    %v1482 = vmul.f32 %v1378, %v1458
    %v1483 = vmul.f32 %v1379, %v1458
    %v1484 = vmul.f32 %v1380, %v1458
    %v1485 = vmul.f32 %v1381, %v1458
    %v1486 = vmul.f32 %v1382, %v1458
    %v1487 = vmul.f32 %v1383, %v1458
    %v1488 = vmul.f32 %v1384, %v1458
    %v1489 = vmul.f32 %v1385, %v1458
    %v1490 = vmul.f32 %v1386, %v1458
    %v1492 = vlaneseq
    %v1493 = vshrl.u32 %v1492, 7
    %v1494 = vsub.s32 0, %v1493
    %v1495 = vrot.slane %v1315, %v1494
    %v1497 = vmul.f32 %v1459, %v1495
    %v1498 = vmul.f32 %v1460, %v1495
    %v1499 = vmul.f32 %v1461, %v1495
    %v1500 = vmul.f32 %v1462, %v1495
    %v1501 = vmul.f32 %v1463, %v1495
    %v1502 = vmul.f32 %v1464, %v1495
    %v1503 = vmul.f32 %v1465, %v1495
    %v1504 = vmul.f32 %v1466, %v1495
    %v1505 = vmul.f32 %v1467, %v1495
    %v1506 = vmul.f32 %v1468, %v1495
    %v1507 = vmul.f32 %v1469, %v1495
    %v1508 = vmul.f32 %v1470, %v1495
    %v1509 = vmul.f32 %v1471, %v1495
    %v1510 = vmul.f32 %v1472, %v1495
    %v1511 = vmul.f32 %v1473, %v1495
    %v1512 = vmul.f32 %v1474, %v1495
    %v1513 = vmul.f32 %v1475, %v1495
    %v1514 = vmul.f32 %v1476, %v1495
    %v1515 = vmul.f32 %v1477, %v1495
    %v1516 = vmul.f32 %v1478, %v1495
    %v1517 = vmul.f32 %v1479, %v1495
    %v1518 = vmul.f32 %v1480, %v1495
    %v1519 = vmul.f32 %v1481, %v1495
    %v1520 = vmul.f32 %v1482, %v1495
    %v1521 = vmul.f32 %v1483, %v1495
    %v1522 = vmul.f32 %v1484, %v1495
    %v1523 = vmul.f32 %v1485, %v1495
    %v1524 = vmul.f32 %v1486, %v1495
    %v1525 = vmul.f32 %v1487, %v1495
    %v1526 = vmul.f32 %v1488, %v1495
    %v1527 = vmul.f32 %v1489, %v1495
    %v1528 = vmul.f32 %v1490, %v1495
    %v1530 = vlaneseq
    %v1531 = vshrl.u32 %v1530, 7
    %v1532 = vsub.s32 0, %v1531
    %v1533 = vrot.slane %v1316, %v1532
    %v1535 = vadd.f32 %v1497, %v1533
    %v1536 = vadd.f32 %v1498, %v1533
    %v1537 = vadd.f32 %v1499, %v1533
    %v1538 = vadd.f32 %v1500, %v1533
    %v1539 = vadd.f32 %v1501, %v1533
    %v1540 = vadd.f32 %v1502, %v1533
    %v1541 = vadd.f32 %v1503, %v1533
    %v1542 = vadd.f32 %v1504, %v1533
    %v1543 = vadd.f32 %v1505, %v1533
    %v1544 = vadd.f32 %v1506, %v1533
    %v1545 = vadd.f32 %v1507, %v1533
    %v1546 = vadd.f32 %v1508, %v1533
    %v1547 = vadd.f32 %v1509, %v1533
    %v1548 = vadd.f32 %v1510, %v1533
    %v1549 = vadd.f32 %v1511, %v1533
    %v1550 = vadd.f32 %v1512, %v1533
    %v1551 = vadd.f32 %v1513, %v1533
    %v1552 = vadd.f32 %v1514, %v1533
    %v1553 = vadd.f32 %v1515, %v1533
    %v1554 = vadd.f32 %v1516, %v1533
    %v1555 = vadd.f32 %v1517, %v1533
    %v1556 = vadd.f32 %v1518, %v1533
    %v1557 = vadd.f32 %v1519, %v1533
    %v1558 = vadd.f32 %v1520, %v1533
    %v1559 = vadd.f32 %v1521, %v1533
    %v1560 = vadd.f32 %v1522, %v1533
    %v1561 = vadd.f32 %v1523, %v1533
    %v1562 = vadd.f32 %v1524, %v1533
    %v1563 = vadd.f32 %v1525, %v1533
    %v1564 = vadd.f32 %v1526, %v1533
    %v1565 = vadd.f32 %v1527, %v1533
    %v1566 = vadd.f32 %v1528, %v1533
    %v1567 = vmax.f32 %v1535, 0.0
    %v1568 = vmax.f32 %v1536, 0.0
    %v1569 = vmax.f32 %v1537, 0.0
    %v1570 = vmax.f32 %v1538, 0.0
    %v1571 = vmax.f32 %v1539, 0.0
    %v1572 = vmax.f32 %v1540, 0.0
    %v1573 = vmax.f32 %v1541, 0.0
    %v1574 = vmax.f32 %v1542, 0.0
    %v1575 = vmax.f32 %v1543, 0.0
    %v1576 = vmax.f32 %v1544, 0.0
    %v1577 = vmax.f32 %v1545, 0.0
    %v1578 = vmax.f32 %v1546, 0.0
    %v1579 = vmax.f32 %v1547, 0.0
    %v1580 = vmax.f32 %v1548, 0.0
    %v1581 = vmax.f32 %v1549, 0.0
    %v1582 = vmax.f32 %v1550, 0.0
    %v1583 = vmax.f32 %v1551, 0.0
    %v1584 = vmax.f32 %v1552, 0.0
    %v1585 = vmax.f32 %v1553, 0.0
    %v1586 = vmax.f32 %v1554, 0.0
    %v1587 = vmax.f32 %v1555, 0.0
    %v1588 = vmax.f32 %v1556, 0.0
    %v1589 = vmax.f32 %v1557, 0.0
    %v1590 = vmax.f32 %v1558, 0.0
    %v1591 = vmax.f32 %v1559, 0.0
    %v1592 = vmax.f32 %v1560, 0.0
    %v1593 = vmax.f32 %v1561, 0.0
    %v1594 = vmax.f32 %v1562, 0.0
    %v1595 = vmax.f32 %v1563, 0.0
    %v1596 = vmax.f32 %v1564, 0.0
    %v1597 = vmax.f32 %v1565, 0.0
    %v1598 = vmax.f32 %v1566, 0.0
    %v1599 = vld [vmem:[%s21] sm:$0xf]
    %v1600 = vld [vmem:[%s21 + $0x4] sm:$0xf]
    %v1601 = vld [vmem:[%s21 + $0x8] sm:$0xf]
    %v1602 = vld [vmem:[%s21 + $0xc] sm:$0xf]
    %v1603 = vld [vmem:[%s21 + $0x10] sm:$0xf]
    %v1604 = vld [vmem:[%s21 + $0x14] sm:$0xf]
    %v1605 = vld [vmem:[%s21 + $0x18] sm:$0xf]
    %v1606 = vld [vmem:[%s21 + $0x1c] sm:$0xf]
    %v1607 = vld [vmem:[%s21 + $0x20] sm:$0xf]
    %v1608 = vld [vmem:[%s21 + $0x24] sm:$0xf]
    %v1609 = vld [vmem:[%s21 + $0x28] sm:$0xf]
    %v1610 = vld [vmem:[%s21 + $0x2c] sm:$0xf]
    %v1611 = vld [vmem:[%s21 + $0x30] sm:$0xf]
    %v1612 = vld [vmem:[%s21 + $0x34] sm:$0xf]
    %v1613 = vld [vmem:[%s21 + $0x38] sm:$0xf]
    %v1614 = vld [vmem:[%s21 + $0x3c] sm:$0xf]
    %v1615 = vpack.c.bf16 %v1568, %v1567
    %v1616 = vpack.c.bf16 %v1570, %v1569
    %v1617 = vpack.c.bf16 %v1572, %v1571
    %v1618 = vpack.c.bf16 %v1574, %v1573
    %v1619 = vpack.c.bf16 %v1576, %v1575
    %v1620 = vpack.c.bf16 %v1578, %v1577
    %v1621 = vpack.c.bf16 %v1580, %v1579
    %v1622 = vpack.c.bf16 %v1582, %v1581
    %v1623 = vpack.c.bf16 %v1584, %v1583
    %v1624 = vpack.c.bf16 %v1586, %v1585
    %v1625 = vpack.c.bf16 %v1588, %v1587
    %v1626 = vpack.c.bf16 %v1590, %v1589
    %v1627 = vpack.c.bf16 %v1592, %v1591
    %v1628 = vpack.c.bf16 %v1594, %v1593
    %v1629 = vpack.c.bf16 %v1596, %v1595
    %v1630 = vpack.c.bf16 %v1598, %v1597
    %v1631 = vld [vmem:[%s23] sm:$0x1]
    %v1633 = vlaneseq
    %v1634 = vshrl.u32 %v1633, 7
    %v1635 = vsub.s32 0, %v1634
    %v1636 = vrot.slane %v1631, %v1635
    %v1654 = vunpack.c.l.b16 %v1599
    %v1655 = vunpack.c.l.b16 %v1600
    %v1656 = vunpack.c.l.b16 %v1601
    %v1657 = vunpack.c.l.b16 %v1602
    %v1658 = vunpack.c.l.b16 %v1603
    %v1659 = vunpack.c.l.b16 %v1604
    %v1660 = vunpack.c.l.b16 %v1605
    %v1661 = vunpack.c.l.b16 %v1606
    %v1662 = vunpack.c.l.b16 %v1607
    %v1663 = vunpack.c.l.b16 %v1608
    %v1664 = vunpack.c.l.b16 %v1609
    %v1665 = vunpack.c.l.b16 %v1610
    %v1666 = vunpack.c.l.b16 %v1611
    %v1667 = vunpack.c.l.b16 %v1612
    %v1668 = vunpack.c.l.b16 %v1613
    %v1669 = vunpack.c.l.b16 %v1614
    %v1670 = vpack.c.b16 %v1655, %v1654
    %v1671 = vpack.c.b16 %v1657, %v1656
    %v1672 = vpack.c.b16 %v1659, %v1658
    %v1673 = vpack.c.b16 %v1661, %v1660
    %v1674 = vpack.c.b16 %v1663, %v1662
    %v1675 = vpack.c.b16 %v1665, %v1664
    %v1676 = vpack.c.b16 %v1667, %v1666
    %v1677 = vpack.c.b16 %v1669, %v1668
    %1686 = vmatprep.subr.bf16.mxu0 0
    %1687 = vmatpush1.bf16.msra.mxu0 %v1677
    %1688 = vmatprep.subr.bf16.mxu0 0
    %1689 = vmatpush1.bf16.msra.mxu0 %v1676
    %1690 = vmatprep.subr.bf16.mxu0 0
    %1691 = vmatpush1.bf16.msra.mxu0 %v1675
    %1692 = vmatprep.subr.bf16.mxu0 0
    %1693 = vmatpush1.bf16.msra.mxu0 %v1674
    %1694 = vmatprep.subr.bf16.mxu0 0
    %1695 = vmatpush1.bf16.msra.mxu0 %v1673
    %1696 = vmatprep.subr.bf16.mxu0 0
    %1697 = vmatpush1.bf16.msra.mxu0 %v1672
    %1698 = vmatprep.subr.bf16.mxu0 0
    %1699 = vmatpush1.bf16.msra.mxu0 %v1671
    %1700 = vmatprep.subr.bf16.mxu0 0
    %1701 = vmatpush1.bf16.msra.mxu0 %v1670
    %1702 = vmatprep.subr.bf16.mxu0 0
    %1703 = vmatpush2.bf16.msra.mxu0 0
    %1704 = vmatprep.subr.bf16.mxu0 0
    %1705 = vmatpush2.bf16.msra.mxu0 0
    %1706 = vmatprep.subr.bf16.mxu0 0
    %1707 = vmatpush2.bf16.msra.mxu0 0
    %1708 = vmatprep.subr.bf16.mxu0 0
    %1709 = vmatpush2.bf16.msra.mxu0 0
    %1710 = vmatprep.subr.bf16.mxu0 0
    %1711 = vmatpush2.bf16.msra.mxu0 0
    %1712 = vmatprep.subr.bf16.mxu0 0
    %1713 = vmatpush2.bf16.msra.mxu0 0
    %1714 = vmatprep.subr.bf16.mxu0 0
    %1715 = vmatpush2.bf16.msra.mxu0 0
    %1716 = vmatprep.subr.bf16.mxu0 0
    %1717 = vmatpush2.bf16.msra.mxu0 0
    %1718 = vmatprep.mubr.bf16.mxu0 0
    %1719 = vmatmul.mubr.bf16.gmra.mxu0 %v1615
    %v1720 = vpop.f32.mrf.mxu0
    %v1721 = vadd.f32 %v1636, %v1720
    %v1722 = vpop.f32.mrf.mxu0
    %v1723 = vpop.f32.mrf.mxu0
    %v1724 = vadd.f32 %v1636, %v1723
    %v1725 = vpop.f32.mrf.mxu0
    %1726 = vmatprep.mubr.bf16.mxu0 0
    %1727 = vmatmul.mubr.bf16.gmra.mxu0 %v1616
    %v1728 = vpop.f32.mrf.mxu0
    %v1729 = vadd.f32 %v1636, %v1728
    %v1730 = vpop.f32.mrf.mxu0
    %v1731 = vpop.f32.mrf.mxu0
    %v1732 = vadd.f32 %v1636, %v1731
    %v1733 = vpop.f32.mrf.mxu0
    %1734 = vmatprep.mubr.bf16.mxu0 0
    %1735 = vmatmul.mubr.bf16.gmra.mxu0 %v1617
    %v1736 = vpop.f32.mrf.mxu0
    %v1737 = vadd.f32 %v1636, %v1736
    %v1738 = vpop.f32.mrf.mxu0
    %v1739 = vpop.f32.mrf.mxu0
    %v1740 = vadd.f32 %v1636, %v1739
    %v1741 = vpop.f32.mrf.mxu0
    %1742 = vmatprep.mubr.bf16.mxu0 0
    %1743 = vmatmul.mubr.bf16.gmra.mxu0 %v1618
    %v1744 = vpop.f32.mrf.mxu0
    %v1745 = vadd.f32 %v1636, %v1744
    %v1746 = vpop.f32.mrf.mxu0
    %v1747 = vpop.f32.mrf.mxu0
    %v1748 = vadd.f32 %v1636, %v1747
    %v1749 = vpop.f32.mrf.mxu0
    %1750 = vmatprep.mubr.bf16.mxu0 0
    %1751 = vmatmul.mubr.bf16.gmra.mxu0 %v1619
    %v1752 = vpop.f32.mrf.mxu0
    %v1753 = vadd.f32 %v1636, %v1752
    %v1754 = vpop.f32.mrf.mxu0
    %v1755 = vpop.f32.mrf.mxu0
    %v1756 = vadd.f32 %v1636, %v1755
    %v1757 = vpop.f32.mrf.mxu0
    %1758 = vmatprep.mubr.bf16.mxu0 0
    %1759 = vmatmul.mubr.bf16.gmra.mxu0 %v1620
    %v1760 = vpop.f32.mrf.mxu0
    %v1761 = vadd.f32 %v1636, %v1760
    %v1762 = vpop.f32.mrf.mxu0
    %v1763 = vpop.f32.mrf.mxu0
    %v1764 = vadd.f32 %v1636, %v1763
    %v1765 = vpop.f32.mrf.mxu0
    %1766 = vmatprep.mubr.bf16.mxu0 0
    %1767 = vmatmul.mubr.bf16.gmra.mxu0 %v1621
    %v1768 = vpop.f32.mrf.mxu0
    %v1769 = vadd.f32 %v1636, %v1768
    %v1770 = vpop.f32.mrf.mxu0
    %v1771 = vpop.f32.mrf.mxu0
    %v1772 = vadd.f32 %v1636, %v1771
    %v1773 = vpop.f32.mrf.mxu0
    %1774 = vmatprep.mubr.bf16.mxu0 0
    %1775 = vmatmul.mubr.bf16.gmra.mxu0 %v1622
    %v1776 = vpop.f32.mrf.mxu0
    %v1777 = vadd.f32 %v1636, %v1776
    %v1778 = vpop.f32.mrf.mxu0
    %v1779 = vpop.f32.mrf.mxu0
    %v1780 = vadd.f32 %v1636, %v1779
    %v1781 = vpop.f32.mrf.mxu0
    %1782 = vmatprep.mubr.bf16.mxu0 0
    %1783 = vmatmul.mubr.bf16.gmra.mxu0 %v1623
    %v1784 = vpop.f32.mrf.mxu0
    %v1785 = vadd.f32 %v1636, %v1784
    %v1786 = vpop.f32.mrf.mxu0
    %v1787 = vpop.f32.mrf.mxu0
    %v1788 = vadd.f32 %v1636, %v1787
    %v1789 = vpop.f32.mrf.mxu0
    %1790 = vmatprep.mubr.bf16.mxu0 0
    %1791 = vmatmul.mubr.bf16.gmra.mxu0 %v1624
    %v1792 = vpop.f32.mrf.mxu0
    %v1793 = vadd.f32 %v1636, %v1792
    %v1794 = vpop.f32.mrf.mxu0
    %v1795 = vpop.f32.mrf.mxu0
    %v1796 = vadd.f32 %v1636, %v1795
    %v1797 = vpop.f32.mrf.mxu0
    %1798 = vmatprep.mubr.bf16.mxu0 0
    %1799 = vmatmul.mubr.bf16.gmra.mxu0 %v1625
    %v1800 = vpop.f32.mrf.mxu0
    %v1801 = vadd.f32 %v1636, %v1800
    %v1802 = vpop.f32.mrf.mxu0
    %v1803 = vpop.f32.mrf.mxu0
    %v1804 = vadd.f32 %v1636, %v1803
    %v1805 = vpop.f32.mrf.mxu0
    %1806 = vmatprep.mubr.bf16.mxu0 0
    %1807 = vmatmul.mubr.bf16.gmra.mxu0 %v1626
    %v1808 = vpop.f32.mrf.mxu0
    %v1809 = vadd.f32 %v1636, %v1808
    %v1810 = vpop.f32.mrf.mxu0
    %v1811 = vpop.f32.mrf.mxu0
    %v1812 = vadd.f32 %v1636, %v1811
    %v1813 = vpop.f32.mrf.mxu0
    %1814 = vmatprep.mubr.bf16.mxu0 0
    %1815 = vmatmul.mubr.bf16.gmra.mxu0 %v1627
    %v1816 = vpop.f32.mrf.mxu0
    %v1817 = vadd.f32 %v1636, %v1816
    %v1818 = vpop.f32.mrf.mxu0
    %v1819 = vpop.f32.mrf.mxu0
    %v1820 = vadd.f32 %v1636, %v1819
    %v1821 = vpop.f32.mrf.mxu0
    %1822 = vmatprep.mubr.bf16.mxu0 0
    %1823 = vmatmul.mubr.bf16.gmra.mxu0 %v1628
    %v1824 = vpop.f32.mrf.mxu0
    %v1825 = vadd.f32 %v1636, %v1824
    %v1826 = vpop.f32.mrf.mxu0
    %v1827 = vpop.f32.mrf.mxu0
    %v1828 = vadd.f32 %v1636, %v1827
    %v1829 = vpop.f32.mrf.mxu0
    %1830 = vmatprep.mubr.bf16.mxu0 0
    %1831 = vmatmul.mubr.bf16.gmra.mxu0 %v1629
    %v1832 = vpop.f32.mrf.mxu0
    %v1833 = vadd.f32 %v1636, %v1832
    %v1834 = vpop.f32.mrf.mxu0
    %v1835 = vpop.f32.mrf.mxu0
    %v1836 = vadd.f32 %v1636, %v1835
    %v1837 = vpop.f32.mrf.mxu0
    %1838 = vmatprep.mubr.bf16.mxu0 0
    %1839 = vmatmul.mubr.bf16.gmra.mxu0 %v1630
    %v1840 = vpop.f32.mrf.mxu0
    %v1841 = vadd.f32 %v1636, %v1840
    %v1842 = vpop.f32.mrf.mxu0
    %v1843 = vpop.f32.mrf.mxu0
    %v1844 = vadd.f32 %v1636, %v1843
    %v1845 = vpop.f32.mrf.mxu0
    %1846 = vdwg.mxu0
    %v1847 = vld [vmem:[%s25] sm:$0x1]
    %v1848 = vld [vmem:[%s27] sm:$0x1]
    %v1849 = vadd.f32 %v1721, %v1724
    %v1850 = vadd.f32 %v1849, %v1729
    %v1851 = vadd.f32 %v1850, %v1732
    %v1852 = vadd.f32 %v1851, %v1737
    %v1853 = vadd.f32 %v1852, %v1740
    %v1854 = vadd.f32 %v1853, %v1745
    %v1855 = vadd.f32 %v1854, %v1748
    %v1856 = vadd.f32 %v1855, %v1753
    %v1857 = vadd.f32 %v1856, %v1756
    %v1858 = vadd.f32 %v1857, %v1761
    %v1859 = vadd.f32 %v1858, %v1764
    %v1860 = vadd.f32 %v1859, %v1769
    %v1861 = vadd.f32 %v1860, %v1772
    %v1862 = vadd.f32 %v1861, %v1777
    %v1863 = vadd.f32 %v1862, %v1780
    %v1864 = vadd.f32 %v1863, %v1785
    %v1865 = vadd.f32 %v1864, %v1788
    %v1866 = vadd.f32 %v1865, %v1793
    %v1867 = vadd.f32 %v1866, %v1796
    %v1868 = vadd.f32 %v1867, %v1801
    %v1869 = vadd.f32 %v1868, %v1804
    %v1870 = vadd.f32 %v1869, %v1809
    %v1871 = vadd.f32 %v1870, %v1812
    %v1872 = vadd.f32 %v1871, %v1817
    %v1873 = vadd.f32 %v1872, %v1820
    %v1874 = vadd.f32 %v1873, %v1825
    %v1875 = vadd.f32 %v1874, %v1828
    %v1876 = vadd.f32 %v1875, %v1833
    %v1877 = vadd.f32 %v1876, %v1836
    %v1878 = vadd.f32 %v1877, %v1841
    %v1879 = vadd.f32 %v1878, %v1844
    %v1880 = vrot.slane %v1879, 4
    %v1881 = vadd.f32 %v1879, %v1880
    %v1882 = vrot.slane %v1881, 2
    %v1883 = vadd.f32 %v1881, %v1882
    %v1884 = vrot.slane %v1883, 1
    %v1885 = vadd.f32 %v1883, %v1884
    %v1886 = vmul.f32 %v1885, %v821
    %v1887 = vsub.f32 %v1721, %v1886
    %v1888 = vsub.f32 %v1724, %v1886
    %v1889 = vsub.f32 %v1729, %v1886
    %v1890 = vsub.f32 %v1732, %v1886
    %v1891 = vsub.f32 %v1737, %v1886
    %v1892 = vsub.f32 %v1740, %v1886
    %v1893 = vsub.f32 %v1745, %v1886
    %v1894 = vsub.f32 %v1748, %v1886
    %v1895 = vsub.f32 %v1753, %v1886
    %v1896 = vsub.f32 %v1756, %v1886
    %v1897 = vsub.f32 %v1761, %v1886
    %v1898 = vsub.f32 %v1764, %v1886
    %v1899 = vsub.f32 %v1769, %v1886
    %v1900 = vsub.f32 %v1772, %v1886
    %v1901 = vsub.f32 %v1777, %v1886
    %v1902 = vsub.f32 %v1780, %v1886
    %v1903 = vsub.f32 %v1785, %v1886
    %v1904 = vsub.f32 %v1788, %v1886
    %v1905 = vsub.f32 %v1793, %v1886
    %v1906 = vsub.f32 %v1796, %v1886
    %v1907 = vsub.f32 %v1801, %v1886
    %v1908 = vsub.f32 %v1804, %v1886
    %v1909 = vsub.f32 %v1809, %v1886
    %v1910 = vsub.f32 %v1812, %v1886
    %v1911 = vsub.f32 %v1817, %v1886
    %v1912 = vsub.f32 %v1820, %v1886
    %v1913 = vsub.f32 %v1825, %v1886
    %v1914 = vsub.f32 %v1828, %v1886
    %v1915 = vsub.f32 %v1833, %v1886
    %v1916 = vsub.f32 %v1836, %v1886
    %v1917 = vsub.f32 %v1841, %v1886
    %v1918 = vsub.f32 %v1844, %v1886
    %v1919 = vmul.f32 %v1887, %v1887
    %v1920 = vmul.f32 %v1888, %v1888
    %v1921 = vmul.f32 %v1889, %v1889
    %v1922 = vmul.f32 %v1890, %v1890
    %v1923 = vmul.f32 %v1891, %v1891
    %v1924 = vmul.f32 %v1892, %v1892
    %v1925 = vmul.f32 %v1893, %v1893
    %v1926 = vmul.f32 %v1894, %v1894
    %v1927 = vmul.f32 %v1895, %v1895
    %v1928 = vmul.f32 %v1896, %v1896
    %v1929 = vmul.f32 %v1897, %v1897
    %v1930 = vmul.f32 %v1898, %v1898
    %v1931 = vmul.f32 %v1899, %v1899
    %v1932 = vmul.f32 %v1900, %v1900
    %v1933 = vmul.f32 %v1901, %v1901
    %v1934 = vmul.f32 %v1902, %v1902
    %v1935 = vmul.f32 %v1903, %v1903
    %v1936 = vmul.f32 %v1904, %v1904
    %v1937 = vmul.f32 %v1905, %v1905
    %v1938 = vmul.f32 %v1906, %v1906
    %v1939 = vmul.f32 %v1907, %v1907
    %v1940 = vmul.f32 %v1908, %v1908
    %v1941 = vmul.f32 %v1909, %v1909
    %v1942 = vmul.f32 %v1910, %v1910
    %v1943 = vmul.f32 %v1911, %v1911
    %v1944 = vmul.f32 %v1912, %v1912
    %v1945 = vmul.f32 %v1913, %v1913
    %v1946 = vmul.f32 %v1914, %v1914
    %v1947 = vmul.f32 %v1915, %v1915
    %v1948 = vmul.f32 %v1916, %v1916
    %v1949 = vmul.f32 %v1917, %v1917
    %v1950 = vmul.f32 %v1918, %v1918
    %v1951 = vadd.f32 %v1919, %v1920
    %v1952 = vadd.f32 %v1951, %v1921
    %v1953 = vadd.f32 %v1952, %v1922
    %v1954 = vadd.f32 %v1953, %v1923
    %v1955 = vadd.f32 %v1954, %v1924
    %v1956 = vadd.f32 %v1955, %v1925
    %v1957 = vadd.f32 %v1956, %v1926
    %v1958 = vadd.f32 %v1957, %v1927
    %v1959 = vadd.f32 %v1958, %v1928
    %v1960 = vadd.f32 %v1959, %v1929
    %v1961 = vadd.f32 %v1960, %v1930
    %v1962 = vadd.f32 %v1961, %v1931
    %v1963 = vadd.f32 %v1962, %v1932
    %v1964 = vadd.f32 %v1963, %v1933
    %v1965 = vadd.f32 %v1964, %v1934
    %v1966 = vadd.f32 %v1965, %v1935
    %v1967 = vadd.f32 %v1966, %v1936
    %v1968 = vadd.f32 %v1967, %v1937
    %v1969 = vadd.f32 %v1968, %v1938
    %v1970 = vadd.f32 %v1969, %v1939
    %v1971 = vadd.f32 %v1970, %v1940
    %v1972 = vadd.f32 %v1971, %v1941
    %v1973 = vadd.f32 %v1972, %v1942
    %v1974 = vadd.f32 %v1973, %v1943
    %v1975 = vadd.f32 %v1974, %v1944
    %v1976 = vadd.f32 %v1975, %v1945
    %v1977 = vadd.f32 %v1976, %v1946
    %v1978 = vadd.f32 %v1977, %v1947
    %v1979 = vadd.f32 %v1978, %v1948
    %v1980 = vadd.f32 %v1979, %v1949
    %v1981 = vadd.f32 %v1980, %v1950
    %v1982 = vrot.slane %v1981, 4
    %v1983 = vadd.f32 %v1981, %v1982
    %v1984 = vrot.slane %v1983, 2
    %v1985 = vadd.f32 %v1983, %v1984
    %v1986 = vrot.slane %v1985, 1
    %v1987 = vadd.f32 %v1985, %v1986
    %v1988 = vmul.f32 %v1987, %v821
    %v1989 = vadd.f32 %v1988, 1e-05
    %v1990 = vrsqrt.pop %v1989
    %v1991 = vmul.f32 %v1887, %v1990
    %v1992 = vmul.f32 %v1888, %v1990
    %v1993 = vmul.f32 %v1889, %v1990
    %v1994 = vmul.f32 %v1890, %v1990
    %v1995 = vmul.f32 %v1891, %v1990
    %v1996 = vmul.f32 %v1892, %v1990
    %v1997 = vmul.f32 %v1893, %v1990
    %v1998 = vmul.f32 %v1894, %v1990
    %v1999 = vmul.f32 %v1895, %v1990
    %v2000 = vmul.f32 %v1896, %v1990
    %v2001 = vmul.f32 %v1897, %v1990
    %v2002 = vmul.f32 %v1898, %v1990
    %v2003 = vmul.f32 %v1899, %v1990
    %v2004 = vmul.f32 %v1900, %v1990
    %v2005 = vmul.f32 %v1901, %v1990
    %v2006 = vmul.f32 %v1902, %v1990
    %v2007 = vmul.f32 %v1903, %v1990
    %v2008 = vmul.f32 %v1904, %v1990
    %v2009 = vmul.f32 %v1905, %v1990
    %v2010 = vmul.f32 %v1906, %v1990
    %v2011 = vmul.f32 %v1907, %v1990
    %v2012 = vmul.f32 %v1908, %v1990
    %v2013 = vmul.f32 %v1909, %v1990
    %v2014 = vmul.f32 %v1910, %v1990
    %v2015 = vmul.f32 %v1911, %v1990
    %v2016 = vmul.f32 %v1912, %v1990
    %v2017 = vmul.f32 %v1913, %v1990
    %v2018 = vmul.f32 %v1914, %v1990
    %v2019 = vmul.f32 %v1915, %v1990
    %v2020 = vmul.f32 %v1916, %v1990
    %v2021 = vmul.f32 %v1917, %v1990
    %v2022 = vmul.f32 %v1918, %v1990
    %v2024 = vlaneseq
    %v2025 = vshrl.u32 %v2024, 7
    %v2026 = vsub.s32 0, %v2025
    %v2027 = vrot.slane %v1847, %v2026
    %v2029 = vmul.f32 %v1991, %v2027
    %v2030 = vmul.f32 %v1992, %v2027
    %v2031 = vmul.f32 %v1993, %v2027
    %v2032 = vmul.f32 %v1994, %v2027
    %v2033 = vmul.f32 %v1995, %v2027
    %v2034 = vmul.f32 %v1996, %v2027
    %v2035 = vmul.f32 %v1997, %v2027
    %v2036 = vmul.f32 %v1998, %v2027
    %v2037 = vmul.f32 %v1999, %v2027
    %v2038 = vmul.f32 %v2000, %v2027
    %v2039 = vmul.f32 %v2001, %v2027
    %v2040 = vmul.f32 %v2002, %v2027
    %v2041 = vmul.f32 %v2003, %v2027
    %v2042 = vmul.f32 %v2004, %v2027
    %v2043 = vmul.f32 %v2005, %v2027
    %v2044 = vmul.f32 %v2006, %v2027
    %v2045 = vmul.f32 %v2007, %v2027
    %v2046 = vmul.f32 %v2008, %v2027
    %v2047 = vmul.f32 %v2009, %v2027
    %v2048 = vmul.f32 %v2010, %v2027
    %v2049 = vmul.f32 %v2011, %v2027
    %v2050 = vmul.f32 %v2012, %v2027
    %v2051 = vmul.f32 %v2013, %v2027
    %v2052 = vmul.f32 %v2014, %v2027
    %v2053 = vmul.f32 %v2015, %v2027
    %v2054 = vmul.f32 %v2016, %v2027
    %v2055 = vmul.f32 %v2017, %v2027
    %v2056 = vmul.f32 %v2018, %v2027
    %v2057 = vmul.f32 %v2019, %v2027
    %v2058 = vmul.f32 %v2020, %v2027
    %v2059 = vmul.f32 %v2021, %v2027
    %v2060 = vmul.f32 %v2022, %v2027
    %v2062 = vlaneseq
    %v2063 = vshrl.u32 %v2062, 7
    %v2064 = vsub.s32 0, %v2063
    %v2065 = vrot.slane %v1848, %v2064
    %v2067 = vadd.f32 %v2029, %v2065
    %v2068 = vadd.f32 %v2030, %v2065
    %v2069 = vadd.f32 %v2031, %v2065
    %v2070 = vadd.f32 %v2032, %v2065
    %v2071 = vadd.f32 %v2033, %v2065
    %v2072 = vadd.f32 %v2034, %v2065
    %v2073 = vadd.f32 %v2035, %v2065
    %v2074 = vadd.f32 %v2036, %v2065
    %v2075 = vadd.f32 %v2037, %v2065
    %v2076 = vadd.f32 %v2038, %v2065
    %v2077 = vadd.f32 %v2039, %v2065
    %v2078 = vadd.f32 %v2040, %v2065
    %v2079 = vadd.f32 %v2041, %v2065
    %v2080 = vadd.f32 %v2042, %v2065
    %v2081 = vadd.f32 %v2043, %v2065
    %v2082 = vadd.f32 %v2044, %v2065
    %v2083 = vadd.f32 %v2045, %v2065
    %v2084 = vadd.f32 %v2046, %v2065
    %v2085 = vadd.f32 %v2047, %v2065
    %v2086 = vadd.f32 %v2048, %v2065
    %v2087 = vadd.f32 %v2049, %v2065
    %v2088 = vadd.f32 %v2050, %v2065
    %v2089 = vadd.f32 %v2051, %v2065
    %v2090 = vadd.f32 %v2052, %v2065
    %v2091 = vadd.f32 %v2053, %v2065
    %v2092 = vadd.f32 %v2054, %v2065
    %v2093 = vadd.f32 %v2055, %v2065
    %v2094 = vadd.f32 %v2056, %v2065
    %v2095 = vadd.f32 %v2057, %v2065
    %v2096 = vadd.f32 %v2058, %v2065
    %v2097 = vadd.f32 %v2059, %v2065
    %v2098 = vadd.f32 %v2060, %v2065
    %v2099 = vmax.f32 %v2067, 0.0
    %v2100 = vmax.f32 %v2068, 0.0
    %v2101 = vmax.f32 %v2069, 0.0
    %v2102 = vmax.f32 %v2070, 0.0
    %v2103 = vmax.f32 %v2071, 0.0
    %v2104 = vmax.f32 %v2072, 0.0
    %v2105 = vmax.f32 %v2073, 0.0
    %v2106 = vmax.f32 %v2074, 0.0
    %v2107 = vmax.f32 %v2075, 0.0
    %v2108 = vmax.f32 %v2076, 0.0
    %v2109 = vmax.f32 %v2077, 0.0
    %v2110 = vmax.f32 %v2078, 0.0
    %v2111 = vmax.f32 %v2079, 0.0
    %v2112 = vmax.f32 %v2080, 0.0
    %v2113 = vmax.f32 %v2081, 0.0
    %v2114 = vmax.f32 %v2082, 0.0
    %v2115 = vmax.f32 %v2083, 0.0
    %v2116 = vmax.f32 %v2084, 0.0
    %v2117 = vmax.f32 %v2085, 0.0
    %v2118 = vmax.f32 %v2086, 0.0
    %v2119 = vmax.f32 %v2087, 0.0
    %v2120 = vmax.f32 %v2088, 0.0
    %v2121 = vmax.f32 %v2089, 0.0
    %v2122 = vmax.f32 %v2090, 0.0
    %v2123 = vmax.f32 %v2091, 0.0
    %v2124 = vmax.f32 %v2092, 0.0
    %v2125 = vmax.f32 %v2093, 0.0
    %v2126 = vmax.f32 %v2094, 0.0
    %v2127 = vmax.f32 %v2095, 0.0
    %v2128 = vmax.f32 %v2096, 0.0
    %v2129 = vmax.f32 %v2097, 0.0
    %v2130 = vmax.f32 %v2098, 0.0
    %v2131 = vld [vmem:[%s29] sm:$0xf]
    %v2132 = vld [vmem:[%s29 + $0x4] sm:$0xf]
    %v2133 = vld [vmem:[%s29 + $0x8] sm:$0xf]
    %v2134 = vld [vmem:[%s29 + $0xc] sm:$0xf]
    %v2135 = vld [vmem:[%s29 + $0x10] sm:$0xf]
    %v2136 = vld [vmem:[%s29 + $0x14] sm:$0xf]
    %v2137 = vld [vmem:[%s29 + $0x18] sm:$0xf]
    %v2138 = vld [vmem:[%s29 + $0x1c] sm:$0xf]
    %v2139 = vld [vmem:[%s29 + $0x20] sm:$0xf]
    %v2140 = vld [vmem:[%s29 + $0x24] sm:$0xf]
    %v2141 = vld [vmem:[%s29 + $0x28] sm:$0xf]
    %v2142 = vld [vmem:[%s29 + $0x2c] sm:$0xf]
    %v2143 = vld [vmem:[%s29 + $0x30] sm:$0xf]
    %v2144 = vld [vmem:[%s29 + $0x34] sm:$0xf]
    %v2145 = vld [vmem:[%s29 + $0x38] sm:$0xf]
    %v2146 = vld [vmem:[%s29 + $0x3c] sm:$0xf]
    %v2147 = vpack.c.bf16 %v2100, %v2099
    %v2148 = vpack.c.bf16 %v2102, %v2101
    %v2149 = vpack.c.bf16 %v2104, %v2103
    %v2150 = vpack.c.bf16 %v2106, %v2105
    %v2151 = vpack.c.bf16 %v2108, %v2107
    %v2152 = vpack.c.bf16 %v2110, %v2109
    %v2153 = vpack.c.bf16 %v2112, %v2111
    %v2154 = vpack.c.bf16 %v2114, %v2113
    %v2155 = vpack.c.bf16 %v2116, %v2115
    %v2156 = vpack.c.bf16 %v2118, %v2117
    %v2157 = vpack.c.bf16 %v2120, %v2119
    %v2158 = vpack.c.bf16 %v2122, %v2121
    %v2159 = vpack.c.bf16 %v2124, %v2123
    %v2160 = vpack.c.bf16 %v2126, %v2125
    %v2161 = vpack.c.bf16 %v2128, %v2127
    %v2162 = vpack.c.bf16 %v2130, %v2129
    %v2163 = vld [vmem:[%s31] sm:$0x1]
    %v2165 = vlaneseq
    %v2166 = vshrl.u32 %v2165, 7
    %v2167 = vsub.s32 0, %v2166
    %v2168 = vrot.slane %v2163, %v2167
    %v2186 = vunpack.c.l.b16 %v2131
    %v2187 = vunpack.c.l.b16 %v2132
    %v2188 = vunpack.c.l.b16 %v2133
    %v2189 = vunpack.c.l.b16 %v2134
    %v2190 = vunpack.c.l.b16 %v2135
    %v2191 = vunpack.c.l.b16 %v2136
    %v2192 = vunpack.c.l.b16 %v2137
    %v2193 = vunpack.c.l.b16 %v2138
    %v2194 = vunpack.c.l.b16 %v2139
    %v2195 = vunpack.c.l.b16 %v2140
    %v2196 = vunpack.c.l.b16 %v2141
    %v2197 = vunpack.c.l.b16 %v2142
    %v2198 = vunpack.c.l.b16 %v2143
    %v2199 = vunpack.c.l.b16 %v2144
    %v2200 = vunpack.c.l.b16 %v2145
    %v2201 = vunpack.c.l.b16 %v2146
    %v2202 = vpack.c.b16 %v2187, %v2186
    %v2203 = vpack.c.b16 %v2189, %v2188
    %v2204 = vpack.c.b16 %v2191, %v2190
    %v2205 = vpack.c.b16 %v2193, %v2192
    %v2206 = vpack.c.b16 %v2195, %v2194
    %v2207 = vpack.c.b16 %v2197, %v2196
    %v2208 = vpack.c.b16 %v2199, %v2198
    %v2209 = vpack.c.b16 %v2201, %v2200
    %2218 = vmatprep.subr.bf16.mxu0 0
    %2219 = vmatpush1.bf16.msra.mxu0 %v2209
    %2220 = vmatprep.subr.bf16.mxu0 0
    %2221 = vmatpush1.bf16.msra.mxu0 %v2208
    %2222 = vmatprep.subr.bf16.mxu0 0
    %2223 = vmatpush1.bf16.msra.mxu0 %v2207
    %2224 = vmatprep.subr.bf16.mxu0 0
    %2225 = vmatpush1.bf16.msra.mxu0 %v2206
    %2226 = vmatprep.subr.bf16.mxu0 0
    %2227 = vmatpush1.bf16.msra.mxu0 %v2205
    %2228 = vmatprep.subr.bf16.mxu0 0
    %2229 = vmatpush1.bf16.msra.mxu0 %v2204
    %2230 = vmatprep.subr.bf16.mxu0 0
    %2231 = vmatpush1.bf16.msra.mxu0 %v2203
    %2232 = vmatprep.subr.bf16.mxu0 0
    %2233 = vmatpush1.bf16.msra.mxu0 %v2202
    %2234 = vmatprep.subr.bf16.mxu0 0
    %2235 = vmatpush2.bf16.msra.mxu0 0
    %2236 = vmatprep.subr.bf16.mxu0 0
    %2237 = vmatpush2.bf16.msra.mxu0 0
    %2238 = vmatprep.subr.bf16.mxu0 0
    %2239 = vmatpush2.bf16.msra.mxu0 0
    %2240 = vmatprep.subr.bf16.mxu0 0
    %2241 = vmatpush2.bf16.msra.mxu0 0
    %2242 = vmatprep.subr.bf16.mxu0 0
    %2243 = vmatpush2.bf16.msra.mxu0 0
    %2244 = vmatprep.subr.bf16.mxu0 0
    %2245 = vmatpush2.bf16.msra.mxu0 0
    %2246 = vmatprep.subr.bf16.mxu0 0
    %2247 = vmatpush2.bf16.msra.mxu0 0
    %2248 = vmatprep.subr.bf16.mxu0 0
    %2249 = vmatpush2.bf16.msra.mxu0 0
    %2250 = vmatprep.mubr.bf16.mxu0 0
    %2251 = vmatmul.mubr.bf16.gmra.mxu0 %v2147
    %v2252 = vpop.f32.mrf.mxu0
    %v2253 = vadd.f32 %v2168, %v2252
    %v2254 = vpop.f32.mrf.mxu0
    %v2255 = vpop.f32.mrf.mxu0
    %v2256 = vadd.f32 %v2168, %v2255
    %v2257 = vpop.f32.mrf.mxu0
    %2258 = vmatprep.mubr.bf16.mxu0 0
    %2259 = vmatmul.mubr.bf16.gmra.mxu0 %v2148
    %v2260 = vpop.f32.mrf.mxu0
    %v2261 = vadd.f32 %v2168, %v2260
    %v2262 = vpop.f32.mrf.mxu0
    %v2263 = vpop.f32.mrf.mxu0
    %v2264 = vadd.f32 %v2168, %v2263
    %v2265 = vpop.f32.mrf.mxu0
    %2266 = vmatprep.mubr.bf16.mxu0 0
    %2267 = vmatmul.mubr.bf16.gmra.mxu0 %v2149
    %v2268 = vpop.f32.mrf.mxu0
    %v2269 = vadd.f32 %v2168, %v2268
    %v2270 = vpop.f32.mrf.mxu0
    %v2271 = vpop.f32.mrf.mxu0
    %v2272 = vadd.f32 %v2168, %v2271
    %v2273 = vpop.f32.mrf.mxu0
    %2274 = vmatprep.mubr.bf16.mxu0 0
    %2275 = vmatmul.mubr.bf16.gmra.mxu0 %v2150
    %v2276 = vpop.f32.mrf.mxu0
    %v2277 = vadd.f32 %v2168, %v2276
    %v2278 = vpop.f32.mrf.mxu0
    %v2279 = vpop.f32.mrf.mxu0
    %v2280 = vadd.f32 %v2168, %v2279
    %v2281 = vpop.f32.mrf.mxu0
    %2282 = vmatprep.mubr.bf16.mxu0 0
    %2283 = vmatmul.mubr.bf16.gmra.mxu0 %v2151
    %v2284 = vpop.f32.mrf.mxu0
    %v2285 = vadd.f32 %v2168, %v2284
    %v2286 = vpop.f32.mrf.mxu0
    %v2287 = vpop.f32.mrf.mxu0
    %v2288 = vadd.f32 %v2168, %v2287
    %v2289 = vpop.f32.mrf.mxu0
    %2290 = vmatprep.mubr.bf16.mxu0 0
    %2291 = vmatmul.mubr.bf16.gmra.mxu0 %v2152
    %v2292 = vpop.f32.mrf.mxu0
    %v2293 = vadd.f32 %v2168, %v2292
    %v2294 = vpop.f32.mrf.mxu0
    %v2295 = vpop.f32.mrf.mxu0
    %v2296 = vadd.f32 %v2168, %v2295
    %v2297 = vpop.f32.mrf.mxu0
    %2298 = vmatprep.mubr.bf16.mxu0 0
    %2299 = vmatmul.mubr.bf16.gmra.mxu0 %v2153
    %v2300 = vpop.f32.mrf.mxu0
    %v2301 = vadd.f32 %v2168, %v2300
    %v2302 = vpop.f32.mrf.mxu0
    %v2303 = vpop.f32.mrf.mxu0
    %v2304 = vadd.f32 %v2168, %v2303
    %v2305 = vpop.f32.mrf.mxu0
    %2306 = vmatprep.mubr.bf16.mxu0 0
    %2307 = vmatmul.mubr.bf16.gmra.mxu0 %v2154
    %v2308 = vpop.f32.mrf.mxu0
    %v2309 = vadd.f32 %v2168, %v2308
    %v2310 = vpop.f32.mrf.mxu0
    %v2311 = vpop.f32.mrf.mxu0
    %v2312 = vadd.f32 %v2168, %v2311
    %v2313 = vpop.f32.mrf.mxu0
    %2314 = vmatprep.mubr.bf16.mxu0 0
    %2315 = vmatmul.mubr.bf16.gmra.mxu0 %v2155
    %v2316 = vpop.f32.mrf.mxu0
    %v2317 = vadd.f32 %v2168, %v2316
    %v2318 = vpop.f32.mrf.mxu0
    %v2319 = vpop.f32.mrf.mxu0
    %v2320 = vadd.f32 %v2168, %v2319
    %v2321 = vpop.f32.mrf.mxu0
    %2322 = vmatprep.mubr.bf16.mxu0 0
    %2323 = vmatmul.mubr.bf16.gmra.mxu0 %v2156
    %v2324 = vpop.f32.mrf.mxu0
    %v2325 = vadd.f32 %v2168, %v2324
    %v2326 = vpop.f32.mrf.mxu0
    %v2327 = vpop.f32.mrf.mxu0
    %v2328 = vadd.f32 %v2168, %v2327
    %v2329 = vpop.f32.mrf.mxu0
    %2330 = vmatprep.mubr.bf16.mxu0 0
    %2331 = vmatmul.mubr.bf16.gmra.mxu0 %v2157
    %v2332 = vpop.f32.mrf.mxu0
    %v2333 = vadd.f32 %v2168, %v2332
    %v2334 = vpop.f32.mrf.mxu0
    %v2335 = vpop.f32.mrf.mxu0
    %v2336 = vadd.f32 %v2168, %v2335
    %v2337 = vpop.f32.mrf.mxu0
    %2338 = vmatprep.mubr.bf16.mxu0 0
    %2339 = vmatmul.mubr.bf16.gmra.mxu0 %v2158
    %v2340 = vpop.f32.mrf.mxu0
    %v2341 = vadd.f32 %v2168, %v2340
    %v2342 = vpop.f32.mrf.mxu0
    %v2343 = vpop.f32.mrf.mxu0
    %v2344 = vadd.f32 %v2168, %v2343
    %v2345 = vpop.f32.mrf.mxu0
    %2346 = vmatprep.mubr.bf16.mxu0 0
    %2347 = vmatmul.mubr.bf16.gmra.mxu0 %v2159
    %v2348 = vpop.f32.mrf.mxu0
    %v2349 = vadd.f32 %v2168, %v2348
    %v2350 = vpop.f32.mrf.mxu0
    %v2351 = vpop.f32.mrf.mxu0
    %v2352 = vadd.f32 %v2168, %v2351
    %v2353 = vpop.f32.mrf.mxu0
    %2354 = vmatprep.mubr.bf16.mxu0 0
    %2355 = vmatmul.mubr.bf16.gmra.mxu0 %v2160
    %v2356 = vpop.f32.mrf.mxu0
    %v2357 = vadd.f32 %v2168, %v2356
    %v2358 = vpop.f32.mrf.mxu0
    %v2359 = vpop.f32.mrf.mxu0
    %v2360 = vadd.f32 %v2168, %v2359
    %v2361 = vpop.f32.mrf.mxu0
    %2362 = vmatprep.mubr.bf16.mxu0 0
    %2363 = vmatmul.mubr.bf16.gmra.mxu0 %v2161
    %v2364 = vpop.f32.mrf.mxu0
    %v2365 = vadd.f32 %v2168, %v2364
    %v2366 = vpop.f32.mrf.mxu0
    %v2367 = vpop.f32.mrf.mxu0
    %v2368 = vadd.f32 %v2168, %v2367
    %v2369 = vpop.f32.mrf.mxu0
    %2370 = vmatprep.mubr.bf16.mxu0 0
    %2371 = vmatmul.mubr.bf16.gmra.mxu0 %v2162
    %v2372 = vpop.f32.mrf.mxu0
    %v2373 = vadd.f32 %v2168, %v2372
    %v2374 = vpop.f32.mrf.mxu0
    %v2375 = vpop.f32.mrf.mxu0
    %v2376 = vadd.f32 %v2168, %v2375
    %v2377 = vpop.f32.mrf.mxu0
    %2378 = vdwg.mxu0
    %v2379 = vld [vmem:[%s33] sm:$0x1]
    %v2380 = vld [vmem:[%s35] sm:$0x1]
    %v2381 = vadd.f32 %v2253, %v2256
    %v2382 = vadd.f32 %v2381, %v2261
    %v2383 = vadd.f32 %v2382, %v2264
    %v2384 = vadd.f32 %v2383, %v2269
    %v2385 = vadd.f32 %v2384, %v2272
    %v2386 = vadd.f32 %v2385, %v2277
    %v2387 = vadd.f32 %v2386, %v2280
    %v2388 = vadd.f32 %v2387, %v2285
    %v2389 = vadd.f32 %v2388, %v2288
    %v2390 = vadd.f32 %v2389, %v2293
    %v2391 = vadd.f32 %v2390, %v2296
    %v2392 = vadd.f32 %v2391, %v2301
    %v2393 = vadd.f32 %v2392, %v2304
    %v2394 = vadd.f32 %v2393, %v2309
    %v2395 = vadd.f32 %v2394, %v2312
    %v2396 = vadd.f32 %v2395, %v2317
    %v2397 = vadd.f32 %v2396, %v2320
    %v2398 = vadd.f32 %v2397, %v2325
    %v2399 = vadd.f32 %v2398, %v2328
    %v2400 = vadd.f32 %v2399, %v2333
    %v2401 = vadd.f32 %v2400, %v2336
    %v2402 = vadd.f32 %v2401, %v2341
    %v2403 = vadd.f32 %v2402, %v2344
    %v2404 = vadd.f32 %v2403, %v2349
    %v2405 = vadd.f32 %v2404, %v2352
    %v2406 = vadd.f32 %v2405, %v2357
    %v2407 = vadd.f32 %v2406, %v2360
    %v2408 = vadd.f32 %v2407, %v2365
    %v2409 = vadd.f32 %v2408, %v2368
    %v2410 = vadd.f32 %v2409, %v2373
    %v2411 = vadd.f32 %v2410, %v2376
    %v2412 = vrot.slane %v2411, 4
    %v2413 = vadd.f32 %v2411, %v2412
    %v2414 = vrot.slane %v2413, 2
    %v2415 = vadd.f32 %v2413, %v2414
    %v2416 = vrot.slane %v2415, 1
    %v2417 = vadd.f32 %v2415, %v2416
    %v2418 = vmul.f32 %v2417, %v821
    %v2419 = vsub.f32 %v2253, %v2418
    %v2420 = vsub.f32 %v2256, %v2418
    %v2421 = vsub.f32 %v2261, %v2418
    %v2422 = vsub.f32 %v2264, %v2418
    %v2423 = vsub.f32 %v2269, %v2418
    %v2424 = vsub.f32 %v2272, %v2418
    %v2425 = vsub.f32 %v2277, %v2418
    %v2426 = vsub.f32 %v2280, %v2418
    %v2427 = vsub.f32 %v2285, %v2418
    %v2428 = vsub.f32 %v2288, %v2418
    %v2429 = vsub.f32 %v2293, %v2418
    %v2430 = vsub.f32 %v2296, %v2418
    %v2431 = vsub.f32 %v2301, %v2418
    %v2432 = vsub.f32 %v2304, %v2418
    %v2433 = vsub.f32 %v2309, %v2418
    %v2434 = vsub.f32 %v2312, %v2418
    %v2435 = vsub.f32 %v2317, %v2418
    %v2436 = vsub.f32 %v2320, %v2418
    %v2437 = vsub.f32 %v2325, %v2418
    %v2438 = vsub.f32 %v2328, %v2418
    %v2439 = vsub.f32 %v2333, %v2418
    %v2440 = vsub.f32 %v2336, %v2418
    %v2441 = vsub.f32 %v2341, %v2418
    %v2442 = vsub.f32 %v2344, %v2418
    %v2443 = vsub.f32 %v2349, %v2418
    %v2444 = vsub.f32 %v2352, %v2418
    %v2445 = vsub.f32 %v2357, %v2418
    %v2446 = vsub.f32 %v2360, %v2418
    %v2447 = vsub.f32 %v2365, %v2418
    %v2448 = vsub.f32 %v2368, %v2418
    %v2449 = vsub.f32 %v2373, %v2418
    %v2450 = vsub.f32 %v2376, %v2418
    %v2451 = vmul.f32 %v2419, %v2419
    %v2452 = vmul.f32 %v2420, %v2420
    %v2453 = vmul.f32 %v2421, %v2421
    %v2454 = vmul.f32 %v2422, %v2422
    %v2455 = vmul.f32 %v2423, %v2423
    %v2456 = vmul.f32 %v2424, %v2424
    %v2457 = vmul.f32 %v2425, %v2425
    %v2458 = vmul.f32 %v2426, %v2426
    %v2459 = vmul.f32 %v2427, %v2427
    %v2460 = vmul.f32 %v2428, %v2428
    %v2461 = vmul.f32 %v2429, %v2429
    %v2462 = vmul.f32 %v2430, %v2430
    %v2463 = vmul.f32 %v2431, %v2431
    %v2464 = vmul.f32 %v2432, %v2432
    %v2465 = vmul.f32 %v2433, %v2433
    %v2466 = vmul.f32 %v2434, %v2434
    %v2467 = vmul.f32 %v2435, %v2435
    %v2468 = vmul.f32 %v2436, %v2436
    %v2469 = vmul.f32 %v2437, %v2437
    %v2470 = vmul.f32 %v2438, %v2438
    %v2471 = vmul.f32 %v2439, %v2439
    %v2472 = vmul.f32 %v2440, %v2440
    %v2473 = vmul.f32 %v2441, %v2441
    %v2474 = vmul.f32 %v2442, %v2442
    %v2475 = vmul.f32 %v2443, %v2443
    %v2476 = vmul.f32 %v2444, %v2444
    %v2477 = vmul.f32 %v2445, %v2445
    %v2478 = vmul.f32 %v2446, %v2446
    %v2479 = vmul.f32 %v2447, %v2447
    %v2480 = vmul.f32 %v2448, %v2448
    %v2481 = vmul.f32 %v2449, %v2449
    %v2482 = vmul.f32 %v2450, %v2450
    %v2483 = vadd.f32 %v2451, %v2452
    %v2484 = vadd.f32 %v2483, %v2453
    %v2485 = vadd.f32 %v2484, %v2454
    %v2486 = vadd.f32 %v2485, %v2455
    %v2487 = vadd.f32 %v2486, %v2456
    %v2488 = vadd.f32 %v2487, %v2457
    %v2489 = vadd.f32 %v2488, %v2458
    %v2490 = vadd.f32 %v2489, %v2459
    %v2491 = vadd.f32 %v2490, %v2460
    %v2492 = vadd.f32 %v2491, %v2461
    %v2493 = vadd.f32 %v2492, %v2462
    %v2494 = vadd.f32 %v2493, %v2463
    %v2495 = vadd.f32 %v2494, %v2464
    %v2496 = vadd.f32 %v2495, %v2465
    %v2497 = vadd.f32 %v2496, %v2466
    %v2498 = vadd.f32 %v2497, %v2467
    %v2499 = vadd.f32 %v2498, %v2468
    %v2500 = vadd.f32 %v2499, %v2469
    %v2501 = vadd.f32 %v2500, %v2470
    %v2502 = vadd.f32 %v2501, %v2471
    %v2503 = vadd.f32 %v2502, %v2472
    %v2504 = vadd.f32 %v2503, %v2473
    %v2505 = vadd.f32 %v2504, %v2474
    %v2506 = vadd.f32 %v2505, %v2475
    %v2507 = vadd.f32 %v2506, %v2476
    %v2508 = vadd.f32 %v2507, %v2477
    %v2509 = vadd.f32 %v2508, %v2478
    %v2510 = vadd.f32 %v2509, %v2479
    %v2511 = vadd.f32 %v2510, %v2480
    %v2512 = vadd.f32 %v2511, %v2481
    %v2513 = vadd.f32 %v2512, %v2482
    %v2514 = vrot.slane %v2513, 4
    %v2515 = vadd.f32 %v2513, %v2514
    %v2516 = vrot.slane %v2515, 2
    %v2517 = vadd.f32 %v2515, %v2516
    %v2518 = vrot.slane %v2517, 1
    %v2519 = vadd.f32 %v2517, %v2518
    %v2520 = vmul.f32 %v2519, %v821
    %v2521 = vadd.f32 %v2520, 1e-05
    %v2522 = vrsqrt.pop %v2521
    %v2523 = vmul.f32 %v2419, %v2522
    %v2524 = vmul.f32 %v2420, %v2522
    %v2525 = vmul.f32 %v2421, %v2522
    %v2526 = vmul.f32 %v2422, %v2522
    %v2527 = vmul.f32 %v2423, %v2522
    %v2528 = vmul.f32 %v2424, %v2522
    %v2529 = vmul.f32 %v2425, %v2522
    %v2530 = vmul.f32 %v2426, %v2522
    %v2531 = vmul.f32 %v2427, %v2522
    %v2532 = vmul.f32 %v2428, %v2522
    %v2533 = vmul.f32 %v2429, %v2522
    %v2534 = vmul.f32 %v2430, %v2522
    %v2535 = vmul.f32 %v2431, %v2522
    %v2536 = vmul.f32 %v2432, %v2522
    %v2537 = vmul.f32 %v2433, %v2522
    %v2538 = vmul.f32 %v2434, %v2522
    %v2539 = vmul.f32 %v2435, %v2522
    %v2540 = vmul.f32 %v2436, %v2522
    %v2541 = vmul.f32 %v2437, %v2522
    %v2542 = vmul.f32 %v2438, %v2522
    %v2543 = vmul.f32 %v2439, %v2522
    %v2544 = vmul.f32 %v2440, %v2522
    %v2545 = vmul.f32 %v2441, %v2522
    %v2546 = vmul.f32 %v2442, %v2522
    %v2547 = vmul.f32 %v2443, %v2522
    %v2548 = vmul.f32 %v2444, %v2522
    %v2549 = vmul.f32 %v2445, %v2522
    %v2550 = vmul.f32 %v2446, %v2522
    %v2551 = vmul.f32 %v2447, %v2522
    %v2552 = vmul.f32 %v2448, %v2522
    %v2553 = vmul.f32 %v2449, %v2522
    %v2554 = vmul.f32 %v2450, %v2522
    %v2556 = vlaneseq
    %v2557 = vshrl.u32 %v2556, 7
    %v2558 = vsub.s32 0, %v2557
    %v2559 = vrot.slane %v2379, %v2558
    %v2561 = vmul.f32 %v2523, %v2559
    %v2562 = vmul.f32 %v2524, %v2559
    %v2563 = vmul.f32 %v2525, %v2559
    %v2564 = vmul.f32 %v2526, %v2559
    %v2565 = vmul.f32 %v2527, %v2559
    %v2566 = vmul.f32 %v2528, %v2559
    %v2567 = vmul.f32 %v2529, %v2559
    %v2568 = vmul.f32 %v2530, %v2559
    %v2569 = vmul.f32 %v2531, %v2559
    %v2570 = vmul.f32 %v2532, %v2559
    %v2571 = vmul.f32 %v2533, %v2559
    %v2572 = vmul.f32 %v2534, %v2559
    %v2573 = vmul.f32 %v2535, %v2559
    %v2574 = vmul.f32 %v2536, %v2559
    %v2575 = vmul.f32 %v2537, %v2559
    %v2576 = vmul.f32 %v2538, %v2559
    %v2577 = vmul.f32 %v2539, %v2559
    %v2578 = vmul.f32 %v2540, %v2559
    %v2579 = vmul.f32 %v2541, %v2559
    %v2580 = vmul.f32 %v2542, %v2559
    %v2581 = vmul.f32 %v2543, %v2559
    %v2582 = vmul.f32 %v2544, %v2559
    %v2583 = vmul.f32 %v2545, %v2559
    %v2584 = vmul.f32 %v2546, %v2559
    %v2585 = vmul.f32 %v2547, %v2559
    %v2586 = vmul.f32 %v2548, %v2559
    %v2587 = vmul.f32 %v2549, %v2559
    %v2588 = vmul.f32 %v2550, %v2559
    %v2589 = vmul.f32 %v2551, %v2559
    %v2590 = vmul.f32 %v2552, %v2559
    %v2591 = vmul.f32 %v2553, %v2559
    %v2592 = vmul.f32 %v2554, %v2559
    %v2594 = vlaneseq
    %v2595 = vshrl.u32 %v2594, 7
    %v2596 = vsub.s32 0, %v2595
    %v2597 = vrot.slane %v2380, %v2596
    %v2599 = vadd.f32 %v2561, %v2597
    %v2600 = vadd.f32 %v2562, %v2597
    %v2601 = vadd.f32 %v2563, %v2597
    %v2602 = vadd.f32 %v2564, %v2597
    %v2603 = vadd.f32 %v2565, %v2597
    %v2604 = vadd.f32 %v2566, %v2597
    %v2605 = vadd.f32 %v2567, %v2597
    %v2606 = vadd.f32 %v2568, %v2597
    %v2607 = vadd.f32 %v2569, %v2597
    %v2608 = vadd.f32 %v2570, %v2597
    %v2609 = vadd.f32 %v2571, %v2597
    %v2610 = vadd.f32 %v2572, %v2597
    %v2611 = vadd.f32 %v2573, %v2597
    %v2612 = vadd.f32 %v2574, %v2597
    %v2613 = vadd.f32 %v2575, %v2597
    %v2614 = vadd.f32 %v2576, %v2597
    %v2615 = vadd.f32 %v2577, %v2597
    %v2616 = vadd.f32 %v2578, %v2597
    %v2617 = vadd.f32 %v2579, %v2597
    %v2618 = vadd.f32 %v2580, %v2597
    %v2619 = vadd.f32 %v2581, %v2597
    %v2620 = vadd.f32 %v2582, %v2597
    %v2621 = vadd.f32 %v2583, %v2597
    %v2622 = vadd.f32 %v2584, %v2597
    %v2623 = vadd.f32 %v2585, %v2597
    %v2624 = vadd.f32 %v2586, %v2597
    %v2625 = vadd.f32 %v2587, %v2597
    %v2626 = vadd.f32 %v2588, %v2597
    %v2627 = vadd.f32 %v2589, %v2597
    %v2628 = vadd.f32 %v2590, %v2597
    %v2629 = vadd.f32 %v2591, %v2597
    %v2630 = vadd.f32 %v2592, %v2597
    %v2631 = vmax.f32 %v2599, 0.0
    %v2632 = vmax.f32 %v2600, 0.0
    %v2633 = vmax.f32 %v2601, 0.0
    %v2634 = vmax.f32 %v2602, 0.0
    %v2635 = vmax.f32 %v2603, 0.0
    %v2636 = vmax.f32 %v2604, 0.0
    %v2637 = vmax.f32 %v2605, 0.0
    %v2638 = vmax.f32 %v2606, 0.0
    %v2639 = vmax.f32 %v2607, 0.0
    %v2640 = vmax.f32 %v2608, 0.0
    %v2641 = vmax.f32 %v2609, 0.0
    %v2642 = vmax.f32 %v2610, 0.0
    %v2643 = vmax.f32 %v2611, 0.0
    %v2644 = vmax.f32 %v2612, 0.0
    %v2645 = vmax.f32 %v2613, 0.0
    %v2646 = vmax.f32 %v2614, 0.0
    %v2647 = vmax.f32 %v2615, 0.0
    %v2648 = vmax.f32 %v2616, 0.0
    %v2649 = vmax.f32 %v2617, 0.0
    %v2650 = vmax.f32 %v2618, 0.0
    %v2651 = vmax.f32 %v2619, 0.0
    %v2652 = vmax.f32 %v2620, 0.0
    %v2653 = vmax.f32 %v2621, 0.0
    %v2654 = vmax.f32 %v2622, 0.0
    %v2655 = vmax.f32 %v2623, 0.0
    %v2656 = vmax.f32 %v2624, 0.0
    %v2657 = vmax.f32 %v2625, 0.0
    %v2658 = vmax.f32 %v2626, 0.0
    %v2659 = vmax.f32 %v2627, 0.0
    %v2660 = vmax.f32 %v2628, 0.0
    %v2661 = vmax.f32 %v2629, 0.0
    %v2662 = vmax.f32 %v2630, 0.0
    %v2663 = vld [vmem:[%s37] sm:$0xf]
    %v2664 = vld [vmem:[%s37 + $0x4] sm:$0xf]
    %v2665 = vld [vmem:[%s37 + $0x8] sm:$0xf]
    %v2666 = vld [vmem:[%s37 + $0xc] sm:$0xf]
    %v2667 = vld [vmem:[%s37 + $0x10] sm:$0xf]
    %v2668 = vld [vmem:[%s37 + $0x14] sm:$0xf]
    %v2669 = vld [vmem:[%s37 + $0x18] sm:$0xf]
    %v2670 = vld [vmem:[%s37 + $0x1c] sm:$0xf]
    %v2671 = vld [vmem:[%s37 + $0x20] sm:$0xf]
    %v2672 = vld [vmem:[%s37 + $0x24] sm:$0xf]
    %v2673 = vld [vmem:[%s37 + $0x28] sm:$0xf]
    %v2674 = vld [vmem:[%s37 + $0x2c] sm:$0xf]
    %v2675 = vld [vmem:[%s37 + $0x30] sm:$0xf]
    %v2676 = vld [vmem:[%s37 + $0x34] sm:$0xf]
    %v2677 = vld [vmem:[%s37 + $0x38] sm:$0xf]
    %v2678 = vld [vmem:[%s37 + $0x3c] sm:$0xf]
    %v2679 = vpack.c.bf16 %v2632, %v2631
    %v2680 = vpack.c.bf16 %v2634, %v2633
    %v2681 = vpack.c.bf16 %v2636, %v2635
    %v2682 = vpack.c.bf16 %v2638, %v2637
    %v2683 = vpack.c.bf16 %v2640, %v2639
    %v2684 = vpack.c.bf16 %v2642, %v2641
    %v2685 = vpack.c.bf16 %v2644, %v2643
    %v2686 = vpack.c.bf16 %v2646, %v2645
    %v2687 = vpack.c.bf16 %v2648, %v2647
    %v2688 = vpack.c.bf16 %v2650, %v2649
    %v2689 = vpack.c.bf16 %v2652, %v2651
    %v2690 = vpack.c.bf16 %v2654, %v2653
    %v2691 = vpack.c.bf16 %v2656, %v2655
    %v2692 = vpack.c.bf16 %v2658, %v2657
    %v2693 = vpack.c.bf16 %v2660, %v2659
    %v2694 = vpack.c.bf16 %v2662, %v2661
    %v2695 = vld [vmem:[%s39] sm:$0x1]
    %v2697 = vlaneseq
    %v2698 = vshrl.u32 %v2697, 7
    %v2699 = vsub.s32 0, %v2698
    %v2700 = vrot.slane %v2695, %v2699
    %v2718 = vunpack.c.l.b16 %v2663
    %v2719 = vunpack.c.l.b16 %v2664
    %v2720 = vunpack.c.l.b16 %v2665
    %v2721 = vunpack.c.l.b16 %v2666
    %v2722 = vunpack.c.l.b16 %v2667
    %v2723 = vunpack.c.l.b16 %v2668
    %v2724 = vunpack.c.l.b16 %v2669
    %v2725 = vunpack.c.l.b16 %v2670
    %v2726 = vunpack.c.l.b16 %v2671
    %v2727 = vunpack.c.l.b16 %v2672
    %v2728 = vunpack.c.l.b16 %v2673
    %v2729 = vunpack.c.l.b16 %v2674
    %v2730 = vunpack.c.l.b16 %v2675
    %v2731 = vunpack.c.l.b16 %v2676
    %v2732 = vunpack.c.l.b16 %v2677
    %v2733 = vunpack.c.l.b16 %v2678
    %v2734 = vpack.c.b16 %v2719, %v2718
    %v2735 = vpack.c.b16 %v2721, %v2720
    %v2736 = vpack.c.b16 %v2723, %v2722
    %v2737 = vpack.c.b16 %v2725, %v2724
    %v2738 = vpack.c.b16 %v2727, %v2726
    %v2739 = vpack.c.b16 %v2729, %v2728
    %v2740 = vpack.c.b16 %v2731, %v2730
    %v2741 = vpack.c.b16 %v2733, %v2732
    %2750 = vmatprep.subr.bf16.mxu0 0
    %2751 = vmatpush1.bf16.msra.mxu0 %v2741
    %2752 = vmatprep.subr.bf16.mxu0 0
    %2753 = vmatpush1.bf16.msra.mxu0 %v2740
    %2754 = vmatprep.subr.bf16.mxu0 0
    %2755 = vmatpush1.bf16.msra.mxu0 %v2739
    %2756 = vmatprep.subr.bf16.mxu0 0
    %2757 = vmatpush1.bf16.msra.mxu0 %v2738
    %2758 = vmatprep.subr.bf16.mxu0 0
    %2759 = vmatpush1.bf16.msra.mxu0 %v2737
    %2760 = vmatprep.subr.bf16.mxu0 0
    %2761 = vmatpush1.bf16.msra.mxu0 %v2736
    %2762 = vmatprep.subr.bf16.mxu0 0
    %2763 = vmatpush1.bf16.msra.mxu0 %v2735
    %2764 = vmatprep.subr.bf16.mxu0 0
    %2765 = vmatpush1.bf16.msra.mxu0 %v2734
    %2766 = vmatprep.subr.bf16.mxu0 0
    %2767 = vmatpush2.bf16.msra.mxu0 0
    %2768 = vmatprep.subr.bf16.mxu0 0
    %2769 = vmatpush2.bf16.msra.mxu0 0
    %2770 = vmatprep.subr.bf16.mxu0 0
    %2771 = vmatpush2.bf16.msra.mxu0 0
    %2772 = vmatprep.subr.bf16.mxu0 0
    %2773 = vmatpush2.bf16.msra.mxu0 0
    %2774 = vmatprep.subr.bf16.mxu0 0
    %2775 = vmatpush2.bf16.msra.mxu0 0
    %2776 = vmatprep.subr.bf16.mxu0 0
    %2777 = vmatpush2.bf16.msra.mxu0 0
    %2778 = vmatprep.subr.bf16.mxu0 0
    %2779 = vmatpush2.bf16.msra.mxu0 0
    %2780 = vmatprep.subr.bf16.mxu0 0
    %2781 = vmatpush2.bf16.msra.mxu0 0
    %2782 = vmatprep.mubr.bf16.mxu0 0
    %2783 = vmatmul.mubr.bf16.gmra.mxu0 %v2679
    %v2784 = vpop.f32.mrf.mxu0
    %v2785 = vadd.f32 %v2700, %v2784
    %v2786 = vpop.f32.mrf.mxu0
    %v2787 = vpop.f32.mrf.mxu0
    %v2788 = vadd.f32 %v2700, %v2787
    %v2789 = vpop.f32.mrf.mxu0
    %2790 = vmatprep.mubr.bf16.mxu0 0
    %2791 = vmatmul.mubr.bf16.gmra.mxu0 %v2680
    %v2792 = vpop.f32.mrf.mxu0
    %v2793 = vadd.f32 %v2700, %v2792
    %v2794 = vpop.f32.mrf.mxu0
    %v2795 = vpop.f32.mrf.mxu0
    %v2796 = vadd.f32 %v2700, %v2795
    %v2797 = vpop.f32.mrf.mxu0
    %2798 = vmatprep.mubr.bf16.mxu0 0
    %2799 = vmatmul.mubr.bf16.gmra.mxu0 %v2681
    %v2800 = vpop.f32.mrf.mxu0
    %v2801 = vadd.f32 %v2700, %v2800
    %v2802 = vpop.f32.mrf.mxu0
    %v2803 = vpop.f32.mrf.mxu0
    %v2804 = vadd.f32 %v2700, %v2803
    %v2805 = vpop.f32.mrf.mxu0
    %2806 = vmatprep.mubr.bf16.mxu0 0
    %2807 = vmatmul.mubr.bf16.gmra.mxu0 %v2682
    %v2808 = vpop.f32.mrf.mxu0
    %v2809 = vadd.f32 %v2700, %v2808
    %v2810 = vpop.f32.mrf.mxu0
    %v2811 = vpop.f32.mrf.mxu0
    %v2812 = vadd.f32 %v2700, %v2811
    %v2813 = vpop.f32.mrf.mxu0
    %2814 = vmatprep.mubr.bf16.mxu0 0
    %2815 = vmatmul.mubr.bf16.gmra.mxu0 %v2683
    %v2816 = vpop.f32.mrf.mxu0
    %v2817 = vadd.f32 %v2700, %v2816
    %v2818 = vpop.f32.mrf.mxu0
    %v2819 = vpop.f32.mrf.mxu0
    %v2820 = vadd.f32 %v2700, %v2819
    %v2821 = vpop.f32.mrf.mxu0
    %2822 = vmatprep.mubr.bf16.mxu0 0
    %2823 = vmatmul.mubr.bf16.gmra.mxu0 %v2684
    %v2824 = vpop.f32.mrf.mxu0
    %v2825 = vadd.f32 %v2700, %v2824
    %v2826 = vpop.f32.mrf.mxu0
    %v2827 = vpop.f32.mrf.mxu0
    %v2828 = vadd.f32 %v2700, %v2827
    %v2829 = vpop.f32.mrf.mxu0
    %2830 = vmatprep.mubr.bf16.mxu0 0
    %2831 = vmatmul.mubr.bf16.gmra.mxu0 %v2685
    %v2832 = vpop.f32.mrf.mxu0
    %v2833 = vadd.f32 %v2700, %v2832
    %v2834 = vpop.f32.mrf.mxu0
    %v2835 = vpop.f32.mrf.mxu0
    %v2836 = vadd.f32 %v2700, %v2835
    %v2837 = vpop.f32.mrf.mxu0
    %2838 = vmatprep.mubr.bf16.mxu0 0
    %2839 = vmatmul.mubr.bf16.gmra.mxu0 %v2686
    %v2840 = vpop.f32.mrf.mxu0
    %v2841 = vadd.f32 %v2700, %v2840
    %v2842 = vpop.f32.mrf.mxu0
    %v2843 = vpop.f32.mrf.mxu0
    %v2844 = vadd.f32 %v2700, %v2843
    %v2845 = vpop.f32.mrf.mxu0
    %2846 = vmatprep.mubr.bf16.mxu0 0
    %2847 = vmatmul.mubr.bf16.gmra.mxu0 %v2687
    %v2848 = vpop.f32.mrf.mxu0
    %v2849 = vadd.f32 %v2700, %v2848
    %v2850 = vpop.f32.mrf.mxu0
    %v2851 = vpop.f32.mrf.mxu0
    %v2852 = vadd.f32 %v2700, %v2851
    %v2853 = vpop.f32.mrf.mxu0
    %2854 = vmatprep.mubr.bf16.mxu0 0
    %2855 = vmatmul.mubr.bf16.gmra.mxu0 %v2688
    %v2856 = vpop.f32.mrf.mxu0
    %v2857 = vadd.f32 %v2700, %v2856
    %v2858 = vpop.f32.mrf.mxu0
    %v2859 = vpop.f32.mrf.mxu0
    %v2860 = vadd.f32 %v2700, %v2859
    %v2861 = vpop.f32.mrf.mxu0
    %2862 = vmatprep.mubr.bf16.mxu0 0
    %2863 = vmatmul.mubr.bf16.gmra.mxu0 %v2689
    %v2864 = vpop.f32.mrf.mxu0
    %v2865 = vadd.f32 %v2700, %v2864
    %v2866 = vpop.f32.mrf.mxu0
    %v2867 = vpop.f32.mrf.mxu0
    %v2868 = vadd.f32 %v2700, %v2867
    %v2869 = vpop.f32.mrf.mxu0
    %2870 = vmatprep.mubr.bf16.mxu0 0
    %2871 = vmatmul.mubr.bf16.gmra.mxu0 %v2690
    %v2872 = vpop.f32.mrf.mxu0
    %v2873 = vadd.f32 %v2700, %v2872
    %v2874 = vpop.f32.mrf.mxu0
    %v2875 = vpop.f32.mrf.mxu0
    %v2876 = vadd.f32 %v2700, %v2875
    %v2877 = vpop.f32.mrf.mxu0
    %2878 = vmatprep.mubr.bf16.mxu0 0
    %2879 = vmatmul.mubr.bf16.gmra.mxu0 %v2691
    %v2880 = vpop.f32.mrf.mxu0
    %v2881 = vadd.f32 %v2700, %v2880
    %v2882 = vpop.f32.mrf.mxu0
    %v2883 = vpop.f32.mrf.mxu0
    %v2884 = vadd.f32 %v2700, %v2883
    %v2885 = vpop.f32.mrf.mxu0
    %2886 = vmatprep.mubr.bf16.mxu0 0
    %2887 = vmatmul.mubr.bf16.gmra.mxu0 %v2692
    %v2888 = vpop.f32.mrf.mxu0
    %v2889 = vadd.f32 %v2700, %v2888
    %v2890 = vpop.f32.mrf.mxu0
    %v2891 = vpop.f32.mrf.mxu0
    %v2892 = vadd.f32 %v2700, %v2891
    %v2893 = vpop.f32.mrf.mxu0
    %2894 = vmatprep.mubr.bf16.mxu0 0
    %2895 = vmatmul.mubr.bf16.gmra.mxu0 %v2693
    %v2896 = vpop.f32.mrf.mxu0
    %v2897 = vadd.f32 %v2700, %v2896
    %v2898 = vpop.f32.mrf.mxu0
    %v2899 = vpop.f32.mrf.mxu0
    %v2900 = vadd.f32 %v2700, %v2899
    %v2901 = vpop.f32.mrf.mxu0
    %2902 = vmatprep.mubr.bf16.mxu0 0
    %2903 = vmatmul.mubr.bf16.gmra.mxu0 %v2694
    %v2904 = vpop.f32.mrf.mxu0
    %v2905 = vadd.f32 %v2700, %v2904
    %v2906 = vpop.f32.mrf.mxu0
    %v2907 = vpop.f32.mrf.mxu0
    %v2908 = vadd.f32 %v2700, %v2907
    %v2909 = vpop.f32.mrf.mxu0
    %2910 = vdwg.mxu0
    %v2911 = vld [vmem:[%s41] sm:$0x1]
    %v2912 = vld [vmem:[%s43] sm:$0x1]
    %v2913 = vadd.f32 %v2785, %v2788
    %v2914 = vadd.f32 %v2913, %v2793
    %v2915 = vadd.f32 %v2914, %v2796
    %v2916 = vadd.f32 %v2915, %v2801
    %v2917 = vadd.f32 %v2916, %v2804
    %v2918 = vadd.f32 %v2917, %v2809
    %v2919 = vadd.f32 %v2918, %v2812
    %v2920 = vadd.f32 %v2919, %v2817
    %v2921 = vadd.f32 %v2920, %v2820
    %v2922 = vadd.f32 %v2921, %v2825
    %v2923 = vadd.f32 %v2922, %v2828
    %v2924 = vadd.f32 %v2923, %v2833
    %v2925 = vadd.f32 %v2924, %v2836
    %v2926 = vadd.f32 %v2925, %v2841
    %v2927 = vadd.f32 %v2926, %v2844
    %v2928 = vadd.f32 %v2927, %v2849
    %v2929 = vadd.f32 %v2928, %v2852
    %v2930 = vadd.f32 %v2929, %v2857
    %v2931 = vadd.f32 %v2930, %v2860
    %v2932 = vadd.f32 %v2931, %v2865
    %v2933 = vadd.f32 %v2932, %v2868
    %v2934 = vadd.f32 %v2933, %v2873
    %v2935 = vadd.f32 %v2934, %v2876
    %v2936 = vadd.f32 %v2935, %v2881
    %v2937 = vadd.f32 %v2936, %v2884
    %v2938 = vadd.f32 %v2937, %v2889
    %v2939 = vadd.f32 %v2938, %v2892
    %v2940 = vadd.f32 %v2939, %v2897
    %v2941 = vadd.f32 %v2940, %v2900
    %v2942 = vadd.f32 %v2941, %v2905
    %v2943 = vadd.f32 %v2942, %v2908
    %v2944 = vrot.slane %v2943, 4
    %v2945 = vadd.f32 %v2943, %v2944
    %v2946 = vrot.slane %v2945, 2
    %v2947 = vadd.f32 %v2945, %v2946
    %v2948 = vrot.slane %v2947, 1
    %v2949 = vadd.f32 %v2947, %v2948
    %v2950 = vmul.f32 %v2949, %v821
    %v2951 = vsub.f32 %v2785, %v2950
    %v2952 = vsub.f32 %v2788, %v2950
    %v2953 = vsub.f32 %v2793, %v2950
    %v2954 = vsub.f32 %v2796, %v2950
    %v2955 = vsub.f32 %v2801, %v2950
    %v2956 = vsub.f32 %v2804, %v2950
    %v2957 = vsub.f32 %v2809, %v2950
    %v2958 = vsub.f32 %v2812, %v2950
    %v2959 = vsub.f32 %v2817, %v2950
    %v2960 = vsub.f32 %v2820, %v2950
    %v2961 = vsub.f32 %v2825, %v2950
    %v2962 = vsub.f32 %v2828, %v2950
    %v2963 = vsub.f32 %v2833, %v2950
    %v2964 = vsub.f32 %v2836, %v2950
    %v2965 = vsub.f32 %v2841, %v2950
    %v2966 = vsub.f32 %v2844, %v2950
    %v2967 = vsub.f32 %v2849, %v2950
    %v2968 = vsub.f32 %v2852, %v2950
    %v2969 = vsub.f32 %v2857, %v2950
    %v2970 = vsub.f32 %v2860, %v2950
    %v2971 = vsub.f32 %v2865, %v2950
    %v2972 = vsub.f32 %v2868, %v2950
    %v2973 = vsub.f32 %v2873, %v2950
    %v2974 = vsub.f32 %v2876, %v2950
    %v2975 = vsub.f32 %v2881, %v2950
    %v2976 = vsub.f32 %v2884, %v2950
    %v2977 = vsub.f32 %v2889, %v2950
    %v2978 = vsub.f32 %v2892, %v2950
    %v2979 = vsub.f32 %v2897, %v2950
    %v2980 = vsub.f32 %v2900, %v2950
    %v2981 = vsub.f32 %v2905, %v2950
    %v2982 = vsub.f32 %v2908, %v2950
    %v2983 = vmul.f32 %v2951, %v2951
    %v2984 = vmul.f32 %v2952, %v2952
    %v2985 = vmul.f32 %v2953, %v2953
    %v2986 = vmul.f32 %v2954, %v2954
    %v2987 = vmul.f32 %v2955, %v2955
    %v2988 = vmul.f32 %v2956, %v2956
    %v2989 = vmul.f32 %v2957, %v2957
    %v2990 = vmul.f32 %v2958, %v2958
    %v2991 = vmul.f32 %v2959, %v2959
    %v2992 = vmul.f32 %v2960, %v2960
    %v2993 = vmul.f32 %v2961, %v2961
    %v2994 = vmul.f32 %v2962, %v2962
    %v2995 = vmul.f32 %v2963, %v2963
    %v2996 = vmul.f32 %v2964, %v2964
    %v2997 = vmul.f32 %v2965, %v2965
    %v2998 = vmul.f32 %v2966, %v2966
    %v2999 = vmul.f32 %v2967, %v2967
    %v3000 = vmul.f32 %v2968, %v2968
    %v3001 = vmul.f32 %v2969, %v2969
    %v3002 = vmul.f32 %v2970, %v2970
    %v3003 = vmul.f32 %v2971, %v2971
    %v3004 = vmul.f32 %v2972, %v2972
    %v3005 = vmul.f32 %v2973, %v2973
    %v3006 = vmul.f32 %v2974, %v2974
    %v3007 = vmul.f32 %v2975, %v2975
    %v3008 = vmul.f32 %v2976, %v2976
    %v3009 = vmul.f32 %v2977, %v2977
    %v3010 = vmul.f32 %v2978, %v2978
    %v3011 = vmul.f32 %v2979, %v2979
    %v3012 = vmul.f32 %v2980, %v2980
    %v3013 = vmul.f32 %v2981, %v2981
    %v3014 = vmul.f32 %v2982, %v2982
    %v3015 = vadd.f32 %v2983, %v2984
    %v3016 = vadd.f32 %v3015, %v2985
    %v3017 = vadd.f32 %v3016, %v2986
    %v3018 = vadd.f32 %v3017, %v2987
    %v3019 = vadd.f32 %v3018, %v2988
    %v3020 = vadd.f32 %v3019, %v2989
    %v3021 = vadd.f32 %v3020, %v2990
    %v3022 = vadd.f32 %v3021, %v2991
    %v3023 = vadd.f32 %v3022, %v2992
    %v3024 = vadd.f32 %v3023, %v2993
    %v3025 = vadd.f32 %v3024, %v2994
    %v3026 = vadd.f32 %v3025, %v2995
    %v3027 = vadd.f32 %v3026, %v2996
    %v3028 = vadd.f32 %v3027, %v2997
    %v3029 = vadd.f32 %v3028, %v2998
    %v3030 = vadd.f32 %v3029, %v2999
    %v3031 = vadd.f32 %v3030, %v3000
    %v3032 = vadd.f32 %v3031, %v3001
    %v3033 = vadd.f32 %v3032, %v3002
    %v3034 = vadd.f32 %v3033, %v3003
    %v3035 = vadd.f32 %v3034, %v3004
    %v3036 = vadd.f32 %v3035, %v3005
    %v3037 = vadd.f32 %v3036, %v3006
    %v3038 = vadd.f32 %v3037, %v3007
    %v3039 = vadd.f32 %v3038, %v3008
    %v3040 = vadd.f32 %v3039, %v3009
    %v3041 = vadd.f32 %v3040, %v3010
    %v3042 = vadd.f32 %v3041, %v3011
    %v3043 = vadd.f32 %v3042, %v3012
    %v3044 = vadd.f32 %v3043, %v3013
    %v3045 = vadd.f32 %v3044, %v3014
    %v3046 = vrot.slane %v3045, 4
    %v3047 = vadd.f32 %v3045, %v3046
    %v3048 = vrot.slane %v3047, 2
    %v3049 = vadd.f32 %v3047, %v3048
    %v3050 = vrot.slane %v3049, 1
    %v3051 = vadd.f32 %v3049, %v3050
    %v3052 = vmul.f32 %v3051, %v821
    %v3053 = vadd.f32 %v3052, 1e-05
    %v3054 = vrsqrt.pop %v3053
    %v3055 = vmul.f32 %v2951, %v3054
    %v3056 = vmul.f32 %v2952, %v3054
    %v3057 = vmul.f32 %v2953, %v3054
    %v3058 = vmul.f32 %v2954, %v3054
    %v3059 = vmul.f32 %v2955, %v3054
    %v3060 = vmul.f32 %v2956, %v3054
    %v3061 = vmul.f32 %v2957, %v3054
    %v3062 = vmul.f32 %v2958, %v3054
    %v3063 = vmul.f32 %v2959, %v3054
    %v3064 = vmul.f32 %v2960, %v3054
    %v3065 = vmul.f32 %v2961, %v3054
    %v3066 = vmul.f32 %v2962, %v3054
    %v3067 = vmul.f32 %v2963, %v3054
    %v3068 = vmul.f32 %v2964, %v3054
    %v3069 = vmul.f32 %v2965, %v3054
    %v3070 = vmul.f32 %v2966, %v3054
    %v3071 = vmul.f32 %v2967, %v3054
    %v3072 = vmul.f32 %v2968, %v3054
    %v3073 = vmul.f32 %v2969, %v3054
    %v3074 = vmul.f32 %v2970, %v3054
    %v3075 = vmul.f32 %v2971, %v3054
    %v3076 = vmul.f32 %v2972, %v3054
    %v3077 = vmul.f32 %v2973, %v3054
    %v3078 = vmul.f32 %v2974, %v3054
    %v3079 = vmul.f32 %v2975, %v3054
    %v3080 = vmul.f32 %v2976, %v3054
    %v3081 = vmul.f32 %v2977, %v3054
    %v3082 = vmul.f32 %v2978, %v3054
    %v3083 = vmul.f32 %v2979, %v3054
    %v3084 = vmul.f32 %v2980, %v3054
    %v3085 = vmul.f32 %v2981, %v3054
    %v3086 = vmul.f32 %v2982, %v3054
    %v3088 = vlaneseq
    %v3089 = vshrl.u32 %v3088, 7
    %v3090 = vsub.s32 0, %v3089
    %v3091 = vrot.slane %v2911, %v3090
    %v3093 = vmul.f32 %v3055, %v3091
    %v3094 = vmul.f32 %v3056, %v3091
    %v3095 = vmul.f32 %v3057, %v3091
    %v3096 = vmul.f32 %v3058, %v3091
    %v3097 = vmul.f32 %v3059, %v3091
    %v3098 = vmul.f32 %v3060, %v3091
    %v3099 = vmul.f32 %v3061, %v3091
    %v3100 = vmul.f32 %v3062, %v3091
    %v3101 = vmul.f32 %v3063, %v3091
    %v3102 = vmul.f32 %v3064, %v3091
    %v3103 = vmul.f32 %v3065, %v3091
    %v3104 = vmul.f32 %v3066, %v3091
    %v3105 = vmul.f32 %v3067, %v3091
    %v3106 = vmul.f32 %v3068, %v3091
    %v3107 = vmul.f32 %v3069, %v3091
    %v3108 = vmul.f32 %v3070, %v3091
    %v3109 = vmul.f32 %v3071, %v3091
    %v3110 = vmul.f32 %v3072, %v3091
    %v3111 = vmul.f32 %v3073, %v3091
    %v3112 = vmul.f32 %v3074, %v3091
    %v3113 = vmul.f32 %v3075, %v3091
    %v3114 = vmul.f32 %v3076, %v3091
    %v3115 = vmul.f32 %v3077, %v3091
    %v3116 = vmul.f32 %v3078, %v3091
    %v3117 = vmul.f32 %v3079, %v3091
    %v3118 = vmul.f32 %v3080, %v3091
    %v3119 = vmul.f32 %v3081, %v3091
    %v3120 = vmul.f32 %v3082, %v3091
    %v3121 = vmul.f32 %v3083, %v3091
    %v3122 = vmul.f32 %v3084, %v3091
    %v3123 = vmul.f32 %v3085, %v3091
    %v3124 = vmul.f32 %v3086, %v3091
    %v3126 = vlaneseq
    %v3127 = vshrl.u32 %v3126, 7
    %v3128 = vsub.s32 0, %v3127
    %v3129 = vrot.slane %v2912, %v3128
    %v3131 = vadd.f32 %v3093, %v3129
    %v3132 = vadd.f32 %v3094, %v3129
    %v3133 = vadd.f32 %v3095, %v3129
    %v3134 = vadd.f32 %v3096, %v3129
    %v3135 = vadd.f32 %v3097, %v3129
    %v3136 = vadd.f32 %v3098, %v3129
    %v3137 = vadd.f32 %v3099, %v3129
    %v3138 = vadd.f32 %v3100, %v3129
    %v3139 = vadd.f32 %v3101, %v3129
    %v3140 = vadd.f32 %v3102, %v3129
    %v3141 = vadd.f32 %v3103, %v3129
    %v3142 = vadd.f32 %v3104, %v3129
    %v3143 = vadd.f32 %v3105, %v3129
    %v3144 = vadd.f32 %v3106, %v3129
    %v3145 = vadd.f32 %v3107, %v3129
    %v3146 = vadd.f32 %v3108, %v3129
    %v3147 = vadd.f32 %v3109, %v3129
    %v3148 = vadd.f32 %v3110, %v3129
    %v3149 = vadd.f32 %v3111, %v3129
    %v3150 = vadd.f32 %v3112, %v3129
    %v3151 = vadd.f32 %v3113, %v3129
    %v3152 = vadd.f32 %v3114, %v3129
    %v3153 = vadd.f32 %v3115, %v3129
    %v3154 = vadd.f32 %v3116, %v3129
    %v3155 = vadd.f32 %v3117, %v3129
    %v3156 = vadd.f32 %v3118, %v3129
    %v3157 = vadd.f32 %v3119, %v3129
    %v3158 = vadd.f32 %v3120, %v3129
    %v3159 = vadd.f32 %v3121, %v3129
    %v3160 = vadd.f32 %v3122, %v3129
    %v3161 = vadd.f32 %v3123, %v3129
    %v3162 = vadd.f32 %v3124, %v3129
    %v3163 = vmax.f32 %v3131, 0.0
    %v3164 = vmax.f32 %v3132, 0.0
    %v3165 = vmax.f32 %v3133, 0.0
    %v3166 = vmax.f32 %v3134, 0.0
    %v3167 = vmax.f32 %v3135, 0.0
    %v3168 = vmax.f32 %v3136, 0.0
    %v3169 = vmax.f32 %v3137, 0.0
    %v3170 = vmax.f32 %v3138, 0.0
    %v3171 = vmax.f32 %v3139, 0.0
    %v3172 = vmax.f32 %v3140, 0.0
    %v3173 = vmax.f32 %v3141, 0.0
    %v3174 = vmax.f32 %v3142, 0.0
    %v3175 = vmax.f32 %v3143, 0.0
    %v3176 = vmax.f32 %v3144, 0.0
    %v3177 = vmax.f32 %v3145, 0.0
    %v3178 = vmax.f32 %v3146, 0.0
    %v3179 = vmax.f32 %v3147, 0.0
    %v3180 = vmax.f32 %v3148, 0.0
    %v3181 = vmax.f32 %v3149, 0.0
    %v3182 = vmax.f32 %v3150, 0.0
    %v3183 = vmax.f32 %v3151, 0.0
    %v3184 = vmax.f32 %v3152, 0.0
    %v3185 = vmax.f32 %v3153, 0.0
    %v3186 = vmax.f32 %v3154, 0.0
    %v3187 = vmax.f32 %v3155, 0.0
    %v3188 = vmax.f32 %v3156, 0.0
    %v3189 = vmax.f32 %v3157, 0.0
    %v3190 = vmax.f32 %v3158, 0.0
    %v3191 = vmax.f32 %v3159, 0.0
    %v3192 = vmax.f32 %v3160, 0.0
    %v3193 = vmax.f32 %v3161, 0.0
    %v3194 = vmax.f32 %v3162, 0.0
    %v3195 = vld [vmem:[%s45] sm:$0xf]
    %v3196 = vld [vmem:[%s45 + $0x4] sm:$0xf]
    %v3197 = vld [vmem:[%s45 + $0x8] sm:$0xf]
    %v3198 = vld [vmem:[%s45 + $0xc] sm:$0xf]
    %v3199 = vld [vmem:[%s45 + $0x10] sm:$0xf]
    %v3200 = vld [vmem:[%s45 + $0x14] sm:$0xf]
    %v3201 = vld [vmem:[%s45 + $0x18] sm:$0xf]
    %v3202 = vld [vmem:[%s45 + $0x1c] sm:$0xf]
    %v3203 = vld [vmem:[%s45 + $0x20] sm:$0xf]
    %v3204 = vld [vmem:[%s45 + $0x24] sm:$0xf]
    %v3205 = vld [vmem:[%s45 + $0x28] sm:$0xf]
    %v3206 = vld [vmem:[%s45 + $0x2c] sm:$0xf]
    %v3207 = vld [vmem:[%s45 + $0x30] sm:$0xf]
    %v3208 = vld [vmem:[%s45 + $0x34] sm:$0xf]
    %v3209 = vld [vmem:[%s45 + $0x38] sm:$0xf]
    %v3210 = vld [vmem:[%s45 + $0x3c] sm:$0xf]
    %v3211 = vpack.c.bf16 %v3164, %v3163
    %v3212 = vpack.c.bf16 %v3166, %v3165
    %v3213 = vpack.c.bf16 %v3168, %v3167
    %v3214 = vpack.c.bf16 %v3170, %v3169
    %v3215 = vpack.c.bf16 %v3172, %v3171
    %v3216 = vpack.c.bf16 %v3174, %v3173
    %v3217 = vpack.c.bf16 %v3176, %v3175
    %v3218 = vpack.c.bf16 %v3178, %v3177
    %v3219 = vpack.c.bf16 %v3180, %v3179
    %v3220 = vpack.c.bf16 %v3182, %v3181
    %v3221 = vpack.c.bf16 %v3184, %v3183
    %v3222 = vpack.c.bf16 %v3186, %v3185
    %v3223 = vpack.c.bf16 %v3188, %v3187
    %v3224 = vpack.c.bf16 %v3190, %v3189
    %v3225 = vpack.c.bf16 %v3192, %v3191
    %v3226 = vpack.c.bf16 %v3194, %v3193
    %v3227 = vld [vmem:[%s47] sm:$0x1]
    %v3229 = vlaneseq
    %v3230 = vshrl.u32 %v3229, 7
    %v3231 = vsub.s32 0, %v3230
    %v3232 = vrot.slane %v3227, %v3231
    %v3250 = vunpack.c.l.b16 %v3195
    %v3251 = vunpack.c.l.b16 %v3196
    %v3252 = vunpack.c.l.b16 %v3197
    %v3253 = vunpack.c.l.b16 %v3198
    %v3254 = vunpack.c.l.b16 %v3199
    %v3255 = vunpack.c.l.b16 %v3200
    %v3256 = vunpack.c.l.b16 %v3201
    %v3257 = vunpack.c.l.b16 %v3202
    %v3258 = vunpack.c.l.b16 %v3203
    %v3259 = vunpack.c.l.b16 %v3204
    %v3260 = vunpack.c.l.b16 %v3205
    %v3261 = vunpack.c.l.b16 %v3206
    %v3262 = vunpack.c.l.b16 %v3207
    %v3263 = vunpack.c.l.b16 %v3208
    %v3264 = vunpack.c.l.b16 %v3209
    %v3265 = vunpack.c.l.b16 %v3210
    %v3266 = vpack.c.b16 %v3251, %v3250
    %v3267 = vpack.c.b16 %v3253, %v3252
    %v3268 = vpack.c.b16 %v3255, %v3254
    %v3269 = vpack.c.b16 %v3257, %v3256
    %v3270 = vpack.c.b16 %v3259, %v3258
    %v3271 = vpack.c.b16 %v3261, %v3260
    %v3272 = vpack.c.b16 %v3263, %v3262
    %v3273 = vpack.c.b16 %v3265, %v3264
    %3282 = vmatprep.subr.bf16.mxu0 0
    %3283 = vmatpush1.bf16.msra.mxu0 %v3273
    %3284 = vmatprep.subr.bf16.mxu0 0
    %3285 = vmatpush1.bf16.msra.mxu0 %v3272
    %3286 = vmatprep.subr.bf16.mxu0 0
    %3287 = vmatpush1.bf16.msra.mxu0 %v3271
    %3288 = vmatprep.subr.bf16.mxu0 0
    %3289 = vmatpush1.bf16.msra.mxu0 %v3270
    %3290 = vmatprep.subr.bf16.mxu0 0
    %3291 = vmatpush1.bf16.msra.mxu0 %v3269
    %3292 = vmatprep.subr.bf16.mxu0 0
    %3293 = vmatpush1.bf16.msra.mxu0 %v3268
    %3294 = vmatprep.subr.bf16.mxu0 0
    %3295 = vmatpush1.bf16.msra.mxu0 %v3267
    %3296 = vmatprep.subr.bf16.mxu0 0
    %3297 = vmatpush1.bf16.msra.mxu0 %v3266
    %3298 = vmatprep.subr.bf16.mxu0 0
    %3299 = vmatpush2.bf16.msra.mxu0 0
    %3300 = vmatprep.subr.bf16.mxu0 0
    %3301 = vmatpush2.bf16.msra.mxu0 0
    %3302 = vmatprep.subr.bf16.mxu0 0
    %3303 = vmatpush2.bf16.msra.mxu0 0
    %3304 = vmatprep.subr.bf16.mxu0 0
    %3305 = vmatpush2.bf16.msra.mxu0 0
    %3306 = vmatprep.subr.bf16.mxu0 0
    %3307 = vmatpush2.bf16.msra.mxu0 0
    %3308 = vmatprep.subr.bf16.mxu0 0
    %3309 = vmatpush2.bf16.msra.mxu0 0
    %3310 = vmatprep.subr.bf16.mxu0 0
    %3311 = vmatpush2.bf16.msra.mxu0 0
    %3312 = vmatprep.subr.bf16.mxu0 0
    %3313 = vmatpush2.bf16.msra.mxu0 0
    %3314 = vmatprep.mubr.bf16.mxu0 0
    %3315 = vmatmul.mubr.bf16.gmra.mxu0 %v3211
    %v3316 = vpop.f32.mrf.mxu0
    %v3317 = vadd.f32 %v3232, %v3316
    %v3318 = vpop.f32.mrf.mxu0
    %v3319 = vpop.f32.mrf.mxu0
    %v3320 = vadd.f32 %v3232, %v3319
    %v3321 = vpop.f32.mrf.mxu0
    %3322 = vmatprep.mubr.bf16.mxu0 0
    %3323 = vmatmul.mubr.bf16.gmra.mxu0 %v3212
    %v3324 = vpop.f32.mrf.mxu0
    %v3325 = vadd.f32 %v3232, %v3324
    %v3326 = vpop.f32.mrf.mxu0
    %v3327 = vpop.f32.mrf.mxu0
    %v3328 = vadd.f32 %v3232, %v3327
    %v3329 = vpop.f32.mrf.mxu0
    %3330 = vmatprep.mubr.bf16.mxu0 0
    %3331 = vmatmul.mubr.bf16.gmra.mxu0 %v3213
    %v3332 = vpop.f32.mrf.mxu0
    %v3333 = vadd.f32 %v3232, %v3332
    %v3334 = vpop.f32.mrf.mxu0
    %v3335 = vpop.f32.mrf.mxu0
    %v3336 = vadd.f32 %v3232, %v3335
    %v3337 = vpop.f32.mrf.mxu0
    %3338 = vmatprep.mubr.bf16.mxu0 0
    %3339 = vmatmul.mubr.bf16.gmra.mxu0 %v3214
    %v3340 = vpop.f32.mrf.mxu0
    %v3341 = vadd.f32 %v3232, %v3340
    %v3342 = vpop.f32.mrf.mxu0
    %v3343 = vpop.f32.mrf.mxu0
    %v3344 = vadd.f32 %v3232, %v3343
    %v3345 = vpop.f32.mrf.mxu0
    %3346 = vmatprep.mubr.bf16.mxu0 0
    %3347 = vmatmul.mubr.bf16.gmra.mxu0 %v3215
    %v3348 = vpop.f32.mrf.mxu0
    %v3349 = vadd.f32 %v3232, %v3348
    %v3350 = vpop.f32.mrf.mxu0
    %v3351 = vpop.f32.mrf.mxu0
    %v3352 = vadd.f32 %v3232, %v3351
    %v3353 = vpop.f32.mrf.mxu0
    %3354 = vmatprep.mubr.bf16.mxu0 0
    %3355 = vmatmul.mubr.bf16.gmra.mxu0 %v3216
    %v3356 = vpop.f32.mrf.mxu0
    %v3357 = vadd.f32 %v3232, %v3356
    %v3358 = vpop.f32.mrf.mxu0
    %v3359 = vpop.f32.mrf.mxu0
    %v3360 = vadd.f32 %v3232, %v3359
    %v3361 = vpop.f32.mrf.mxu0
    %3362 = vmatprep.mubr.bf16.mxu0 0
    %3363 = vmatmul.mubr.bf16.gmra.mxu0 %v3217
    %v3364 = vpop.f32.mrf.mxu0
    %v3365 = vadd.f32 %v3232, %v3364
    %v3366 = vpop.f32.mrf.mxu0
    %v3367 = vpop.f32.mrf.mxu0
    %v3368 = vadd.f32 %v3232, %v3367
    %v3369 = vpop.f32.mrf.mxu0
    %3370 = vmatprep.mubr.bf16.mxu0 0
    %3371 = vmatmul.mubr.bf16.gmra.mxu0 %v3218
    %v3372 = vpop.f32.mrf.mxu0
    %v3373 = vadd.f32 %v3232, %v3372
    %v3374 = vpop.f32.mrf.mxu0
    %v3375 = vpop.f32.mrf.mxu0
    %v3376 = vadd.f32 %v3232, %v3375
    %v3377 = vpop.f32.mrf.mxu0
    %3378 = vmatprep.mubr.bf16.mxu0 0
    %3379 = vmatmul.mubr.bf16.gmra.mxu0 %v3219
    %v3380 = vpop.f32.mrf.mxu0
    %v3381 = vadd.f32 %v3232, %v3380
    %v3382 = vpop.f32.mrf.mxu0
    %v3383 = vpop.f32.mrf.mxu0
    %v3384 = vadd.f32 %v3232, %v3383
    %v3385 = vpop.f32.mrf.mxu0
    %3386 = vmatprep.mubr.bf16.mxu0 0
    %3387 = vmatmul.mubr.bf16.gmra.mxu0 %v3220
    %v3388 = vpop.f32.mrf.mxu0
    %v3389 = vadd.f32 %v3232, %v3388
    %v3390 = vpop.f32.mrf.mxu0
    %v3391 = vpop.f32.mrf.mxu0
    %v3392 = vadd.f32 %v3232, %v3391
    %v3393 = vpop.f32.mrf.mxu0
    %3394 = vmatprep.mubr.bf16.mxu0 0
    %3395 = vmatmul.mubr.bf16.gmra.mxu0 %v3221
    %v3396 = vpop.f32.mrf.mxu0
    %v3397 = vadd.f32 %v3232, %v3396
    %v3398 = vpop.f32.mrf.mxu0
    %v3399 = vpop.f32.mrf.mxu0
    %v3400 = vadd.f32 %v3232, %v3399
    %v3401 = vpop.f32.mrf.mxu0
    %3402 = vmatprep.mubr.bf16.mxu0 0
    %3403 = vmatmul.mubr.bf16.gmra.mxu0 %v3222
    %v3404 = vpop.f32.mrf.mxu0
    %v3405 = vadd.f32 %v3232, %v3404
    %v3406 = vpop.f32.mrf.mxu0
    %v3407 = vpop.f32.mrf.mxu0
    %v3408 = vadd.f32 %v3232, %v3407
    %v3409 = vpop.f32.mrf.mxu0
    %3410 = vmatprep.mubr.bf16.mxu0 0
    %3411 = vmatmul.mubr.bf16.gmra.mxu0 %v3223
    %v3412 = vpop.f32.mrf.mxu0
    %v3413 = vadd.f32 %v3232, %v3412
    %v3414 = vpop.f32.mrf.mxu0
    %v3415 = vpop.f32.mrf.mxu0
    %v3416 = vadd.f32 %v3232, %v3415
    %v3417 = vpop.f32.mrf.mxu0
    %3418 = vmatprep.mubr.bf16.mxu0 0
    %3419 = vmatmul.mubr.bf16.gmra.mxu0 %v3224
    %v3420 = vpop.f32.mrf.mxu0
    %v3421 = vadd.f32 %v3232, %v3420
    %v3422 = vpop.f32.mrf.mxu0
    %v3423 = vpop.f32.mrf.mxu0
    %v3424 = vadd.f32 %v3232, %v3423
    %v3425 = vpop.f32.mrf.mxu0
    %3426 = vmatprep.mubr.bf16.mxu0 0
    %3427 = vmatmul.mubr.bf16.gmra.mxu0 %v3225
    %v3428 = vpop.f32.mrf.mxu0
    %v3429 = vadd.f32 %v3232, %v3428
    %v3430 = vpop.f32.mrf.mxu0
    %v3431 = vpop.f32.mrf.mxu0
    %v3432 = vadd.f32 %v3232, %v3431
    %v3433 = vpop.f32.mrf.mxu0
    %3434 = vmatprep.mubr.bf16.mxu0 0
    %3435 = vmatmul.mubr.bf16.gmra.mxu0 %v3226
    %v3436 = vpop.f32.mrf.mxu0
    %v3437 = vadd.f32 %v3232, %v3436
    %v3438 = vpop.f32.mrf.mxu0
    %v3439 = vpop.f32.mrf.mxu0
    %v3440 = vadd.f32 %v3232, %v3439
    %v3441 = vpop.f32.mrf.mxu0
    %3442 = vdwg.mxu0
    %v3443 = vld [vmem:[%s49] sm:$0x1]
    %v3444 = vld [vmem:[%s51] sm:$0x1]
    %v3445 = vadd.f32 %v3317, %v3320
    %v3446 = vadd.f32 %v3445, %v3325
    %v3447 = vadd.f32 %v3446, %v3328
    %v3448 = vadd.f32 %v3447, %v3333
    %v3449 = vadd.f32 %v3448, %v3336
    %v3450 = vadd.f32 %v3449, %v3341
    %v3451 = vadd.f32 %v3450, %v3344
    %v3452 = vadd.f32 %v3451, %v3349
    %v3453 = vadd.f32 %v3452, %v3352
    %v3454 = vadd.f32 %v3453, %v3357
    %v3455 = vadd.f32 %v3454, %v3360
    %v3456 = vadd.f32 %v3455, %v3365
    %v3457 = vadd.f32 %v3456, %v3368
    %v3458 = vadd.f32 %v3457, %v3373
    %v3459 = vadd.f32 %v3458, %v3376
    %v3460 = vadd.f32 %v3459, %v3381
    %v3461 = vadd.f32 %v3460, %v3384
    %v3462 = vadd.f32 %v3461, %v3389
    %v3463 = vadd.f32 %v3462, %v3392
    %v3464 = vadd.f32 %v3463, %v3397
    %v3465 = vadd.f32 %v3464, %v3400
    %v3466 = vadd.f32 %v3465, %v3405
    %v3467 = vadd.f32 %v3466, %v3408
    %v3468 = vadd.f32 %v3467, %v3413
    %v3469 = vadd.f32 %v3468, %v3416
    %v3470 = vadd.f32 %v3469, %v3421
    %v3471 = vadd.f32 %v3470, %v3424
    %v3472 = vadd.f32 %v3471, %v3429
    %v3473 = vadd.f32 %v3472, %v3432
    %v3474 = vadd.f32 %v3473, %v3437
    %v3475 = vadd.f32 %v3474, %v3440
    %v3476 = vrot.slane %v3475, 4
    %v3477 = vadd.f32 %v3475, %v3476
    %v3478 = vrot.slane %v3477, 2
    %v3479 = vadd.f32 %v3477, %v3478
    %v3480 = vrot.slane %v3479, 1
    %v3481 = vadd.f32 %v3479, %v3480
    %v3482 = vmul.f32 %v3481, %v821
    %v3483 = vsub.f32 %v3317, %v3482
    %v3484 = vsub.f32 %v3320, %v3482
    %v3485 = vsub.f32 %v3325, %v3482
    %v3486 = vsub.f32 %v3328, %v3482
    %v3487 = vsub.f32 %v3333, %v3482
    %v3488 = vsub.f32 %v3336, %v3482
    %v3489 = vsub.f32 %v3341, %v3482
    %v3490 = vsub.f32 %v3344, %v3482
    %v3491 = vsub.f32 %v3349, %v3482
    %v3492 = vsub.f32 %v3352, %v3482
    %v3493 = vsub.f32 %v3357, %v3482
    %v3494 = vsub.f32 %v3360, %v3482
    %v3495 = vsub.f32 %v3365, %v3482
    %v3496 = vsub.f32 %v3368, %v3482
    %v3497 = vsub.f32 %v3373, %v3482
    %v3498 = vsub.f32 %v3376, %v3482
    %v3499 = vsub.f32 %v3381, %v3482
    %v3500 = vsub.f32 %v3384, %v3482
    %v3501 = vsub.f32 %v3389, %v3482
    %v3502 = vsub.f32 %v3392, %v3482
    %v3503 = vsub.f32 %v3397, %v3482
    %v3504 = vsub.f32 %v3400, %v3482
    %v3505 = vsub.f32 %v3405, %v3482
    %v3506 = vsub.f32 %v3408, %v3482
    %v3507 = vsub.f32 %v3413, %v3482
    %v3508 = vsub.f32 %v3416, %v3482
    %v3509 = vsub.f32 %v3421, %v3482
    %v3510 = vsub.f32 %v3424, %v3482
    %v3511 = vsub.f32 %v3429, %v3482
    %v3512 = vsub.f32 %v3432, %v3482
    %v3513 = vsub.f32 %v3437, %v3482
    %v3514 = vsub.f32 %v3440, %v3482
    %v3515 = vmul.f32 %v3483, %v3483
    %v3516 = vmul.f32 %v3484, %v3484
    %v3517 = vmul.f32 %v3485, %v3485
    %v3518 = vmul.f32 %v3486, %v3486
    %v3519 = vmul.f32 %v3487, %v3487
    %v3520 = vmul.f32 %v3488, %v3488
    %v3521 = vmul.f32 %v3489, %v3489
    %v3522 = vmul.f32 %v3490, %v3490
    %v3523 = vmul.f32 %v3491, %v3491
    %v3524 = vmul.f32 %v3492, %v3492
    %v3525 = vmul.f32 %v3493, %v3493
    %v3526 = vmul.f32 %v3494, %v3494
    %v3527 = vmul.f32 %v3495, %v3495
    %v3528 = vmul.f32 %v3496, %v3496
    %v3529 = vmul.f32 %v3497, %v3497
    %v3530 = vmul.f32 %v3498, %v3498
    %v3531 = vmul.f32 %v3499, %v3499
    %v3532 = vmul.f32 %v3500, %v3500
    %v3533 = vmul.f32 %v3501, %v3501
    %v3534 = vmul.f32 %v3502, %v3502
    %v3535 = vmul.f32 %v3503, %v3503
    %v3536 = vmul.f32 %v3504, %v3504
    %v3537 = vmul.f32 %v3505, %v3505
    %v3538 = vmul.f32 %v3506, %v3506
    %v3539 = vmul.f32 %v3507, %v3507
    %v3540 = vmul.f32 %v3508, %v3508
    %v3541 = vmul.f32 %v3509, %v3509
    %v3542 = vmul.f32 %v3510, %v3510
    %v3543 = vmul.f32 %v3511, %v3511
    %v3544 = vmul.f32 %v3512, %v3512
    %v3545 = vmul.f32 %v3513, %v3513
    %v3546 = vmul.f32 %v3514, %v3514
    %v3547 = vadd.f32 %v3515, %v3516
    %v3548 = vadd.f32 %v3547, %v3517
    %v3549 = vadd.f32 %v3548, %v3518
    %v3550 = vadd.f32 %v3549, %v3519
    %v3551 = vadd.f32 %v3550, %v3520
    %v3552 = vadd.f32 %v3551, %v3521
    %v3553 = vadd.f32 %v3552, %v3522
    %v3554 = vadd.f32 %v3553, %v3523
    %v3555 = vadd.f32 %v3554, %v3524
    %v3556 = vadd.f32 %v3555, %v3525
    %v3557 = vadd.f32 %v3556, %v3526
    %v3558 = vadd.f32 %v3557, %v3527
    %v3559 = vadd.f32 %v3558, %v3528
    %v3560 = vadd.f32 %v3559, %v3529
    %v3561 = vadd.f32 %v3560, %v3530
    %v3562 = vadd.f32 %v3561, %v3531
    %v3563 = vadd.f32 %v3562, %v3532
    %v3564 = vadd.f32 %v3563, %v3533
    %v3565 = vadd.f32 %v3564, %v3534
    %v3566 = vadd.f32 %v3565, %v3535
    %v3567 = vadd.f32 %v3566, %v3536
    %v3568 = vadd.f32 %v3567, %v3537
    %v3569 = vadd.f32 %v3568, %v3538
    %v3570 = vadd.f32 %v3569, %v3539
    %v3571 = vadd.f32 %v3570, %v3540
    %v3572 = vadd.f32 %v3571, %v3541
    %v3573 = vadd.f32 %v3572, %v3542
    %v3574 = vadd.f32 %v3573, %v3543
    %v3575 = vadd.f32 %v3574, %v3544
    %v3576 = vadd.f32 %v3575, %v3545
    %v3577 = vadd.f32 %v3576, %v3546
    %v3578 = vrot.slane %v3577, 4
    %v3579 = vadd.f32 %v3577, %v3578
    %v3580 = vrot.slane %v3579, 2
    %v3581 = vadd.f32 %v3579, %v3580
    %v3582 = vrot.slane %v3581, 1
    %v3583 = vadd.f32 %v3581, %v3582
    %v3584 = vmul.f32 %v3583, %v821
    %v3585 = vadd.f32 %v3584, 1e-05
    %v3586 = vrsqrt.pop %v3585
    %v3587 = vmul.f32 %v3483, %v3586
    %v3588 = vmul.f32 %v3484, %v3586
    %v3589 = vmul.f32 %v3485, %v3586
    %v3590 = vmul.f32 %v3486, %v3586
    %v3591 = vmul.f32 %v3487, %v3586
    %v3592 = vmul.f32 %v3488, %v3586
    %v3593 = vmul.f32 %v3489, %v3586
    %v3594 = vmul.f32 %v3490, %v3586
    %v3595 = vmul.f32 %v3491, %v3586
    %v3596 = vmul.f32 %v3492, %v3586
    %v3597 = vmul.f32 %v3493, %v3586
    %v3598 = vmul.f32 %v3494, %v3586
    %v3599 = vmul.f32 %v3495, %v3586
    %v3600 = vmul.f32 %v3496, %v3586
    %v3601 = vmul.f32 %v3497, %v3586
    %v3602 = vmul.f32 %v3498, %v3586
    %v3603 = vmul.f32 %v3499, %v3586
    %v3604 = vmul.f32 %v3500, %v3586
    %v3605 = vmul.f32 %v3501, %v3586
    %v3606 = vmul.f32 %v3502, %v3586
    %v3607 = vmul.f32 %v3503, %v3586
    %v3608 = vmul.f32 %v3504, %v3586
    %v3609 = vmul.f32 %v3505, %v3586
    %v3610 = vmul.f32 %v3506, %v3586
    %v3611 = vmul.f32 %v3507, %v3586
    %v3612 = vmul.f32 %v3508, %v3586
    %v3613 = vmul.f32 %v3509, %v3586
    %v3614 = vmul.f32 %v3510, %v3586
    %v3615 = vmul.f32 %v3511, %v3586
    %v3616 = vmul.f32 %v3512, %v3586
    %v3617 = vmul.f32 %v3513, %v3586
    %v3618 = vmul.f32 %v3514, %v3586
    %v3620 = vlaneseq
    %v3621 = vshrl.u32 %v3620, 7
    %v3622 = vsub.s32 0, %v3621
    %v3623 = vrot.slane %v3443, %v3622
    %v3625 = vmul.f32 %v3587, %v3623
    %v3626 = vmul.f32 %v3588, %v3623
    %v3627 = vmul.f32 %v3589, %v3623
    %v3628 = vmul.f32 %v3590, %v3623
    %v3629 = vmul.f32 %v3591, %v3623
    %v3630 = vmul.f32 %v3592, %v3623
    %v3631 = vmul.f32 %v3593, %v3623
    %v3632 = vmul.f32 %v3594, %v3623
    %v3633 = vmul.f32 %v3595, %v3623
    %v3634 = vmul.f32 %v3596, %v3623
    %v3635 = vmul.f32 %v3597, %v3623
    %v3636 = vmul.f32 %v3598, %v3623
    %v3637 = vmul.f32 %v3599, %v3623
    %v3638 = vmul.f32 %v3600, %v3623
    %v3639 = vmul.f32 %v3601, %v3623
    %v3640 = vmul.f32 %v3602, %v3623
    %v3641 = vmul.f32 %v3603, %v3623
    %v3642 = vmul.f32 %v3604, %v3623
    %v3643 = vmul.f32 %v3605, %v3623
    %v3644 = vmul.f32 %v3606, %v3623
    %v3645 = vmul.f32 %v3607, %v3623
    %v3646 = vmul.f32 %v3608, %v3623
    %v3647 = vmul.f32 %v3609, %v3623
    %v3648 = vmul.f32 %v3610, %v3623
    %v3649 = vmul.f32 %v3611, %v3623
    %v3650 = vmul.f32 %v3612, %v3623
    %v3651 = vmul.f32 %v3613, %v3623
    %v3652 = vmul.f32 %v3614, %v3623
    %v3653 = vmul.f32 %v3615, %v3623
    %v3654 = vmul.f32 %v3616, %v3623
    %v3655 = vmul.f32 %v3617, %v3623
    %v3656 = vmul.f32 %v3618, %v3623
    %v3658 = vlaneseq
    %v3659 = vshrl.u32 %v3658, 7
    %v3660 = vsub.s32 0, %v3659
    %v3661 = vrot.slane %v3444, %v3660
    %v3663 = vadd.f32 %v3625, %v3661
    %v3664 = vadd.f32 %v3626, %v3661
    %v3665 = vadd.f32 %v3627, %v3661
    %v3666 = vadd.f32 %v3628, %v3661
    %v3667 = vadd.f32 %v3629, %v3661
    %v3668 = vadd.f32 %v3630, %v3661
    %v3669 = vadd.f32 %v3631, %v3661
    %v3670 = vadd.f32 %v3632, %v3661
    %v3671 = vadd.f32 %v3633, %v3661
    %v3672 = vadd.f32 %v3634, %v3661
    %v3673 = vadd.f32 %v3635, %v3661
    %v3674 = vadd.f32 %v3636, %v3661
    %v3675 = vadd.f32 %v3637, %v3661
    %v3676 = vadd.f32 %v3638, %v3661
    %v3677 = vadd.f32 %v3639, %v3661
    %v3678 = vadd.f32 %v3640, %v3661
    %v3679 = vadd.f32 %v3641, %v3661
    %v3680 = vadd.f32 %v3642, %v3661
    %v3681 = vadd.f32 %v3643, %v3661
    %v3682 = vadd.f32 %v3644, %v3661
    %v3683 = vadd.f32 %v3645, %v3661
    %v3684 = vadd.f32 %v3646, %v3661
    %v3685 = vadd.f32 %v3647, %v3661
    %v3686 = vadd.f32 %v3648, %v3661
    %v3687 = vadd.f32 %v3649, %v3661
    %v3688 = vadd.f32 %v3650, %v3661
    %v3689 = vadd.f32 %v3651, %v3661
    %v3690 = vadd.f32 %v3652, %v3661
    %v3691 = vadd.f32 %v3653, %v3661
    %v3692 = vadd.f32 %v3654, %v3661
    %v3693 = vadd.f32 %v3655, %v3661
    %v3694 = vadd.f32 %v3656, %v3661
    %v3695 = vmax.f32 %v3663, 0.0
    %v3696 = vmax.f32 %v3664, 0.0
    %v3697 = vmax.f32 %v3665, 0.0
    %v3698 = vmax.f32 %v3666, 0.0
    %v3699 = vmax.f32 %v3667, 0.0
    %v3700 = vmax.f32 %v3668, 0.0
    %v3701 = vmax.f32 %v3669, 0.0
    %v3702 = vmax.f32 %v3670, 0.0
    %v3703 = vmax.f32 %v3671, 0.0
    %v3704 = vmax.f32 %v3672, 0.0
    %v3705 = vmax.f32 %v3673, 0.0
    %v3706 = vmax.f32 %v3674, 0.0
    %v3707 = vmax.f32 %v3675, 0.0
    %v3708 = vmax.f32 %v3676, 0.0
    %v3709 = vmax.f32 %v3677, 0.0
    %v3710 = vmax.f32 %v3678, 0.0
    %v3711 = vmax.f32 %v3679, 0.0
    %v3712 = vmax.f32 %v3680, 0.0
    %v3713 = vmax.f32 %v3681, 0.0
    %v3714 = vmax.f32 %v3682, 0.0
    %v3715 = vmax.f32 %v3683, 0.0
    %v3716 = vmax.f32 %v3684, 0.0
    %v3717 = vmax.f32 %v3685, 0.0
    %v3718 = vmax.f32 %v3686, 0.0
    %v3719 = vmax.f32 %v3687, 0.0
    %v3720 = vmax.f32 %v3688, 0.0
    %v3721 = vmax.f32 %v3689, 0.0
    %v3722 = vmax.f32 %v3690, 0.0
    %v3723 = vmax.f32 %v3691, 0.0
    %v3724 = vmax.f32 %v3692, 0.0
    %v3725 = vmax.f32 %v3693, 0.0
    %v3726 = vmax.f32 %v3694, 0.0
    %v3727 = vld [vmem:[%s53] sm:$0xf]
    %v3728 = vld [vmem:[%s53 + $0x4] sm:$0xf]
    %v3729 = vld [vmem:[%s53 + $0x8] sm:$0xf]
    %v3730 = vld [vmem:[%s53 + $0xc] sm:$0xf]
    %v3731 = vld [vmem:[%s53 + $0x10] sm:$0xf]
    %v3732 = vld [vmem:[%s53 + $0x14] sm:$0xf]
    %v3733 = vld [vmem:[%s53 + $0x18] sm:$0xf]
    %v3734 = vld [vmem:[%s53 + $0x1c] sm:$0xf]
    %v3735 = vld [vmem:[%s53 + $0x20] sm:$0xf]
    %v3736 = vld [vmem:[%s53 + $0x24] sm:$0xf]
    %v3737 = vld [vmem:[%s53 + $0x28] sm:$0xf]
    %v3738 = vld [vmem:[%s53 + $0x2c] sm:$0xf]
    %v3739 = vld [vmem:[%s53 + $0x30] sm:$0xf]
    %v3740 = vld [vmem:[%s53 + $0x34] sm:$0xf]
    %v3741 = vld [vmem:[%s53 + $0x38] sm:$0xf]
    %v3742 = vld [vmem:[%s53 + $0x3c] sm:$0xf]
    %v3743 = vpack.c.bf16 %v3696, %v3695
    %v3744 = vpack.c.bf16 %v3698, %v3697
    %v3745 = vpack.c.bf16 %v3700, %v3699
    %v3746 = vpack.c.bf16 %v3702, %v3701
    %v3747 = vpack.c.bf16 %v3704, %v3703
    %v3748 = vpack.c.bf16 %v3706, %v3705
    %v3749 = vpack.c.bf16 %v3708, %v3707
    %v3750 = vpack.c.bf16 %v3710, %v3709
    %v3751 = vpack.c.bf16 %v3712, %v3711
    %v3752 = vpack.c.bf16 %v3714, %v3713
    %v3753 = vpack.c.bf16 %v3716, %v3715
    %v3754 = vpack.c.bf16 %v3718, %v3717
    %v3755 = vpack.c.bf16 %v3720, %v3719
    %v3756 = vpack.c.bf16 %v3722, %v3721
    %v3757 = vpack.c.bf16 %v3724, %v3723
    %v3758 = vpack.c.bf16 %v3726, %v3725
    %v3759 = vld [vmem:[%s55] sm:$0x1]
    %v3761 = vlaneseq
    %v3762 = vshrl.u32 %v3761, 7
    %v3763 = vsub.s32 0, %v3762
    %v3764 = vrot.slane %v3759, %v3763
    %v3782 = vunpack.c.l.b16 %v3727
    %v3783 = vunpack.c.l.b16 %v3728
    %v3784 = vunpack.c.l.b16 %v3729
    %v3785 = vunpack.c.l.b16 %v3730
    %v3786 = vunpack.c.l.b16 %v3731
    %v3787 = vunpack.c.l.b16 %v3732
    %v3788 = vunpack.c.l.b16 %v3733
    %v3789 = vunpack.c.l.b16 %v3734
    %v3790 = vunpack.c.l.b16 %v3735
    %v3791 = vunpack.c.l.b16 %v3736
    %v3792 = vunpack.c.l.b16 %v3737
    %v3793 = vunpack.c.l.b16 %v3738
    %v3794 = vunpack.c.l.b16 %v3739
    %v3795 = vunpack.c.l.b16 %v3740
    %v3796 = vunpack.c.l.b16 %v3741
    %v3797 = vunpack.c.l.b16 %v3742
    %v3798 = vpack.c.b16 %v3783, %v3782
    %v3799 = vpack.c.b16 %v3785, %v3784
    %v3800 = vpack.c.b16 %v3787, %v3786
    %v3801 = vpack.c.b16 %v3789, %v3788
    %v3802 = vpack.c.b16 %v3791, %v3790
    %v3803 = vpack.c.b16 %v3793, %v3792
    %v3804 = vpack.c.b16 %v3795, %v3794
    %v3805 = vpack.c.b16 %v3797, %v3796
    %3814 = vmatprep.subr.bf16.mxu0 0
    %3815 = vmatpush1.bf16.msra.mxu0 %v3805
    %3816 = vmatprep.subr.bf16.mxu0 0
    %3817 = vmatpush1.bf16.msra.mxu0 %v3804
    %3818 = vmatprep.subr.bf16.mxu0 0
    %3819 = vmatpush1.bf16.msra.mxu0 %v3803
    %3820 = vmatprep.subr.bf16.mxu0 0
    %3821 = vmatpush1.bf16.msra.mxu0 %v3802
    %3822 = vmatprep.subr.bf16.mxu0 0
    %3823 = vmatpush1.bf16.msra.mxu0 %v3801
    %3824 = vmatprep.subr.bf16.mxu0 0
    %3825 = vmatpush1.bf16.msra.mxu0 %v3800
    %3826 = vmatprep.subr.bf16.mxu0 0
    %3827 = vmatpush1.bf16.msra.mxu0 %v3799
    %3828 = vmatprep.subr.bf16.mxu0 0
    %3829 = vmatpush1.bf16.msra.mxu0 %v3798
    %3830 = vmatprep.subr.bf16.mxu0 0
    %3831 = vmatpush2.bf16.msra.mxu0 0
    %3832 = vmatprep.subr.bf16.mxu0 0
    %3833 = vmatpush2.bf16.msra.mxu0 0
    %3834 = vmatprep.subr.bf16.mxu0 0
    %3835 = vmatpush2.bf16.msra.mxu0 0
    %3836 = vmatprep.subr.bf16.mxu0 0
    %3837 = vmatpush2.bf16.msra.mxu0 0
    %3838 = vmatprep.subr.bf16.mxu0 0
    %3839 = vmatpush2.bf16.msra.mxu0 0
    %3840 = vmatprep.subr.bf16.mxu0 0
    %3841 = vmatpush2.bf16.msra.mxu0 0
    %3842 = vmatprep.subr.bf16.mxu0 0
    %3843 = vmatpush2.bf16.msra.mxu0 0
    %3844 = vmatprep.subr.bf16.mxu0 0
    %3845 = vmatpush2.bf16.msra.mxu0 0
    %3846 = vmatprep.mubr.bf16.mxu0 0
    %3847 = vmatmul.mubr.bf16.gmra.mxu0 %v3743
    %v3848 = vpop.f32.mrf.mxu0
    %v3849 = vadd.f32 %v3764, %v3848
    %v3850 = vpop.f32.mrf.mxu0
    %v3851 = vpop.f32.mrf.mxu0
    %v3852 = vadd.f32 %v3764, %v3851
    %v3853 = vpop.f32.mrf.mxu0
    %3854 = vmatprep.mubr.bf16.mxu0 0
    %3855 = vmatmul.mubr.bf16.gmra.mxu0 %v3744
    %v3856 = vpop.f32.mrf.mxu0
    %v3857 = vadd.f32 %v3764, %v3856
    %v3858 = vpop.f32.mrf.mxu0
    %v3859 = vpop.f32.mrf.mxu0
    %v3860 = vadd.f32 %v3764, %v3859
    %v3861 = vpop.f32.mrf.mxu0
    %3862 = vmatprep.mubr.bf16.mxu0 0
    %3863 = vmatmul.mubr.bf16.gmra.mxu0 %v3745
    %v3864 = vpop.f32.mrf.mxu0
    %v3865 = vadd.f32 %v3764, %v3864
    %v3866 = vpop.f32.mrf.mxu0
    %v3867 = vpop.f32.mrf.mxu0
    %v3868 = vadd.f32 %v3764, %v3867
    %v3869 = vpop.f32.mrf.mxu0
    %3870 = vmatprep.mubr.bf16.mxu0 0
    %3871 = vmatmul.mubr.bf16.gmra.mxu0 %v3746
    %v3872 = vpop.f32.mrf.mxu0
    %v3873 = vadd.f32 %v3764, %v3872
    %v3874 = vpop.f32.mrf.mxu0
    %v3875 = vpop.f32.mrf.mxu0
    %v3876 = vadd.f32 %v3764, %v3875
    %v3877 = vpop.f32.mrf.mxu0
    %3878 = vmatprep.mubr.bf16.mxu0 0
    %3879 = vmatmul.mubr.bf16.gmra.mxu0 %v3747
    %v3880 = vpop.f32.mrf.mxu0
    %v3881 = vadd.f32 %v3764, %v3880
    %v3882 = vpop.f32.mrf.mxu0
    %v3883 = vpop.f32.mrf.mxu0
    %v3884 = vadd.f32 %v3764, %v3883
    %v3885 = vpop.f32.mrf.mxu0
    %3886 = vmatprep.mubr.bf16.mxu0 0
    %3887 = vmatmul.mubr.bf16.gmra.mxu0 %v3748
    %v3888 = vpop.f32.mrf.mxu0
    %v3889 = vadd.f32 %v3764, %v3888
    %v3890 = vpop.f32.mrf.mxu0
    %v3891 = vpop.f32.mrf.mxu0
    %v3892 = vadd.f32 %v3764, %v3891
    %v3893 = vpop.f32.mrf.mxu0
    %3894 = vmatprep.mubr.bf16.mxu0 0
    %3895 = vmatmul.mubr.bf16.gmra.mxu0 %v3749
    %v3896 = vpop.f32.mrf.mxu0
    %v3897 = vadd.f32 %v3764, %v3896
    %v3898 = vpop.f32.mrf.mxu0
    %v3899 = vpop.f32.mrf.mxu0
    %v3900 = vadd.f32 %v3764, %v3899
    %v3901 = vpop.f32.mrf.mxu0
    %3902 = vmatprep.mubr.bf16.mxu0 0
    %3903 = vmatmul.mubr.bf16.gmra.mxu0 %v3750
    %v3904 = vpop.f32.mrf.mxu0
    %v3905 = vadd.f32 %v3764, %v3904
    %v3906 = vpop.f32.mrf.mxu0
    %v3907 = vpop.f32.mrf.mxu0
    %v3908 = vadd.f32 %v3764, %v3907
    %v3909 = vpop.f32.mrf.mxu0
    %3910 = vmatprep.mubr.bf16.mxu0 0
    %3911 = vmatmul.mubr.bf16.gmra.mxu0 %v3751
    %v3912 = vpop.f32.mrf.mxu0
    %v3913 = vadd.f32 %v3764, %v3912
    %v3914 = vpop.f32.mrf.mxu0
    %v3915 = vpop.f32.mrf.mxu0
    %v3916 = vadd.f32 %v3764, %v3915
    %v3917 = vpop.f32.mrf.mxu0
    %3918 = vmatprep.mubr.bf16.mxu0 0
    %3919 = vmatmul.mubr.bf16.gmra.mxu0 %v3752
    %v3920 = vpop.f32.mrf.mxu0
    %v3921 = vadd.f32 %v3764, %v3920
    %v3922 = vpop.f32.mrf.mxu0
    %v3923 = vpop.f32.mrf.mxu0
    %v3924 = vadd.f32 %v3764, %v3923
    %v3925 = vpop.f32.mrf.mxu0
    %3926 = vmatprep.mubr.bf16.mxu0 0
    %3927 = vmatmul.mubr.bf16.gmra.mxu0 %v3753
    %v3928 = vpop.f32.mrf.mxu0
    %v3929 = vadd.f32 %v3764, %v3928
    %v3930 = vpop.f32.mrf.mxu0
    %v3931 = vpop.f32.mrf.mxu0
    %v3932 = vadd.f32 %v3764, %v3931
    %v3933 = vpop.f32.mrf.mxu0
    %3934 = vmatprep.mubr.bf16.mxu0 0
    %3935 = vmatmul.mubr.bf16.gmra.mxu0 %v3754
    %v3936 = vpop.f32.mrf.mxu0
    %v3937 = vadd.f32 %v3764, %v3936
    %v3938 = vpop.f32.mrf.mxu0
    %v3939 = vpop.f32.mrf.mxu0
    %v3940 = vadd.f32 %v3764, %v3939
    %v3941 = vpop.f32.mrf.mxu0
    %3942 = vmatprep.mubr.bf16.mxu0 0
    %3943 = vmatmul.mubr.bf16.gmra.mxu0 %v3755
    %v3944 = vpop.f32.mrf.mxu0
    %v3945 = vadd.f32 %v3764, %v3944
    %v3946 = vpop.f32.mrf.mxu0
    %v3947 = vpop.f32.mrf.mxu0
    %v3948 = vadd.f32 %v3764, %v3947
    %v3949 = vpop.f32.mrf.mxu0
    %3950 = vmatprep.mubr.bf16.mxu0 0
    %3951 = vmatmul.mubr.bf16.gmra.mxu0 %v3756
    %v3952 = vpop.f32.mrf.mxu0
    %v3953 = vadd.f32 %v3764, %v3952
    %v3954 = vpop.f32.mrf.mxu0
    %v3955 = vpop.f32.mrf.mxu0
    %v3956 = vadd.f32 %v3764, %v3955
    %v3957 = vpop.f32.mrf.mxu0
    %3958 = vmatprep.mubr.bf16.mxu0 0
    %3959 = vmatmul.mubr.bf16.gmra.mxu0 %v3757
    %v3960 = vpop.f32.mrf.mxu0
    %v3961 = vadd.f32 %v3764, %v3960
    %v3962 = vpop.f32.mrf.mxu0
    %v3963 = vpop.f32.mrf.mxu0
    %v3964 = vadd.f32 %v3764, %v3963
    %v3965 = vpop.f32.mrf.mxu0
    %3966 = vmatprep.mubr.bf16.mxu0 0
    %3967 = vmatmul.mubr.bf16.gmra.mxu0 %v3758
    %v3968 = vpop.f32.mrf.mxu0
    %v3969 = vadd.f32 %v3764, %v3968
    %v3970 = vpop.f32.mrf.mxu0
    %v3971 = vpop.f32.mrf.mxu0
    %v3972 = vadd.f32 %v3764, %v3971
    %v3973 = vpop.f32.mrf.mxu0
    %3974 = vdwg.mxu0
    %v3975 = vld [vmem:[%s57] sm:$0x1]
    %v3976 = vld [vmem:[%s59] sm:$0x1]
    %v3977 = vadd.f32 %v3849, %v3852
    %v3978 = vadd.f32 %v3977, %v3857
    %v3979 = vadd.f32 %v3978, %v3860
    %v3980 = vadd.f32 %v3979, %v3865
    %v3981 = vadd.f32 %v3980, %v3868
    %v3982 = vadd.f32 %v3981, %v3873
    %v3983 = vadd.f32 %v3982, %v3876
    %v3984 = vadd.f32 %v3983, %v3881
    %v3985 = vadd.f32 %v3984, %v3884
    %v3986 = vadd.f32 %v3985, %v3889
    %v3987 = vadd.f32 %v3986, %v3892
    %v3988 = vadd.f32 %v3987, %v3897
    %v3989 = vadd.f32 %v3988, %v3900
    %v3990 = vadd.f32 %v3989, %v3905
    %v3991 = vadd.f32 %v3990, %v3908
    %v3992 = vadd.f32 %v3991, %v3913
    %v3993 = vadd.f32 %v3992, %v3916
    %v3994 = vadd.f32 %v3993, %v3921
    %v3995 = vadd.f32 %v3994, %v3924
    %v3996 = vadd.f32 %v3995, %v3929
    %v3997 = vadd.f32 %v3996, %v3932
    %v3998 = vadd.f32 %v3997, %v3937
    %v3999 = vadd.f32 %v3998, %v3940
    %v4000 = vadd.f32 %v3999, %v3945
    %v4001 = vadd.f32 %v4000, %v3948
    %v4002 = vadd.f32 %v4001, %v3953
    %v4003 = vadd.f32 %v4002, %v3956
    %v4004 = vadd.f32 %v4003, %v3961
    %v4005 = vadd.f32 %v4004, %v3964
    %v4006 = vadd.f32 %v4005, %v3969
    %v4007 = vadd.f32 %v4006, %v3972
    %v4008 = vrot.slane %v4007, 4
    %v4009 = vadd.f32 %v4007, %v4008
    %v4010 = vrot.slane %v4009, 2
    %v4011 = vadd.f32 %v4009, %v4010
    %v4012 = vrot.slane %v4011, 1
    %v4013 = vadd.f32 %v4011, %v4012
    %v4014 = vmul.f32 %v4013, %v821
    %v4015 = vsub.f32 %v3849, %v4014
    %v4016 = vsub.f32 %v3852, %v4014
    %v4017 = vsub.f32 %v3857, %v4014
    %v4018 = vsub.f32 %v3860, %v4014
    %v4019 = vsub.f32 %v3865, %v4014
    %v4020 = vsub.f32 %v3868, %v4014
    %v4021 = vsub.f32 %v3873, %v4014
    %v4022 = vsub.f32 %v3876, %v4014
    %v4023 = vsub.f32 %v3881, %v4014
    %v4024 = vsub.f32 %v3884, %v4014
    %v4025 = vsub.f32 %v3889, %v4014
    %v4026 = vsub.f32 %v3892, %v4014
    %v4027 = vsub.f32 %v3897, %v4014
    %v4028 = vsub.f32 %v3900, %v4014
    %v4029 = vsub.f32 %v3905, %v4014
    %v4030 = vsub.f32 %v3908, %v4014
    %v4031 = vsub.f32 %v3913, %v4014
    %v4032 = vsub.f32 %v3916, %v4014
    %v4033 = vsub.f32 %v3921, %v4014
    %v4034 = vsub.f32 %v3924, %v4014
    %v4035 = vsub.f32 %v3929, %v4014
    %v4036 = vsub.f32 %v3932, %v4014
    %v4037 = vsub.f32 %v3937, %v4014
    %v4038 = vsub.f32 %v3940, %v4014
    %v4039 = vsub.f32 %v3945, %v4014
    %v4040 = vsub.f32 %v3948, %v4014
    %v4041 = vsub.f32 %v3953, %v4014
    %v4042 = vsub.f32 %v3956, %v4014
    %v4043 = vsub.f32 %v3961, %v4014
    %v4044 = vsub.f32 %v3964, %v4014
    %v4045 = vsub.f32 %v3969, %v4014
    %v4046 = vsub.f32 %v3972, %v4014
    %v4047 = vmul.f32 %v4015, %v4015
    %v4048 = vmul.f32 %v4016, %v4016
    %v4049 = vmul.f32 %v4017, %v4017
    %v4050 = vmul.f32 %v4018, %v4018
    %v4051 = vmul.f32 %v4019, %v4019
    %v4052 = vmul.f32 %v4020, %v4020
    %v4053 = vmul.f32 %v4021, %v4021
    %v4054 = vmul.f32 %v4022, %v4022
    %v4055 = vmul.f32 %v4023, %v4023
    %v4056 = vmul.f32 %v4024, %v4024
    %v4057 = vmul.f32 %v4025, %v4025
    %v4058 = vmul.f32 %v4026, %v4026
    %v4059 = vmul.f32 %v4027, %v4027
    %v4060 = vmul.f32 %v4028, %v4028
    %v4061 = vmul.f32 %v4029, %v4029
    %v4062 = vmul.f32 %v4030, %v4030
    %v4063 = vmul.f32 %v4031, %v4031
    %v4064 = vmul.f32 %v4032, %v4032
    %v4065 = vmul.f32 %v4033, %v4033
    %v4066 = vmul.f32 %v4034, %v4034
    %v4067 = vmul.f32 %v4035, %v4035
    %v4068 = vmul.f32 %v4036, %v4036
    %v4069 = vmul.f32 %v4037, %v4037
    %v4070 = vmul.f32 %v4038, %v4038
    %v4071 = vmul.f32 %v4039, %v4039
    %v4072 = vmul.f32 %v4040, %v4040
    %v4073 = vmul.f32 %v4041, %v4041
    %v4074 = vmul.f32 %v4042, %v4042
    %v4075 = vmul.f32 %v4043, %v4043
    %v4076 = vmul.f32 %v4044, %v4044
    %v4077 = vmul.f32 %v4045, %v4045
    %v4078 = vmul.f32 %v4046, %v4046
    %v4079 = vadd.f32 %v4047, %v4048
    %v4080 = vadd.f32 %v4079, %v4049
    %v4081 = vadd.f32 %v4080, %v4050
    %v4082 = vadd.f32 %v4081, %v4051
    %v4083 = vadd.f32 %v4082, %v4052
    %v4084 = vadd.f32 %v4083, %v4053
    %v4085 = vadd.f32 %v4084, %v4054
    %v4086 = vadd.f32 %v4085, %v4055
    %v4087 = vadd.f32 %v4086, %v4056
    %v4088 = vadd.f32 %v4087, %v4057
    %v4089 = vadd.f32 %v4088, %v4058
    %v4090 = vadd.f32 %v4089, %v4059
    %v4091 = vadd.f32 %v4090, %v4060
    %v4092 = vadd.f32 %v4091, %v4061
    %v4093 = vadd.f32 %v4092, %v4062
    %v4094 = vadd.f32 %v4093, %v4063
    %v4095 = vadd.f32 %v4094, %v4064
    %v4096 = vadd.f32 %v4095, %v4065
    %v4097 = vadd.f32 %v4096, %v4066
    %v4098 = vadd.f32 %v4097, %v4067
    %v4099 = vadd.f32 %v4098, %v4068
    %v4100 = vadd.f32 %v4099, %v4069
    %v4101 = vadd.f32 %v4100, %v4070
    %v4102 = vadd.f32 %v4101, %v4071
    %v4103 = vadd.f32 %v4102, %v4072
    %v4104 = vadd.f32 %v4103, %v4073
    %v4105 = vadd.f32 %v4104, %v4074
    %v4106 = vadd.f32 %v4105, %v4075
    %v4107 = vadd.f32 %v4106, %v4076
    %v4108 = vadd.f32 %v4107, %v4077
    %v4109 = vadd.f32 %v4108, %v4078
    %v4110 = vrot.slane %v4109, 4
    %v4111 = vadd.f32 %v4109, %v4110
    %v4112 = vrot.slane %v4111, 2
    %v4113 = vadd.f32 %v4111, %v4112
    %v4114 = vrot.slane %v4113, 1
    %v4115 = vadd.f32 %v4113, %v4114
    %v4116 = vmul.f32 %v4115, %v821
    %v4117 = vadd.f32 %v4116, 1e-05
    %v4118 = vrsqrt.pop %v4117
    %v4119 = vmul.f32 %v4015, %v4118
    %v4120 = vmul.f32 %v4016, %v4118
    %v4121 = vmul.f32 %v4017, %v4118
    %v4122 = vmul.f32 %v4018, %v4118
    %v4123 = vmul.f32 %v4019, %v4118
    %v4124 = vmul.f32 %v4020, %v4118
    %v4125 = vmul.f32 %v4021, %v4118
    %v4126 = vmul.f32 %v4022, %v4118
    %v4127 = vmul.f32 %v4023, %v4118
    %v4128 = vmul.f32 %v4024, %v4118
    %v4129 = vmul.f32 %v4025, %v4118
    %v4130 = vmul.f32 %v4026, %v4118
    %v4131 = vmul.f32 %v4027, %v4118
    %v4132 = vmul.f32 %v4028, %v4118
    %v4133 = vmul.f32 %v4029, %v4118
    %v4134 = vmul.f32 %v4030, %v4118
    %v4135 = vmul.f32 %v4031, %v4118
    %v4136 = vmul.f32 %v4032, %v4118
    %v4137 = vmul.f32 %v4033, %v4118
    %v4138 = vmul.f32 %v4034, %v4118
    %v4139 = vmul.f32 %v4035, %v4118
    %v4140 = vmul.f32 %v4036, %v4118
    %v4141 = vmul.f32 %v4037, %v4118
    %v4142 = vmul.f32 %v4038, %v4118
    %v4143 = vmul.f32 %v4039, %v4118
    %v4144 = vmul.f32 %v4040, %v4118
    %v4145 = vmul.f32 %v4041, %v4118
    %v4146 = vmul.f32 %v4042, %v4118
    %v4147 = vmul.f32 %v4043, %v4118
    %v4148 = vmul.f32 %v4044, %v4118
    %v4149 = vmul.f32 %v4045, %v4118
    %v4150 = vmul.f32 %v4046, %v4118
    %v4152 = vlaneseq
    %v4153 = vshrl.u32 %v4152, 7
    %v4154 = vsub.s32 0, %v4153
    %v4155 = vrot.slane %v3975, %v4154
    %v4157 = vmul.f32 %v4119, %v4155
    %v4158 = vmul.f32 %v4120, %v4155
    %v4159 = vmul.f32 %v4121, %v4155
    %v4160 = vmul.f32 %v4122, %v4155
    %v4161 = vmul.f32 %v4123, %v4155
    %v4162 = vmul.f32 %v4124, %v4155
    %v4163 = vmul.f32 %v4125, %v4155
    %v4164 = vmul.f32 %v4126, %v4155
    %v4165 = vmul.f32 %v4127, %v4155
    %v4166 = vmul.f32 %v4128, %v4155
    %v4167 = vmul.f32 %v4129, %v4155
    %v4168 = vmul.f32 %v4130, %v4155
    %v4169 = vmul.f32 %v4131, %v4155
    %v4170 = vmul.f32 %v4132, %v4155
    %v4171 = vmul.f32 %v4133, %v4155
    %v4172 = vmul.f32 %v4134, %v4155
    %v4173 = vmul.f32 %v4135, %v4155
    %v4174 = vmul.f32 %v4136, %v4155
    %v4175 = vmul.f32 %v4137, %v4155
    %v4176 = vmul.f32 %v4138, %v4155
    %v4177 = vmul.f32 %v4139, %v4155
    %v4178 = vmul.f32 %v4140, %v4155
    %v4179 = vmul.f32 %v4141, %v4155
    %v4180 = vmul.f32 %v4142, %v4155
    %v4181 = vmul.f32 %v4143, %v4155
    %v4182 = vmul.f32 %v4144, %v4155
    %v4183 = vmul.f32 %v4145, %v4155
    %v4184 = vmul.f32 %v4146, %v4155
    %v4185 = vmul.f32 %v4147, %v4155
    %v4186 = vmul.f32 %v4148, %v4155
    %v4187 = vmul.f32 %v4149, %v4155
    %v4188 = vmul.f32 %v4150, %v4155
    %v4190 = vlaneseq
    %v4191 = vshrl.u32 %v4190, 7
    %v4192 = vsub.s32 0, %v4191
    %v4193 = vrot.slane %v3976, %v4192
    %v4195 = vadd.f32 %v4157, %v4193
    %v4196 = vadd.f32 %v4158, %v4193
    %v4197 = vadd.f32 %v4159, %v4193
    %v4198 = vadd.f32 %v4160, %v4193
    %v4199 = vadd.f32 %v4161, %v4193
    %v4200 = vadd.f32 %v4162, %v4193
    %v4201 = vadd.f32 %v4163, %v4193
    %v4202 = vadd.f32 %v4164, %v4193
    %v4203 = vadd.f32 %v4165, %v4193
    %v4204 = vadd.f32 %v4166, %v4193
    %v4205 = vadd.f32 %v4167, %v4193
    %v4206 = vadd.f32 %v4168, %v4193
    %v4207 = vadd.f32 %v4169, %v4193
    %v4208 = vadd.f32 %v4170, %v4193
    %v4209 = vadd.f32 %v4171, %v4193
    %v4210 = vadd.f32 %v4172, %v4193
    %v4211 = vadd.f32 %v4173, %v4193
    %v4212 = vadd.f32 %v4174, %v4193
    %v4213 = vadd.f32 %v4175, %v4193
    %v4214 = vadd.f32 %v4176, %v4193
    %v4215 = vadd.f32 %v4177, %v4193
    %v4216 = vadd.f32 %v4178, %v4193
    %v4217 = vadd.f32 %v4179, %v4193
    %v4218 = vadd.f32 %v4180, %v4193
    %v4219 = vadd.f32 %v4181, %v4193
    %v4220 = vadd.f32 %v4182, %v4193
    %v4221 = vadd.f32 %v4183, %v4193
    %v4222 = vadd.f32 %v4184, %v4193
    %v4223 = vadd.f32 %v4185, %v4193
    %v4224 = vadd.f32 %v4186, %v4193
    %v4225 = vadd.f32 %v4187, %v4193
    %v4226 = vadd.f32 %v4188, %v4193
    %v4227 = vmax.f32 %v4195, 0.0
    %v4228 = vmax.f32 %v4196, 0.0
    %v4229 = vmax.f32 %v4197, 0.0
    %v4230 = vmax.f32 %v4198, 0.0
    %v4231 = vmax.f32 %v4199, 0.0
    %v4232 = vmax.f32 %v4200, 0.0
    %v4233 = vmax.f32 %v4201, 0.0
    %v4234 = vmax.f32 %v4202, 0.0
    %v4235 = vmax.f32 %v4203, 0.0
    %v4236 = vmax.f32 %v4204, 0.0
    %v4237 = vmax.f32 %v4205, 0.0
    %v4238 = vmax.f32 %v4206, 0.0
    %v4239 = vmax.f32 %v4207, 0.0
    %v4240 = vmax.f32 %v4208, 0.0
    %v4241 = vmax.f32 %v4209, 0.0
    %v4242 = vmax.f32 %v4210, 0.0
    %v4243 = vmax.f32 %v4211, 0.0
    %v4244 = vmax.f32 %v4212, 0.0
    %v4245 = vmax.f32 %v4213, 0.0
    %v4246 = vmax.f32 %v4214, 0.0
    %v4247 = vmax.f32 %v4215, 0.0
    %v4248 = vmax.f32 %v4216, 0.0
    %v4249 = vmax.f32 %v4217, 0.0
    %v4250 = vmax.f32 %v4218, 0.0
    %v4251 = vmax.f32 %v4219, 0.0
    %v4252 = vmax.f32 %v4220, 0.0
    %v4253 = vmax.f32 %v4221, 0.0
    %v4254 = vmax.f32 %v4222, 0.0
    %v4255 = vmax.f32 %v4223, 0.0
    %v4256 = vmax.f32 %v4224, 0.0
    %v4257 = vmax.f32 %v4225, 0.0
    %v4258 = vmax.f32 %v4226, 0.0
    %v4259 = vld [vmem:[%s61] sm:$0xff]
    %v4260 = vld [vmem:[%s61 + $0x8] sm:$0xff]
    %v4261 = vld [vmem:[%s61 + $0x10] sm:$0xff]
    %v4262 = vld [vmem:[%s61 + $0x18] sm:$0xff]
    %v4263 = vld [vmem:[%s61 + $0x20] sm:$0xff]
    %v4264 = vld [vmem:[%s61 + $0x28] sm:$0xff]
    %v4265 = vld [vmem:[%s61 + $0x30] sm:$0xff]
    %v4266 = vld [vmem:[%s61 + $0x38] sm:$0xff]
    %v4267 = vld [vmem:[%s61 + $0x40] sm:$0xff]
    %v4268 = vld [vmem:[%s61 + $0x48] sm:$0xff]
    %v4269 = vld [vmem:[%s61 + $0x50] sm:$0xff]
    %v4270 = vld [vmem:[%s61 + $0x58] sm:$0xff]
    %v4271 = vld [vmem:[%s61 + $0x60] sm:$0xff]
    %v4272 = vld [vmem:[%s61 + $0x68] sm:$0xff]
    %v4273 = vld [vmem:[%s61 + $0x70] sm:$0xff]
    %v4274 = vld [vmem:[%s61 + $0x78] sm:$0xff]
    %v4275 = vpack.c.bf16 %v4228, %v4227
    %v4276 = vpack.c.bf16 %v4230, %v4229
    %v4277 = vpack.c.bf16 %v4232, %v4231
    %v4278 = vpack.c.bf16 %v4234, %v4233
    %v4279 = vpack.c.bf16 %v4236, %v4235
    %v4280 = vpack.c.bf16 %v4238, %v4237
    %v4281 = vpack.c.bf16 %v4240, %v4239
    %v4282 = vpack.c.bf16 %v4242, %v4241
    %v4283 = vpack.c.bf16 %v4244, %v4243
    %v4284 = vpack.c.bf16 %v4246, %v4245
    %v4285 = vpack.c.bf16 %v4248, %v4247
    %v4286 = vpack.c.bf16 %v4250, %v4249
    %v4287 = vpack.c.bf16 %v4252, %v4251
    %v4288 = vpack.c.bf16 %v4254, %v4253
    %v4289 = vpack.c.bf16 %v4256, %v4255
    %v4290 = vpack.c.bf16 %v4258, %v4257
    %v4291 = vld [vmem:[%s63] sm:$0x3]
    %v4293 = vlaneseq
    %v4294 = vshrl.u32 %v4293, 7
    %v4295 = vsub.s32 0, %v4294
    %v4296 = vrot.slane %v4291, %v4295
    %v4297 = vlaneseq
    %v4298 = vshrl.u32 %v4297, 7
    %v4299 = vsub.s32 1, %v4298
    %v4300 = vrot.slane %v4291, %v4299
    %v4319 = vunpack.c.l.b16 %v4259
    %v4320 = vunpack.c.h.b16 %v4259
    %v4321 = vunpack.c.l.b16 %v4260
    %v4322 = vunpack.c.h.b16 %v4260
    %v4323 = vunpack.c.l.b16 %v4261
    %v4324 = vunpack.c.h.b16 %v4261
    %v4325 = vunpack.c.l.b16 %v4262
    %v4326 = vunpack.c.h.b16 %v4262
    %v4327 = vunpack.c.l.b16 %v4263
    %v4328 = vunpack.c.h.b16 %v4263
    %v4329 = vunpack.c.l.b16 %v4264
    %v4330 = vunpack.c.h.b16 %v4264
    %v4331 = vunpack.c.l.b16 %v4265
    %v4332 = vunpack.c.h.b16 %v4265
    %v4333 = vunpack.c.l.b16 %v4266
    %v4334 = vunpack.c.h.b16 %v4266
    %v4335 = vunpack.c.l.b16 %v4267
    %v4336 = vunpack.c.h.b16 %v4267
    %v4337 = vunpack.c.l.b16 %v4268
    %v4338 = vunpack.c.h.b16 %v4268
    %v4339 = vunpack.c.l.b16 %v4269
    %v4340 = vunpack.c.h.b16 %v4269
    %v4341 = vunpack.c.l.b16 %v4270
    %v4342 = vunpack.c.h.b16 %v4270
    %v4343 = vunpack.c.l.b16 %v4271
    %v4344 = vunpack.c.h.b16 %v4271
    %v4345 = vunpack.c.l.b16 %v4272
    %v4346 = vunpack.c.h.b16 %v4272
    %v4347 = vunpack.c.l.b16 %v4273
    %v4348 = vunpack.c.h.b16 %v4273
    %v4349 = vunpack.c.l.b16 %v4274
    %v4350 = vunpack.c.h.b16 %v4274
    %v4351 = vpack.c.b16 %v4321, %v4319
    %v4352 = vpack.c.b16 %v4322, %v4320
    %v4353 = vpack.c.b16 %v4325, %v4323
    %v4354 = vpack.c.b16 %v4326, %v4324
    %v4355 = vpack.c.b16 %v4329, %v4327
    %v4356 = vpack.c.b16 %v4330, %v4328
    %v4357 = vpack.c.b16 %v4333, %v4331
    %v4358 = vpack.c.b16 %v4334, %v4332
    %v4359 = vpack.c.b16 %v4337, %v4335
    %v4360 = vpack.c.b16 %v4338, %v4336
    %v4361 = vpack.c.b16 %v4341, %v4339
    %v4362 = vpack.c.b16 %v4342, %v4340
    %v4363 = vpack.c.b16 %v4345, %v4343
    %v4364 = vpack.c.b16 %v4346, %v4344
    %v4365 = vpack.c.b16 %v4349, %v4347
    %v4366 = vpack.c.b16 %v4350, %v4348
    %4383 = vmatprep.subr.bf16.mxu0 %v4366
    %4384 = vmatpush1.bf16.msra.mxu0 %v4365
    %4385 = vmatprep.subr.bf16.mxu0 %v4364
    %4386 = vmatpush1.bf16.msra.mxu0 %v4363
    %4387 = vmatprep.subr.bf16.mxu0 %v4362
    %4388 = vmatpush1.bf16.msra.mxu0 %v4361
    %4389 = vmatprep.subr.bf16.mxu0 %v4360
    %4390 = vmatpush1.bf16.msra.mxu0 %v4359
    %4391 = vmatprep.subr.bf16.mxu0 %v4358
    %4392 = vmatpush1.bf16.msra.mxu0 %v4357
    %4393 = vmatprep.subr.bf16.mxu0 %v4356
    %4394 = vmatpush1.bf16.msra.mxu0 %v4355
    %4395 = vmatprep.subr.bf16.mxu0 %v4354
    %4396 = vmatpush1.bf16.msra.mxu0 %v4353
    %4397 = vmatprep.subr.bf16.mxu0 %v4352
    %4398 = vmatpush1.bf16.msra.mxu0 %v4351
    %4399 = vmatprep.subr.bf16.mxu0 0
    %4400 = vmatpush2.bf16.msra.mxu0 0
    %4401 = vmatprep.subr.bf16.mxu0 0
    %4402 = vmatpush2.bf16.msra.mxu0 0
    %4403 = vmatprep.subr.bf16.mxu0 0
    %4404 = vmatpush2.bf16.msra.mxu0 0
    %4405 = vmatprep.subr.bf16.mxu0 0
    %4406 = vmatpush2.bf16.msra.mxu0 0
    %4407 = vmatprep.subr.bf16.mxu0 0
    %4408 = vmatpush2.bf16.msra.mxu0 0
    %4409 = vmatprep.subr.bf16.mxu0 0
    %4410 = vmatpush2.bf16.msra.mxu0 0
    %4411 = vmatprep.subr.bf16.mxu0 0
    %4412 = vmatpush2.bf16.msra.mxu0 0
    %4413 = vmatprep.subr.bf16.mxu0 0
    %4414 = vmatpush2.bf16.msra.mxu0 0
    %4415 = vmatprep.mubr.bf16.mxu0 0
    %4416 = vmatmul.mubr.bf16.gmra.mxu0 %v4275
    %v4417 = vpop.f32.mrf.mxu0
    %v4418 = vadd.f32 %v4296, %v4417
    %v4419 = vpop.f32.mrf.mxu0
    %v4420 = vadd.f32 %v4300, %v4419
    %v4421 = vpop.f32.mrf.mxu0
    %v4422 = vadd.f32 %v4296, %v4421
    %v4423 = vpop.f32.mrf.mxu0
    %v4424 = vadd.f32 %v4300, %v4423
    %4425 = vmatprep.mubr.bf16.mxu0 0
    %4426 = vmatmul.mubr.bf16.gmra.mxu0 %v4276
    %v4427 = vpop.f32.mrf.mxu0
    %v4428 = vadd.f32 %v4296, %v4427
    %v4429 = vpop.f32.mrf.mxu0
    %v4430 = vadd.f32 %v4300, %v4429
    %v4431 = vpop.f32.mrf.mxu0
    %v4432 = vadd.f32 %v4296, %v4431
    %v4433 = vpop.f32.mrf.mxu0
    %v4434 = vadd.f32 %v4300, %v4433
    %4435 = vmatprep.mubr.bf16.mxu0 0
    %4436 = vmatmul.mubr.bf16.gmra.mxu0 %v4277
    %v4437 = vpop.f32.mrf.mxu0
    %v4438 = vadd.f32 %v4296, %v4437
    %v4439 = vpop.f32.mrf.mxu0
    %v4440 = vadd.f32 %v4300, %v4439
    %v4441 = vpop.f32.mrf.mxu0
    %v4442 = vadd.f32 %v4296, %v4441
    %v4443 = vpop.f32.mrf.mxu0
    %v4444 = vadd.f32 %v4300, %v4443
    %4445 = vmatprep.mubr.bf16.mxu0 0
    %4446 = vmatmul.mubr.bf16.gmra.mxu0 %v4278
    %v4447 = vpop.f32.mrf.mxu0
    %v4448 = vadd.f32 %v4296, %v4447
    %v4449 = vpop.f32.mrf.mxu0
    %v4450 = vadd.f32 %v4300, %v4449
    %v4451 = vpop.f32.mrf.mxu0
    %v4452 = vadd.f32 %v4296, %v4451
    %v4453 = vpop.f32.mrf.mxu0
    %v4454 = vadd.f32 %v4300, %v4453
    %4455 = vmatprep.mubr.bf16.mxu0 0
    %4456 = vmatmul.mubr.bf16.gmra.mxu0 %v4279
    %v4457 = vpop.f32.mrf.mxu0
    %v4458 = vadd.f32 %v4296, %v4457
    %v4459 = vpop.f32.mrf.mxu0
    %v4460 = vadd.f32 %v4300, %v4459
    %v4461 = vpop.f32.mrf.mxu0
    %v4462 = vadd.f32 %v4296, %v4461
    %v4463 = vpop.f32.mrf.mxu0
    %v4464 = vadd.f32 %v4300, %v4463
    %4465 = vmatprep.mubr.bf16.mxu0 0
    %4466 = vmatmul.mubr.bf16.gmra.mxu0 %v4280
    %v4467 = vpop.f32.mrf.mxu0
    %v4468 = vadd.f32 %v4296, %v4467
    %v4469 = vpop.f32.mrf.mxu0
    %v4470 = vadd.f32 %v4300, %v4469
    %v4471 = vpop.f32.mrf.mxu0
    %v4472 = vadd.f32 %v4296, %v4471
    %v4473 = vpop.f32.mrf.mxu0
    %v4474 = vadd.f32 %v4300, %v4473
    %4475 = vmatprep.mubr.bf16.mxu0 0
    %4476 = vmatmul.mubr.bf16.gmra.mxu0 %v4281
    %v4477 = vpop.f32.mrf.mxu0
    %v4478 = vadd.f32 %v4296, %v4477
    %v4479 = vpop.f32.mrf.mxu0
    %v4480 = vadd.f32 %v4300, %v4479
    %v4481 = vpop.f32.mrf.mxu0
    %v4482 = vadd.f32 %v4296, %v4481
    %v4483 = vpop.f32.mrf.mxu0
    %v4484 = vadd.f32 %v4300, %v4483
    %4485 = vmatprep.mubr.bf16.mxu0 0
    %4486 = vmatmul.mubr.bf16.gmra.mxu0 %v4282
    %v4487 = vpop.f32.mrf.mxu0
    %v4488 = vadd.f32 %v4296, %v4487
    %v4489 = vpop.f32.mrf.mxu0
    %v4490 = vadd.f32 %v4300, %v4489
    %v4491 = vpop.f32.mrf.mxu0
    %v4492 = vadd.f32 %v4296, %v4491
    %v4493 = vpop.f32.mrf.mxu0
    %v4494 = vadd.f32 %v4300, %v4493
    %4495 = vmatprep.mubr.bf16.mxu0 0
    %4496 = vmatmul.mubr.bf16.gmra.mxu0 %v4283
    %v4497 = vpop.f32.mrf.mxu0
    %v4498 = vadd.f32 %v4296, %v4497
    %v4499 = vpop.f32.mrf.mxu0
    %v4500 = vadd.f32 %v4300, %v4499
    %v4501 = vpop.f32.mrf.mxu0
    %v4502 = vadd.f32 %v4296, %v4501
    %v4503 = vpop.f32.mrf.mxu0
    %v4504 = vadd.f32 %v4300, %v4503
    %4505 = vmatprep.mubr.bf16.mxu0 0
    %4506 = vmatmul.mubr.bf16.gmra.mxu0 %v4284
    %v4507 = vpop.f32.mrf.mxu0
    %v4508 = vadd.f32 %v4296, %v4507
    %v4509 = vpop.f32.mrf.mxu0
    %v4510 = vadd.f32 %v4300, %v4509
    %v4511 = vpop.f32.mrf.mxu0
    %v4512 = vadd.f32 %v4296, %v4511
    %v4513 = vpop.f32.mrf.mxu0
    %v4514 = vadd.f32 %v4300, %v4513
    %4515 = vmatprep.mubr.bf16.mxu0 0
    %4516 = vmatmul.mubr.bf16.gmra.mxu0 %v4285
    %v4517 = vpop.f32.mrf.mxu0
    %v4518 = vadd.f32 %v4296, %v4517
    %v4519 = vpop.f32.mrf.mxu0
    %v4520 = vadd.f32 %v4300, %v4519
    %v4521 = vpop.f32.mrf.mxu0
    %v4522 = vadd.f32 %v4296, %v4521
    %v4523 = vpop.f32.mrf.mxu0
    %v4524 = vadd.f32 %v4300, %v4523
    %4525 = vmatprep.mubr.bf16.mxu0 0
    %4526 = vmatmul.mubr.bf16.gmra.mxu0 %v4286
    %v4527 = vpop.f32.mrf.mxu0
    %v4528 = vadd.f32 %v4296, %v4527
    %v4529 = vpop.f32.mrf.mxu0
    %v4530 = vadd.f32 %v4300, %v4529
    %v4531 = vpop.f32.mrf.mxu0
    %v4532 = vadd.f32 %v4296, %v4531
    %v4533 = vpop.f32.mrf.mxu0
    %v4534 = vadd.f32 %v4300, %v4533
    %4535 = vmatprep.mubr.bf16.mxu0 0
    %4536 = vmatmul.mubr.bf16.gmra.mxu0 %v4287
    %v4537 = vpop.f32.mrf.mxu0
    %v4538 = vadd.f32 %v4296, %v4537
    %v4539 = vpop.f32.mrf.mxu0
    %v4540 = vadd.f32 %v4300, %v4539
    %v4541 = vpop.f32.mrf.mxu0
    %v4542 = vadd.f32 %v4296, %v4541
    %v4543 = vpop.f32.mrf.mxu0
    %v4544 = vadd.f32 %v4300, %v4543
    %4545 = vmatprep.mubr.bf16.mxu0 0
    %4546 = vmatmul.mubr.bf16.gmra.mxu0 %v4288
    %v4547 = vpop.f32.mrf.mxu0
    %v4548 = vadd.f32 %v4296, %v4547
    %v4549 = vpop.f32.mrf.mxu0
    %v4550 = vadd.f32 %v4300, %v4549
    %v4551 = vpop.f32.mrf.mxu0
    %v4552 = vadd.f32 %v4296, %v4551
    %v4553 = vpop.f32.mrf.mxu0
    %v4554 = vadd.f32 %v4300, %v4553
    %4555 = vmatprep.mubr.bf16.mxu0 0
    %4556 = vmatmul.mubr.bf16.gmra.mxu0 %v4289
    %v4557 = vpop.f32.mrf.mxu0
    %v4558 = vadd.f32 %v4296, %v4557
    %v4559 = vpop.f32.mrf.mxu0
    %v4560 = vadd.f32 %v4300, %v4559
    %v4561 = vpop.f32.mrf.mxu0
    %v4562 = vadd.f32 %v4296, %v4561
    %v4563 = vpop.f32.mrf.mxu0
    %v4564 = vadd.f32 %v4300, %v4563
    %4565 = vmatprep.mubr.bf16.mxu0 0
    %4566 = vmatmul.mubr.bf16.gmra.mxu0 %v4290
    %v4567 = vpop.f32.mrf.mxu0
    %v4568 = vadd.f32 %v4296, %v4567
    %v4569 = vpop.f32.mrf.mxu0
    %v4570 = vadd.f32 %v4300, %v4569
    %v4571 = vpop.f32.mrf.mxu0
    %v4572 = vadd.f32 %v4296, %v4571
    %v4573 = vpop.f32.mrf.mxu0
    %v4574 = vadd.f32 %v4300, %v4573
    %4575 = vdwg.mxu0
    %v4576 = vmul.f32 %v4420, 0.5
    %v4577 = vmul.f32 %v4424, 0.5
    %v4578 = vmul.f32 %v4430, 0.5
    %v4579 = vmul.f32 %v4434, 0.5
    %v4580 = vmul.f32 %v4440, 0.5
    %v4581 = vmul.f32 %v4444, 0.5
    %v4582 = vmul.f32 %v4450, 0.5
    %v4583 = vmul.f32 %v4454, 0.5
    %v4584 = vmul.f32 %v4460, 0.5
    %v4585 = vmul.f32 %v4464, 0.5
    %v4586 = vmul.f32 %v4470, 0.5
    %v4587 = vmul.f32 %v4474, 0.5
    %v4588 = vmul.f32 %v4480, 0.5
    %v4589 = vmul.f32 %v4484, 0.5
    %v4590 = vmul.f32 %v4490, 0.5
    %v4591 = vmul.f32 %v4494, 0.5
    %v4592 = vmul.f32 %v4500, 0.5
    %v4593 = vmul.f32 %v4504, 0.5
    %v4594 = vmul.f32 %v4510, 0.5
    %v4595 = vmul.f32 %v4514, 0.5
    %v4596 = vmul.f32 %v4520, 0.5
    %v4597 = vmul.f32 %v4524, 0.5
    %v4598 = vmul.f32 %v4530, 0.5
    %v4599 = vmul.f32 %v4534, 0.5
    %v4600 = vmul.f32 %v4540, 0.5
    %v4601 = vmul.f32 %v4544, 0.5
    %v4602 = vmul.f32 %v4550, 0.5
    %v4603 = vmul.f32 %v4554, 0.5
    %v4604 = vmul.f32 %v4560, 0.5
    %v4605 = vmul.f32 %v4564, 0.5
    %v4606 = vmul.f32 %v4570, 0.5
    %v4607 = vmul.f32 %v4574, 0.5
    %v4608 = vmul.f32 %v4576, 1.442695
    %v4609 = vpow.pop %v4608
    %v4610 = vmul.f32 %v4577, 1.442695
    %v4611 = vpow.pop %v4610
    %v4612 = vmul.f32 %v4578, 1.442695
    %v4613 = vpow.pop %v4612
    %v4614 = vmul.f32 %v4579, 1.442695
    %v4615 = vpow.pop %v4614
    %v4616 = vmul.f32 %v4580, 1.442695
    %v4617 = vpow.pop %v4616
    %v4618 = vmul.f32 %v4581, 1.442695
    %v4619 = vpow.pop %v4618
    %v4620 = vmul.f32 %v4582, 1.442695
    %v4621 = vpow.pop %v4620
    %v4622 = vmul.f32 %v4583, 1.442695
    %v4623 = vpow.pop %v4622
    %v4624 = vmul.f32 %v4584, 1.442695
    %v4625 = vpow.pop %v4624
    %v4626 = vmul.f32 %v4585, 1.442695
    %v4627 = vpow.pop %v4626
    %v4628 = vmul.f32 %v4586, 1.442695
    %v4629 = vpow.pop %v4628
    %v4630 = vmul.f32 %v4587, 1.442695
    %v4631 = vpow.pop %v4630
    %v4632 = vmul.f32 %v4588, 1.442695
    %v4633 = vpow.pop %v4632
    %v4634 = vmul.f32 %v4589, 1.442695
    %v4635 = vpow.pop %v4634
    %v4636 = vmul.f32 %v4590, 1.442695
    %v4637 = vpow.pop %v4636
    %v4638 = vmul.f32 %v4591, 1.442695
    %v4639 = vpow.pop %v4638
    %v4640 = vmul.f32 %v4592, 1.442695
    %v4641 = vpow.pop %v4640
    %v4642 = vmul.f32 %v4593, 1.442695
    %v4643 = vpow.pop %v4642
    %v4644 = vmul.f32 %v4594, 1.442695
    %v4645 = vpow.pop %v4644
    %v4646 = vmul.f32 %v4595, 1.442695
    %v4647 = vpow.pop %v4646
    %v4648 = vmul.f32 %v4596, 1.442695
    %v4649 = vpow.pop %v4648
    %v4650 = vmul.f32 %v4597, 1.442695
    %v4651 = vpow.pop %v4650
    %v4652 = vmul.f32 %v4598, 1.442695
    %v4653 = vpow.pop %v4652
    %v4654 = vmul.f32 %v4599, 1.442695
    %v4655 = vpow.pop %v4654
    %v4656 = vmul.f32 %v4600, 1.442695
    %v4657 = vpow.pop %v4656
    %v4658 = vmul.f32 %v4601, 1.442695
    %v4659 = vpow.pop %v4658
    %v4660 = vmul.f32 %v4602, 1.442695
    %v4661 = vpow.pop %v4660
    %v4662 = vmul.f32 %v4603, 1.442695
    %v4663 = vpow.pop %v4662
    %v4664 = vmul.f32 %v4604, 1.442695
    %v4665 = vpow.pop %v4664
    %v4666 = vmul.f32 %v4605, 1.442695
    %v4667 = vpow.pop %v4666
    %v4668 = vmul.f32 %v4606, 1.442695
    %v4669 = vpow.pop %v4668
    %v4670 = vmul.f32 %v4607, 1.442695
    %v4671 = vpow.pop %v4670
    %v4672 = vld [vmem:[%s3] sm:$0xff]
    %v4673 = vld [vmem:[%s3 + $0x8] sm:$0xff]
    %v4674 = vld [vmem:[%s3 + $0x10] sm:$0xff]
    %v4675 = vld [vmem:[%s3 + $0x18] sm:$0xff]
    %v4676 = vld [vmem:[%s3 + $0x20] sm:$0xff]
    %v4677 = vld [vmem:[%s3 + $0x28] sm:$0xff]
    %v4678 = vld [vmem:[%s3 + $0x30] sm:$0xff]
    %v4679 = vld [vmem:[%s3 + $0x38] sm:$0xff]
    %v4680 = vld [vmem:[%s3 + $0x40] sm:$0xff]
    %v4681 = vld [vmem:[%s3 + $0x48] sm:$0xff]
    %v4682 = vld [vmem:[%s3 + $0x50] sm:$0xff]
    %v4683 = vld [vmem:[%s3 + $0x58] sm:$0xff]
    %v4684 = vld [vmem:[%s3 + $0x60] sm:$0xff]
    %v4685 = vld [vmem:[%s3 + $0x68] sm:$0xff]
    %v4686 = vld [vmem:[%s3 + $0x70] sm:$0xff]
    %v4687 = vld [vmem:[%s3 + $0x78] sm:$0xff]
    %v4688 = vld [vmem:[%s3 + $0x80] sm:$0xff]
    %v4689 = vld [vmem:[%s3 + $0x88] sm:$0xff]
    %v4690 = vld [vmem:[%s3 + $0x90] sm:$0xff]
    %v4691 = vld [vmem:[%s3 + $0x98] sm:$0xff]
    %v4692 = vld [vmem:[%s3 + $0xa0] sm:$0xff]
    %v4693 = vld [vmem:[%s3 + $0xa8] sm:$0xff]
    %v4694 = vld [vmem:[%s3 + $0xb0] sm:$0xff]
    %v4695 = vld [vmem:[%s3 + $0xb8] sm:$0xff]
    %v4696 = vld [vmem:[%s3 + $0xc0] sm:$0xff]
    %v4697 = vld [vmem:[%s3 + $0xc8] sm:$0xff]
    %v4698 = vld [vmem:[%s3 + $0xd0] sm:$0xff]
    %v4699 = vld [vmem:[%s3 + $0xd8] sm:$0xff]
    %v4700 = vld [vmem:[%s3 + $0xe0] sm:$0xff]
    %v4701 = vld [vmem:[%s3 + $0xe8] sm:$0xff]
    %v4702 = vld [vmem:[%s3 + $0xf0] sm:$0xff]
    %v4703 = vld [vmem:[%s3 + $0xf8] sm:$0xff]
    %v4704 = vmul.f32 %v4672, %v4609
    %v4705 = vmul.f32 %v4673, %v4611
    %v4706 = vmul.f32 %v4674, %v4613
    %v4707 = vmul.f32 %v4675, %v4615
    %v4708 = vmul.f32 %v4676, %v4617
    %v4709 = vmul.f32 %v4677, %v4619
    %v4710 = vmul.f32 %v4678, %v4621
    %v4711 = vmul.f32 %v4679, %v4623
    %v4712 = vmul.f32 %v4680, %v4625
    %v4713 = vmul.f32 %v4681, %v4627
    %v4714 = vmul.f32 %v4682, %v4629
    %v4715 = vmul.f32 %v4683, %v4631
    %v4716 = vmul.f32 %v4684, %v4633
    %v4717 = vmul.f32 %v4685, %v4635
    %v4718 = vmul.f32 %v4686, %v4637
    %v4719 = vmul.f32 %v4687, %v4639
    %v4720 = vmul.f32 %v4688, %v4641
    %v4721 = vmul.f32 %v4689, %v4643
    %v4722 = vmul.f32 %v4690, %v4645
    %v4723 = vmul.f32 %v4691, %v4647
    %v4724 = vmul.f32 %v4692, %v4649
    %v4725 = vmul.f32 %v4693, %v4651
    %v4726 = vmul.f32 %v4694, %v4653
    %v4727 = vmul.f32 %v4695, %v4655
    %v4728 = vmul.f32 %v4696, %v4657
    %v4729 = vmul.f32 %v4697, %v4659
    %v4730 = vmul.f32 %v4698, %v4661
    %v4731 = vmul.f32 %v4699, %v4663
    %v4732 = vmul.f32 %v4700, %v4665
    %v4733 = vmul.f32 %v4701, %v4667
    %v4734 = vmul.f32 %v4702, %v4669
    %v4735 = vmul.f32 %v4703, %v4671
    %v4736 = vadd.f32 %v4418, %v4704
    %v4737 = vadd.f32 %v4422, %v4705
    %v4738 = vadd.f32 %v4428, %v4706
    %v4739 = vadd.f32 %v4432, %v4707
    %v4740 = vadd.f32 %v4438, %v4708
    %v4741 = vadd.f32 %v4442, %v4709
    %v4742 = vadd.f32 %v4448, %v4710
    %v4743 = vadd.f32 %v4452, %v4711
    %v4744 = vadd.f32 %v4458, %v4712
    %v4745 = vadd.f32 %v4462, %v4713
    %v4746 = vadd.f32 %v4468, %v4714
    %v4747 = vadd.f32 %v4472, %v4715
    %v4748 = vadd.f32 %v4478, %v4716
    %v4749 = vadd.f32 %v4482, %v4717
    %v4750 = vadd.f32 %v4488, %v4718
    %v4751 = vadd.f32 %v4492, %v4719
    %v4752 = vadd.f32 %v4498, %v4720
    %v4753 = vadd.f32 %v4502, %v4721
    %v4754 = vadd.f32 %v4508, %v4722
    %v4755 = vadd.f32 %v4512, %v4723
    %v4756 = vadd.f32 %v4518, %v4724
    %v4757 = vadd.f32 %v4522, %v4725
    %v4758 = vadd.f32 %v4528, %v4726
    %v4759 = vadd.f32 %v4532, %v4727
    %v4760 = vadd.f32 %v4538, %v4728
    %v4761 = vadd.f32 %v4542, %v4729
    %v4762 = vadd.f32 %v4548, %v4730
    %v4763 = vadd.f32 %v4552, %v4731
    %v4764 = vadd.f32 %v4558, %v4732
    %v4765 = vadd.f32 %v4562, %v4733
    %v4766 = vadd.f32 %v4568, %v4734
    %v4767 = vadd.f32 %v4572, %v4735
    %4768 = vst [vmem:[%s127] sm:$0xff] %v4418
    %4769 = vst [vmem:[%s127 + $0x8] sm:$0xff] %v4422
    %4770 = vst [vmem:[%s127 + $0x10] sm:$0xff] %v4428
    %4771 = vst [vmem:[%s127 + $0x18] sm:$0xff] %v4432
    %4772 = vst [vmem:[%s127 + $0x20] sm:$0xff] %v4438
    %4773 = vst [vmem:[%s127 + $0x28] sm:$0xff] %v4442
    %4774 = vst [vmem:[%s127 + $0x30] sm:$0xff] %v4448
    %4775 = vst [vmem:[%s127 + $0x38] sm:$0xff] %v4452
    %4776 = vst [vmem:[%s127 + $0x40] sm:$0xff] %v4458
    %4777 = vst [vmem:[%s127 + $0x48] sm:$0xff] %v4462
    %4778 = vst [vmem:[%s127 + $0x50] sm:$0xff] %v4468
    %4779 = vst [vmem:[%s127 + $0x58] sm:$0xff] %v4472
    %4780 = vst [vmem:[%s127 + $0x60] sm:$0xff] %v4478
    %4781 = vst [vmem:[%s127 + $0x68] sm:$0xff] %v4482
    %4782 = vst [vmem:[%s127 + $0x70] sm:$0xff] %v4488
    %4783 = vst [vmem:[%s127 + $0x78] sm:$0xff] %v4492
    %4784 = vst [vmem:[%s127 + $0x80] sm:$0xff] %v4498
    %4785 = vst [vmem:[%s127 + $0x88] sm:$0xff] %v4502
    %4786 = vst [vmem:[%s127 + $0x90] sm:$0xff] %v4508
    %4787 = vst [vmem:[%s127 + $0x98] sm:$0xff] %v4512
    %4788 = vst [vmem:[%s127 + $0xa0] sm:$0xff] %v4518
    %4789 = vst [vmem:[%s127 + $0xa8] sm:$0xff] %v4522
    %4790 = vst [vmem:[%s127 + $0xb0] sm:$0xff] %v4528
    %4791 = vst [vmem:[%s127 + $0xb8] sm:$0xff] %v4532
    %4792 = vst [vmem:[%s127 + $0xc0] sm:$0xff] %v4538
    %4793 = vst [vmem:[%s127 + $0xc8] sm:$0xff] %v4542
    %4794 = vst [vmem:[%s127 + $0xd0] sm:$0xff] %v4548
    %4795 = vst [vmem:[%s127 + $0xd8] sm:$0xff] %v4552
    %4796 = vst [vmem:[%s127 + $0xe0] sm:$0xff] %v4558
    %4797 = vst [vmem:[%s127 + $0xe8] sm:$0xff] %v4562
    %4798 = vst [vmem:[%s127 + $0xf0] sm:$0xff] %v4568
    %4799 = vst [vmem:[%s127 + $0xf8] sm:$0xff] %v4572
    %4800 = vst [vmem:[%s129] sm:$0xff] %v4420
    %4801 = vst [vmem:[%s129 + $0x8] sm:$0xff] %v4424
    %4802 = vst [vmem:[%s129 + $0x10] sm:$0xff] %v4430
    %4803 = vst [vmem:[%s129 + $0x18] sm:$0xff] %v4434
    %4804 = vst [vmem:[%s129 + $0x20] sm:$0xff] %v4440
    %4805 = vst [vmem:[%s129 + $0x28] sm:$0xff] %v4444
    %4806 = vst [vmem:[%s129 + $0x30] sm:$0xff] %v4450
    %4807 = vst [vmem:[%s129 + $0x38] sm:$0xff] %v4454
    %4808 = vst [vmem:[%s129 + $0x40] sm:$0xff] %v4460
    %4809 = vst [vmem:[%s129 + $0x48] sm:$0xff] %v4464
    %4810 = vst [vmem:[%s129 + $0x50] sm:$0xff] %v4470
    %4811 = vst [vmem:[%s129 + $0x58] sm:$0xff] %v4474
    %4812 = vst [vmem:[%s129 + $0x60] sm:$0xff] %v4480
    %4813 = vst [vmem:[%s129 + $0x68] sm:$0xff] %v4484
    %4814 = vst [vmem:[%s129 + $0x70] sm:$0xff] %v4490
    %4815 = vst [vmem:[%s129 + $0x78] sm:$0xff] %v4494
    %4816 = vst [vmem:[%s129 + $0x80] sm:$0xff] %v4500
    %4817 = vst [vmem:[%s129 + $0x88] sm:$0xff] %v4504
    %4818 = vst [vmem:[%s129 + $0x90] sm:$0xff] %v4510
    %4819 = vst [vmem:[%s129 + $0x98] sm:$0xff] %v4514
    %4820 = vst [vmem:[%s129 + $0xa0] sm:$0xff] %v4520
    %4821 = vst [vmem:[%s129 + $0xa8] sm:$0xff] %v4524
    %4822 = vst [vmem:[%s129 + $0xb0] sm:$0xff] %v4530
    %4823 = vst [vmem:[%s129 + $0xb8] sm:$0xff] %v4534
    %4824 = vst [vmem:[%s129 + $0xc0] sm:$0xff] %v4540
    %4825 = vst [vmem:[%s129 + $0xc8] sm:$0xff] %v4544
    %4826 = vst [vmem:[%s129 + $0xd0] sm:$0xff] %v4550
    %4827 = vst [vmem:[%s129 + $0xd8] sm:$0xff] %v4554
    %4828 = vst [vmem:[%s129 + $0xe0] sm:$0xff] %v4560
    %4829 = vst [vmem:[%s129 + $0xe8] sm:$0xff] %v4564
    %4830 = vst [vmem:[%s129 + $0xf0] sm:$0xff] %v4570
    %4831 = vst [vmem:[%s129 + $0xf8] sm:$0xff] %v4574
    %v4832 = vld [vmem:[%s65] sm:$0xf]
    %v4833 = vld [vmem:[%s65 + $0x4] sm:$0xf]
    %v4834 = vld [vmem:[%s65 + $0x8] sm:$0xf]
    %v4835 = vld [vmem:[%s65 + $0xc] sm:$0xf]
    %v4836 = vld [vmem:[%s65 + $0x10] sm:$0xf]
    %v4837 = vld [vmem:[%s65 + $0x14] sm:$0xf]
    %v4838 = vld [vmem:[%s65 + $0x18] sm:$0xf]
    %v4839 = vld [vmem:[%s65 + $0x1c] sm:$0xf]
    %v4840 = vld [vmem:[%s65 + $0x20] sm:$0xf]
    %v4841 = vld [vmem:[%s65 + $0x24] sm:$0xf]
    %v4842 = vld [vmem:[%s65 + $0x28] sm:$0xf]
    %v4843 = vld [vmem:[%s65 + $0x2c] sm:$0xf]
    %v4844 = vld [vmem:[%s65 + $0x30] sm:$0xf]
    %v4845 = vld [vmem:[%s65 + $0x34] sm:$0xf]
    %v4846 = vld [vmem:[%s65 + $0x38] sm:$0xf]
    %v4847 = vld [vmem:[%s65 + $0x3c] sm:$0xf]
    %v4848 = vpack.c.bf16 %v4737, %v4736
    %v4849 = vpack.c.bf16 %v4739, %v4738
    %v4850 = vpack.c.bf16 %v4741, %v4740
    %v4851 = vpack.c.bf16 %v4743, %v4742
    %v4852 = vpack.c.bf16 %v4745, %v4744
    %v4853 = vpack.c.bf16 %v4747, %v4746
    %v4854 = vpack.c.bf16 %v4749, %v4748
    %v4855 = vpack.c.bf16 %v4751, %v4750
    %v4856 = vpack.c.bf16 %v4753, %v4752
    %v4857 = vpack.c.bf16 %v4755, %v4754
    %v4858 = vpack.c.bf16 %v4757, %v4756
    %v4859 = vpack.c.bf16 %v4759, %v4758
    %v4860 = vpack.c.bf16 %v4761, %v4760
    %v4861 = vpack.c.bf16 %v4763, %v4762
    %v4862 = vpack.c.bf16 %v4765, %v4764
    %v4863 = vpack.c.bf16 %v4767, %v4766
    %v4864 = vld [vmem:[%s67] sm:$0x1]
    %v4866 = vlaneseq
    %v4867 = vshrl.u32 %v4866, 7
    %v4868 = vsub.s32 0, %v4867
    %v4869 = vrot.slane %v4864, %v4868
    %v4887 = vunpack.c.l.b16 %v4832
    %v4888 = vunpack.c.l.b16 %v4833
    %v4889 = vunpack.c.l.b16 %v4834
    %v4890 = vunpack.c.l.b16 %v4835
    %v4891 = vunpack.c.l.b16 %v4836
    %v4892 = vunpack.c.l.b16 %v4837
    %v4893 = vunpack.c.l.b16 %v4838
    %v4894 = vunpack.c.l.b16 %v4839
    %v4895 = vunpack.c.l.b16 %v4840
    %v4896 = vunpack.c.l.b16 %v4841
    %v4897 = vunpack.c.l.b16 %v4842
    %v4898 = vunpack.c.l.b16 %v4843
    %v4899 = vunpack.c.l.b16 %v4844
    %v4900 = vunpack.c.l.b16 %v4845
    %v4901 = vunpack.c.l.b16 %v4846
    %v4902 = vunpack.c.l.b16 %v4847
    %v4903 = vpack.c.b16 %v4888, %v4887
    %v4904 = vpack.c.b16 %v4890, %v4889
    %v4905 = vpack.c.b16 %v4892, %v4891
    %v4906 = vpack.c.b16 %v4894, %v4893
    %v4907 = vpack.c.b16 %v4896, %v4895
    %v4908 = vpack.c.b16 %v4898, %v4897
    %v4909 = vpack.c.b16 %v4900, %v4899
    %v4910 = vpack.c.b16 %v4902, %v4901
    %4919 = vmatprep.subr.bf16.mxu0 0
    %4920 = vmatpush1.bf16.msra.mxu0 %v4910
    %4921 = vmatprep.subr.bf16.mxu0 0
    %4922 = vmatpush1.bf16.msra.mxu0 %v4909
    %4923 = vmatprep.subr.bf16.mxu0 0
    %4924 = vmatpush1.bf16.msra.mxu0 %v4908
    %4925 = vmatprep.subr.bf16.mxu0 0
    %4926 = vmatpush1.bf16.msra.mxu0 %v4907
    %4927 = vmatprep.subr.bf16.mxu0 0
    %4928 = vmatpush1.bf16.msra.mxu0 %v4906
    %4929 = vmatprep.subr.bf16.mxu0 0
    %4930 = vmatpush1.bf16.msra.mxu0 %v4905
    %4931 = vmatprep.subr.bf16.mxu0 0
    %4932 = vmatpush1.bf16.msra.mxu0 %v4904
    %4933 = vmatprep.subr.bf16.mxu0 0
    %4934 = vmatpush1.bf16.msra.mxu0 %v4903
    %4935 = vmatprep.subr.bf16.mxu0 0
    %4936 = vmatpush2.bf16.msra.mxu0 0
    %4937 = vmatprep.subr.bf16.mxu0 0
    %4938 = vmatpush2.bf16.msra.mxu0 0
    %4939 = vmatprep.subr.bf16.mxu0 0
    %4940 = vmatpush2.bf16.msra.mxu0 0
    %4941 = vmatprep.subr.bf16.mxu0 0
    %4942 = vmatpush2.bf16.msra.mxu0 0
    %4943 = vmatprep.subr.bf16.mxu0 0
    %4944 = vmatpush2.bf16.msra.mxu0 0
    %4945 = vmatprep.subr.bf16.mxu0 0
    %4946 = vmatpush2.bf16.msra.mxu0 0
    %4947 = vmatprep.subr.bf16.mxu0 0
    %4948 = vmatpush2.bf16.msra.mxu0 0
    %4949 = vmatprep.subr.bf16.mxu0 0
    %4950 = vmatpush2.bf16.msra.mxu0 0
    %4951 = vmatprep.mubr.bf16.mxu0 0
    %4952 = vmatmul.mubr.bf16.gmra.mxu0 %v4848
    %v4953 = vpop.f32.mrf.mxu0
    %v4954 = vadd.f32 %v4869, %v4953
    %v4955 = vpop.f32.mrf.mxu0
    %v4956 = vpop.f32.mrf.mxu0
    %v4957 = vadd.f32 %v4869, %v4956
    %v4958 = vpop.f32.mrf.mxu0
    %4959 = vmatprep.mubr.bf16.mxu0 0
    %4960 = vmatmul.mubr.bf16.gmra.mxu0 %v4849
    %v4961 = vpop.f32.mrf.mxu0
    %v4962 = vadd.f32 %v4869, %v4961
    %v4963 = vpop.f32.mrf.mxu0
    %v4964 = vpop.f32.mrf.mxu0
    %v4965 = vadd.f32 %v4869, %v4964
    %v4966 = vpop.f32.mrf.mxu0
    %4967 = vmatprep.mubr.bf16.mxu0 0
    %4968 = vmatmul.mubr.bf16.gmra.mxu0 %v4850
    %v4969 = vpop.f32.mrf.mxu0
    %v4970 = vadd.f32 %v4869, %v4969
    %v4971 = vpop.f32.mrf.mxu0
    %v4972 = vpop.f32.mrf.mxu0
    %v4973 = vadd.f32 %v4869, %v4972
    %v4974 = vpop.f32.mrf.mxu0
    %4975 = vmatprep.mubr.bf16.mxu0 0
    %4976 = vmatmul.mubr.bf16.gmra.mxu0 %v4851
    %v4977 = vpop.f32.mrf.mxu0
    %v4978 = vadd.f32 %v4869, %v4977
    %v4979 = vpop.f32.mrf.mxu0
    %v4980 = vpop.f32.mrf.mxu0
    %v4981 = vadd.f32 %v4869, %v4980
    %v4982 = vpop.f32.mrf.mxu0
    %4983 = vmatprep.mubr.bf16.mxu0 0
    %4984 = vmatmul.mubr.bf16.gmra.mxu0 %v4852
    %v4985 = vpop.f32.mrf.mxu0
    %v4986 = vadd.f32 %v4869, %v4985
    %v4987 = vpop.f32.mrf.mxu0
    %v4988 = vpop.f32.mrf.mxu0
    %v4989 = vadd.f32 %v4869, %v4988
    %v4990 = vpop.f32.mrf.mxu0
    %4991 = vmatprep.mubr.bf16.mxu0 0
    %4992 = vmatmul.mubr.bf16.gmra.mxu0 %v4853
    %v4993 = vpop.f32.mrf.mxu0
    %v4994 = vadd.f32 %v4869, %v4993
    %v4995 = vpop.f32.mrf.mxu0
    %v4996 = vpop.f32.mrf.mxu0
    %v4997 = vadd.f32 %v4869, %v4996
    %v4998 = vpop.f32.mrf.mxu0
    %4999 = vmatprep.mubr.bf16.mxu0 0
    %5000 = vmatmul.mubr.bf16.gmra.mxu0 %v4854
    %v5001 = vpop.f32.mrf.mxu0
    %v5002 = vadd.f32 %v4869, %v5001
    %v5003 = vpop.f32.mrf.mxu0
    %v5004 = vpop.f32.mrf.mxu0
    %v5005 = vadd.f32 %v4869, %v5004
    %v5006 = vpop.f32.mrf.mxu0
    %5007 = vmatprep.mubr.bf16.mxu0 0
    %5008 = vmatmul.mubr.bf16.gmra.mxu0 %v4855
    %v5009 = vpop.f32.mrf.mxu0
    %v5010 = vadd.f32 %v4869, %v5009
    %v5011 = vpop.f32.mrf.mxu0
    %v5012 = vpop.f32.mrf.mxu0
    %v5013 = vadd.f32 %v4869, %v5012
    %v5014 = vpop.f32.mrf.mxu0
    %5015 = vmatprep.mubr.bf16.mxu0 0
    %5016 = vmatmul.mubr.bf16.gmra.mxu0 %v4856
    %v5017 = vpop.f32.mrf.mxu0
    %v5018 = vadd.f32 %v4869, %v5017
    %v5019 = vpop.f32.mrf.mxu0
    %v5020 = vpop.f32.mrf.mxu0
    %v5021 = vadd.f32 %v4869, %v5020
    %v5022 = vpop.f32.mrf.mxu0
    %5023 = vmatprep.mubr.bf16.mxu0 0
    %5024 = vmatmul.mubr.bf16.gmra.mxu0 %v4857
    %v5025 = vpop.f32.mrf.mxu0
    %v5026 = vadd.f32 %v4869, %v5025
    %v5027 = vpop.f32.mrf.mxu0
    %v5028 = vpop.f32.mrf.mxu0
    %v5029 = vadd.f32 %v4869, %v5028
    %v5030 = vpop.f32.mrf.mxu0
    %5031 = vmatprep.mubr.bf16.mxu0 0
    %5032 = vmatmul.mubr.bf16.gmra.mxu0 %v4858
    %v5033 = vpop.f32.mrf.mxu0
    %v5034 = vadd.f32 %v4869, %v5033
    %v5035 = vpop.f32.mrf.mxu0
    %v5036 = vpop.f32.mrf.mxu0
    %v5037 = vadd.f32 %v4869, %v5036
    %v5038 = vpop.f32.mrf.mxu0
    %5039 = vmatprep.mubr.bf16.mxu0 0
    %5040 = vmatmul.mubr.bf16.gmra.mxu0 %v4859
    %v5041 = vpop.f32.mrf.mxu0
    %v5042 = vadd.f32 %v4869, %v5041
    %v5043 = vpop.f32.mrf.mxu0
    %v5044 = vpop.f32.mrf.mxu0
    %v5045 = vadd.f32 %v4869, %v5044
    %v5046 = vpop.f32.mrf.mxu0
    %5047 = vmatprep.mubr.bf16.mxu0 0
    %5048 = vmatmul.mubr.bf16.gmra.mxu0 %v4860
    %v5049 = vpop.f32.mrf.mxu0
    %v5050 = vadd.f32 %v4869, %v5049
    %v5051 = vpop.f32.mrf.mxu0
    %v5052 = vpop.f32.mrf.mxu0
    %v5053 = vadd.f32 %v4869, %v5052
    %v5054 = vpop.f32.mrf.mxu0
    %5055 = vmatprep.mubr.bf16.mxu0 0
    %5056 = vmatmul.mubr.bf16.gmra.mxu0 %v4861
    %v5057 = vpop.f32.mrf.mxu0
    %v5058 = vadd.f32 %v4869, %v5057
    %v5059 = vpop.f32.mrf.mxu0
    %v5060 = vpop.f32.mrf.mxu0
    %v5061 = vadd.f32 %v4869, %v5060
    %v5062 = vpop.f32.mrf.mxu0
    %5063 = vmatprep.mubr.bf16.mxu0 0
    %5064 = vmatmul.mubr.bf16.gmra.mxu0 %v4862
    %v5065 = vpop.f32.mrf.mxu0
    %v5066 = vadd.f32 %v4869, %v5065
    %v5067 = vpop.f32.mrf.mxu0
    %v5068 = vpop.f32.mrf.mxu0
    %v5069 = vadd.f32 %v4869, %v5068
    %v5070 = vpop.f32.mrf.mxu0
    %5071 = vmatprep.mubr.bf16.mxu0 0
    %5072 = vmatmul.mubr.bf16.gmra.mxu0 %v4863
    %v5073 = vpop.f32.mrf.mxu0
    %v5074 = vadd.f32 %v4869, %v5073
    %v5075 = vpop.f32.mrf.mxu0
    %v5076 = vpop.f32.mrf.mxu0
    %v5077 = vadd.f32 %v4869, %v5076
    %v5078 = vpop.f32.mrf.mxu0
    %5079 = vdwg.mxu0
    %v5080 = vld [vmem:[#allocation2] sm:$0x1]
    %v5081 = vld [vmem:[#allocation4] sm:$0x1]
    %v5082 = vadd.f32 %v4954, %v4957
    %v5083 = vadd.f32 %v5082, %v4962
    %v5084 = vadd.f32 %v5083, %v4965
    %v5085 = vadd.f32 %v5084, %v4970
    %v5086 = vadd.f32 %v5085, %v4973
    %v5087 = vadd.f32 %v5086, %v4978
    %v5088 = vadd.f32 %v5087, %v4981
    %v5089 = vadd.f32 %v5088, %v4986
    %v5090 = vadd.f32 %v5089, %v4989
    %v5091 = vadd.f32 %v5090, %v4994
    %v5092 = vadd.f32 %v5091, %v4997
    %v5093 = vadd.f32 %v5092, %v5002
    %v5094 = vadd.f32 %v5093, %v5005
    %v5095 = vadd.f32 %v5094, %v5010
    %v5096 = vadd.f32 %v5095, %v5013
    %v5097 = vadd.f32 %v5096, %v5018
    %v5098 = vadd.f32 %v5097, %v5021
    %v5099 = vadd.f32 %v5098, %v5026
    %v5100 = vadd.f32 %v5099, %v5029
    %v5101 = vadd.f32 %v5100, %v5034
    %v5102 = vadd.f32 %v5101, %v5037
    %v5103 = vadd.f32 %v5102, %v5042
    %v5104 = vadd.f32 %v5103, %v5045
    %v5105 = vadd.f32 %v5104, %v5050
    %v5106 = vadd.f32 %v5105, %v5053
    %v5107 = vadd.f32 %v5106, %v5058
    %v5108 = vadd.f32 %v5107, %v5061
    %v5109 = vadd.f32 %v5108, %v5066
    %v5110 = vadd.f32 %v5109, %v5069
    %v5111 = vadd.f32 %v5110, %v5074
    %v5112 = vadd.f32 %v5111, %v5077
    %v5113 = vrot.slane %v5112, 4
    %v5114 = vadd.f32 %v5112, %v5113
    %v5115 = vrot.slane %v5114, 2
    %v5116 = vadd.f32 %v5114, %v5115
    %v5117 = vrot.slane %v5116, 1
    %v5118 = vadd.f32 %v5116, %v5117
    %v5119 = vmul.f32 %v5118, %v821
    %v5120 = vsub.f32 %v4954, %v5119
    %v5121 = vsub.f32 %v4957, %v5119
    %v5122 = vsub.f32 %v4962, %v5119
    %v5123 = vsub.f32 %v4965, %v5119
    %v5124 = vsub.f32 %v4970, %v5119
    %v5125 = vsub.f32 %v4973, %v5119
    %v5126 = vsub.f32 %v4978, %v5119
    %v5127 = vsub.f32 %v4981, %v5119
    %v5128 = vsub.f32 %v4986, %v5119
    %v5129 = vsub.f32 %v4989, %v5119
    %v5130 = vsub.f32 %v4994, %v5119
    %v5131 = vsub.f32 %v4997, %v5119
    %v5132 = vsub.f32 %v5002, %v5119
    %v5133 = vsub.f32 %v5005, %v5119
    %v5134 = vsub.f32 %v5010, %v5119
    %v5135 = vsub.f32 %v5013, %v5119
    %v5136 = vsub.f32 %v5018, %v5119
    %v5137 = vsub.f32 %v5021, %v5119
    %v5138 = vsub.f32 %v5026, %v5119
    %v5139 = vsub.f32 %v5029, %v5119
    %v5140 = vsub.f32 %v5034, %v5119
    %v5141 = vsub.f32 %v5037, %v5119
    %v5142 = vsub.f32 %v5042, %v5119
    %v5143 = vsub.f32 %v5045, %v5119
    %v5144 = vsub.f32 %v5050, %v5119
    %v5145 = vsub.f32 %v5053, %v5119
    %v5146 = vsub.f32 %v5058, %v5119
    %v5147 = vsub.f32 %v5061, %v5119
    %v5148 = vsub.f32 %v5066, %v5119
    %v5149 = vsub.f32 %v5069, %v5119
    %v5150 = vsub.f32 %v5074, %v5119
    %v5151 = vsub.f32 %v5077, %v5119
    %v5152 = vmul.f32 %v5120, %v5120
    %v5153 = vmul.f32 %v5121, %v5121
    %v5154 = vmul.f32 %v5122, %v5122
    %v5155 = vmul.f32 %v5123, %v5123
    %v5156 = vmul.f32 %v5124, %v5124
    %v5157 = vmul.f32 %v5125, %v5125
    %v5158 = vmul.f32 %v5126, %v5126
    %v5159 = vmul.f32 %v5127, %v5127
    %v5160 = vmul.f32 %v5128, %v5128
    %v5161 = vmul.f32 %v5129, %v5129
    %v5162 = vmul.f32 %v5130, %v5130
    %v5163 = vmul.f32 %v5131, %v5131
    %v5164 = vmul.f32 %v5132, %v5132
    %v5165 = vmul.f32 %v5133, %v5133
    %v5166 = vmul.f32 %v5134, %v5134
    %v5167 = vmul.f32 %v5135, %v5135
    %v5168 = vmul.f32 %v5136, %v5136
    %v5169 = vmul.f32 %v5137, %v5137
    %v5170 = vmul.f32 %v5138, %v5138
    %v5171 = vmul.f32 %v5139, %v5139
    %v5172 = vmul.f32 %v5140, %v5140
    %v5173 = vmul.f32 %v5141, %v5141
    %v5174 = vmul.f32 %v5142, %v5142
    %v5175 = vmul.f32 %v5143, %v5143
    %v5176 = vmul.f32 %v5144, %v5144
    %v5177 = vmul.f32 %v5145, %v5145
    %v5178 = vmul.f32 %v5146, %v5146
    %v5179 = vmul.f32 %v5147, %v5147
    %v5180 = vmul.f32 %v5148, %v5148
    %v5181 = vmul.f32 %v5149, %v5149
    %v5182 = vmul.f32 %v5150, %v5150
    %v5183 = vmul.f32 %v5151, %v5151
    %v5184 = vadd.f32 %v5152, %v5153
    %v5185 = vadd.f32 %v5184, %v5154
    %v5186 = vadd.f32 %v5185, %v5155
    %v5187 = vadd.f32 %v5186, %v5156
    %v5188 = vadd.f32 %v5187, %v5157
    %v5189 = vadd.f32 %v5188, %v5158
    %v5190 = vadd.f32 %v5189, %v5159
    %v5191 = vadd.f32 %v5190, %v5160
    %v5192 = vadd.f32 %v5191, %v5161
    %v5193 = vadd.f32 %v5192, %v5162
    %v5194 = vadd.f32 %v5193, %v5163
    %v5195 = vadd.f32 %v5194, %v5164
    %v5196 = vadd.f32 %v5195, %v5165
    %v5197 = vadd.f32 %v5196, %v5166
    %v5198 = vadd.f32 %v5197, %v5167
    %v5199 = vadd.f32 %v5198, %v5168
    %v5200 = vadd.f32 %v5199, %v5169
    %v5201 = vadd.f32 %v5200, %v5170
    %v5202 = vadd.f32 %v5201, %v5171
    %v5203 = vadd.f32 %v5202, %v5172
    %v5204 = vadd.f32 %v5203, %v5173
    %v5205 = vadd.f32 %v5204, %v5174
    %v5206 = vadd.f32 %v5205, %v5175
    %v5207 = vadd.f32 %v5206, %v5176
    %v5208 = vadd.f32 %v5207, %v5177
    %v5209 = vadd.f32 %v5208, %v5178
    %v5210 = vadd.f32 %v5209, %v5179
    %v5211 = vadd.f32 %v5210, %v5180
    %v5212 = vadd.f32 %v5211, %v5181
    %v5213 = vadd.f32 %v5212, %v5182
    %v5214 = vadd.f32 %v5213, %v5183
    %v5215 = vrot.slane %v5214, 4
    %v5216 = vadd.f32 %v5214, %v5215
    %v5217 = vrot.slane %v5216, 2
    %v5218 = vadd.f32 %v5216, %v5217
    %v5219 = vrot.slane %v5218, 1
    %v5220 = vadd.f32 %v5218, %v5219
    %v5221 = vmul.f32 %v5220, %v821
    %v5222 = vadd.f32 %v5221, 1e-05
    %v5223 = vrsqrt.pop %v5222
    %v5224 = vmul.f32 %v5120, %v5223
    %v5225 = vmul.f32 %v5121, %v5223
    %v5226 = vmul.f32 %v5122, %v5223
    %v5227 = vmul.f32 %v5123, %v5223
    %v5228 = vmul.f32 %v5124, %v5223
    %v5229 = vmul.f32 %v5125, %v5223
    %v5230 = vmul.f32 %v5126, %v5223
    %v5231 = vmul.f32 %v5127, %v5223
    %v5232 = vmul.f32 %v5128, %v5223
    %v5233 = vmul.f32 %v5129, %v5223
    %v5234 = vmul.f32 %v5130, %v5223
    %v5235 = vmul.f32 %v5131, %v5223
    %v5236 = vmul.f32 %v5132, %v5223
    %v5237 = vmul.f32 %v5133, %v5223
    %v5238 = vmul.f32 %v5134, %v5223
    %v5239 = vmul.f32 %v5135, %v5223
    %v5240 = vmul.f32 %v5136, %v5223
    %v5241 = vmul.f32 %v5137, %v5223
    %v5242 = vmul.f32 %v5138, %v5223
    %v5243 = vmul.f32 %v5139, %v5223
    %v5244 = vmul.f32 %v5140, %v5223
    %v5245 = vmul.f32 %v5141, %v5223
    %v5246 = vmul.f32 %v5142, %v5223
    %v5247 = vmul.f32 %v5143, %v5223
    %v5248 = vmul.f32 %v5144, %v5223
    %v5249 = vmul.f32 %v5145, %v5223
    %v5250 = vmul.f32 %v5146, %v5223
    %v5251 = vmul.f32 %v5147, %v5223
    %v5252 = vmul.f32 %v5148, %v5223
    %v5253 = vmul.f32 %v5149, %v5223
    %v5254 = vmul.f32 %v5150, %v5223
    %v5255 = vmul.f32 %v5151, %v5223
    %v5257 = vlaneseq
    %v5258 = vshrl.u32 %v5257, 7
    %v5259 = vsub.s32 0, %v5258
    %v5260 = vrot.slane %v5080, %v5259
    %v5262 = vmul.f32 %v5224, %v5260
    %v5263 = vmul.f32 %v5225, %v5260
    %v5264 = vmul.f32 %v5226, %v5260
    %v5265 = vmul.f32 %v5227, %v5260
    %v5266 = vmul.f32 %v5228, %v5260
    %v5267 = vmul.f32 %v5229, %v5260
    %v5268 = vmul.f32 %v5230, %v5260
    %v5269 = vmul.f32 %v5231, %v5260
    %v5270 = vmul.f32 %v5232, %v5260
    %v5271 = vmul.f32 %v5233, %v5260
    %v5272 = vmul.f32 %v5234, %v5260
    %v5273 = vmul.f32 %v5235, %v5260
    %v5274 = vmul.f32 %v5236, %v5260
    %v5275 = vmul.f32 %v5237, %v5260
    %v5276 = vmul.f32 %v5238, %v5260
    %v5277 = vmul.f32 %v5239, %v5260
    %v5278 = vmul.f32 %v5240, %v5260
    %v5279 = vmul.f32 %v5241, %v5260
    %v5280 = vmul.f32 %v5242, %v5260
    %v5281 = vmul.f32 %v5243, %v5260
    %v5282 = vmul.f32 %v5244, %v5260
    %v5283 = vmul.f32 %v5245, %v5260
    %v5284 = vmul.f32 %v5246, %v5260
    %v5285 = vmul.f32 %v5247, %v5260
    %v5286 = vmul.f32 %v5248, %v5260
    %v5287 = vmul.f32 %v5249, %v5260
    %v5288 = vmul.f32 %v5250, %v5260
    %v5289 = vmul.f32 %v5251, %v5260
    %v5290 = vmul.f32 %v5252, %v5260
    %v5291 = vmul.f32 %v5253, %v5260
    %v5292 = vmul.f32 %v5254, %v5260
    %v5293 = vmul.f32 %v5255, %v5260
    %v5295 = vlaneseq
    %v5296 = vshrl.u32 %v5295, 7
    %v5297 = vsub.s32 0, %v5296
    %v5298 = vrot.slane %v5081, %v5297
    %v5300 = vadd.f32 %v5262, %v5298
    %v5301 = vadd.f32 %v5263, %v5298
    %v5302 = vadd.f32 %v5264, %v5298
    %v5303 = vadd.f32 %v5265, %v5298
    %v5304 = vadd.f32 %v5266, %v5298
    %v5305 = vadd.f32 %v5267, %v5298
    %v5306 = vadd.f32 %v5268, %v5298
    %v5307 = vadd.f32 %v5269, %v5298
    %v5308 = vadd.f32 %v5270, %v5298
    %v5309 = vadd.f32 %v5271, %v5298
    %v5310 = vadd.f32 %v5272, %v5298
    %v5311 = vadd.f32 %v5273, %v5298
    %v5312 = vadd.f32 %v5274, %v5298
    %v5313 = vadd.f32 %v5275, %v5298
    %v5314 = vadd.f32 %v5276, %v5298
    %v5315 = vadd.f32 %v5277, %v5298
    %v5316 = vadd.f32 %v5278, %v5298
    %v5317 = vadd.f32 %v5279, %v5298
    %v5318 = vadd.f32 %v5280, %v5298
    %v5319 = vadd.f32 %v5281, %v5298
    %v5320 = vadd.f32 %v5282, %v5298
    %v5321 = vadd.f32 %v5283, %v5298
    %v5322 = vadd.f32 %v5284, %v5298
    %v5323 = vadd.f32 %v5285, %v5298
    %v5324 = vadd.f32 %v5286, %v5298
    %v5325 = vadd.f32 %v5287, %v5298
    %v5326 = vadd.f32 %v5288, %v5298
    %v5327 = vadd.f32 %v5289, %v5298
    %v5328 = vadd.f32 %v5290, %v5298
    %v5329 = vadd.f32 %v5291, %v5298
    %v5330 = vadd.f32 %v5292, %v5298
    %v5331 = vadd.f32 %v5293, %v5298
    %v5332 = vmax.f32 %v5300, 0.0
    %v5333 = vmax.f32 %v5301, 0.0
    %v5334 = vmax.f32 %v5302, 0.0
    %v5335 = vmax.f32 %v5303, 0.0
    %v5336 = vmax.f32 %v5304, 0.0
    %v5337 = vmax.f32 %v5305, 0.0
    %v5338 = vmax.f32 %v5306, 0.0
    %v5339 = vmax.f32 %v5307, 0.0
    %v5340 = vmax.f32 %v5308, 0.0
    %v5341 = vmax.f32 %v5309, 0.0
    %v5342 = vmax.f32 %v5310, 0.0
    %v5343 = vmax.f32 %v5311, 0.0
    %v5344 = vmax.f32 %v5312, 0.0
    %v5345 = vmax.f32 %v5313, 0.0
    %v5346 = vmax.f32 %v5314, 0.0
    %v5347 = vmax.f32 %v5315, 0.0
    %v5348 = vmax.f32 %v5316, 0.0
    %v5349 = vmax.f32 %v5317, 0.0
    %v5350 = vmax.f32 %v5318, 0.0
    %v5351 = vmax.f32 %v5319, 0.0
    %v5352 = vmax.f32 %v5320, 0.0
    %v5353 = vmax.f32 %v5321, 0.0
    %v5354 = vmax.f32 %v5322, 0.0
    %v5355 = vmax.f32 %v5323, 0.0
    %v5356 = vmax.f32 %v5324, 0.0
    %v5357 = vmax.f32 %v5325, 0.0
    %v5358 = vmax.f32 %v5326, 0.0
    %v5359 = vmax.f32 %v5327, 0.0
    %v5360 = vmax.f32 %v5328, 0.0
    %v5361 = vmax.f32 %v5329, 0.0
    %v5362 = vmax.f32 %v5330, 0.0
    %v5363 = vmax.f32 %v5331, 0.0
    %v5364 = vld [vmem:[%s73] sm:$0xf]
    %v5365 = vld [vmem:[%s73 + $0x4] sm:$0xf]
    %v5366 = vld [vmem:[%s73 + $0x8] sm:$0xf]
    %v5367 = vld [vmem:[%s73 + $0xc] sm:$0xf]
    %v5368 = vld [vmem:[%s73 + $0x10] sm:$0xf]
    %v5369 = vld [vmem:[%s73 + $0x14] sm:$0xf]
    %v5370 = vld [vmem:[%s73 + $0x18] sm:$0xf]
    %v5371 = vld [vmem:[%s73 + $0x1c] sm:$0xf]
    %v5372 = vld [vmem:[%s73 + $0x20] sm:$0xf]
    %v5373 = vld [vmem:[%s73 + $0x24] sm:$0xf]
    %v5374 = vld [vmem:[%s73 + $0x28] sm:$0xf]
    %v5375 = vld [vmem:[%s73 + $0x2c] sm:$0xf]
    %v5376 = vld [vmem:[%s73 + $0x30] sm:$0xf]
    %v5377 = vld [vmem:[%s73 + $0x34] sm:$0xf]
    %v5378 = vld [vmem:[%s73 + $0x38] sm:$0xf]
    %v5379 = vld [vmem:[%s73 + $0x3c] sm:$0xf]
    %v5380 = vpack.c.bf16 %v5333, %v5332
    %v5381 = vpack.c.bf16 %v5335, %v5334
    %v5382 = vpack.c.bf16 %v5337, %v5336
    %v5383 = vpack.c.bf16 %v5339, %v5338
    %v5384 = vpack.c.bf16 %v5341, %v5340
    %v5385 = vpack.c.bf16 %v5343, %v5342
    %v5386 = vpack.c.bf16 %v5345, %v5344
    %v5387 = vpack.c.bf16 %v5347, %v5346
    %v5388 = vpack.c.bf16 %v5349, %v5348
    %v5389 = vpack.c.bf16 %v5351, %v5350
    %v5390 = vpack.c.bf16 %v5353, %v5352
    %v5391 = vpack.c.bf16 %v5355, %v5354
    %v5392 = vpack.c.bf16 %v5357, %v5356
    %v5393 = vpack.c.bf16 %v5359, %v5358
    %v5394 = vpack.c.bf16 %v5361, %v5360
    %v5395 = vpack.c.bf16 %v5363, %v5362
    %v5396 = vld [vmem:[#allocation6] sm:$0x1]
    %v5398 = vlaneseq
    %v5399 = vshrl.u32 %v5398, 7
    %v5400 = vsub.s32 0, %v5399
    %v5401 = vrot.slane %v5396, %v5400
    %v5419 = vunpack.c.l.b16 %v5364
    %v5420 = vunpack.c.l.b16 %v5365
    %v5421 = vunpack.c.l.b16 %v5366
    %v5422 = vunpack.c.l.b16 %v5367
    %v5423 = vunpack.c.l.b16 %v5368
    %v5424 = vunpack.c.l.b16 %v5369
    %v5425 = vunpack.c.l.b16 %v5370
    %v5426 = vunpack.c.l.b16 %v5371
    %v5427 = vunpack.c.l.b16 %v5372
    %v5428 = vunpack.c.l.b16 %v5373
    %v5429 = vunpack.c.l.b16 %v5374
    %v5430 = vunpack.c.l.b16 %v5375
    %v5431 = vunpack.c.l.b16 %v5376
    %v5432 = vunpack.c.l.b16 %v5377
    %v5433 = vunpack.c.l.b16 %v5378
    %v5434 = vunpack.c.l.b16 %v5379
    %v5435 = vpack.c.b16 %v5420, %v5419
    %v5436 = vpack.c.b16 %v5422, %v5421
    %v5437 = vpack.c.b16 %v5424, %v5423
    %v5438 = vpack.c.b16 %v5426, %v5425
    %v5439 = vpack.c.b16 %v5428, %v5427
    %v5440 = vpack.c.b16 %v5430, %v5429
    %v5441 = vpack.c.b16 %v5432, %v5431
    %v5442 = vpack.c.b16 %v5434, %v5433
    %5451 = vmatprep.subr.bf16.mxu0 0
    %5452 = vmatpush1.bf16.msra.mxu0 %v5442
    %5453 = vmatprep.subr.bf16.mxu0 0
    %5454 = vmatpush1.bf16.msra.mxu0 %v5441
    %5455 = vmatprep.subr.bf16.mxu0 0
    %5456 = vmatpush1.bf16.msra.mxu0 %v5440
    %5457 = vmatprep.subr.bf16.mxu0 0
    %5458 = vmatpush1.bf16.msra.mxu0 %v5439
    %5459 = vmatprep.subr.bf16.mxu0 0
    %5460 = vmatpush1.bf16.msra.mxu0 %v5438
    %5461 = vmatprep.subr.bf16.mxu0 0
    %5462 = vmatpush1.bf16.msra.mxu0 %v5437
    %5463 = vmatprep.subr.bf16.mxu0 0
    %5464 = vmatpush1.bf16.msra.mxu0 %v5436
    %5465 = vmatprep.subr.bf16.mxu0 0
    %5466 = vmatpush1.bf16.msra.mxu0 %v5435
    %5467 = vmatprep.subr.bf16.mxu0 0
    %5468 = vmatpush2.bf16.msra.mxu0 0
    %5469 = vmatprep.subr.bf16.mxu0 0
    %5470 = vmatpush2.bf16.msra.mxu0 0
    %5471 = vmatprep.subr.bf16.mxu0 0
    %5472 = vmatpush2.bf16.msra.mxu0 0
    %5473 = vmatprep.subr.bf16.mxu0 0
    %5474 = vmatpush2.bf16.msra.mxu0 0
    %5475 = vmatprep.subr.bf16.mxu0 0
    %5476 = vmatpush2.bf16.msra.mxu0 0
    %5477 = vmatprep.subr.bf16.mxu0 0
    %5478 = vmatpush2.bf16.msra.mxu0 0
    %5479 = vmatprep.subr.bf16.mxu0 0
    %5480 = vmatpush2.bf16.msra.mxu0 0
    %5481 = vmatprep.subr.bf16.mxu0 0
    %5482 = vmatpush2.bf16.msra.mxu0 0
    %5483 = vmatprep.mubr.bf16.mxu0 0
    %5484 = vmatmul.mubr.bf16.gmra.mxu0 %v5380
    %v5485 = vpop.f32.mrf.mxu0
    %v5486 = vadd.f32 %v5401, %v5485
    %v5487 = vpop.f32.mrf.mxu0
    %v5488 = vpop.f32.mrf.mxu0
    %v5489 = vadd.f32 %v5401, %v5488
    %v5490 = vpop.f32.mrf.mxu0
    %5491 = vmatprep.mubr.bf16.mxu0 0
    %5492 = vmatmul.mubr.bf16.gmra.mxu0 %v5381
    %v5493 = vpop.f32.mrf.mxu0
    %v5494 = vadd.f32 %v5401, %v5493
    %v5495 = vpop.f32.mrf.mxu0
    %v5496 = vpop.f32.mrf.mxu0
    %v5497 = vadd.f32 %v5401, %v5496
    %v5498 = vpop.f32.mrf.mxu0
    %5499 = vmatprep.mubr.bf16.mxu0 0
    %5500 = vmatmul.mubr.bf16.gmra.mxu0 %v5382
    %v5501 = vpop.f32.mrf.mxu0
    %v5502 = vadd.f32 %v5401, %v5501
    %v5503 = vpop.f32.mrf.mxu0
    %v5504 = vpop.f32.mrf.mxu0
    %v5505 = vadd.f32 %v5401, %v5504
    %v5506 = vpop.f32.mrf.mxu0
    %5507 = vmatprep.mubr.bf16.mxu0 0
    %5508 = vmatmul.mubr.bf16.gmra.mxu0 %v5383
    %v5509 = vpop.f32.mrf.mxu0
    %v5510 = vadd.f32 %v5401, %v5509
    %v5511 = vpop.f32.mrf.mxu0
    %v5512 = vpop.f32.mrf.mxu0
    %v5513 = vadd.f32 %v5401, %v5512
    %v5514 = vpop.f32.mrf.mxu0
    %5515 = vmatprep.mubr.bf16.mxu0 0
    %5516 = vmatmul.mubr.bf16.gmra.mxu0 %v5384
    %v5517 = vpop.f32.mrf.mxu0
    %v5518 = vadd.f32 %v5401, %v5517
    %v5519 = vpop.f32.mrf.mxu0
    %v5520 = vpop.f32.mrf.mxu0
    %v5521 = vadd.f32 %v5401, %v5520
    %v5522 = vpop.f32.mrf.mxu0
    %5523 = vmatprep.mubr.bf16.mxu0 0
    %5524 = vmatmul.mubr.bf16.gmra.mxu0 %v5385
    %v5525 = vpop.f32.mrf.mxu0
    %v5526 = vadd.f32 %v5401, %v5525
    %v5527 = vpop.f32.mrf.mxu0
    %v5528 = vpop.f32.mrf.mxu0
    %v5529 = vadd.f32 %v5401, %v5528
    %v5530 = vpop.f32.mrf.mxu0
    %5531 = vmatprep.mubr.bf16.mxu0 0
    %5532 = vmatmul.mubr.bf16.gmra.mxu0 %v5386
    %v5533 = vpop.f32.mrf.mxu0
    %v5534 = vadd.f32 %v5401, %v5533
    %v5535 = vpop.f32.mrf.mxu0
    %v5536 = vpop.f32.mrf.mxu0
    %v5537 = vadd.f32 %v5401, %v5536
    %v5538 = vpop.f32.mrf.mxu0
    %5539 = vmatprep.mubr.bf16.mxu0 0
    %5540 = vmatmul.mubr.bf16.gmra.mxu0 %v5387
    %v5541 = vpop.f32.mrf.mxu0
    %v5542 = vadd.f32 %v5401, %v5541
    %v5543 = vpop.f32.mrf.mxu0
    %v5544 = vpop.f32.mrf.mxu0
    %v5545 = vadd.f32 %v5401, %v5544
    %v5546 = vpop.f32.mrf.mxu0
    %5547 = vmatprep.mubr.bf16.mxu0 0
    %5548 = vmatmul.mubr.bf16.gmra.mxu0 %v5388
    %v5549 = vpop.f32.mrf.mxu0
    %v5550 = vadd.f32 %v5401, %v5549
    %v5551 = vpop.f32.mrf.mxu0
    %v5552 = vpop.f32.mrf.mxu0
    %v5553 = vadd.f32 %v5401, %v5552
    %v5554 = vpop.f32.mrf.mxu0
    %5555 = vmatprep.mubr.bf16.mxu0 0
    %5556 = vmatmul.mubr.bf16.gmra.mxu0 %v5389
    %v5557 = vpop.f32.mrf.mxu0
    %v5558 = vadd.f32 %v5401, %v5557
    %v5559 = vpop.f32.mrf.mxu0
    %v5560 = vpop.f32.mrf.mxu0
    %v5561 = vadd.f32 %v5401, %v5560
    %v5562 = vpop.f32.mrf.mxu0
    %5563 = vmatprep.mubr.bf16.mxu0 0
    %5564 = vmatmul.mubr.bf16.gmra.mxu0 %v5390
    %v5565 = vpop.f32.mrf.mxu0
    %v5566 = vadd.f32 %v5401, %v5565
    %v5567 = vpop.f32.mrf.mxu0
    %v5568 = vpop.f32.mrf.mxu0
    %v5569 = vadd.f32 %v5401, %v5568
    %v5570 = vpop.f32.mrf.mxu0
    %5571 = vmatprep.mubr.bf16.mxu0 0
    %5572 = vmatmul.mubr.bf16.gmra.mxu0 %v5391
    %v5573 = vpop.f32.mrf.mxu0
    %v5574 = vadd.f32 %v5401, %v5573
    %v5575 = vpop.f32.mrf.mxu0
    %v5576 = vpop.f32.mrf.mxu0
    %v5577 = vadd.f32 %v5401, %v5576
    %v5578 = vpop.f32.mrf.mxu0
    %5579 = vmatprep.mubr.bf16.mxu0 0
    %5580 = vmatmul.mubr.bf16.gmra.mxu0 %v5392
    %v5581 = vpop.f32.mrf.mxu0
    %v5582 = vadd.f32 %v5401, %v5581
    %v5583 = vpop.f32.mrf.mxu0
    %v5584 = vpop.f32.mrf.mxu0
    %v5585 = vadd.f32 %v5401, %v5584
    %v5586 = vpop.f32.mrf.mxu0
    %5587 = vmatprep.mubr.bf16.mxu0 0
    %5588 = vmatmul.mubr.bf16.gmra.mxu0 %v5393
    %v5589 = vpop.f32.mrf.mxu0
    %v5590 = vadd.f32 %v5401, %v5589
    %v5591 = vpop.f32.mrf.mxu0
    %v5592 = vpop.f32.mrf.mxu0
    %v5593 = vadd.f32 %v5401, %v5592
    %v5594 = vpop.f32.mrf.mxu0
    %5595 = vmatprep.mubr.bf16.mxu0 0
    %5596 = vmatmul.mubr.bf16.gmra.mxu0 %v5394
    %v5597 = vpop.f32.mrf.mxu0
    %v5598 = vadd.f32 %v5401, %v5597
    %v5599 = vpop.f32.mrf.mxu0
    %v5600 = vpop.f32.mrf.mxu0
    %v5601 = vadd.f32 %v5401, %v5600
    %v5602 = vpop.f32.mrf.mxu0
    %5603 = vmatprep.mubr.bf16.mxu0 0
    %5604 = vmatmul.mubr.bf16.gmra.mxu0 %v5395
    %v5605 = vpop.f32.mrf.mxu0
    %v5606 = vadd.f32 %v5401, %v5605
    %v5607 = vpop.f32.mrf.mxu0
    %v5608 = vpop.f32.mrf.mxu0
    %v5609 = vadd.f32 %v5401, %v5608
    %v5610 = vpop.f32.mrf.mxu0
    %5611 = vdwg.mxu0
    %v5612 = vld [vmem:[#allocation7] sm:$0x1]
    %v5613 = vld [vmem:[#allocation9] sm:$0x1]
    %v5614 = vadd.f32 %v5486, %v5489
    %v5615 = vadd.f32 %v5614, %v5494
    %v5616 = vadd.f32 %v5615, %v5497
    %v5617 = vadd.f32 %v5616, %v5502
    %v5618 = vadd.f32 %v5617, %v5505
    %v5619 = vadd.f32 %v5618, %v5510
    %v5620 = vadd.f32 %v5619, %v5513
    %v5621 = vadd.f32 %v5620, %v5518
    %v5622 = vadd.f32 %v5621, %v5521
    %v5623 = vadd.f32 %v5622, %v5526
    %v5624 = vadd.f32 %v5623, %v5529
    %v5625 = vadd.f32 %v5624, %v5534
    %v5626 = vadd.f32 %v5625, %v5537
    %v5627 = vadd.f32 %v5626, %v5542
    %v5628 = vadd.f32 %v5627, %v5545
    %v5629 = vadd.f32 %v5628, %v5550
    %v5630 = vadd.f32 %v5629, %v5553
    %v5631 = vadd.f32 %v5630, %v5558
    %v5632 = vadd.f32 %v5631, %v5561
    %v5633 = vadd.f32 %v5632, %v5566
    %v5634 = vadd.f32 %v5633, %v5569
    %v5635 = vadd.f32 %v5634, %v5574
    %v5636 = vadd.f32 %v5635, %v5577
    %v5637 = vadd.f32 %v5636, %v5582
    %v5638 = vadd.f32 %v5637, %v5585
    %v5639 = vadd.f32 %v5638, %v5590
    %v5640 = vadd.f32 %v5639, %v5593
    %v5641 = vadd.f32 %v5640, %v5598
    %v5642 = vadd.f32 %v5641, %v5601
    %v5643 = vadd.f32 %v5642, %v5606
    %v5644 = vadd.f32 %v5643, %v5609
    %v5645 = vrot.slane %v5644, 4
    %v5646 = vadd.f32 %v5644, %v5645
    %v5647 = vrot.slane %v5646, 2
    %v5648 = vadd.f32 %v5646, %v5647
    %v5649 = vrot.slane %v5648, 1
    %v5650 = vadd.f32 %v5648, %v5649
    %v5651 = vmul.f32 %v5650, %v821
    %v5652 = vsub.f32 %v5486, %v5651
    %v5653 = vsub.f32 %v5489, %v5651
    %v5654 = vsub.f32 %v5494, %v5651
    %v5655 = vsub.f32 %v5497, %v5651
    %v5656 = vsub.f32 %v5502, %v5651
    %v5657 = vsub.f32 %v5505, %v5651
    %v5658 = vsub.f32 %v5510, %v5651
    %v5659 = vsub.f32 %v5513, %v5651
    %v5660 = vsub.f32 %v5518, %v5651
    %v5661 = vsub.f32 %v5521, %v5651
    %v5662 = vsub.f32 %v5526, %v5651
    %v5663 = vsub.f32 %v5529, %v5651
    %v5664 = vsub.f32 %v5534, %v5651
    %v5665 = vsub.f32 %v5537, %v5651
    %v5666 = vsub.f32 %v5542, %v5651
    %v5667 = vsub.f32 %v5545, %v5651
    %v5668 = vsub.f32 %v5550, %v5651
    %v5669 = vsub.f32 %v5553, %v5651
    %v5670 = vsub.f32 %v5558, %v5651
    %v5671 = vsub.f32 %v5561, %v5651
    %v5672 = vsub.f32 %v5566, %v5651
    %v5673 = vsub.f32 %v5569, %v5651
    %v5674 = vsub.f32 %v5574, %v5651
    %v5675 = vsub.f32 %v5577, %v5651
    %v5676 = vsub.f32 %v5582, %v5651
    %v5677 = vsub.f32 %v5585, %v5651
    %v5678 = vsub.f32 %v5590, %v5651
    %v5679 = vsub.f32 %v5593, %v5651
    %v5680 = vsub.f32 %v5598, %v5651
    %v5681 = vsub.f32 %v5601, %v5651
    %v5682 = vsub.f32 %v5606, %v5651
    %v5683 = vsub.f32 %v5609, %v5651
    %v5684 = vmul.f32 %v5652, %v5652
    %v5685 = vmul.f32 %v5653, %v5653
    %v5686 = vmul.f32 %v5654, %v5654
    %v5687 = vmul.f32 %v5655, %v5655
    %v5688 = vmul.f32 %v5656, %v5656
    %v5689 = vmul.f32 %v5657, %v5657
    %v5690 = vmul.f32 %v5658, %v5658
    %v5691 = vmul.f32 %v5659, %v5659
    %v5692 = vmul.f32 %v5660, %v5660
    %v5693 = vmul.f32 %v5661, %v5661
    %v5694 = vmul.f32 %v5662, %v5662
    %v5695 = vmul.f32 %v5663, %v5663
    %v5696 = vmul.f32 %v5664, %v5664
    %v5697 = vmul.f32 %v5665, %v5665
    %v5698 = vmul.f32 %v5666, %v5666
    %v5699 = vmul.f32 %v5667, %v5667
    %v5700 = vmul.f32 %v5668, %v5668
    %v5701 = vmul.f32 %v5669, %v5669
    %v5702 = vmul.f32 %v5670, %v5670
    %v5703 = vmul.f32 %v5671, %v5671
    %v5704 = vmul.f32 %v5672, %v5672
    %v5705 = vmul.f32 %v5673, %v5673
    %v5706 = vmul.f32 %v5674, %v5674
    %v5707 = vmul.f32 %v5675, %v5675
    %v5708 = vmul.f32 %v5676, %v5676
    %v5709 = vmul.f32 %v5677, %v5677
    %v5710 = vmul.f32 %v5678, %v5678
    %v5711 = vmul.f32 %v5679, %v5679
    %v5712 = vmul.f32 %v5680, %v5680
    %v5713 = vmul.f32 %v5681, %v5681
    %v5714 = vmul.f32 %v5682, %v5682
    %v5715 = vmul.f32 %v5683, %v5683
    %v5716 = vadd.f32 %v5684, %v5685
    %v5717 = vadd.f32 %v5716, %v5686
    %v5718 = vadd.f32 %v5717, %v5687
    %v5719 = vadd.f32 %v5718, %v5688
    %v5720 = vadd.f32 %v5719, %v5689
    %v5721 = vadd.f32 %v5720, %v5690
    %v5722 = vadd.f32 %v5721, %v5691
    %v5723 = vadd.f32 %v5722, %v5692
    %v5724 = vadd.f32 %v5723, %v5693
    %v5725 = vadd.f32 %v5724, %v5694
    %v5726 = vadd.f32 %v5725, %v5695
    %v5727 = vadd.f32 %v5726, %v5696
    %v5728 = vadd.f32 %v5727, %v5697
    %v5729 = vadd.f32 %v5728, %v5698
    %v5730 = vadd.f32 %v5729, %v5699
    %v5731 = vadd.f32 %v5730, %v5700
    %v5732 = vadd.f32 %v5731, %v5701
    %v5733 = vadd.f32 %v5732, %v5702
    %v5734 = vadd.f32 %v5733, %v5703
    %v5735 = vadd.f32 %v5734, %v5704
    %v5736 = vadd.f32 %v5735, %v5705
    %v5737 = vadd.f32 %v5736, %v5706
    %v5738 = vadd.f32 %v5737, %v5707
    %v5739 = vadd.f32 %v5738, %v5708
    %v5740 = vadd.f32 %v5739, %v5709
    %v5741 = vadd.f32 %v5740, %v5710
    %v5742 = vadd.f32 %v5741, %v5711
    %v5743 = vadd.f32 %v5742, %v5712
    %v5744 = vadd.f32 %v5743, %v5713
    %v5745 = vadd.f32 %v5744, %v5714
    %v5746 = vadd.f32 %v5745, %v5715
    %v5747 = vrot.slane %v5746, 4
    %v5748 = vadd.f32 %v5746, %v5747
    %v5749 = vrot.slane %v5748, 2
    %v5750 = vadd.f32 %v5748, %v5749
    %v5751 = vrot.slane %v5750, 1
    %v5752 = vadd.f32 %v5750, %v5751
    %v5753 = vmul.f32 %v5752, %v821
    %v5754 = vadd.f32 %v5753, 1e-05
    %v5755 = vrsqrt.pop %v5754
    %v5756 = vmul.f32 %v5652, %v5755
    %v5757 = vmul.f32 %v5653, %v5755
    %v5758 = vmul.f32 %v5654, %v5755
    %v5759 = vmul.f32 %v5655, %v5755
    %v5760 = vmul.f32 %v5656, %v5755
    %v5761 = vmul.f32 %v5657, %v5755
    %v5762 = vmul.f32 %v5658, %v5755
    %v5763 = vmul.f32 %v5659, %v5755
    %v5764 = vmul.f32 %v5660, %v5755
    %v5765 = vmul.f32 %v5661, %v5755
    %v5766 = vmul.f32 %v5662, %v5755
    %v5767 = vmul.f32 %v5663, %v5755
    %v5768 = vmul.f32 %v5664, %v5755
    %v5769 = vmul.f32 %v5665, %v5755
    %v5770 = vmul.f32 %v5666, %v5755
    %v5771 = vmul.f32 %v5667, %v5755
    %v5772 = vmul.f32 %v5668, %v5755
    %v5773 = vmul.f32 %v5669, %v5755
    %v5774 = vmul.f32 %v5670, %v5755
    %v5775 = vmul.f32 %v5671, %v5755
    %v5776 = vmul.f32 %v5672, %v5755
    %v5777 = vmul.f32 %v5673, %v5755
    %v5778 = vmul.f32 %v5674, %v5755
    %v5779 = vmul.f32 %v5675, %v5755
    %v5780 = vmul.f32 %v5676, %v5755
    %v5781 = vmul.f32 %v5677, %v5755
    %v5782 = vmul.f32 %v5678, %v5755
    %v5783 = vmul.f32 %v5679, %v5755
    %v5784 = vmul.f32 %v5680, %v5755
    %v5785 = vmul.f32 %v5681, %v5755
    %v5786 = vmul.f32 %v5682, %v5755
    %v5787 = vmul.f32 %v5683, %v5755
    %v5789 = vlaneseq
    %v5790 = vshrl.u32 %v5789, 7
    %v5791 = vsub.s32 0, %v5790
    %v5792 = vrot.slane %v5612, %v5791
    %v5794 = vmul.f32 %v5756, %v5792
    %v5795 = vmul.f32 %v5757, %v5792
    %v5796 = vmul.f32 %v5758, %v5792
    %v5797 = vmul.f32 %v5759, %v5792
    %v5798 = vmul.f32 %v5760, %v5792
    %v5799 = vmul.f32 %v5761, %v5792
    %v5800 = vmul.f32 %v5762, %v5792
    %v5801 = vmul.f32 %v5763, %v5792
    %v5802 = vmul.f32 %v5764, %v5792
    %v5803 = vmul.f32 %v5765, %v5792
    %v5804 = vmul.f32 %v5766, %v5792
    %v5805 = vmul.f32 %v5767, %v5792
    %v5806 = vmul.f32 %v5768, %v5792
    %v5807 = vmul.f32 %v5769, %v5792
    %v5808 = vmul.f32 %v5770, %v5792
    %v5809 = vmul.f32 %v5771, %v5792
    %v5810 = vmul.f32 %v5772, %v5792
    %v5811 = vmul.f32 %v5773, %v5792
    %v5812 = vmul.f32 %v5774, %v5792
    %v5813 = vmul.f32 %v5775, %v5792
    %v5814 = vmul.f32 %v5776, %v5792
    %v5815 = vmul.f32 %v5777, %v5792
    %v5816 = vmul.f32 %v5778, %v5792
    %v5817 = vmul.f32 %v5779, %v5792
    %v5818 = vmul.f32 %v5780, %v5792
    %v5819 = vmul.f32 %v5781, %v5792
    %v5820 = vmul.f32 %v5782, %v5792
    %v5821 = vmul.f32 %v5783, %v5792
    %v5822 = vmul.f32 %v5784, %v5792
    %v5823 = vmul.f32 %v5785, %v5792
    %v5824 = vmul.f32 %v5786, %v5792
    %v5825 = vmul.f32 %v5787, %v5792
    %v5827 = vlaneseq
    %v5828 = vshrl.u32 %v5827, 7
    %v5829 = vsub.s32 0, %v5828
    %v5830 = vrot.slane %v5613, %v5829
    %v5832 = vadd.f32 %v5794, %v5830
    %v5833 = vadd.f32 %v5795, %v5830
    %v5834 = vadd.f32 %v5796, %v5830
    %v5835 = vadd.f32 %v5797, %v5830
    %v5836 = vadd.f32 %v5798, %v5830
    %v5837 = vadd.f32 %v5799, %v5830
    %v5838 = vadd.f32 %v5800, %v5830
    %v5839 = vadd.f32 %v5801, %v5830
    %v5840 = vadd.f32 %v5802, %v5830
    %v5841 = vadd.f32 %v5803, %v5830
    %v5842 = vadd.f32 %v5804, %v5830
    %v5843 = vadd.f32 %v5805, %v5830
    %v5844 = vadd.f32 %v5806, %v5830
    %v5845 = vadd.f32 %v5807, %v5830
    %v5846 = vadd.f32 %v5808, %v5830
    %v5847 = vadd.f32 %v5809, %v5830
    %v5848 = vadd.f32 %v5810, %v5830
    %v5849 = vadd.f32 %v5811, %v5830
    %v5850 = vadd.f32 %v5812, %v5830
    %v5851 = vadd.f32 %v5813, %v5830
    %v5852 = vadd.f32 %v5814, %v5830
    %v5853 = vadd.f32 %v5815, %v5830
    %v5854 = vadd.f32 %v5816, %v5830
    %v5855 = vadd.f32 %v5817, %v5830
    %v5856 = vadd.f32 %v5818, %v5830
    %v5857 = vadd.f32 %v5819, %v5830
    %v5858 = vadd.f32 %v5820, %v5830
    %v5859 = vadd.f32 %v5821, %v5830
    %v5860 = vadd.f32 %v5822, %v5830
    %v5861 = vadd.f32 %v5823, %v5830
    %v5862 = vadd.f32 %v5824, %v5830
    %v5863 = vadd.f32 %v5825, %v5830
    %v5864 = vmax.f32 %v5832, 0.0
    %v5865 = vmax.f32 %v5833, 0.0
    %v5866 = vmax.f32 %v5834, 0.0
    %v5867 = vmax.f32 %v5835, 0.0
    %v5868 = vmax.f32 %v5836, 0.0
    %v5869 = vmax.f32 %v5837, 0.0
    %v5870 = vmax.f32 %v5838, 0.0
    %v5871 = vmax.f32 %v5839, 0.0
    %v5872 = vmax.f32 %v5840, 0.0
    %v5873 = vmax.f32 %v5841, 0.0
    %v5874 = vmax.f32 %v5842, 0.0
    %v5875 = vmax.f32 %v5843, 0.0
    %v5876 = vmax.f32 %v5844, 0.0
    %v5877 = vmax.f32 %v5845, 0.0
    %v5878 = vmax.f32 %v5846, 0.0
    %v5879 = vmax.f32 %v5847, 0.0
    %v5880 = vmax.f32 %v5848, 0.0
    %v5881 = vmax.f32 %v5849, 0.0
    %v5882 = vmax.f32 %v5850, 0.0
    %v5883 = vmax.f32 %v5851, 0.0
    %v5884 = vmax.f32 %v5852, 0.0
    %v5885 = vmax.f32 %v5853, 0.0
    %v5886 = vmax.f32 %v5854, 0.0
    %v5887 = vmax.f32 %v5855, 0.0
    %v5888 = vmax.f32 %v5856, 0.0
    %v5889 = vmax.f32 %v5857, 0.0
    %v5890 = vmax.f32 %v5858, 0.0
    %v5891 = vmax.f32 %v5859, 0.0
    %v5892 = vmax.f32 %v5860, 0.0
    %v5893 = vmax.f32 %v5861, 0.0
    %v5894 = vmax.f32 %v5862, 0.0
    %v5895 = vmax.f32 %v5863, 0.0
    %v5896 = vld [vmem:[%s81] sm:$0xf]
    %v5897 = vld [vmem:[%s81 + $0x4] sm:$0xf]
    %v5898 = vld [vmem:[%s81 + $0x8] sm:$0xf]
    %v5899 = vld [vmem:[%s81 + $0xc] sm:$0xf]
    %v5900 = vld [vmem:[%s81 + $0x10] sm:$0xf]
    %v5901 = vld [vmem:[%s81 + $0x14] sm:$0xf]
    %v5902 = vld [vmem:[%s81 + $0x18] sm:$0xf]
    %v5903 = vld [vmem:[%s81 + $0x1c] sm:$0xf]
    %v5904 = vld [vmem:[%s81 + $0x20] sm:$0xf]
    %v5905 = vld [vmem:[%s81 + $0x24] sm:$0xf]
    %v5906 = vld [vmem:[%s81 + $0x28] sm:$0xf]
    %v5907 = vld [vmem:[%s81 + $0x2c] sm:$0xf]
    %v5908 = vld [vmem:[%s81 + $0x30] sm:$0xf]
    %v5909 = vld [vmem:[%s81 + $0x34] sm:$0xf]
    %v5910 = vld [vmem:[%s81 + $0x38] sm:$0xf]
    %v5911 = vld [vmem:[%s81 + $0x3c] sm:$0xf]
    %v5912 = vpack.c.bf16 %v5865, %v5864
    %v5913 = vpack.c.bf16 %v5867, %v5866
    %v5914 = vpack.c.bf16 %v5869, %v5868
    %v5915 = vpack.c.bf16 %v5871, %v5870
    %v5916 = vpack.c.bf16 %v5873, %v5872
    %v5917 = vpack.c.bf16 %v5875, %v5874
    %v5918 = vpack.c.bf16 %v5877, %v5876
    %v5919 = vpack.c.bf16 %v5879, %v5878
    %v5920 = vpack.c.bf16 %v5881, %v5880
    %v5921 = vpack.c.bf16 %v5883, %v5882
    %v5922 = vpack.c.bf16 %v5885, %v5884
    %v5923 = vpack.c.bf16 %v5887, %v5886
    %v5924 = vpack.c.bf16 %v5889, %v5888
    %v5925 = vpack.c.bf16 %v5891, %v5890
    %v5926 = vpack.c.bf16 %v5893, %v5892
    %v5927 = vpack.c.bf16 %v5895, %v5894
    %v5928 = vld [vmem:[#allocation10] sm:$0x1]
    %v5930 = vlaneseq
    %v5931 = vshrl.u32 %v5930, 7
    %v5932 = vsub.s32 0, %v5931
    %v5933 = vrot.slane %v5928, %v5932
    %v5951 = vunpack.c.l.b16 %v5896
    %v5952 = vunpack.c.l.b16 %v5897
    %v5953 = vunpack.c.l.b16 %v5898
    %v5954 = vunpack.c.l.b16 %v5899
    %v5955 = vunpack.c.l.b16 %v5900
    %v5956 = vunpack.c.l.b16 %v5901
    %v5957 = vunpack.c.l.b16 %v5902
    %v5958 = vunpack.c.l.b16 %v5903
    %v5959 = vunpack.c.l.b16 %v5904
    %v5960 = vunpack.c.l.b16 %v5905
    %v5961 = vunpack.c.l.b16 %v5906
    %v5962 = vunpack.c.l.b16 %v5907
    %v5963 = vunpack.c.l.b16 %v5908
    %v5964 = vunpack.c.l.b16 %v5909
    %v5965 = vunpack.c.l.b16 %v5910
    %v5966 = vunpack.c.l.b16 %v5911
    %v5967 = vpack.c.b16 %v5952, %v5951
    %v5968 = vpack.c.b16 %v5954, %v5953
    %v5969 = vpack.c.b16 %v5956, %v5955
    %v5970 = vpack.c.b16 %v5958, %v5957
    %v5971 = vpack.c.b16 %v5960, %v5959
    %v5972 = vpack.c.b16 %v5962, %v5961
    %v5973 = vpack.c.b16 %v5964, %v5963
    %v5974 = vpack.c.b16 %v5966, %v5965
    %5983 = vmatprep.subr.bf16.mxu0 0
    %5984 = vmatpush1.bf16.msra.mxu0 %v5974
    %5985 = vmatprep.subr.bf16.mxu0 0
    %5986 = vmatpush1.bf16.msra.mxu0 %v5973
    %5987 = vmatprep.subr.bf16.mxu0 0
    %5988 = vmatpush1.bf16.msra.mxu0 %v5972
    %5989 = vmatprep.subr.bf16.mxu0 0
    %5990 = vmatpush1.bf16.msra.mxu0 %v5971
    %5991 = vmatprep.subr.bf16.mxu0 0
    %5992 = vmatpush1.bf16.msra.mxu0 %v5970
    %5993 = vmatprep.subr.bf16.mxu0 0
    %5994 = vmatpush1.bf16.msra.mxu0 %v5969
    %5995 = vmatprep.subr.bf16.mxu0 0
    %5996 = vmatpush1.bf16.msra.mxu0 %v5968
    %5997 = vmatprep.subr.bf16.mxu0 0
    %5998 = vmatpush1.bf16.msra.mxu0 %v5967
    %5999 = vmatprep.subr.bf16.mxu0 0
    %6000 = vmatpush2.bf16.msra.mxu0 0
    %6001 = vmatprep.subr.bf16.mxu0 0
    %6002 = vmatpush2.bf16.msra.mxu0 0
    %6003 = vmatprep.subr.bf16.mxu0 0
    %6004 = vmatpush2.bf16.msra.mxu0 0
    %6005 = vmatprep.subr.bf16.mxu0 0
    %6006 = vmatpush2.bf16.msra.mxu0 0
    %6007 = vmatprep.subr.bf16.mxu0 0
    %6008 = vmatpush2.bf16.msra.mxu0 0
    %6009 = vmatprep.subr.bf16.mxu0 0
    %6010 = vmatpush2.bf16.msra.mxu0 0
    %6011 = vmatprep.subr.bf16.mxu0 0
    %6012 = vmatpush2.bf16.msra.mxu0 0
    %6013 = vmatprep.subr.bf16.mxu0 0
    %6014 = vmatpush2.bf16.msra.mxu0 0
    %6015 = vmatprep.mubr.bf16.mxu0 0
    %6016 = vmatmul.mubr.bf16.gmra.mxu0 %v5912
    %v6017 = vpop.f32.mrf.mxu0
    %v6018 = vadd.f32 %v5933, %v6017
    %v6019 = vpop.f32.mrf.mxu0
    %v6020 = vpop.f32.mrf.mxu0
    %v6021 = vadd.f32 %v5933, %v6020
    %v6022 = vpop.f32.mrf.mxu0
    %6023 = vmatprep.mubr.bf16.mxu0 0
    %6024 = vmatmul.mubr.bf16.gmra.mxu0 %v5913
    %v6025 = vpop.f32.mrf.mxu0
    %v6026 = vadd.f32 %v5933, %v6025
    %v6027 = vpop.f32.mrf.mxu0
    %v6028 = vpop.f32.mrf.mxu0
    %v6029 = vadd.f32 %v5933, %v6028
    %v6030 = vpop.f32.mrf.mxu0
    %6031 = vmatprep.mubr.bf16.mxu0 0
    %6032 = vmatmul.mubr.bf16.gmra.mxu0 %v5914
    %v6033 = vpop.f32.mrf.mxu0
    %v6034 = vadd.f32 %v5933, %v6033
    %v6035 = vpop.f32.mrf.mxu0
    %v6036 = vpop.f32.mrf.mxu0
    %v6037 = vadd.f32 %v5933, %v6036
    %v6038 = vpop.f32.mrf.mxu0
    %6039 = vmatprep.mubr.bf16.mxu0 0
    %6040 = vmatmul.mubr.bf16.gmra.mxu0 %v5915
    %v6041 = vpop.f32.mrf.mxu0
    %v6042 = vadd.f32 %v5933, %v6041
    %v6043 = vpop.f32.mrf.mxu0
    %v6044 = vpop.f32.mrf.mxu0
    %v6045 = vadd.f32 %v5933, %v6044
    %v6046 = vpop.f32.mrf.mxu0
    %6047 = vmatprep.mubr.bf16.mxu0 0
    %6048 = vmatmul.mubr.bf16.gmra.mxu0 %v5916
    %v6049 = vpop.f32.mrf.mxu0
    %v6050 = vadd.f32 %v5933, %v6049
    %v6051 = vpop.f32.mrf.mxu0
    %v6052 = vpop.f32.mrf.mxu0
    %v6053 = vadd.f32 %v5933, %v6052
    %v6054 = vpop.f32.mrf.mxu0
    %6055 = vmatprep.mubr.bf16.mxu0 0
    %6056 = vmatmul.mubr.bf16.gmra.mxu0 %v5917
    %v6057 = vpop.f32.mrf.mxu0
    %v6058 = vadd.f32 %v5933, %v6057
    %v6059 = vpop.f32.mrf.mxu0
    %v6060 = vpop.f32.mrf.mxu0
    %v6061 = vadd.f32 %v5933, %v6060
    %v6062 = vpop.f32.mrf.mxu0
    %6063 = vmatprep.mubr.bf16.mxu0 0
    %6064 = vmatmul.mubr.bf16.gmra.mxu0 %v5918
    %v6065 = vpop.f32.mrf.mxu0
    %v6066 = vadd.f32 %v5933, %v6065
    %v6067 = vpop.f32.mrf.mxu0
    %v6068 = vpop.f32.mrf.mxu0
    %v6069 = vadd.f32 %v5933, %v6068
    %v6070 = vpop.f32.mrf.mxu0
    %6071 = vmatprep.mubr.bf16.mxu0 0
    %6072 = vmatmul.mubr.bf16.gmra.mxu0 %v5919
    %v6073 = vpop.f32.mrf.mxu0
    %v6074 = vadd.f32 %v5933, %v6073
    %v6075 = vpop.f32.mrf.mxu0
    %v6076 = vpop.f32.mrf.mxu0
    %v6077 = vadd.f32 %v5933, %v6076
    %v6078 = vpop.f32.mrf.mxu0
    %6079 = vmatprep.mubr.bf16.mxu0 0
    %6080 = vmatmul.mubr.bf16.gmra.mxu0 %v5920
    %v6081 = vpop.f32.mrf.mxu0
    %v6082 = vadd.f32 %v5933, %v6081
    %v6083 = vpop.f32.mrf.mxu0
    %v6084 = vpop.f32.mrf.mxu0
    %v6085 = vadd.f32 %v5933, %v6084
    %v6086 = vpop.f32.mrf.mxu0
    %6087 = vmatprep.mubr.bf16.mxu0 0
    %6088 = vmatmul.mubr.bf16.gmra.mxu0 %v5921
    %v6089 = vpop.f32.mrf.mxu0
    %v6090 = vadd.f32 %v5933, %v6089
    %v6091 = vpop.f32.mrf.mxu0
    %v6092 = vpop.f32.mrf.mxu0
    %v6093 = vadd.f32 %v5933, %v6092
    %v6094 = vpop.f32.mrf.mxu0
    %6095 = vmatprep.mubr.bf16.mxu0 0
    %6096 = vmatmul.mubr.bf16.gmra.mxu0 %v5922
    %v6097 = vpop.f32.mrf.mxu0
    %v6098 = vadd.f32 %v5933, %v6097
    %v6099 = vpop.f32.mrf.mxu0
    %v6100 = vpop.f32.mrf.mxu0
    %v6101 = vadd.f32 %v5933, %v6100
    %v6102 = vpop.f32.mrf.mxu0
    %6103 = vmatprep.mubr.bf16.mxu0 0
    %6104 = vmatmul.mubr.bf16.gmra.mxu0 %v5923
    %v6105 = vpop.f32.mrf.mxu0
    %v6106 = vadd.f32 %v5933, %v6105
    %v6107 = vpop.f32.mrf.mxu0
    %v6108 = vpop.f32.mrf.mxu0
    %v6109 = vadd.f32 %v5933, %v6108
    %v6110 = vpop.f32.mrf.mxu0
    %6111 = vmatprep.mubr.bf16.mxu0 0
    %6112 = vmatmul.mubr.bf16.gmra.mxu0 %v5924
    %v6113 = vpop.f32.mrf.mxu0
    %v6114 = vadd.f32 %v5933, %v6113
    %v6115 = vpop.f32.mrf.mxu0
    %v6116 = vpop.f32.mrf.mxu0
    %v6117 = vadd.f32 %v5933, %v6116
    %v6118 = vpop.f32.mrf.mxu0
    %6119 = vmatprep.mubr.bf16.mxu0 0
    %6120 = vmatmul.mubr.bf16.gmra.mxu0 %v5925
    %v6121 = vpop.f32.mrf.mxu0
    %v6122 = vadd.f32 %v5933, %v6121
    %v6123 = vpop.f32.mrf.mxu0
    %v6124 = vpop.f32.mrf.mxu0
    %v6125 = vadd.f32 %v5933, %v6124
    %v6126 = vpop.f32.mrf.mxu0
    %6127 = vmatprep.mubr.bf16.mxu0 0
    %6128 = vmatmul.mubr.bf16.gmra.mxu0 %v5926
    %v6129 = vpop.f32.mrf.mxu0
    %v6130 = vadd.f32 %v5933, %v6129
    %v6131 = vpop.f32.mrf.mxu0
    %v6132 = vpop.f32.mrf.mxu0
    %v6133 = vadd.f32 %v5933, %v6132
    %v6134 = vpop.f32.mrf.mxu0
    %6135 = vmatprep.mubr.bf16.mxu0 0
    %6136 = vmatmul.mubr.bf16.gmra.mxu0 %v5927
    %v6137 = vpop.f32.mrf.mxu0
    %v6138 = vadd.f32 %v5933, %v6137
    %v6139 = vpop.f32.mrf.mxu0
    %v6140 = vpop.f32.mrf.mxu0
    %v6141 = vadd.f32 %v5933, %v6140
    %v6142 = vpop.f32.mrf.mxu0
    %6143 = vdwg.mxu0
    %v6144 = vld [vmem:[#allocation12] sm:$0x1]
    %v6145 = vld [vmem:[#allocation13] sm:$0x1]
    %v6146 = vadd.f32 %v6018, %v6021
    %v6147 = vadd.f32 %v6146, %v6026
    %v6148 = vadd.f32 %v6147, %v6029
    %v6149 = vadd.f32 %v6148, %v6034
    %v6150 = vadd.f32 %v6149, %v6037
    %v6151 = vadd.f32 %v6150, %v6042
    %v6152 = vadd.f32 %v6151, %v6045
    %v6153 = vadd.f32 %v6152, %v6050
    %v6154 = vadd.f32 %v6153, %v6053
    %v6155 = vadd.f32 %v6154, %v6058
    %v6156 = vadd.f32 %v6155, %v6061
    %v6157 = vadd.f32 %v6156, %v6066
    %v6158 = vadd.f32 %v6157, %v6069
    %v6159 = vadd.f32 %v6158, %v6074
    %v6160 = vadd.f32 %v6159, %v6077
    %v6161 = vadd.f32 %v6160, %v6082
    %v6162 = vadd.f32 %v6161, %v6085
    %v6163 = vadd.f32 %v6162, %v6090
    %v6164 = vadd.f32 %v6163, %v6093
    %v6165 = vadd.f32 %v6164, %v6098
    %v6166 = vadd.f32 %v6165, %v6101
    %v6167 = vadd.f32 %v6166, %v6106
    %v6168 = vadd.f32 %v6167, %v6109
    %v6169 = vadd.f32 %v6168, %v6114
    %v6170 = vadd.f32 %v6169, %v6117
    %v6171 = vadd.f32 %v6170, %v6122
    %v6172 = vadd.f32 %v6171, %v6125
    %v6173 = vadd.f32 %v6172, %v6130
    %v6174 = vadd.f32 %v6173, %v6133
    %v6175 = vadd.f32 %v6174, %v6138
    %v6176 = vadd.f32 %v6175, %v6141
    %v6177 = vrot.slane %v6176, 4
    %v6178 = vadd.f32 %v6176, %v6177
    %v6179 = vrot.slane %v6178, 2
    %v6180 = vadd.f32 %v6178, %v6179
    %v6181 = vrot.slane %v6180, 1
    %v6182 = vadd.f32 %v6180, %v6181
    %v6183 = vmul.f32 %v6182, %v821
    %v6184 = vsub.f32 %v6018, %v6183
    %v6185 = vsub.f32 %v6021, %v6183
    %v6186 = vsub.f32 %v6026, %v6183
    %v6187 = vsub.f32 %v6029, %v6183
    %v6188 = vsub.f32 %v6034, %v6183
    %v6189 = vsub.f32 %v6037, %v6183
    %v6190 = vsub.f32 %v6042, %v6183
    %v6191 = vsub.f32 %v6045, %v6183
    %v6192 = vsub.f32 %v6050, %v6183
    %v6193 = vsub.f32 %v6053, %v6183
    %v6194 = vsub.f32 %v6058, %v6183
    %v6195 = vsub.f32 %v6061, %v6183
    %v6196 = vsub.f32 %v6066, %v6183
    %v6197 = vsub.f32 %v6069, %v6183
    %v6198 = vsub.f32 %v6074, %v6183
    %v6199 = vsub.f32 %v6077, %v6183
    %v6200 = vsub.f32 %v6082, %v6183
    %v6201 = vsub.f32 %v6085, %v6183
    %v6202 = vsub.f32 %v6090, %v6183
    %v6203 = vsub.f32 %v6093, %v6183
    %v6204 = vsub.f32 %v6098, %v6183
    %v6205 = vsub.f32 %v6101, %v6183
    %v6206 = vsub.f32 %v6106, %v6183
    %v6207 = vsub.f32 %v6109, %v6183
    %v6208 = vsub.f32 %v6114, %v6183
    %v6209 = vsub.f32 %v6117, %v6183
    %v6210 = vsub.f32 %v6122, %v6183
    %v6211 = vsub.f32 %v6125, %v6183
    %v6212 = vsub.f32 %v6130, %v6183
    %v6213 = vsub.f32 %v6133, %v6183
    %v6214 = vsub.f32 %v6138, %v6183
    %v6215 = vsub.f32 %v6141, %v6183
    %v6216 = vmul.f32 %v6184, %v6184
    %v6217 = vmul.f32 %v6185, %v6185
    %v6218 = vmul.f32 %v6186, %v6186
    %v6219 = vmul.f32 %v6187, %v6187
    %v6220 = vmul.f32 %v6188, %v6188
    %v6221 = vmul.f32 %v6189, %v6189
    %v6222 = vmul.f32 %v6190, %v6190
    %v6223 = vmul.f32 %v6191, %v6191
    %v6224 = vmul.f32 %v6192, %v6192
    %v6225 = vmul.f32 %v6193, %v6193
    %v6226 = vmul.f32 %v6194, %v6194
    %v6227 = vmul.f32 %v6195, %v6195
    %v6228 = vmul.f32 %v6196, %v6196
    %v6229 = vmul.f32 %v6197, %v6197
    %v6230 = vmul.f32 %v6198, %v6198
    %v6231 = vmul.f32 %v6199, %v6199
    %v6232 = vmul.f32 %v6200, %v6200
    %v6233 = vmul.f32 %v6201, %v6201
    %v6234 = vmul.f32 %v6202, %v6202
    %v6235 = vmul.f32 %v6203, %v6203
    %v6236 = vmul.f32 %v6204, %v6204
    %v6237 = vmul.f32 %v6205, %v6205
    %v6238 = vmul.f32 %v6206, %v6206
    %v6239 = vmul.f32 %v6207, %v6207
    %v6240 = vmul.f32 %v6208, %v6208
    %v6241 = vmul.f32 %v6209, %v6209
    %v6242 = vmul.f32 %v6210, %v6210
    %v6243 = vmul.f32 %v6211, %v6211
    %v6244 = vmul.f32 %v6212, %v6212
    %v6245 = vmul.f32 %v6213, %v6213
    %v6246 = vmul.f32 %v6214, %v6214
    %v6247 = vmul.f32 %v6215, %v6215
    %v6248 = vadd.f32 %v6216, %v6217
    %v6249 = vadd.f32 %v6248, %v6218
    %v6250 = vadd.f32 %v6249, %v6219
    %v6251 = vadd.f32 %v6250, %v6220
    %v6252 = vadd.f32 %v6251, %v6221
    %v6253 = vadd.f32 %v6252, %v6222
    %v6254 = vadd.f32 %v6253, %v6223
    %v6255 = vadd.f32 %v6254, %v6224
    %v6256 = vadd.f32 %v6255, %v6225
    %v6257 = vadd.f32 %v6256, %v6226
    %v6258 = vadd.f32 %v6257, %v6227
    %v6259 = vadd.f32 %v6258, %v6228
    %v6260 = vadd.f32 %v6259, %v6229
    %v6261 = vadd.f32 %v6260, %v6230
    %v6262 = vadd.f32 %v6261, %v6231
    %v6263 = vadd.f32 %v6262, %v6232
    %v6264 = vadd.f32 %v6263, %v6233
    %v6265 = vadd.f32 %v6264, %v6234
    %v6266 = vadd.f32 %v6265, %v6235
    %v6267 = vadd.f32 %v6266, %v6236
    %v6268 = vadd.f32 %v6267, %v6237
    %v6269 = vadd.f32 %v6268, %v6238
    %v6270 = vadd.f32 %v6269, %v6239
    %v6271 = vadd.f32 %v6270, %v6240
    %v6272 = vadd.f32 %v6271, %v6241
    %v6273 = vadd.f32 %v6272, %v6242
    %v6274 = vadd.f32 %v6273, %v6243
    %v6275 = vadd.f32 %v6274, %v6244
    %v6276 = vadd.f32 %v6275, %v6245
    %v6277 = vadd.f32 %v6276, %v6246
    %v6278 = vadd.f32 %v6277, %v6247
    %v6279 = vrot.slane %v6278, 4
    %v6280 = vadd.f32 %v6278, %v6279
    %v6281 = vrot.slane %v6280, 2
    %v6282 = vadd.f32 %v6280, %v6281
    %v6283 = vrot.slane %v6282, 1
    %v6284 = vadd.f32 %v6282, %v6283
    %v6285 = vmul.f32 %v6284, %v821
    %v6286 = vadd.f32 %v6285, 1e-05
    %v6287 = vrsqrt.pop %v6286
    %v6288 = vmul.f32 %v6184, %v6287
    %v6289 = vmul.f32 %v6185, %v6287
    %v6290 = vmul.f32 %v6186, %v6287
    %v6291 = vmul.f32 %v6187, %v6287
    %v6292 = vmul.f32 %v6188, %v6287
    %v6293 = vmul.f32 %v6189, %v6287
    %v6294 = vmul.f32 %v6190, %v6287
    %v6295 = vmul.f32 %v6191, %v6287
    %v6296 = vmul.f32 %v6192, %v6287
    %v6297 = vmul.f32 %v6193, %v6287
    %v6298 = vmul.f32 %v6194, %v6287
    %v6299 = vmul.f32 %v6195, %v6287
    %v6300 = vmul.f32 %v6196, %v6287
    %v6301 = vmul.f32 %v6197, %v6287
    %v6302 = vmul.f32 %v6198, %v6287
    %v6303 = vmul.f32 %v6199, %v6287
    %v6304 = vmul.f32 %v6200, %v6287
    %v6305 = vmul.f32 %v6201, %v6287
    %v6306 = vmul.f32 %v6202, %v6287
    %v6307 = vmul.f32 %v6203, %v6287
    %v6308 = vmul.f32 %v6204, %v6287
    %v6309 = vmul.f32 %v6205, %v6287
    %v6310 = vmul.f32 %v6206, %v6287
    %v6311 = vmul.f32 %v6207, %v6287
    %v6312 = vmul.f32 %v6208, %v6287
    %v6313 = vmul.f32 %v6209, %v6287
    %v6314 = vmul.f32 %v6210, %v6287
    %v6315 = vmul.f32 %v6211, %v6287
    %v6316 = vmul.f32 %v6212, %v6287
    %v6317 = vmul.f32 %v6213, %v6287
    %v6318 = vmul.f32 %v6214, %v6287
    %v6319 = vmul.f32 %v6215, %v6287
    %v6321 = vlaneseq
    %v6322 = vshrl.u32 %v6321, 7
    %v6323 = vsub.s32 0, %v6322
    %v6324 = vrot.slane %v6144, %v6323
    %v6326 = vmul.f32 %v6288, %v6324
    %v6327 = vmul.f32 %v6289, %v6324
    %v6328 = vmul.f32 %v6290, %v6324
    %v6329 = vmul.f32 %v6291, %v6324
    %v6330 = vmul.f32 %v6292, %v6324
    %v6331 = vmul.f32 %v6293, %v6324
    %v6332 = vmul.f32 %v6294, %v6324
    %v6333 = vmul.f32 %v6295, %v6324
    %v6334 = vmul.f32 %v6296, %v6324
    %v6335 = vmul.f32 %v6297, %v6324
    %v6336 = vmul.f32 %v6298, %v6324
    %v6337 = vmul.f32 %v6299, %v6324
    %v6338 = vmul.f32 %v6300, %v6324
    %v6339 = vmul.f32 %v6301, %v6324
    %v6340 = vmul.f32 %v6302, %v6324
    %v6341 = vmul.f32 %v6303, %v6324
    %v6342 = vmul.f32 %v6304, %v6324
    %v6343 = vmul.f32 %v6305, %v6324
    %v6344 = vmul.f32 %v6306, %v6324
    %v6345 = vmul.f32 %v6307, %v6324
    %v6346 = vmul.f32 %v6308, %v6324
    %v6347 = vmul.f32 %v6309, %v6324
    %v6348 = vmul.f32 %v6310, %v6324
    %v6349 = vmul.f32 %v6311, %v6324
    %v6350 = vmul.f32 %v6312, %v6324
    %v6351 = vmul.f32 %v6313, %v6324
    %v6352 = vmul.f32 %v6314, %v6324
    %v6353 = vmul.f32 %v6315, %v6324
    %v6354 = vmul.f32 %v6316, %v6324
    %v6355 = vmul.f32 %v6317, %v6324
    %v6356 = vmul.f32 %v6318, %v6324
    %v6357 = vmul.f32 %v6319, %v6324
    %v6359 = vlaneseq
    %v6360 = vshrl.u32 %v6359, 7
    %v6361 = vsub.s32 0, %v6360
    %v6362 = vrot.slane %v6145, %v6361
    %v6364 = vadd.f32 %v6326, %v6362
    %v6365 = vadd.f32 %v6327, %v6362
    %v6366 = vadd.f32 %v6328, %v6362
    %v6367 = vadd.f32 %v6329, %v6362
    %v6368 = vadd.f32 %v6330, %v6362
    %v6369 = vadd.f32 %v6331, %v6362
    %v6370 = vadd.f32 %v6332, %v6362
    %v6371 = vadd.f32 %v6333, %v6362
    %v6372 = vadd.f32 %v6334, %v6362
    %v6373 = vadd.f32 %v6335, %v6362
    %v6374 = vadd.f32 %v6336, %v6362
    %v6375 = vadd.f32 %v6337, %v6362
    %v6376 = vadd.f32 %v6338, %v6362
    %v6377 = vadd.f32 %v6339, %v6362
    %v6378 = vadd.f32 %v6340, %v6362
    %v6379 = vadd.f32 %v6341, %v6362
    %v6380 = vadd.f32 %v6342, %v6362
    %v6381 = vadd.f32 %v6343, %v6362
    %v6382 = vadd.f32 %v6344, %v6362
    %v6383 = vadd.f32 %v6345, %v6362
    %v6384 = vadd.f32 %v6346, %v6362
    %v6385 = vadd.f32 %v6347, %v6362
    %v6386 = vadd.f32 %v6348, %v6362
    %v6387 = vadd.f32 %v6349, %v6362
    %v6388 = vadd.f32 %v6350, %v6362
    %v6389 = vadd.f32 %v6351, %v6362
    %v6390 = vadd.f32 %v6352, %v6362
    %v6391 = vadd.f32 %v6353, %v6362
    %v6392 = vadd.f32 %v6354, %v6362
    %v6393 = vadd.f32 %v6355, %v6362
    %v6394 = vadd.f32 %v6356, %v6362
    %v6395 = vadd.f32 %v6357, %v6362
    %v6396 = vmax.f32 %v6364, 0.0
    %v6397 = vmax.f32 %v6365, 0.0
    %v6398 = vmax.f32 %v6366, 0.0
    %v6399 = vmax.f32 %v6367, 0.0
    %v6400 = vmax.f32 %v6368, 0.0
    %v6401 = vmax.f32 %v6369, 0.0
    %v6402 = vmax.f32 %v6370, 0.0
    %v6403 = vmax.f32 %v6371, 0.0
    %v6404 = vmax.f32 %v6372, 0.0
    %v6405 = vmax.f32 %v6373, 0.0
    %v6406 = vmax.f32 %v6374, 0.0
    %v6407 = vmax.f32 %v6375, 0.0
    %v6408 = vmax.f32 %v6376, 0.0
    %v6409 = vmax.f32 %v6377, 0.0
    %v6410 = vmax.f32 %v6378, 0.0
    %v6411 = vmax.f32 %v6379, 0.0
    %v6412 = vmax.f32 %v6380, 0.0
    %v6413 = vmax.f32 %v6381, 0.0
    %v6414 = vmax.f32 %v6382, 0.0
    %v6415 = vmax.f32 %v6383, 0.0
    %v6416 = vmax.f32 %v6384, 0.0
    %v6417 = vmax.f32 %v6385, 0.0
    %v6418 = vmax.f32 %v6386, 0.0
    %v6419 = vmax.f32 %v6387, 0.0
    %v6420 = vmax.f32 %v6388, 0.0
    %v6421 = vmax.f32 %v6389, 0.0
    %v6422 = vmax.f32 %v6390, 0.0
    %v6423 = vmax.f32 %v6391, 0.0
    %v6424 = vmax.f32 %v6392, 0.0
    %v6425 = vmax.f32 %v6393, 0.0
    %v6426 = vmax.f32 %v6394, 0.0
    %v6427 = vmax.f32 %v6395, 0.0
    %v6428 = vld [vmem:[%s89] sm:$0xf]
    %v6429 = vld [vmem:[%s89 + $0x4] sm:$0xf]
    %v6430 = vld [vmem:[%s89 + $0x8] sm:$0xf]
    %v6431 = vld [vmem:[%s89 + $0xc] sm:$0xf]
    %v6432 = vld [vmem:[%s89 + $0x10] sm:$0xf]
    %v6433 = vld [vmem:[%s89 + $0x14] sm:$0xf]
    %v6434 = vld [vmem:[%s89 + $0x18] sm:$0xf]
    %v6435 = vld [vmem:[%s89 + $0x1c] sm:$0xf]
    %v6436 = vld [vmem:[%s89 + $0x20] sm:$0xf]
    %v6437 = vld [vmem:[%s89 + $0x24] sm:$0xf]
    %v6438 = vld [vmem:[%s89 + $0x28] sm:$0xf]
    %v6439 = vld [vmem:[%s89 + $0x2c] sm:$0xf]
    %v6440 = vld [vmem:[%s89 + $0x30] sm:$0xf]
    %v6441 = vld [vmem:[%s89 + $0x34] sm:$0xf]
    %v6442 = vld [vmem:[%s89 + $0x38] sm:$0xf]
    %v6443 = vld [vmem:[%s89 + $0x3c] sm:$0xf]
    %v6444 = vpack.c.bf16 %v6397, %v6396
    %v6445 = vpack.c.bf16 %v6399, %v6398
    %v6446 = vpack.c.bf16 %v6401, %v6400
    %v6447 = vpack.c.bf16 %v6403, %v6402
    %v6448 = vpack.c.bf16 %v6405, %v6404
    %v6449 = vpack.c.bf16 %v6407, %v6406
    %v6450 = vpack.c.bf16 %v6409, %v6408
    %v6451 = vpack.c.bf16 %v6411, %v6410
    %v6452 = vpack.c.bf16 %v6413, %v6412
    %v6453 = vpack.c.bf16 %v6415, %v6414
    %v6454 = vpack.c.bf16 %v6417, %v6416
    %v6455 = vpack.c.bf16 %v6419, %v6418
    %v6456 = vpack.c.bf16 %v6421, %v6420
    %v6457 = vpack.c.bf16 %v6423, %v6422
    %v6458 = vpack.c.bf16 %v6425, %v6424
    %v6459 = vpack.c.bf16 %v6427, %v6426
    %v6460 = vld [vmem:[#allocation15] sm:$0x1]
    %v6462 = vlaneseq
    %v6463 = vshrl.u32 %v6462, 7
    %v6464 = vsub.s32 0, %v6463
    %v6465 = vrot.slane %v6460, %v6464
    %v6483 = vunpack.c.l.b16 %v6428
    %v6484 = vunpack.c.l.b16 %v6429
    %v6485 = vunpack.c.l.b16 %v6430
    %v6486 = vunpack.c.l.b16 %v6431
    %v6487 = vunpack.c.l.b16 %v6432
    %v6488 = vunpack.c.l.b16 %v6433
    %v6489 = vunpack.c.l.b16 %v6434
    %v6490 = vunpack.c.l.b16 %v6435
    %v6491 = vunpack.c.l.b16 %v6436
    %v6492 = vunpack.c.l.b16 %v6437
    %v6493 = vunpack.c.l.b16 %v6438
    %v6494 = vunpack.c.l.b16 %v6439
    %v6495 = vunpack.c.l.b16 %v6440
    %v6496 = vunpack.c.l.b16 %v6441
    %v6497 = vunpack.c.l.b16 %v6442
    %v6498 = vunpack.c.l.b16 %v6443
    %v6499 = vpack.c.b16 %v6484, %v6483
    %v6500 = vpack.c.b16 %v6486, %v6485
    %v6501 = vpack.c.b16 %v6488, %v6487
    %v6502 = vpack.c.b16 %v6490, %v6489
    %v6503 = vpack.c.b16 %v6492, %v6491
    %v6504 = vpack.c.b16 %v6494, %v6493
    %v6505 = vpack.c.b16 %v6496, %v6495
    %v6506 = vpack.c.b16 %v6498, %v6497
    %6515 = vmatprep.subr.bf16.mxu0 0
    %6516 = vmatpush1.bf16.msra.mxu0 %v6506
    %6517 = vmatprep.subr.bf16.mxu0 0
    %6518 = vmatpush1.bf16.msra.mxu0 %v6505
    %6519 = vmatprep.subr.bf16.mxu0 0
    %6520 = vmatpush1.bf16.msra.mxu0 %v6504
    %6521 = vmatprep.subr.bf16.mxu0 0
    %6522 = vmatpush1.bf16.msra.mxu0 %v6503
    %6523 = vmatprep.subr.bf16.mxu0 0
    %6524 = vmatpush1.bf16.msra.mxu0 %v6502
    %6525 = vmatprep.subr.bf16.mxu0 0
    %6526 = vmatpush1.bf16.msra.mxu0 %v6501
    %6527 = vmatprep.subr.bf16.mxu0 0
    %6528 = vmatpush1.bf16.msra.mxu0 %v6500
    %6529 = vmatprep.subr.bf16.mxu0 0
    %6530 = vmatpush1.bf16.msra.mxu0 %v6499
    %6531 = vmatprep.subr.bf16.mxu0 0
    %6532 = vmatpush2.bf16.msra.mxu0 0
    %6533 = vmatprep.subr.bf16.mxu0 0
    %6534 = vmatpush2.bf16.msra.mxu0 0
    %6535 = vmatprep.subr.bf16.mxu0 0
    %6536 = vmatpush2.bf16.msra.mxu0 0
    %6537 = vmatprep.subr.bf16.mxu0 0
    %6538 = vmatpush2.bf16.msra.mxu0 0
    %6539 = vmatprep.subr.bf16.mxu0 0
    %6540 = vmatpush2.bf16.msra.mxu0 0
    %6541 = vmatprep.subr.bf16.mxu0 0
    %6542 = vmatpush2.bf16.msra.mxu0 0
    %6543 = vmatprep.subr.bf16.mxu0 0
    %6544 = vmatpush2.bf16.msra.mxu0 0
    %6545 = vmatprep.subr.bf16.mxu0 0
    %6546 = vmatpush2.bf16.msra.mxu0 0
    %6547 = vmatprep.mubr.bf16.mxu0 0
    %6548 = vmatmul.mubr.bf16.gmra.mxu0 %v6444
    %v6549 = vpop.f32.mrf.mxu0
    %v6550 = vadd.f32 %v6465, %v6549
    %v6551 = vpop.f32.mrf.mxu0
    %v6552 = vpop.f32.mrf.mxu0
    %v6553 = vadd.f32 %v6465, %v6552
    %v6554 = vpop.f32.mrf.mxu0
    %6555 = vmatprep.mubr.bf16.mxu0 0
    %6556 = vmatmul.mubr.bf16.gmra.mxu0 %v6445
    %v6557 = vpop.f32.mrf.mxu0
    %v6558 = vadd.f32 %v6465, %v6557
    %v6559 = vpop.f32.mrf.mxu0
    %v6560 = vpop.f32.mrf.mxu0
    %v6561 = vadd.f32 %v6465, %v6560
    %v6562 = vpop.f32.mrf.mxu0
    %6563 = vmatprep.mubr.bf16.mxu0 0
    %6564 = vmatmul.mubr.bf16.gmra.mxu0 %v6446
    %v6565 = vpop.f32.mrf.mxu0
    %v6566 = vadd.f32 %v6465, %v6565
    %v6567 = vpop.f32.mrf.mxu0
    %v6568 = vpop.f32.mrf.mxu0
    %v6569 = vadd.f32 %v6465, %v6568
    %v6570 = vpop.f32.mrf.mxu0
    %6571 = vmatprep.mubr.bf16.mxu0 0
    %6572 = vmatmul.mubr.bf16.gmra.mxu0 %v6447
    %v6573 = vpop.f32.mrf.mxu0
    %v6574 = vadd.f32 %v6465, %v6573
    %v6575 = vpop.f32.mrf.mxu0
    %v6576 = vpop.f32.mrf.mxu0
    %v6577 = vadd.f32 %v6465, %v6576
    %v6578 = vpop.f32.mrf.mxu0
    %6579 = vmatprep.mubr.bf16.mxu0 0
    %6580 = vmatmul.mubr.bf16.gmra.mxu0 %v6448
    %v6581 = vpop.f32.mrf.mxu0
    %v6582 = vadd.f32 %v6465, %v6581
    %v6583 = vpop.f32.mrf.mxu0
    %v6584 = vpop.f32.mrf.mxu0
    %v6585 = vadd.f32 %v6465, %v6584
    %v6586 = vpop.f32.mrf.mxu0
    %6587 = vmatprep.mubr.bf16.mxu0 0
    %6588 = vmatmul.mubr.bf16.gmra.mxu0 %v6449
    %v6589 = vpop.f32.mrf.mxu0
    %v6590 = vadd.f32 %v6465, %v6589
    %v6591 = vpop.f32.mrf.mxu0
    %v6592 = vpop.f32.mrf.mxu0
    %v6593 = vadd.f32 %v6465, %v6592
    %v6594 = vpop.f32.mrf.mxu0
    %6595 = vmatprep.mubr.bf16.mxu0 0
    %6596 = vmatmul.mubr.bf16.gmra.mxu0 %v6450
    %v6597 = vpop.f32.mrf.mxu0
    %v6598 = vadd.f32 %v6465, %v6597
    %v6599 = vpop.f32.mrf.mxu0
    %v6600 = vpop.f32.mrf.mxu0
    %v6601 = vadd.f32 %v6465, %v6600
    %v6602 = vpop.f32.mrf.mxu0
    %6603 = vmatprep.mubr.bf16.mxu0 0
    %6604 = vmatmul.mubr.bf16.gmra.mxu0 %v6451
    %v6605 = vpop.f32.mrf.mxu0
    %v6606 = vadd.f32 %v6465, %v6605
    %v6607 = vpop.f32.mrf.mxu0
    %v6608 = vpop.f32.mrf.mxu0
    %v6609 = vadd.f32 %v6465, %v6608
    %v6610 = vpop.f32.mrf.mxu0
    %6611 = vmatprep.mubr.bf16.mxu0 0
    %6612 = vmatmul.mubr.bf16.gmra.mxu0 %v6452
    %v6613 = vpop.f32.mrf.mxu0
    %v6614 = vadd.f32 %v6465, %v6613
    %v6615 = vpop.f32.mrf.mxu0
    %v6616 = vpop.f32.mrf.mxu0
    %v6617 = vadd.f32 %v6465, %v6616
    %v6618 = vpop.f32.mrf.mxu0
    %6619 = vmatprep.mubr.bf16.mxu0 0
    %6620 = vmatmul.mubr.bf16.gmra.mxu0 %v6453
    %v6621 = vpop.f32.mrf.mxu0
    %v6622 = vadd.f32 %v6465, %v6621
    %v6623 = vpop.f32.mrf.mxu0
    %v6624 = vpop.f32.mrf.mxu0
    %v6625 = vadd.f32 %v6465, %v6624
    %v6626 = vpop.f32.mrf.mxu0
    %6627 = vmatprep.mubr.bf16.mxu0 0
    %6628 = vmatmul.mubr.bf16.gmra.mxu0 %v6454
    %v6629 = vpop.f32.mrf.mxu0
    %v6630 = vadd.f32 %v6465, %v6629
    %v6631 = vpop.f32.mrf.mxu0
    %v6632 = vpop.f32.mrf.mxu0
    %v6633 = vadd.f32 %v6465, %v6632
    %v6634 = vpop.f32.mrf.mxu0
    %6635 = vmatprep.mubr.bf16.mxu0 0
    %6636 = vmatmul.mubr.bf16.gmra.mxu0 %v6455
    %v6637 = vpop.f32.mrf.mxu0
    %v6638 = vadd.f32 %v6465, %v6637
    %v6639 = vpop.f32.mrf.mxu0
    %v6640 = vpop.f32.mrf.mxu0
    %v6641 = vadd.f32 %v6465, %v6640
    %v6642 = vpop.f32.mrf.mxu0
    %6643 = vmatprep.mubr.bf16.mxu0 0
    %6644 = vmatmul.mubr.bf16.gmra.mxu0 %v6456
    %v6645 = vpop.f32.mrf.mxu0
    %v6646 = vadd.f32 %v6465, %v6645
    %v6647 = vpop.f32.mrf.mxu0
    %v6648 = vpop.f32.mrf.mxu0
    %v6649 = vadd.f32 %v6465, %v6648
    %v6650 = vpop.f32.mrf.mxu0
    %6651 = vmatprep.mubr.bf16.mxu0 0
    %6652 = vmatmul.mubr.bf16.gmra.mxu0 %v6457
    %v6653 = vpop.f32.mrf.mxu0
    %v6654 = vadd.f32 %v6465, %v6653
    %v6655 = vpop.f32.mrf.mxu0
    %v6656 = vpop.f32.mrf.mxu0
    %v6657 = vadd.f32 %v6465, %v6656
    %v6658 = vpop.f32.mrf.mxu0
    %6659 = vmatprep.mubr.bf16.mxu0 0
    %6660 = vmatmul.mubr.bf16.gmra.mxu0 %v6458
    %v6661 = vpop.f32.mrf.mxu0
    %v6662 = vadd.f32 %v6465, %v6661
    %v6663 = vpop.f32.mrf.mxu0
    %v6664 = vpop.f32.mrf.mxu0
    %v6665 = vadd.f32 %v6465, %v6664
    %v6666 = vpop.f32.mrf.mxu0
    %6667 = vmatprep.mubr.bf16.mxu0 0
    %6668 = vmatmul.mubr.bf16.gmra.mxu0 %v6459
    %v6669 = vpop.f32.mrf.mxu0
    %v6670 = vadd.f32 %v6465, %v6669
    %v6671 = vpop.f32.mrf.mxu0
    %v6672 = vpop.f32.mrf.mxu0
    %v6673 = vadd.f32 %v6465, %v6672
    %v6674 = vpop.f32.mrf.mxu0
    %6675 = vdwg.mxu0
    %v6676 = vld [vmem:[#allocation16] sm:$0x1]
    %v6677 = vld [vmem:[#allocation18] sm:$0x1]
    %v6678 = vadd.f32 %v6550, %v6553
    %v6679 = vadd.f32 %v6678, %v6558
    %v6680 = vadd.f32 %v6679, %v6561
    %v6681 = vadd.f32 %v6680, %v6566
    %v6682 = vadd.f32 %v6681, %v6569
    %v6683 = vadd.f32 %v6682, %v6574
    %v6684 = vadd.f32 %v6683, %v6577
    %v6685 = vadd.f32 %v6684, %v6582
    %v6686 = vadd.f32 %v6685, %v6585
    %v6687 = vadd.f32 %v6686, %v6590
    %v6688 = vadd.f32 %v6687, %v6593
    %v6689 = vadd.f32 %v6688, %v6598
    %v6690 = vadd.f32 %v6689, %v6601
    %v6691 = vadd.f32 %v6690, %v6606
    %v6692 = vadd.f32 %v6691, %v6609
    %v6693 = vadd.f32 %v6692, %v6614
    %v6694 = vadd.f32 %v6693, %v6617
    %v6695 = vadd.f32 %v6694, %v6622
    %v6696 = vadd.f32 %v6695, %v6625
    %v6697 = vadd.f32 %v6696, %v6630
    %v6698 = vadd.f32 %v6697, %v6633
    %v6699 = vadd.f32 %v6698, %v6638
    %v6700 = vadd.f32 %v6699, %v6641
    %v6701 = vadd.f32 %v6700, %v6646
    %v6702 = vadd.f32 %v6701, %v6649
    %v6703 = vadd.f32 %v6702, %v6654
    %v6704 = vadd.f32 %v6703, %v6657
    %v6705 = vadd.f32 %v6704, %v6662
    %v6706 = vadd.f32 %v6705, %v6665
    %v6707 = vadd.f32 %v6706, %v6670
    %v6708 = vadd.f32 %v6707, %v6673
    %v6709 = vrot.slane %v6708, 4
    %v6710 = vadd.f32 %v6708, %v6709
    %v6711 = vrot.slane %v6710, 2
    %v6712 = vadd.f32 %v6710, %v6711
    %v6713 = vrot.slane %v6712, 1
    %v6714 = vadd.f32 %v6712, %v6713
    %v6715 = vmul.f32 %v6714, %v821
    %v6716 = vsub.f32 %v6550, %v6715
    %v6717 = vsub.f32 %v6553, %v6715
    %v6718 = vsub.f32 %v6558, %v6715
    %v6719 = vsub.f32 %v6561, %v6715
    %v6720 = vsub.f32 %v6566, %v6715
    %v6721 = vsub.f32 %v6569, %v6715
    %v6722 = vsub.f32 %v6574, %v6715
    %v6723 = vsub.f32 %v6577, %v6715
    %v6724 = vsub.f32 %v6582, %v6715
    %v6725 = vsub.f32 %v6585, %v6715
    %v6726 = vsub.f32 %v6590, %v6715
    %v6727 = vsub.f32 %v6593, %v6715
    %v6728 = vsub.f32 %v6598, %v6715
    %v6729 = vsub.f32 %v6601, %v6715
    %v6730 = vsub.f32 %v6606, %v6715
    %v6731 = vsub.f32 %v6609, %v6715
    %v6732 = vsub.f32 %v6614, %v6715
    %v6733 = vsub.f32 %v6617, %v6715
    %v6734 = vsub.f32 %v6622, %v6715
    %v6735 = vsub.f32 %v6625, %v6715
    %v6736 = vsub.f32 %v6630, %v6715
    %v6737 = vsub.f32 %v6633, %v6715
    %v6738 = vsub.f32 %v6638, %v6715
    %v6739 = vsub.f32 %v6641, %v6715
    %v6740 = vsub.f32 %v6646, %v6715
    %v6741 = vsub.f32 %v6649, %v6715
    %v6742 = vsub.f32 %v6654, %v6715
    %v6743 = vsub.f32 %v6657, %v6715
    %v6744 = vsub.f32 %v6662, %v6715
    %v6745 = vsub.f32 %v6665, %v6715
    %v6746 = vsub.f32 %v6670, %v6715
    %v6747 = vsub.f32 %v6673, %v6715
    %v6748 = vmul.f32 %v6716, %v6716
    %v6749 = vmul.f32 %v6717, %v6717
    %v6750 = vmul.f32 %v6718, %v6718
    %v6751 = vmul.f32 %v6719, %v6719
    %v6752 = vmul.f32 %v6720, %v6720
    %v6753 = vmul.f32 %v6721, %v6721
    %v6754 = vmul.f32 %v6722, %v6722
    %v6755 = vmul.f32 %v6723, %v6723
    %v6756 = vmul.f32 %v6724, %v6724
    %v6757 = vmul.f32 %v6725, %v6725
    %v6758 = vmul.f32 %v6726, %v6726
    %v6759 = vmul.f32 %v6727, %v6727
    %v6760 = vmul.f32 %v6728, %v6728
    %v6761 = vmul.f32 %v6729, %v6729
    %v6762 = vmul.f32 %v6730, %v6730
    %v6763 = vmul.f32 %v6731, %v6731
    %v6764 = vmul.f32 %v6732, %v6732
    %v6765 = vmul.f32 %v6733, %v6733
    %v6766 = vmul.f32 %v6734, %v6734
    %v6767 = vmul.f32 %v6735, %v6735
    %v6768 = vmul.f32 %v6736, %v6736
    %v6769 = vmul.f32 %v6737, %v6737
    %v6770 = vmul.f32 %v6738, %v6738
    %v6771 = vmul.f32 %v6739, %v6739
    %v6772 = vmul.f32 %v6740, %v6740
    %v6773 = vmul.f32 %v6741, %v6741
    %v6774 = vmul.f32 %v6742, %v6742
    %v6775 = vmul.f32 %v6743, %v6743
    %v6776 = vmul.f32 %v6744, %v6744
    %v6777 = vmul.f32 %v6745, %v6745
    %v6778 = vmul.f32 %v6746, %v6746
    %v6779 = vmul.f32 %v6747, %v6747
    %v6780 = vadd.f32 %v6748, %v6749
    %v6781 = vadd.f32 %v6780, %v6750
    %v6782 = vadd.f32 %v6781, %v6751
    %v6783 = vadd.f32 %v6782, %v6752
    %v6784 = vadd.f32 %v6783, %v6753
    %v6785 = vadd.f32 %v6784, %v6754
    %v6786 = vadd.f32 %v6785, %v6755
    %v6787 = vadd.f32 %v6786, %v6756
    %v6788 = vadd.f32 %v6787, %v6757
    %v6789 = vadd.f32 %v6788, %v6758
    %v6790 = vadd.f32 %v6789, %v6759
    %v6791 = vadd.f32 %v6790, %v6760
    %v6792 = vadd.f32 %v6791, %v6761
    %v6793 = vadd.f32 %v6792, %v6762
    %v6794 = vadd.f32 %v6793, %v6763
    %v6795 = vadd.f32 %v6794, %v6764
    %v6796 = vadd.f32 %v6795, %v6765
    %v6797 = vadd.f32 %v6796, %v6766
    %v6798 = vadd.f32 %v6797, %v6767
    %v6799 = vadd.f32 %v6798, %v6768
    %v6800 = vadd.f32 %v6799, %v6769
    %v6801 = vadd.f32 %v6800, %v6770
    %v6802 = vadd.f32 %v6801, %v6771
    %v6803 = vadd.f32 %v6802, %v6772
    %v6804 = vadd.f32 %v6803, %v6773
    %v6805 = vadd.f32 %v6804, %v6774
    %v6806 = vadd.f32 %v6805, %v6775
    %v6807 = vadd.f32 %v6806, %v6776
    %v6808 = vadd.f32 %v6807, %v6777
    %v6809 = vadd.f32 %v6808, %v6778
    %v6810 = vadd.f32 %v6809, %v6779
    %v6811 = vrot.slane %v6810, 4
    %v6812 = vadd.f32 %v6810, %v6811
    %v6813 = vrot.slane %v6812, 2
    %v6814 = vadd.f32 %v6812, %v6813
    %v6815 = vrot.slane %v6814, 1
    %v6816 = vadd.f32 %v6814, %v6815
    %v6817 = vmul.f32 %v6816, %v821
    %v6818 = vadd.f32 %v6817, 1e-05
    %v6819 = vrsqrt.pop %v6818
    %v6820 = vmul.f32 %v6716, %v6819
    %v6821 = vmul.f32 %v6717, %v6819
    %v6822 = vmul.f32 %v6718, %v6819
    %v6823 = vmul.f32 %v6719, %v6819
    %v6824 = vmul.f32 %v6720, %v6819
    %v6825 = vmul.f32 %v6721, %v6819
    %v6826 = vmul.f32 %v6722, %v6819
    %v6827 = vmul.f32 %v6723, %v6819
    %v6828 = vmul.f32 %v6724, %v6819
    %v6829 = vmul.f32 %v6725, %v6819
    %v6830 = vmul.f32 %v6726, %v6819
    %v6831 = vmul.f32 %v6727, %v6819
    %v6832 = vmul.f32 %v6728, %v6819
    %v6833 = vmul.f32 %v6729, %v6819
    %v6834 = vmul.f32 %v6730, %v6819
    %v6835 = vmul.f32 %v6731, %v6819
    %v6836 = vmul.f32 %v6732, %v6819
    %v6837 = vmul.f32 %v6733, %v6819
    %v6838 = vmul.f32 %v6734, %v6819
    %v6839 = vmul.f32 %v6735, %v6819
    %v6840 = vmul.f32 %v6736, %v6819
    %v6841 = vmul.f32 %v6737, %v6819
    %v6842 = vmul.f32 %v6738, %v6819
    %v6843 = vmul.f32 %v6739, %v6819
    %v6844 = vmul.f32 %v6740, %v6819
    %v6845 = vmul.f32 %v6741, %v6819
    %v6846 = vmul.f32 %v6742, %v6819
    %v6847 = vmul.f32 %v6743, %v6819
    %v6848 = vmul.f32 %v6744, %v6819
    %v6849 = vmul.f32 %v6745, %v6819
    %v6850 = vmul.f32 %v6746, %v6819
    %v6851 = vmul.f32 %v6747, %v6819
    %v6853 = vlaneseq
    %v6854 = vshrl.u32 %v6853, 7
    %v6855 = vsub.s32 0, %v6854
    %v6856 = vrot.slane %v6676, %v6855
    %v6858 = vmul.f32 %v6820, %v6856
    %v6859 = vmul.f32 %v6821, %v6856
    %v6860 = vmul.f32 %v6822, %v6856
    %v6861 = vmul.f32 %v6823, %v6856
    %v6862 = vmul.f32 %v6824, %v6856
    %v6863 = vmul.f32 %v6825, %v6856
    %v6864 = vmul.f32 %v6826, %v6856
    %v6865 = vmul.f32 %v6827, %v6856
    %v6866 = vmul.f32 %v6828, %v6856
    %v6867 = vmul.f32 %v6829, %v6856
    %v6868 = vmul.f32 %v6830, %v6856
    %v6869 = vmul.f32 %v6831, %v6856
    %v6870 = vmul.f32 %v6832, %v6856
    %v6871 = vmul.f32 %v6833, %v6856
    %v6872 = vmul.f32 %v6834, %v6856
    %v6873 = vmul.f32 %v6835, %v6856
    %v6874 = vmul.f32 %v6836, %v6856
    %v6875 = vmul.f32 %v6837, %v6856
    %v6876 = vmul.f32 %v6838, %v6856
    %v6877 = vmul.f32 %v6839, %v6856
    %v6878 = vmul.f32 %v6840, %v6856
    %v6879 = vmul.f32 %v6841, %v6856
    %v6880 = vmul.f32 %v6842, %v6856
    %v6881 = vmul.f32 %v6843, %v6856
    %v6882 = vmul.f32 %v6844, %v6856
    %v6883 = vmul.f32 %v6845, %v6856
    %v6884 = vmul.f32 %v6846, %v6856
    %v6885 = vmul.f32 %v6847, %v6856
    %v6886 = vmul.f32 %v6848, %v6856
    %v6887 = vmul.f32 %v6849, %v6856
    %v6888 = vmul.f32 %v6850, %v6856
    %v6889 = vmul.f32 %v6851, %v6856
    %v6891 = vlaneseq
    %v6892 = vshrl.u32 %v6891, 7
    %v6893 = vsub.s32 0, %v6892
    %v6894 = vrot.slane %v6677, %v6893
    %v6896 = vadd.f32 %v6858, %v6894
    %v6897 = vadd.f32 %v6859, %v6894
    %v6898 = vadd.f32 %v6860, %v6894
    %v6899 = vadd.f32 %v6861, %v6894
    %v6900 = vadd.f32 %v6862, %v6894
    %v6901 = vadd.f32 %v6863, %v6894
    %v6902 = vadd.f32 %v6864, %v6894
    %v6903 = vadd.f32 %v6865, %v6894
    %v6904 = vadd.f32 %v6866, %v6894
    %v6905 = vadd.f32 %v6867, %v6894
    %v6906 = vadd.f32 %v6868, %v6894
    %v6907 = vadd.f32 %v6869, %v6894
    %v6908 = vadd.f32 %v6870, %v6894
    %v6909 = vadd.f32 %v6871, %v6894
    %v6910 = vadd.f32 %v6872, %v6894
    %v6911 = vadd.f32 %v6873, %v6894
    %v6912 = vadd.f32 %v6874, %v6894
    %v6913 = vadd.f32 %v6875, %v6894
    %v6914 = vadd.f32 %v6876, %v6894
    %v6915 = vadd.f32 %v6877, %v6894
    %v6916 = vadd.f32 %v6878, %v6894
    %v6917 = vadd.f32 %v6879, %v6894
    %v6918 = vadd.f32 %v6880, %v6894
    %v6919 = vadd.f32 %v6881, %v6894
    %v6920 = vadd.f32 %v6882, %v6894
    %v6921 = vadd.f32 %v6883, %v6894
    %v6922 = vadd.f32 %v6884, %v6894
    %v6923 = vadd.f32 %v6885, %v6894
    %v6924 = vadd.f32 %v6886, %v6894
    %v6925 = vadd.f32 %v6887, %v6894
    %v6926 = vadd.f32 %v6888, %v6894
    %v6927 = vadd.f32 %v6889, %v6894
    %v6928 = vmax.f32 %v6896, 0.0
    %v6929 = vmax.f32 %v6897, 0.0
    %v6930 = vmax.f32 %v6898, 0.0
    %v6931 = vmax.f32 %v6899, 0.0
    %v6932 = vmax.f32 %v6900, 0.0
    %v6933 = vmax.f32 %v6901, 0.0
    %v6934 = vmax.f32 %v6902, 0.0
    %v6935 = vmax.f32 %v6903, 0.0
    %v6936 = vmax.f32 %v6904, 0.0
    %v6937 = vmax.f32 %v6905, 0.0
    %v6938 = vmax.f32 %v6906, 0.0
    %v6939 = vmax.f32 %v6907, 0.0
    %v6940 = vmax.f32 %v6908, 0.0
    %v6941 = vmax.f32 %v6909, 0.0
    %v6942 = vmax.f32 %v6910, 0.0
    %v6943 = vmax.f32 %v6911, 0.0
    %v6944 = vmax.f32 %v6912, 0.0
    %v6945 = vmax.f32 %v6913, 0.0
    %v6946 = vmax.f32 %v6914, 0.0
    %v6947 = vmax.f32 %v6915, 0.0
    %v6948 = vmax.f32 %v6916, 0.0
    %v6949 = vmax.f32 %v6917, 0.0
    %v6950 = vmax.f32 %v6918, 0.0
    %v6951 = vmax.f32 %v6919, 0.0
    %v6952 = vmax.f32 %v6920, 0.0
    %v6953 = vmax.f32 %v6921, 0.0
    %v6954 = vmax.f32 %v6922, 0.0
    %v6955 = vmax.f32 %v6923, 0.0
    %v6956 = vmax.f32 %v6924, 0.0
    %v6957 = vmax.f32 %v6925, 0.0
    %v6958 = vmax.f32 %v6926, 0.0
    %v6959 = vmax.f32 %v6927, 0.0
    %v6960 = vld [vmem:[%s97] sm:$0xf]
    %v6961 = vld [vmem:[%s97 + $0x4] sm:$0xf]
    %v6962 = vld [vmem:[%s97 + $0x8] sm:$0xf]
    %v6963 = vld [vmem:[%s97 + $0xc] sm:$0xf]
    %v6964 = vld [vmem:[%s97 + $0x10] sm:$0xf]
    %v6965 = vld [vmem:[%s97 + $0x14] sm:$0xf]
    %v6966 = vld [vmem:[%s97 + $0x18] sm:$0xf]
    %v6967 = vld [vmem:[%s97 + $0x1c] sm:$0xf]
    %v6968 = vld [vmem:[%s97 + $0x20] sm:$0xf]
    %v6969 = vld [vmem:[%s97 + $0x24] sm:$0xf]
    %v6970 = vld [vmem:[%s97 + $0x28] sm:$0xf]
    %v6971 = vld [vmem:[%s97 + $0x2c] sm:$0xf]
    %v6972 = vld [vmem:[%s97 + $0x30] sm:$0xf]
    %v6973 = vld [vmem:[%s97 + $0x34] sm:$0xf]
    %v6974 = vld [vmem:[%s97 + $0x38] sm:$0xf]
    %v6975 = vld [vmem:[%s97 + $0x3c] sm:$0xf]
    %v6976 = vpack.c.bf16 %v6929, %v6928
    %v6977 = vpack.c.bf16 %v6931, %v6930
    %v6978 = vpack.c.bf16 %v6933, %v6932
    %v6979 = vpack.c.bf16 %v6935, %v6934
    %v6980 = vpack.c.bf16 %v6937, %v6936
    %v6981 = vpack.c.bf16 %v6939, %v6938
    %v6982 = vpack.c.bf16 %v6941, %v6940
    %v6983 = vpack.c.bf16 %v6943, %v6942
    %v6984 = vpack.c.bf16 %v6945, %v6944
    %v6985 = vpack.c.bf16 %v6947, %v6946
    %v6986 = vpack.c.bf16 %v6949, %v6948
    %v6987 = vpack.c.bf16 %v6951, %v6950
    %v6988 = vpack.c.bf16 %v6953, %v6952
    %v6989 = vpack.c.bf16 %v6955, %v6954
    %v6990 = vpack.c.bf16 %v6957, %v6956
    %v6991 = vpack.c.bf16 %v6959, %v6958
    %v6992 = vld [vmem:[#allocation19] sm:$0x1]
    %v6994 = vlaneseq
    %v6995 = vshrl.u32 %v6994, 7
    %v6996 = vsub.s32 0, %v6995
    %v6997 = vrot.slane %v6992, %v6996
    %v7015 = vunpack.c.l.b16 %v6960
    %v7016 = vunpack.c.l.b16 %v6961
    %v7017 = vunpack.c.l.b16 %v6962
    %v7018 = vunpack.c.l.b16 %v6963
    %v7019 = vunpack.c.l.b16 %v6964
    %v7020 = vunpack.c.l.b16 %v6965
    %v7021 = vunpack.c.l.b16 %v6966
    %v7022 = vunpack.c.l.b16 %v6967
    %v7023 = vunpack.c.l.b16 %v6968
    %v7024 = vunpack.c.l.b16 %v6969
    %v7025 = vunpack.c.l.b16 %v6970
    %v7026 = vunpack.c.l.b16 %v6971
    %v7027 = vunpack.c.l.b16 %v6972
    %v7028 = vunpack.c.l.b16 %v6973
    %v7029 = vunpack.c.l.b16 %v6974
    %v7030 = vunpack.c.l.b16 %v6975
    %v7031 = vpack.c.b16 %v7016, %v7015
    %v7032 = vpack.c.b16 %v7018, %v7017
    %v7033 = vpack.c.b16 %v7020, %v7019
    %v7034 = vpack.c.b16 %v7022, %v7021
    %v7035 = vpack.c.b16 %v7024, %v7023
    %v7036 = vpack.c.b16 %v7026, %v7025
    %v7037 = vpack.c.b16 %v7028, %v7027
    %v7038 = vpack.c.b16 %v7030, %v7029
    %7047 = vmatprep.subr.bf16.mxu0 0
    %7048 = vmatpush1.bf16.msra.mxu0 %v7038
    %7049 = vmatprep.subr.bf16.mxu0 0
    %7050 = vmatpush1.bf16.msra.mxu0 %v7037
    %7051 = vmatprep.subr.bf16.mxu0 0
    %7052 = vmatpush1.bf16.msra.mxu0 %v7036
    %7053 = vmatprep.subr.bf16.mxu0 0
    %7054 = vmatpush1.bf16.msra.mxu0 %v7035
    %7055 = vmatprep.subr.bf16.mxu0 0
    %7056 = vmatpush1.bf16.msra.mxu0 %v7034
    %7057 = vmatprep.subr.bf16.mxu0 0
    %7058 = vmatpush1.bf16.msra.mxu0 %v7033
    %7059 = vmatprep.subr.bf16.mxu0 0
    %7060 = vmatpush1.bf16.msra.mxu0 %v7032
    %7061 = vmatprep.subr.bf16.mxu0 0
    %7062 = vmatpush1.bf16.msra.mxu0 %v7031
    %7063 = vmatprep.subr.bf16.mxu0 0
    %7064 = vmatpush2.bf16.msra.mxu0 0
    %7065 = vmatprep.subr.bf16.mxu0 0
    %7066 = vmatpush2.bf16.msra.mxu0 0
    %7067 = vmatprep.subr.bf16.mxu0 0
    %7068 = vmatpush2.bf16.msra.mxu0 0
    %7069 = vmatprep.subr.bf16.mxu0 0
    %7070 = vmatpush2.bf16.msra.mxu0 0
    %7071 = vmatprep.subr.bf16.mxu0 0
    %7072 = vmatpush2.bf16.msra.mxu0 0
    %7073 = vmatprep.subr.bf16.mxu0 0
    %7074 = vmatpush2.bf16.msra.mxu0 0
    %7075 = vmatprep.subr.bf16.mxu0 0
    %7076 = vmatpush2.bf16.msra.mxu0 0
    %7077 = vmatprep.subr.bf16.mxu0 0
    %7078 = vmatpush2.bf16.msra.mxu0 0
    %7079 = vmatprep.mubr.bf16.mxu0 0
    %7080 = vmatmul.mubr.bf16.gmra.mxu0 %v6976
    %v7081 = vpop.f32.mrf.mxu0
    %v7082 = vadd.f32 %v6997, %v7081
    %v7083 = vpop.f32.mrf.mxu0
    %v7084 = vpop.f32.mrf.mxu0
    %v7085 = vadd.f32 %v6997, %v7084
    %v7086 = vpop.f32.mrf.mxu0
    %7087 = vmatprep.mubr.bf16.mxu0 0
    %7088 = vmatmul.mubr.bf16.gmra.mxu0 %v6977
    %v7089 = vpop.f32.mrf.mxu0
    %v7090 = vadd.f32 %v6997, %v7089
    %v7091 = vpop.f32.mrf.mxu0
    %v7092 = vpop.f32.mrf.mxu0
    %v7093 = vadd.f32 %v6997, %v7092
    %v7094 = vpop.f32.mrf.mxu0
    %7095 = vmatprep.mubr.bf16.mxu0 0
    %7096 = vmatmul.mubr.bf16.gmra.mxu0 %v6978
    %v7097 = vpop.f32.mrf.mxu0
    %v7098 = vadd.f32 %v6997, %v7097
    %v7099 = vpop.f32.mrf.mxu0
    %v7100 = vpop.f32.mrf.mxu0
    %v7101 = vadd.f32 %v6997, %v7100
    %v7102 = vpop.f32.mrf.mxu0
    %7103 = vmatprep.mubr.bf16.mxu0 0
    %7104 = vmatmul.mubr.bf16.gmra.mxu0 %v6979
    %v7105 = vpop.f32.mrf.mxu0
    %v7106 = vadd.f32 %v6997, %v7105
    %v7107 = vpop.f32.mrf.mxu0
    %v7108 = vpop.f32.mrf.mxu0
    %v7109 = vadd.f32 %v6997, %v7108
    %v7110 = vpop.f32.mrf.mxu0
    %7111 = vmatprep.mubr.bf16.mxu0 0
    %7112 = vmatmul.mubr.bf16.gmra.mxu0 %v6980
    %v7113 = vpop.f32.mrf.mxu0
    %v7114 = vadd.f32 %v6997, %v7113
    %v7115 = vpop.f32.mrf.mxu0
    %v7116 = vpop.f32.mrf.mxu0
    %v7117 = vadd.f32 %v6997, %v7116
    %v7118 = vpop.f32.mrf.mxu0
    %7119 = vmatprep.mubr.bf16.mxu0 0
    %7120 = vmatmul.mubr.bf16.gmra.mxu0 %v6981
    %v7121 = vpop.f32.mrf.mxu0
    %v7122 = vadd.f32 %v6997, %v7121
    %v7123 = vpop.f32.mrf.mxu0
    %v7124 = vpop.f32.mrf.mxu0
    %v7125 = vadd.f32 %v6997, %v7124
    %v7126 = vpop.f32.mrf.mxu0
    %7127 = vmatprep.mubr.bf16.mxu0 0
    %7128 = vmatmul.mubr.bf16.gmra.mxu0 %v6982
    %v7129 = vpop.f32.mrf.mxu0
    %v7130 = vadd.f32 %v6997, %v7129
    %v7131 = vpop.f32.mrf.mxu0
    %v7132 = vpop.f32.mrf.mxu0
    %v7133 = vadd.f32 %v6997, %v7132
    %v7134 = vpop.f32.mrf.mxu0
    %7135 = vmatprep.mubr.bf16.mxu0 0
    %7136 = vmatmul.mubr.bf16.gmra.mxu0 %v6983
    %v7137 = vpop.f32.mrf.mxu0
    %v7138 = vadd.f32 %v6997, %v7137
    %v7139 = vpop.f32.mrf.mxu0
    %v7140 = vpop.f32.mrf.mxu0
    %v7141 = vadd.f32 %v6997, %v7140
    %v7142 = vpop.f32.mrf.mxu0
    %7143 = vmatprep.mubr.bf16.mxu0 0
    %7144 = vmatmul.mubr.bf16.gmra.mxu0 %v6984
    %v7145 = vpop.f32.mrf.mxu0
    %v7146 = vadd.f32 %v6997, %v7145
    %v7147 = vpop.f32.mrf.mxu0
    %v7148 = vpop.f32.mrf.mxu0
    %v7149 = vadd.f32 %v6997, %v7148
    %v7150 = vpop.f32.mrf.mxu0
    %7151 = vmatprep.mubr.bf16.mxu0 0
    %7152 = vmatmul.mubr.bf16.gmra.mxu0 %v6985
    %v7153 = vpop.f32.mrf.mxu0
    %v7154 = vadd.f32 %v6997, %v7153
    %v7155 = vpop.f32.mrf.mxu0
    %v7156 = vpop.f32.mrf.mxu0
    %v7157 = vadd.f32 %v6997, %v7156
    %v7158 = vpop.f32.mrf.mxu0
    %7159 = vmatprep.mubr.bf16.mxu0 0
    %7160 = vmatmul.mubr.bf16.gmra.mxu0 %v6986
    %v7161 = vpop.f32.mrf.mxu0
    %v7162 = vadd.f32 %v6997, %v7161
    %v7163 = vpop.f32.mrf.mxu0
    %v7164 = vpop.f32.mrf.mxu0
    %v7165 = vadd.f32 %v6997, %v7164
    %v7166 = vpop.f32.mrf.mxu0
    %7167 = vmatprep.mubr.bf16.mxu0 0
    %7168 = vmatmul.mubr.bf16.gmra.mxu0 %v6987
    %v7169 = vpop.f32.mrf.mxu0
    %v7170 = vadd.f32 %v6997, %v7169
    %v7171 = vpop.f32.mrf.mxu0
    %v7172 = vpop.f32.mrf.mxu0
    %v7173 = vadd.f32 %v6997, %v7172
    %v7174 = vpop.f32.mrf.mxu0
    %7175 = vmatprep.mubr.bf16.mxu0 0
    %7176 = vmatmul.mubr.bf16.gmra.mxu0 %v6988
    %v7177 = vpop.f32.mrf.mxu0
    %v7178 = vadd.f32 %v6997, %v7177
    %v7179 = vpop.f32.mrf.mxu0
    %v7180 = vpop.f32.mrf.mxu0
    %v7181 = vadd.f32 %v6997, %v7180
    %v7182 = vpop.f32.mrf.mxu0
    %7183 = vmatprep.mubr.bf16.mxu0 0
    %7184 = vmatmul.mubr.bf16.gmra.mxu0 %v6989
    %v7185 = vpop.f32.mrf.mxu0
    %v7186 = vadd.f32 %v6997, %v7185
    %v7187 = vpop.f32.mrf.mxu0
    %v7188 = vpop.f32.mrf.mxu0
    %v7189 = vadd.f32 %v6997, %v7188
    %v7190 = vpop.f32.mrf.mxu0
    %7191 = vmatprep.mubr.bf16.mxu0 0
    %7192 = vmatmul.mubr.bf16.gmra.mxu0 %v6990
    %v7193 = vpop.f32.mrf.mxu0
    %v7194 = vadd.f32 %v6997, %v7193
    %v7195 = vpop.f32.mrf.mxu0
    %v7196 = vpop.f32.mrf.mxu0
    %v7197 = vadd.f32 %v6997, %v7196
    %v7198 = vpop.f32.mrf.mxu0
    %7199 = vmatprep.mubr.bf16.mxu0 0
    %7200 = vmatmul.mubr.bf16.gmra.mxu0 %v6991
    %v7201 = vpop.f32.mrf.mxu0
    %v7202 = vadd.f32 %v6997, %v7201
    %v7203 = vpop.f32.mrf.mxu0
    %v7204 = vpop.f32.mrf.mxu0
    %v7205 = vadd.f32 %v6997, %v7204
    %v7206 = vpop.f32.mrf.mxu0
    %7207 = vdwg.mxu0
    %v7208 = vld [vmem:[#allocation21] sm:$0x1]
    %v7209 = vld [vmem:[#allocation22] sm:$0x1]
    %v7210 = vadd.f32 %v7082, %v7085
    %v7211 = vadd.f32 %v7210, %v7090
    %v7212 = vadd.f32 %v7211, %v7093
    %v7213 = vadd.f32 %v7212, %v7098
    %v7214 = vadd.f32 %v7213, %v7101
    %v7215 = vadd.f32 %v7214, %v7106
    %v7216 = vadd.f32 %v7215, %v7109
    %v7217 = vadd.f32 %v7216, %v7114
    %v7218 = vadd.f32 %v7217, %v7117
    %v7219 = vadd.f32 %v7218, %v7122
    %v7220 = vadd.f32 %v7219, %v7125
    %v7221 = vadd.f32 %v7220, %v7130
    %v7222 = vadd.f32 %v7221, %v7133
    %v7223 = vadd.f32 %v7222, %v7138
    %v7224 = vadd.f32 %v7223, %v7141
    %v7225 = vadd.f32 %v7224, %v7146
    %v7226 = vadd.f32 %v7225, %v7149
    %v7227 = vadd.f32 %v7226, %v7154
    %v7228 = vadd.f32 %v7227, %v7157
    %v7229 = vadd.f32 %v7228, %v7162
    %v7230 = vadd.f32 %v7229, %v7165
    %v7231 = vadd.f32 %v7230, %v7170
    %v7232 = vadd.f32 %v7231, %v7173
    %v7233 = vadd.f32 %v7232, %v7178
    %v7234 = vadd.f32 %v7233, %v7181
    %v7235 = vadd.f32 %v7234, %v7186
    %v7236 = vadd.f32 %v7235, %v7189
    %v7237 = vadd.f32 %v7236, %v7194
    %v7238 = vadd.f32 %v7237, %v7197
    %v7239 = vadd.f32 %v7238, %v7202
    %v7240 = vadd.f32 %v7239, %v7205
    %v7241 = vrot.slane %v7240, 4
    %v7242 = vadd.f32 %v7240, %v7241
    %v7243 = vrot.slane %v7242, 2
    %v7244 = vadd.f32 %v7242, %v7243
    %v7245 = vrot.slane %v7244, 1
    %v7246 = vadd.f32 %v7244, %v7245
    %v7247 = vmul.f32 %v7246, %v821
    %v7248 = vsub.f32 %v7082, %v7247
    %v7249 = vsub.f32 %v7085, %v7247
    %v7250 = vsub.f32 %v7090, %v7247
    %v7251 = vsub.f32 %v7093, %v7247
    %v7252 = vsub.f32 %v7098, %v7247
    %v7253 = vsub.f32 %v7101, %v7247
    %v7254 = vsub.f32 %v7106, %v7247
    %v7255 = vsub.f32 %v7109, %v7247
    %v7256 = vsub.f32 %v7114, %v7247
    %v7257 = vsub.f32 %v7117, %v7247
    %v7258 = vsub.f32 %v7122, %v7247
    %v7259 = vsub.f32 %v7125, %v7247
    %v7260 = vsub.f32 %v7130, %v7247
    %v7261 = vsub.f32 %v7133, %v7247
    %v7262 = vsub.f32 %v7138, %v7247
    %v7263 = vsub.f32 %v7141, %v7247
    %v7264 = vsub.f32 %v7146, %v7247
    %v7265 = vsub.f32 %v7149, %v7247
    %v7266 = vsub.f32 %v7154, %v7247
    %v7267 = vsub.f32 %v7157, %v7247
    %v7268 = vsub.f32 %v7162, %v7247
    %v7269 = vsub.f32 %v7165, %v7247
    %v7270 = vsub.f32 %v7170, %v7247
    %v7271 = vsub.f32 %v7173, %v7247
    %v7272 = vsub.f32 %v7178, %v7247
    %v7273 = vsub.f32 %v7181, %v7247
    %v7274 = vsub.f32 %v7186, %v7247
    %v7275 = vsub.f32 %v7189, %v7247
    %v7276 = vsub.f32 %v7194, %v7247
    %v7277 = vsub.f32 %v7197, %v7247
    %v7278 = vsub.f32 %v7202, %v7247
    %v7279 = vsub.f32 %v7205, %v7247
    %v7280 = vmul.f32 %v7248, %v7248
    %v7281 = vmul.f32 %v7249, %v7249
    %v7282 = vmul.f32 %v7250, %v7250
    %v7283 = vmul.f32 %v7251, %v7251
    %v7284 = vmul.f32 %v7252, %v7252
    %v7285 = vmul.f32 %v7253, %v7253
    %v7286 = vmul.f32 %v7254, %v7254
    %v7287 = vmul.f32 %v7255, %v7255
    %v7288 = vmul.f32 %v7256, %v7256
    %v7289 = vmul.f32 %v7257, %v7257
    %v7290 = vmul.f32 %v7258, %v7258
    %v7291 = vmul.f32 %v7259, %v7259
    %v7292 = vmul.f32 %v7260, %v7260
    %v7293 = vmul.f32 %v7261, %v7261
    %v7294 = vmul.f32 %v7262, %v7262
    %v7295 = vmul.f32 %v7263, %v7263
    %v7296 = vmul.f32 %v7264, %v7264
    %v7297 = vmul.f32 %v7265, %v7265
    %v7298 = vmul.f32 %v7266, %v7266
    %v7299 = vmul.f32 %v7267, %v7267
    %v7300 = vmul.f32 %v7268, %v7268
    %v7301 = vmul.f32 %v7269, %v7269
    %v7302 = vmul.f32 %v7270, %v7270
    %v7303 = vmul.f32 %v7271, %v7271
    %v7304 = vmul.f32 %v7272, %v7272
    %v7305 = vmul.f32 %v7273, %v7273
    %v7306 = vmul.f32 %v7274, %v7274
    %v7307 = vmul.f32 %v7275, %v7275
    %v7308 = vmul.f32 %v7276, %v7276
    %v7309 = vmul.f32 %v7277, %v7277
    %v7310 = vmul.f32 %v7278, %v7278
    %v7311 = vmul.f32 %v7279, %v7279
    %v7312 = vadd.f32 %v7280, %v7281
    %v7313 = vadd.f32 %v7312, %v7282
    %v7314 = vadd.f32 %v7313, %v7283
    %v7315 = vadd.f32 %v7314, %v7284
    %v7316 = vadd.f32 %v7315, %v7285
    %v7317 = vadd.f32 %v7316, %v7286
    %v7318 = vadd.f32 %v7317, %v7287
    %v7319 = vadd.f32 %v7318, %v7288
    %v7320 = vadd.f32 %v7319, %v7289
    %v7321 = vadd.f32 %v7320, %v7290
    %v7322 = vadd.f32 %v7321, %v7291
    %v7323 = vadd.f32 %v7322, %v7292
    %v7324 = vadd.f32 %v7323, %v7293
    %v7325 = vadd.f32 %v7324, %v7294
    %v7326 = vadd.f32 %v7325, %v7295
    %v7327 = vadd.f32 %v7326, %v7296
    %v7328 = vadd.f32 %v7327, %v7297
    %v7329 = vadd.f32 %v7328, %v7298
    %v7330 = vadd.f32 %v7329, %v7299
    %v7331 = vadd.f32 %v7330, %v7300
    %v7332 = vadd.f32 %v7331, %v7301
    %v7333 = vadd.f32 %v7332, %v7302
    %v7334 = vadd.f32 %v7333, %v7303
    %v7335 = vadd.f32 %v7334, %v7304
    %v7336 = vadd.f32 %v7335, %v7305
    %v7337 = vadd.f32 %v7336, %v7306
    %v7338 = vadd.f32 %v7337, %v7307
    %v7339 = vadd.f32 %v7338, %v7308
    %v7340 = vadd.f32 %v7339, %v7309
    %v7341 = vadd.f32 %v7340, %v7310
    %v7342 = vadd.f32 %v7341, %v7311
    %v7343 = vrot.slane %v7342, 4
    %v7344 = vadd.f32 %v7342, %v7343
    %v7345 = vrot.slane %v7344, 2
    %v7346 = vadd.f32 %v7344, %v7345
    %v7347 = vrot.slane %v7346, 1
    %v7348 = vadd.f32 %v7346, %v7347
    %v7349 = vmul.f32 %v7348, %v821
    %v7350 = vadd.f32 %v7349, 1e-05
    %v7351 = vrsqrt.pop %v7350
    %v7352 = vmul.f32 %v7248, %v7351
    %v7353 = vmul.f32 %v7249, %v7351
    %v7354 = vmul.f32 %v7250, %v7351
    %v7355 = vmul.f32 %v7251, %v7351
    %v7356 = vmul.f32 %v7252, %v7351
    %v7357 = vmul.f32 %v7253, %v7351
    %v7358 = vmul.f32 %v7254, %v7351
    %v7359 = vmul.f32 %v7255, %v7351
    %v7360 = vmul.f32 %v7256, %v7351
    %v7361 = vmul.f32 %v7257, %v7351
    %v7362 = vmul.f32 %v7258, %v7351
    %v7363 = vmul.f32 %v7259, %v7351
    %v7364 = vmul.f32 %v7260, %v7351
    %v7365 = vmul.f32 %v7261, %v7351
    %v7366 = vmul.f32 %v7262, %v7351
    %v7367 = vmul.f32 %v7263, %v7351
    %v7368 = vmul.f32 %v7264, %v7351
    %v7369 = vmul.f32 %v7265, %v7351
    %v7370 = vmul.f32 %v7266, %v7351
    %v7371 = vmul.f32 %v7267, %v7351
    %v7372 = vmul.f32 %v7268, %v7351
    %v7373 = vmul.f32 %v7269, %v7351
    %v7374 = vmul.f32 %v7270, %v7351
    %v7375 = vmul.f32 %v7271, %v7351
    %v7376 = vmul.f32 %v7272, %v7351
    %v7377 = vmul.f32 %v7273, %v7351
    %v7378 = vmul.f32 %v7274, %v7351
    %v7379 = vmul.f32 %v7275, %v7351
    %v7380 = vmul.f32 %v7276, %v7351
    %v7381 = vmul.f32 %v7277, %v7351
    %v7382 = vmul.f32 %v7278, %v7351
    %v7383 = vmul.f32 %v7279, %v7351
    %v7385 = vlaneseq
    %v7386 = vshrl.u32 %v7385, 7
    %v7387 = vsub.s32 0, %v7386
    %v7388 = vrot.slane %v7208, %v7387
    %v7390 = vmul.f32 %v7352, %v7388
    %v7391 = vmul.f32 %v7353, %v7388
    %v7392 = vmul.f32 %v7354, %v7388
    %v7393 = vmul.f32 %v7355, %v7388
    %v7394 = vmul.f32 %v7356, %v7388
    %v7395 = vmul.f32 %v7357, %v7388
    %v7396 = vmul.f32 %v7358, %v7388
    %v7397 = vmul.f32 %v7359, %v7388
    %v7398 = vmul.f32 %v7360, %v7388
    %v7399 = vmul.f32 %v7361, %v7388
    %v7400 = vmul.f32 %v7362, %v7388
    %v7401 = vmul.f32 %v7363, %v7388
    %v7402 = vmul.f32 %v7364, %v7388
    %v7403 = vmul.f32 %v7365, %v7388
    %v7404 = vmul.f32 %v7366, %v7388
    %v7405 = vmul.f32 %v7367, %v7388
    %v7406 = vmul.f32 %v7368, %v7388
    %v7407 = vmul.f32 %v7369, %v7388
    %v7408 = vmul.f32 %v7370, %v7388
    %v7409 = vmul.f32 %v7371, %v7388
    %v7410 = vmul.f32 %v7372, %v7388
    %v7411 = vmul.f32 %v7373, %v7388
    %v7412 = vmul.f32 %v7374, %v7388
    %v7413 = vmul.f32 %v7375, %v7388
    %v7414 = vmul.f32 %v7376, %v7388
    %v7415 = vmul.f32 %v7377, %v7388
    %v7416 = vmul.f32 %v7378, %v7388
    %v7417 = vmul.f32 %v7379, %v7388
    %v7418 = vmul.f32 %v7380, %v7388
    %v7419 = vmul.f32 %v7381, %v7388
    %v7420 = vmul.f32 %v7382, %v7388
    %v7421 = vmul.f32 %v7383, %v7388
    %v7423 = vlaneseq
    %v7424 = vshrl.u32 %v7423, 7
    %v7425 = vsub.s32 0, %v7424
    %v7426 = vrot.slane %v7209, %v7425
    %v7428 = vadd.f32 %v7390, %v7426
    %v7429 = vadd.f32 %v7391, %v7426
    %v7430 = vadd.f32 %v7392, %v7426
    %v7431 = vadd.f32 %v7393, %v7426
    %v7432 = vadd.f32 %v7394, %v7426
    %v7433 = vadd.f32 %v7395, %v7426
    %v7434 = vadd.f32 %v7396, %v7426
    %v7435 = vadd.f32 %v7397, %v7426
    %v7436 = vadd.f32 %v7398, %v7426
    %v7437 = vadd.f32 %v7399, %v7426
    %v7438 = vadd.f32 %v7400, %v7426
    %v7439 = vadd.f32 %v7401, %v7426
    %v7440 = vadd.f32 %v7402, %v7426
    %v7441 = vadd.f32 %v7403, %v7426
    %v7442 = vadd.f32 %v7404, %v7426
    %v7443 = vadd.f32 %v7405, %v7426
    %v7444 = vadd.f32 %v7406, %v7426
    %v7445 = vadd.f32 %v7407, %v7426
    %v7446 = vadd.f32 %v7408, %v7426
    %v7447 = vadd.f32 %v7409, %v7426
    %v7448 = vadd.f32 %v7410, %v7426
    %v7449 = vadd.f32 %v7411, %v7426
    %v7450 = vadd.f32 %v7412, %v7426
    %v7451 = vadd.f32 %v7413, %v7426
    %v7452 = vadd.f32 %v7414, %v7426
    %v7453 = vadd.f32 %v7415, %v7426
    %v7454 = vadd.f32 %v7416, %v7426
    %v7455 = vadd.f32 %v7417, %v7426
    %v7456 = vadd.f32 %v7418, %v7426
    %v7457 = vadd.f32 %v7419, %v7426
    %v7458 = vadd.f32 %v7420, %v7426
    %v7459 = vadd.f32 %v7421, %v7426
    %v7460 = vmax.f32 %v7428, 0.0
    %v7461 = vmax.f32 %v7429, 0.0
    %v7462 = vmax.f32 %v7430, 0.0
    %v7463 = vmax.f32 %v7431, 0.0
    %v7464 = vmax.f32 %v7432, 0.0
    %v7465 = vmax.f32 %v7433, 0.0
    %v7466 = vmax.f32 %v7434, 0.0
    %v7467 = vmax.f32 %v7435, 0.0
    %v7468 = vmax.f32 %v7436, 0.0
    %v7469 = vmax.f32 %v7437, 0.0
    %v7470 = vmax.f32 %v7438, 0.0
    %v7471 = vmax.f32 %v7439, 0.0
    %v7472 = vmax.f32 %v7440, 0.0
    %v7473 = vmax.f32 %v7441, 0.0
    %v7474 = vmax.f32 %v7442, 0.0
    %v7475 = vmax.f32 %v7443, 0.0
    %v7476 = vmax.f32 %v7444, 0.0
    %v7477 = vmax.f32 %v7445, 0.0
    %v7478 = vmax.f32 %v7446, 0.0
    %v7479 = vmax.f32 %v7447, 0.0
    %v7480 = vmax.f32 %v7448, 0.0
    %v7481 = vmax.f32 %v7449, 0.0
    %v7482 = vmax.f32 %v7450, 0.0
    %v7483 = vmax.f32 %v7451, 0.0
    %v7484 = vmax.f32 %v7452, 0.0
    %v7485 = vmax.f32 %v7453, 0.0
    %v7486 = vmax.f32 %v7454, 0.0
    %v7487 = vmax.f32 %v7455, 0.0
    %v7488 = vmax.f32 %v7456, 0.0
    %v7489 = vmax.f32 %v7457, 0.0
    %v7490 = vmax.f32 %v7458, 0.0
    %v7491 = vmax.f32 %v7459, 0.0
    %v7492 = vld [vmem:[%s105] sm:$0xf]
    %v7493 = vld [vmem:[%s105 + $0x4] sm:$0xf]
    %v7494 = vld [vmem:[%s105 + $0x8] sm:$0xf]
    %v7495 = vld [vmem:[%s105 + $0xc] sm:$0xf]
    %v7496 = vld [vmem:[%s105 + $0x10] sm:$0xf]
    %v7497 = vld [vmem:[%s105 + $0x14] sm:$0xf]
    %v7498 = vld [vmem:[%s105 + $0x18] sm:$0xf]
    %v7499 = vld [vmem:[%s105 + $0x1c] sm:$0xf]
    %v7500 = vld [vmem:[%s105 + $0x20] sm:$0xf]
    %v7501 = vld [vmem:[%s105 + $0x24] sm:$0xf]
    %v7502 = vld [vmem:[%s105 + $0x28] sm:$0xf]
    %v7503 = vld [vmem:[%s105 + $0x2c] sm:$0xf]
    %v7504 = vld [vmem:[%s105 + $0x30] sm:$0xf]
    %v7505 = vld [vmem:[%s105 + $0x34] sm:$0xf]
    %v7506 = vld [vmem:[%s105 + $0x38] sm:$0xf]
    %v7507 = vld [vmem:[%s105 + $0x3c] sm:$0xf]
    %v7508 = vpack.c.bf16 %v7461, %v7460
    %v7509 = vpack.c.bf16 %v7463, %v7462
    %v7510 = vpack.c.bf16 %v7465, %v7464
    %v7511 = vpack.c.bf16 %v7467, %v7466
    %v7512 = vpack.c.bf16 %v7469, %v7468
    %v7513 = vpack.c.bf16 %v7471, %v7470
    %v7514 = vpack.c.bf16 %v7473, %v7472
    %v7515 = vpack.c.bf16 %v7475, %v7474
    %v7516 = vpack.c.bf16 %v7477, %v7476
    %v7517 = vpack.c.bf16 %v7479, %v7478
    %v7518 = vpack.c.bf16 %v7481, %v7480
    %v7519 = vpack.c.bf16 %v7483, %v7482
    %v7520 = vpack.c.bf16 %v7485, %v7484
    %v7521 = vpack.c.bf16 %v7487, %v7486
    %v7522 = vpack.c.bf16 %v7489, %v7488
    %v7523 = vpack.c.bf16 %v7491, %v7490
    %v7524 = vld [vmem:[#allocation24] sm:$0x1]
    %v7526 = vlaneseq
    %v7527 = vshrl.u32 %v7526, 7
    %v7528 = vsub.s32 0, %v7527
    %v7529 = vrot.slane %v7524, %v7528
    %v7547 = vunpack.c.l.b16 %v7492
    %v7548 = vunpack.c.l.b16 %v7493
    %v7549 = vunpack.c.l.b16 %v7494
    %v7550 = vunpack.c.l.b16 %v7495
    %v7551 = vunpack.c.l.b16 %v7496
    %v7552 = vunpack.c.l.b16 %v7497
    %v7553 = vunpack.c.l.b16 %v7498
    %v7554 = vunpack.c.l.b16 %v7499
    %v7555 = vunpack.c.l.b16 %v7500
    %v7556 = vunpack.c.l.b16 %v7501
    %v7557 = vunpack.c.l.b16 %v7502
    %v7558 = vunpack.c.l.b16 %v7503
    %v7559 = vunpack.c.l.b16 %v7504
    %v7560 = vunpack.c.l.b16 %v7505
    %v7561 = vunpack.c.l.b16 %v7506
    %v7562 = vunpack.c.l.b16 %v7507
    %v7563 = vpack.c.b16 %v7548, %v7547
    %v7564 = vpack.c.b16 %v7550, %v7549
    %v7565 = vpack.c.b16 %v7552, %v7551
    %v7566 = vpack.c.b16 %v7554, %v7553
    %v7567 = vpack.c.b16 %v7556, %v7555
    %v7568 = vpack.c.b16 %v7558, %v7557
    %v7569 = vpack.c.b16 %v7560, %v7559
    %v7570 = vpack.c.b16 %v7562, %v7561
    %7579 = vmatprep.subr.bf16.mxu0 0
    %7580 = vmatpush1.bf16.msra.mxu0 %v7570
    %7581 = vmatprep.subr.bf16.mxu0 0
    %7582 = vmatpush1.bf16.msra.mxu0 %v7569
    %7583 = vmatprep.subr.bf16.mxu0 0
    %7584 = vmatpush1.bf16.msra.mxu0 %v7568
    %7585 = vmatprep.subr.bf16.mxu0 0
    %7586 = vmatpush1.bf16.msra.mxu0 %v7567
    %7587 = vmatprep.subr.bf16.mxu0 0
    %7588 = vmatpush1.bf16.msra.mxu0 %v7566
    %7589 = vmatprep.subr.bf16.mxu0 0
    %7590 = vmatpush1.bf16.msra.mxu0 %v7565
    %7591 = vmatprep.subr.bf16.mxu0 0
    %7592 = vmatpush1.bf16.msra.mxu0 %v7564
    %7593 = vmatprep.subr.bf16.mxu0 0
    %7594 = vmatpush1.bf16.msra.mxu0 %v7563
    %7595 = vmatprep.subr.bf16.mxu0 0
    %7596 = vmatpush2.bf16.msra.mxu0 0
    %7597 = vmatprep.subr.bf16.mxu0 0
    %7598 = vmatpush2.bf16.msra.mxu0 0
    %7599 = vmatprep.subr.bf16.mxu0 0
    %7600 = vmatpush2.bf16.msra.mxu0 0
    %7601 = vmatprep.subr.bf16.mxu0 0
    %7602 = vmatpush2.bf16.msra.mxu0 0
    %7603 = vmatprep.subr.bf16.mxu0 0
    %7604 = vmatpush2.bf16.msra.mxu0 0
    %7605 = vmatprep.subr.bf16.mxu0 0
    %7606 = vmatpush2.bf16.msra.mxu0 0
    %7607 = vmatprep.subr.bf16.mxu0 0
    %7608 = vmatpush2.bf16.msra.mxu0 0
    %7609 = vmatprep.subr.bf16.mxu0 0
    %7610 = vmatpush2.bf16.msra.mxu0 0
    %7611 = vmatprep.mubr.bf16.mxu0 0
    %7612 = vmatmul.mubr.bf16.gmra.mxu0 %v7508
    %v7613 = vpop.f32.mrf.mxu0
    %v7614 = vadd.f32 %v7529, %v7613
    %v7615 = vpop.f32.mrf.mxu0
    %v7616 = vpop.f32.mrf.mxu0
    %v7617 = vadd.f32 %v7529, %v7616
    %v7618 = vpop.f32.mrf.mxu0
    %7619 = vmatprep.mubr.bf16.mxu0 0
    %7620 = vmatmul.mubr.bf16.gmra.mxu0 %v7509
    %v7621 = vpop.f32.mrf.mxu0
    %v7622 = vadd.f32 %v7529, %v7621
    %v7623 = vpop.f32.mrf.mxu0
    %v7624 = vpop.f32.mrf.mxu0
    %v7625 = vadd.f32 %v7529, %v7624
    %v7626 = vpop.f32.mrf.mxu0
    %7627 = vmatprep.mubr.bf16.mxu0 0
    %7628 = vmatmul.mubr.bf16.gmra.mxu0 %v7510
    %v7629 = vpop.f32.mrf.mxu0
    %v7630 = vadd.f32 %v7529, %v7629
    %v7631 = vpop.f32.mrf.mxu0
    %v7632 = vpop.f32.mrf.mxu0
    %v7633 = vadd.f32 %v7529, %v7632
    %v7634 = vpop.f32.mrf.mxu0
    %7635 = vmatprep.mubr.bf16.mxu0 0
    %7636 = vmatmul.mubr.bf16.gmra.mxu0 %v7511
    %v7637 = vpop.f32.mrf.mxu0
    %v7638 = vadd.f32 %v7529, %v7637
    %v7639 = vpop.f32.mrf.mxu0
    %v7640 = vpop.f32.mrf.mxu0
    %v7641 = vadd.f32 %v7529, %v7640
    %v7642 = vpop.f32.mrf.mxu0
    %7643 = vmatprep.mubr.bf16.mxu0 0
    %7644 = vmatmul.mubr.bf16.gmra.mxu0 %v7512
    %v7645 = vpop.f32.mrf.mxu0
    %v7646 = vadd.f32 %v7529, %v7645
    %v7647 = vpop.f32.mrf.mxu0
    %v7648 = vpop.f32.mrf.mxu0
    %v7649 = vadd.f32 %v7529, %v7648
    %v7650 = vpop.f32.mrf.mxu0
    %7651 = vmatprep.mubr.bf16.mxu0 0
    %7652 = vmatmul.mubr.bf16.gmra.mxu0 %v7513
    %v7653 = vpop.f32.mrf.mxu0
    %v7654 = vadd.f32 %v7529, %v7653
    %v7655 = vpop.f32.mrf.mxu0
    %v7656 = vpop.f32.mrf.mxu0
    %v7657 = vadd.f32 %v7529, %v7656
    %v7658 = vpop.f32.mrf.mxu0
    %7659 = vmatprep.mubr.bf16.mxu0 0
    %7660 = vmatmul.mubr.bf16.gmra.mxu0 %v7514
    %v7661 = vpop.f32.mrf.mxu0
    %v7662 = vadd.f32 %v7529, %v7661
    %v7663 = vpop.f32.mrf.mxu0
    %v7664 = vpop.f32.mrf.mxu0
    %v7665 = vadd.f32 %v7529, %v7664
    %v7666 = vpop.f32.mrf.mxu0
    %7667 = vmatprep.mubr.bf16.mxu0 0
    %7668 = vmatmul.mubr.bf16.gmra.mxu0 %v7515
    %v7669 = vpop.f32.mrf.mxu0
    %v7670 = vadd.f32 %v7529, %v7669
    %v7671 = vpop.f32.mrf.mxu0
    %v7672 = vpop.f32.mrf.mxu0
    %v7673 = vadd.f32 %v7529, %v7672
    %v7674 = vpop.f32.mrf.mxu0
    %7675 = vmatprep.mubr.bf16.mxu0 0
    %7676 = vmatmul.mubr.bf16.gmra.mxu0 %v7516
    %v7677 = vpop.f32.mrf.mxu0
    %v7678 = vadd.f32 %v7529, %v7677
    %v7679 = vpop.f32.mrf.mxu0
    %v7680 = vpop.f32.mrf.mxu0
    %v7681 = vadd.f32 %v7529, %v7680
    %v7682 = vpop.f32.mrf.mxu0
    %7683 = vmatprep.mubr.bf16.mxu0 0
    %7684 = vmatmul.mubr.bf16.gmra.mxu0 %v7517
    %v7685 = vpop.f32.mrf.mxu0
    %v7686 = vadd.f32 %v7529, %v7685
    %v7687 = vpop.f32.mrf.mxu0
    %v7688 = vpop.f32.mrf.mxu0
    %v7689 = vadd.f32 %v7529, %v7688
    %v7690 = vpop.f32.mrf.mxu0
    %7691 = vmatprep.mubr.bf16.mxu0 0
    %7692 = vmatmul.mubr.bf16.gmra.mxu0 %v7518
    %v7693 = vpop.f32.mrf.mxu0
    %v7694 = vadd.f32 %v7529, %v7693
    %v7695 = vpop.f32.mrf.mxu0
    %v7696 = vpop.f32.mrf.mxu0
    %v7697 = vadd.f32 %v7529, %v7696
    %v7698 = vpop.f32.mrf.mxu0
    %7699 = vmatprep.mubr.bf16.mxu0 0
    %7700 = vmatmul.mubr.bf16.gmra.mxu0 %v7519
    %v7701 = vpop.f32.mrf.mxu0
    %v7702 = vadd.f32 %v7529, %v7701
    %v7703 = vpop.f32.mrf.mxu0
    %v7704 = vpop.f32.mrf.mxu0
    %v7705 = vadd.f32 %v7529, %v7704
    %v7706 = vpop.f32.mrf.mxu0
    %7707 = vmatprep.mubr.bf16.mxu0 0
    %7708 = vmatmul.mubr.bf16.gmra.mxu0 %v7520
    %v7709 = vpop.f32.mrf.mxu0
    %v7710 = vadd.f32 %v7529, %v7709
    %v7711 = vpop.f32.mrf.mxu0
    %v7712 = vpop.f32.mrf.mxu0
    %v7713 = vadd.f32 %v7529, %v7712
    %v7714 = vpop.f32.mrf.mxu0
    %7715 = vmatprep.mubr.bf16.mxu0 0
    %7716 = vmatmul.mubr.bf16.gmra.mxu0 %v7521
    %v7717 = vpop.f32.mrf.mxu0
    %v7718 = vadd.f32 %v7529, %v7717
    %v7719 = vpop.f32.mrf.mxu0
    %v7720 = vpop.f32.mrf.mxu0
    %v7721 = vadd.f32 %v7529, %v7720
    %v7722 = vpop.f32.mrf.mxu0
    %7723 = vmatprep.mubr.bf16.mxu0 0
    %7724 = vmatmul.mubr.bf16.gmra.mxu0 %v7522
    %v7725 = vpop.f32.mrf.mxu0
    %v7726 = vadd.f32 %v7529, %v7725
    %v7727 = vpop.f32.mrf.mxu0
    %v7728 = vpop.f32.mrf.mxu0
    %v7729 = vadd.f32 %v7529, %v7728
    %v7730 = vpop.f32.mrf.mxu0
    %7731 = vmatprep.mubr.bf16.mxu0 0
    %7732 = vmatmul.mubr.bf16.gmra.mxu0 %v7523
    %v7733 = vpop.f32.mrf.mxu0
    %v7734 = vadd.f32 %v7529, %v7733
    %v7735 = vpop.f32.mrf.mxu0
    %v7736 = vpop.f32.mrf.mxu0
    %v7737 = vadd.f32 %v7529, %v7736
    %v7738 = vpop.f32.mrf.mxu0
    %7739 = vdwg.mxu0
    %v7740 = vld [vmem:[#allocation25] sm:$0x1]
    %v7741 = vld [vmem:[#allocation27] sm:$0x1]
    %v7742 = vadd.f32 %v7614, %v7617
    %v7743 = vadd.f32 %v7742, %v7622
    %v7744 = vadd.f32 %v7743, %v7625
    %v7745 = vadd.f32 %v7744, %v7630
    %v7746 = vadd.f32 %v7745, %v7633
    %v7747 = vadd.f32 %v7746, %v7638
    %v7748 = vadd.f32 %v7747, %v7641
    %v7749 = vadd.f32 %v7748, %v7646
    %v7750 = vadd.f32 %v7749, %v7649
    %v7751 = vadd.f32 %v7750, %v7654
    %v7752 = vadd.f32 %v7751, %v7657
    %v7753 = vadd.f32 %v7752, %v7662
    %v7754 = vadd.f32 %v7753, %v7665
    %v7755 = vadd.f32 %v7754, %v7670
    %v7756 = vadd.f32 %v7755, %v7673
    %v7757 = vadd.f32 %v7756, %v7678
    %v7758 = vadd.f32 %v7757, %v7681
    %v7759 = vadd.f32 %v7758, %v7686
    %v7760 = vadd.f32 %v7759, %v7689
    %v7761 = vadd.f32 %v7760, %v7694
    %v7762 = vadd.f32 %v7761, %v7697
    %v7763 = vadd.f32 %v7762, %v7702
    %v7764 = vadd.f32 %v7763, %v7705
    %v7765 = vadd.f32 %v7764, %v7710
    %v7766 = vadd.f32 %v7765, %v7713
    %v7767 = vadd.f32 %v7766, %v7718
    %v7768 = vadd.f32 %v7767, %v7721
    %v7769 = vadd.f32 %v7768, %v7726
    %v7770 = vadd.f32 %v7769, %v7729
    %v7771 = vadd.f32 %v7770, %v7734
    %v7772 = vadd.f32 %v7771, %v7737
    %v7773 = vrot.slane %v7772, 4
    %v7774 = vadd.f32 %v7772, %v7773
    %v7775 = vrot.slane %v7774, 2
    %v7776 = vadd.f32 %v7774, %v7775
    %v7777 = vrot.slane %v7776, 1
    %v7778 = vadd.f32 %v7776, %v7777
    %v7779 = vmul.f32 %v7778, %v821
    %v7780 = vsub.f32 %v7614, %v7779
    %v7781 = vsub.f32 %v7617, %v7779
    %v7782 = vsub.f32 %v7622, %v7779
    %v7783 = vsub.f32 %v7625, %v7779
    %v7784 = vsub.f32 %v7630, %v7779
    %v7785 = vsub.f32 %v7633, %v7779
    %v7786 = vsub.f32 %v7638, %v7779
    %v7787 = vsub.f32 %v7641, %v7779
    %v7788 = vsub.f32 %v7646, %v7779
    %v7789 = vsub.f32 %v7649, %v7779
    %v7790 = vsub.f32 %v7654, %v7779
    %v7791 = vsub.f32 %v7657, %v7779
    %v7792 = vsub.f32 %v7662, %v7779
    %v7793 = vsub.f32 %v7665, %v7779
    %v7794 = vsub.f32 %v7670, %v7779
    %v7795 = vsub.f32 %v7673, %v7779
    %v7796 = vsub.f32 %v7678, %v7779
    %v7797 = vsub.f32 %v7681, %v7779
    %v7798 = vsub.f32 %v7686, %v7779
    %v7799 = vsub.f32 %v7689, %v7779
    %v7800 = vsub.f32 %v7694, %v7779
    %v7801 = vsub.f32 %v7697, %v7779
    %v7802 = vsub.f32 %v7702, %v7779
    %v7803 = vsub.f32 %v7705, %v7779
    %v7804 = vsub.f32 %v7710, %v7779
    %v7805 = vsub.f32 %v7713, %v7779
    %v7806 = vsub.f32 %v7718, %v7779
    %v7807 = vsub.f32 %v7721, %v7779
    %v7808 = vsub.f32 %v7726, %v7779
    %v7809 = vsub.f32 %v7729, %v7779
    %v7810 = vsub.f32 %v7734, %v7779
    %v7811 = vsub.f32 %v7737, %v7779
    %v7812 = vmul.f32 %v7780, %v7780
    %v7813 = vmul.f32 %v7781, %v7781
    %v7814 = vmul.f32 %v7782, %v7782
    %v7815 = vmul.f32 %v7783, %v7783
    %v7816 = vmul.f32 %v7784, %v7784
    %v7817 = vmul.f32 %v7785, %v7785
    %v7818 = vmul.f32 %v7786, %v7786
    %v7819 = vmul.f32 %v7787, %v7787
    %v7820 = vmul.f32 %v7788, %v7788
    %v7821 = vmul.f32 %v7789, %v7789
    %v7822 = vmul.f32 %v7790, %v7790
    %v7823 = vmul.f32 %v7791, %v7791
    %v7824 = vmul.f32 %v7792, %v7792
    %v7825 = vmul.f32 %v7793, %v7793
    %v7826 = vmul.f32 %v7794, %v7794
    %v7827 = vmul.f32 %v7795, %v7795
    %v7828 = vmul.f32 %v7796, %v7796
    %v7829 = vmul.f32 %v7797, %v7797
    %v7830 = vmul.f32 %v7798, %v7798
    %v7831 = vmul.f32 %v7799, %v7799
    %v7832 = vmul.f32 %v7800, %v7800
    %v7833 = vmul.f32 %v7801, %v7801
    %v7834 = vmul.f32 %v7802, %v7802
    %v7835 = vmul.f32 %v7803, %v7803
    %v7836 = vmul.f32 %v7804, %v7804
    %v7837 = vmul.f32 %v7805, %v7805
    %v7838 = vmul.f32 %v7806, %v7806
    %v7839 = vmul.f32 %v7807, %v7807
    %v7840 = vmul.f32 %v7808, %v7808
    %v7841 = vmul.f32 %v7809, %v7809
    %v7842 = vmul.f32 %v7810, %v7810
    %v7843 = vmul.f32 %v7811, %v7811
    %v7844 = vadd.f32 %v7812, %v7813
    %v7845 = vadd.f32 %v7844, %v7814
    %v7846 = vadd.f32 %v7845, %v7815
    %v7847 = vadd.f32 %v7846, %v7816
    %v7848 = vadd.f32 %v7847, %v7817
    %v7849 = vadd.f32 %v7848, %v7818
    %v7850 = vadd.f32 %v7849, %v7819
    %v7851 = vadd.f32 %v7850, %v7820
    %v7852 = vadd.f32 %v7851, %v7821
    %v7853 = vadd.f32 %v7852, %v7822
    %v7854 = vadd.f32 %v7853, %v7823
    %v7855 = vadd.f32 %v7854, %v7824
    %v7856 = vadd.f32 %v7855, %v7825
    %v7857 = vadd.f32 %v7856, %v7826
    %v7858 = vadd.f32 %v7857, %v7827
    %v7859 = vadd.f32 %v7858, %v7828
    %v7860 = vadd.f32 %v7859, %v7829
    %v7861 = vadd.f32 %v7860, %v7830
    %v7862 = vadd.f32 %v7861, %v7831
    %v7863 = vadd.f32 %v7862, %v7832
    %v7864 = vadd.f32 %v7863, %v7833
    %v7865 = vadd.f32 %v7864, %v7834
    %v7866 = vadd.f32 %v7865, %v7835
    %v7867 = vadd.f32 %v7866, %v7836
    %v7868 = vadd.f32 %v7867, %v7837
    %v7869 = vadd.f32 %v7868, %v7838
    %v7870 = vadd.f32 %v7869, %v7839
    %v7871 = vadd.f32 %v7870, %v7840
    %v7872 = vadd.f32 %v7871, %v7841
    %v7873 = vadd.f32 %v7872, %v7842
    %v7874 = vadd.f32 %v7873, %v7843
    %v7875 = vrot.slane %v7874, 4
    %v7876 = vadd.f32 %v7874, %v7875
    %v7877 = vrot.slane %v7876, 2
    %v7878 = vadd.f32 %v7876, %v7877
    %v7879 = vrot.slane %v7878, 1
    %v7880 = vadd.f32 %v7878, %v7879
    %v7881 = vmul.f32 %v7880, %v821
    %v7882 = vadd.f32 %v7881, 1e-05
    %v7883 = vrsqrt.pop %v7882
    %v7884 = vmul.f32 %v7780, %v7883
    %v7885 = vmul.f32 %v7781, %v7883
    %v7886 = vmul.f32 %v7782, %v7883
    %v7887 = vmul.f32 %v7783, %v7883
    %v7888 = vmul.f32 %v7784, %v7883
    %v7889 = vmul.f32 %v7785, %v7883
    %v7890 = vmul.f32 %v7786, %v7883
    %v7891 = vmul.f32 %v7787, %v7883
    %v7892 = vmul.f32 %v7788, %v7883
    %v7893 = vmul.f32 %v7789, %v7883
    %v7894 = vmul.f32 %v7790, %v7883
    %v7895 = vmul.f32 %v7791, %v7883
    %v7896 = vmul.f32 %v7792, %v7883
    %v7897 = vmul.f32 %v7793, %v7883
    %v7898 = vmul.f32 %v7794, %v7883
    %v7899 = vmul.f32 %v7795, %v7883
    %v7900 = vmul.f32 %v7796, %v7883
    %v7901 = vmul.f32 %v7797, %v7883
    %v7902 = vmul.f32 %v7798, %v7883
    %v7903 = vmul.f32 %v7799, %v7883
    %v7904 = vmul.f32 %v7800, %v7883
    %v7905 = vmul.f32 %v7801, %v7883
    %v7906 = vmul.f32 %v7802, %v7883
    %v7907 = vmul.f32 %v7803, %v7883
    %v7908 = vmul.f32 %v7804, %v7883
    %v7909 = vmul.f32 %v7805, %v7883
    %v7910 = vmul.f32 %v7806, %v7883
    %v7911 = vmul.f32 %v7807, %v7883
    %v7912 = vmul.f32 %v7808, %v7883
    %v7913 = vmul.f32 %v7809, %v7883
    %v7914 = vmul.f32 %v7810, %v7883
    %v7915 = vmul.f32 %v7811, %v7883
    %v7917 = vlaneseq
    %v7918 = vshrl.u32 %v7917, 7
    %v7919 = vsub.s32 0, %v7918
    %v7920 = vrot.slane %v7740, %v7919
    %v7922 = vmul.f32 %v7884, %v7920
    %v7923 = vmul.f32 %v7885, %v7920
    %v7924 = vmul.f32 %v7886, %v7920
    %v7925 = vmul.f32 %v7887, %v7920
    %v7926 = vmul.f32 %v7888, %v7920
    %v7927 = vmul.f32 %v7889, %v7920
    %v7928 = vmul.f32 %v7890, %v7920
    %v7929 = vmul.f32 %v7891, %v7920
    %v7930 = vmul.f32 %v7892, %v7920
    %v7931 = vmul.f32 %v7893, %v7920
    %v7932 = vmul.f32 %v7894, %v7920
    %v7933 = vmul.f32 %v7895, %v7920
    %v7934 = vmul.f32 %v7896, %v7920
    %v7935 = vmul.f32 %v7897, %v7920
    %v7936 = vmul.f32 %v7898, %v7920
    %v7937 = vmul.f32 %v7899, %v7920
    %v7938 = vmul.f32 %v7900, %v7920
    %v7939 = vmul.f32 %v7901, %v7920
    %v7940 = vmul.f32 %v7902, %v7920
    %v7941 = vmul.f32 %v7903, %v7920
    %v7942 = vmul.f32 %v7904, %v7920
    %v7943 = vmul.f32 %v7905, %v7920
    %v7944 = vmul.f32 %v7906, %v7920
    %v7945 = vmul.f32 %v7907, %v7920
    %v7946 = vmul.f32 %v7908, %v7920
    %v7947 = vmul.f32 %v7909, %v7920
    %v7948 = vmul.f32 %v7910, %v7920
    %v7949 = vmul.f32 %v7911, %v7920
    %v7950 = vmul.f32 %v7912, %v7920
    %v7951 = vmul.f32 %v7913, %v7920
    %v7952 = vmul.f32 %v7914, %v7920
    %v7953 = vmul.f32 %v7915, %v7920
    %v7955 = vlaneseq
    %v7956 = vshrl.u32 %v7955, 7
    %v7957 = vsub.s32 0, %v7956
    %v7958 = vrot.slane %v7741, %v7957
    %v7960 = vadd.f32 %v7922, %v7958
    %v7961 = vadd.f32 %v7923, %v7958
    %v7962 = vadd.f32 %v7924, %v7958
    %v7963 = vadd.f32 %v7925, %v7958
    %v7964 = vadd.f32 %v7926, %v7958
    %v7965 = vadd.f32 %v7927, %v7958
    %v7966 = vadd.f32 %v7928, %v7958
    %v7967 = vadd.f32 %v7929, %v7958
    %v7968 = vadd.f32 %v7930, %v7958
    %v7969 = vadd.f32 %v7931, %v7958
    %v7970 = vadd.f32 %v7932, %v7958
    %v7971 = vadd.f32 %v7933, %v7958
    %v7972 = vadd.f32 %v7934, %v7958
    %v7973 = vadd.f32 %v7935, %v7958
    %v7974 = vadd.f32 %v7936, %v7958
    %v7975 = vadd.f32 %v7937, %v7958
    %v7976 = vadd.f32 %v7938, %v7958
    %v7977 = vadd.f32 %v7939, %v7958
    %v7978 = vadd.f32 %v7940, %v7958
    %v7979 = vadd.f32 %v7941, %v7958
    %v7980 = vadd.f32 %v7942, %v7958
    %v7981 = vadd.f32 %v7943, %v7958
    %v7982 = vadd.f32 %v7944, %v7958
    %v7983 = vadd.f32 %v7945, %v7958
    %v7984 = vadd.f32 %v7946, %v7958
    %v7985 = vadd.f32 %v7947, %v7958
    %v7986 = vadd.f32 %v7948, %v7958
    %v7987 = vadd.f32 %v7949, %v7958
    %v7988 = vadd.f32 %v7950, %v7958
    %v7989 = vadd.f32 %v7951, %v7958
    %v7990 = vadd.f32 %v7952, %v7958
    %v7991 = vadd.f32 %v7953, %v7958
    %v7992 = vmax.f32 %v7960, 0.0
    %v7993 = vmax.f32 %v7961, 0.0
    %v7994 = vmax.f32 %v7962, 0.0
    %v7995 = vmax.f32 %v7963, 0.0
    %v7996 = vmax.f32 %v7964, 0.0
    %v7997 = vmax.f32 %v7965, 0.0
    %v7998 = vmax.f32 %v7966, 0.0
    %v7999 = vmax.f32 %v7967, 0.0
    %v8000 = vmax.f32 %v7968, 0.0
    %v8001 = vmax.f32 %v7969, 0.0
    %v8002 = vmax.f32 %v7970, 0.0
    %v8003 = vmax.f32 %v7971, 0.0
    %v8004 = vmax.f32 %v7972, 0.0
    %v8005 = vmax.f32 %v7973, 0.0
    %v8006 = vmax.f32 %v7974, 0.0
    %v8007 = vmax.f32 %v7975, 0.0
    %v8008 = vmax.f32 %v7976, 0.0
    %v8009 = vmax.f32 %v7977, 0.0
    %v8010 = vmax.f32 %v7978, 0.0
    %v8011 = vmax.f32 %v7979, 0.0
    %v8012 = vmax.f32 %v7980, 0.0
    %v8013 = vmax.f32 %v7981, 0.0
    %v8014 = vmax.f32 %v7982, 0.0
    %v8015 = vmax.f32 %v7983, 0.0
    %v8016 = vmax.f32 %v7984, 0.0
    %v8017 = vmax.f32 %v7985, 0.0
    %v8018 = vmax.f32 %v7986, 0.0
    %v8019 = vmax.f32 %v7987, 0.0
    %v8020 = vmax.f32 %v7988, 0.0
    %v8021 = vmax.f32 %v7989, 0.0
    %v8022 = vmax.f32 %v7990, 0.0
    %v8023 = vmax.f32 %v7991, 0.0
    %v8024 = vld [vmem:[%s113] sm:$0xf]
    %v8025 = vld [vmem:[%s113 + $0x4] sm:$0xf]
    %v8026 = vld [vmem:[%s113 + $0x8] sm:$0xf]
    %v8027 = vld [vmem:[%s113 + $0xc] sm:$0xf]
    %v8028 = vld [vmem:[%s113 + $0x10] sm:$0xf]
    %v8029 = vld [vmem:[%s113 + $0x14] sm:$0xf]
    %v8030 = vld [vmem:[%s113 + $0x18] sm:$0xf]
    %v8031 = vld [vmem:[%s113 + $0x1c] sm:$0xf]
    %v8032 = vld [vmem:[%s113 + $0x20] sm:$0xf]
    %v8033 = vld [vmem:[%s113 + $0x24] sm:$0xf]
    %v8034 = vld [vmem:[%s113 + $0x28] sm:$0xf]
    %v8035 = vld [vmem:[%s113 + $0x2c] sm:$0xf]
    %v8036 = vld [vmem:[%s113 + $0x30] sm:$0xf]
    %v8037 = vld [vmem:[%s113 + $0x34] sm:$0xf]
    %v8038 = vld [vmem:[%s113 + $0x38] sm:$0xf]
    %v8039 = vld [vmem:[%s113 + $0x3c] sm:$0xf]
    %v8040 = vpack.c.bf16 %v7993, %v7992
    %v8041 = vpack.c.bf16 %v7995, %v7994
    %v8042 = vpack.c.bf16 %v7997, %v7996
    %v8043 = vpack.c.bf16 %v7999, %v7998
    %v8044 = vpack.c.bf16 %v8001, %v8000
    %v8045 = vpack.c.bf16 %v8003, %v8002
    %v8046 = vpack.c.bf16 %v8005, %v8004
    %v8047 = vpack.c.bf16 %v8007, %v8006
    %v8048 = vpack.c.bf16 %v8009, %v8008
    %v8049 = vpack.c.bf16 %v8011, %v8010
    %v8050 = vpack.c.bf16 %v8013, %v8012
    %v8051 = vpack.c.bf16 %v8015, %v8014
    %v8052 = vpack.c.bf16 %v8017, %v8016
    %v8053 = vpack.c.bf16 %v8019, %v8018
    %v8054 = vpack.c.bf16 %v8021, %v8020
    %v8055 = vpack.c.bf16 %v8023, %v8022
    %v8056 = vld [vmem:[#allocation28] sm:$0x1]
    %v8058 = vlaneseq
    %v8059 = vshrl.u32 %v8058, 7
    %v8060 = vsub.s32 0, %v8059
    %v8061 = vrot.slane %v8056, %v8060
    %v8079 = vunpack.c.l.b16 %v8024
    %v8080 = vunpack.c.l.b16 %v8025
    %v8081 = vunpack.c.l.b16 %v8026
    %v8082 = vunpack.c.l.b16 %v8027
    %v8083 = vunpack.c.l.b16 %v8028
    %v8084 = vunpack.c.l.b16 %v8029
    %v8085 = vunpack.c.l.b16 %v8030
    %v8086 = vunpack.c.l.b16 %v8031
    %v8087 = vunpack.c.l.b16 %v8032
    %v8088 = vunpack.c.l.b16 %v8033
    %v8089 = vunpack.c.l.b16 %v8034
    %v8090 = vunpack.c.l.b16 %v8035
    %v8091 = vunpack.c.l.b16 %v8036
    %v8092 = vunpack.c.l.b16 %v8037
    %v8093 = vunpack.c.l.b16 %v8038
    %v8094 = vunpack.c.l.b16 %v8039
    %v8095 = vpack.c.b16 %v8080, %v8079
    %v8096 = vpack.c.b16 %v8082, %v8081
    %v8097 = vpack.c.b16 %v8084, %v8083
    %v8098 = vpack.c.b16 %v8086, %v8085
    %v8099 = vpack.c.b16 %v8088, %v8087
    %v8100 = vpack.c.b16 %v8090, %v8089
    %v8101 = vpack.c.b16 %v8092, %v8091
    %v8102 = vpack.c.b16 %v8094, %v8093
    %8111 = vmatprep.subr.bf16.mxu0 0
    %8112 = vmatpush1.bf16.msra.mxu0 %v8102
    %8113 = vmatprep.subr.bf16.mxu0 0
    %8114 = vmatpush1.bf16.msra.mxu0 %v8101
    %8115 = vmatprep.subr.bf16.mxu0 0
    %8116 = vmatpush1.bf16.msra.mxu0 %v8100
    %8117 = vmatprep.subr.bf16.mxu0 0
    %8118 = vmatpush1.bf16.msra.mxu0 %v8099
    %8119 = vmatprep.subr.bf16.mxu0 0
    %8120 = vmatpush1.bf16.msra.mxu0 %v8098
    %8121 = vmatprep.subr.bf16.mxu0 0
    %8122 = vmatpush1.bf16.msra.mxu0 %v8097
    %8123 = vmatprep.subr.bf16.mxu0 0
    %8124 = vmatpush1.bf16.msra.mxu0 %v8096
    %8125 = vmatprep.subr.bf16.mxu0 0
    %8126 = vmatpush1.bf16.msra.mxu0 %v8095
    %8127 = vmatprep.subr.bf16.mxu0 0
    %8128 = vmatpush2.bf16.msra.mxu0 0
    %8129 = vmatprep.subr.bf16.mxu0 0
    %8130 = vmatpush2.bf16.msra.mxu0 0
    %8131 = vmatprep.subr.bf16.mxu0 0
    %8132 = vmatpush2.bf16.msra.mxu0 0
    %8133 = vmatprep.subr.bf16.mxu0 0
    %8134 = vmatpush2.bf16.msra.mxu0 0
    %8135 = vmatprep.subr.bf16.mxu0 0
    %8136 = vmatpush2.bf16.msra.mxu0 0
    %8137 = vmatprep.subr.bf16.mxu0 0
    %8138 = vmatpush2.bf16.msra.mxu0 0
    %8139 = vmatprep.subr.bf16.mxu0 0
    %8140 = vmatpush2.bf16.msra.mxu0 0
    %8141 = vmatprep.subr.bf16.mxu0 0
    %8142 = vmatpush2.bf16.msra.mxu0 0
    %8143 = vmatprep.mubr.bf16.mxu0 0
    %8144 = vmatmul.mubr.bf16.gmra.mxu0 %v8040
    %v8145 = vpop.f32.mrf.mxu0
    %v8146 = vadd.f32 %v8061, %v8145
    %v8147 = vpop.f32.mrf.mxu0
    %v8148 = vpop.f32.mrf.mxu0
    %v8149 = vadd.f32 %v8061, %v8148
    %v8150 = vpop.f32.mrf.mxu0
    %8151 = vmatprep.mubr.bf16.mxu0 0
    %8152 = vmatmul.mubr.bf16.gmra.mxu0 %v8041
    %v8153 = vpop.f32.mrf.mxu0
    %v8154 = vadd.f32 %v8061, %v8153
    %v8155 = vpop.f32.mrf.mxu0
    %v8156 = vpop.f32.mrf.mxu0
    %v8157 = vadd.f32 %v8061, %v8156
    %v8158 = vpop.f32.mrf.mxu0
    %8159 = vmatprep.mubr.bf16.mxu0 0
    %8160 = vmatmul.mubr.bf16.gmra.mxu0 %v8042
    %v8161 = vpop.f32.mrf.mxu0
    %v8162 = vadd.f32 %v8061, %v8161
    %v8163 = vpop.f32.mrf.mxu0
    %v8164 = vpop.f32.mrf.mxu0
    %v8165 = vadd.f32 %v8061, %v8164
    %v8166 = vpop.f32.mrf.mxu0
    %8167 = vmatprep.mubr.bf16.mxu0 0
    %8168 = vmatmul.mubr.bf16.gmra.mxu0 %v8043
    %v8169 = vpop.f32.mrf.mxu0
    %v8170 = vadd.f32 %v8061, %v8169
    %v8171 = vpop.f32.mrf.mxu0
    %v8172 = vpop.f32.mrf.mxu0
    %v8173 = vadd.f32 %v8061, %v8172
    %v8174 = vpop.f32.mrf.mxu0
    %8175 = vmatprep.mubr.bf16.mxu0 0
    %8176 = vmatmul.mubr.bf16.gmra.mxu0 %v8044
    %v8177 = vpop.f32.mrf.mxu0
    %v8178 = vadd.f32 %v8061, %v8177
    %v8179 = vpop.f32.mrf.mxu0
    %v8180 = vpop.f32.mrf.mxu0
    %v8181 = vadd.f32 %v8061, %v8180
    %v8182 = vpop.f32.mrf.mxu0
    %8183 = vmatprep.mubr.bf16.mxu0 0
    %8184 = vmatmul.mubr.bf16.gmra.mxu0 %v8045
    %v8185 = vpop.f32.mrf.mxu0
    %v8186 = vadd.f32 %v8061, %v8185
    %v8187 = vpop.f32.mrf.mxu0
    %v8188 = vpop.f32.mrf.mxu0
    %v8189 = vadd.f32 %v8061, %v8188
    %v8190 = vpop.f32.mrf.mxu0
    %8191 = vmatprep.mubr.bf16.mxu0 0
    %8192 = vmatmul.mubr.bf16.gmra.mxu0 %v8046
    %v8193 = vpop.f32.mrf.mxu0
    %v8194 = vadd.f32 %v8061, %v8193
    %v8195 = vpop.f32.mrf.mxu0
    %v8196 = vpop.f32.mrf.mxu0
    %v8197 = vadd.f32 %v8061, %v8196
    %v8198 = vpop.f32.mrf.mxu0
    %8199 = vmatprep.mubr.bf16.mxu0 0
    %8200 = vmatmul.mubr.bf16.gmra.mxu0 %v8047
    %v8201 = vpop.f32.mrf.mxu0
    %v8202 = vadd.f32 %v8061, %v8201
    %v8203 = vpop.f32.mrf.mxu0
    %v8204 = vpop.f32.mrf.mxu0
    %v8205 = vadd.f32 %v8061, %v8204
    %v8206 = vpop.f32.mrf.mxu0
    %8207 = vmatprep.mubr.bf16.mxu0 0
    %8208 = vmatmul.mubr.bf16.gmra.mxu0 %v8048
    %v8209 = vpop.f32.mrf.mxu0
    %v8210 = vadd.f32 %v8061, %v8209
    %v8211 = vpop.f32.mrf.mxu0
    %v8212 = vpop.f32.mrf.mxu0
    %v8213 = vadd.f32 %v8061, %v8212
    %v8214 = vpop.f32.mrf.mxu0
    %8215 = vmatprep.mubr.bf16.mxu0 0
    %8216 = vmatmul.mubr.bf16.gmra.mxu0 %v8049
    %v8217 = vpop.f32.mrf.mxu0
    %v8218 = vadd.f32 %v8061, %v8217
    %v8219 = vpop.f32.mrf.mxu0
    %v8220 = vpop.f32.mrf.mxu0
    %v8221 = vadd.f32 %v8061, %v8220
    %v8222 = vpop.f32.mrf.mxu0
    %8223 = vmatprep.mubr.bf16.mxu0 0
    %8224 = vmatmul.mubr.bf16.gmra.mxu0 %v8050
    %v8225 = vpop.f32.mrf.mxu0
    %v8226 = vadd.f32 %v8061, %v8225
    %v8227 = vpop.f32.mrf.mxu0
    %v8228 = vpop.f32.mrf.mxu0
    %v8229 = vadd.f32 %v8061, %v8228
    %v8230 = vpop.f32.mrf.mxu0
    %8231 = vmatprep.mubr.bf16.mxu0 0
    %8232 = vmatmul.mubr.bf16.gmra.mxu0 %v8051
    %v8233 = vpop.f32.mrf.mxu0
    %v8234 = vadd.f32 %v8061, %v8233
    %v8235 = vpop.f32.mrf.mxu0
    %v8236 = vpop.f32.mrf.mxu0
    %v8237 = vadd.f32 %v8061, %v8236
    %v8238 = vpop.f32.mrf.mxu0
    %8239 = vmatprep.mubr.bf16.mxu0 0
    %8240 = vmatmul.mubr.bf16.gmra.mxu0 %v8052
    %v8241 = vpop.f32.mrf.mxu0
    %v8242 = vadd.f32 %v8061, %v8241
    %v8243 = vpop.f32.mrf.mxu0
    %v8244 = vpop.f32.mrf.mxu0
    %v8245 = vadd.f32 %v8061, %v8244
    %v8246 = vpop.f32.mrf.mxu0
    %8247 = vmatprep.mubr.bf16.mxu0 0
    %8248 = vmatmul.mubr.bf16.gmra.mxu0 %v8053
    %v8249 = vpop.f32.mrf.mxu0
    %v8250 = vadd.f32 %v8061, %v8249
    %v8251 = vpop.f32.mrf.mxu0
    %v8252 = vpop.f32.mrf.mxu0
    %v8253 = vadd.f32 %v8061, %v8252
    %v8254 = vpop.f32.mrf.mxu0
    %8255 = vmatprep.mubr.bf16.mxu0 0
    %8256 = vmatmul.mubr.bf16.gmra.mxu0 %v8054
    %v8257 = vpop.f32.mrf.mxu0
    %v8258 = vadd.f32 %v8061, %v8257
    %v8259 = vpop.f32.mrf.mxu0
    %v8260 = vpop.f32.mrf.mxu0
    %v8261 = vadd.f32 %v8061, %v8260
    %v8262 = vpop.f32.mrf.mxu0
    %8263 = vmatprep.mubr.bf16.mxu0 0
    %8264 = vmatmul.mubr.bf16.gmra.mxu0 %v8055
    %v8265 = vpop.f32.mrf.mxu0
    %v8266 = vadd.f32 %v8061, %v8265
    %v8267 = vpop.f32.mrf.mxu0
    %v8268 = vpop.f32.mrf.mxu0
    %v8269 = vadd.f32 %v8061, %v8268
    %v8270 = vpop.f32.mrf.mxu0
    %8271 = vdwg.mxu0
    %v8272 = vld [vmem:[#allocation30] sm:$0x1]
    %v8273 = vld [vmem:[#allocation31] sm:$0x1]
    %v8274 = vadd.f32 %v8146, %v8149
    %v8275 = vadd.f32 %v8274, %v8154
    %v8276 = vadd.f32 %v8275, %v8157
    %v8277 = vadd.f32 %v8276, %v8162
    %v8278 = vadd.f32 %v8277, %v8165
    %v8279 = vadd.f32 %v8278, %v8170
    %v8280 = vadd.f32 %v8279, %v8173
    %v8281 = vadd.f32 %v8280, %v8178
    %v8282 = vadd.f32 %v8281, %v8181
    %v8283 = vadd.f32 %v8282, %v8186
    %v8284 = vadd.f32 %v8283, %v8189
    %v8285 = vadd.f32 %v8284, %v8194
    %v8286 = vadd.f32 %v8285, %v8197
    %v8287 = vadd.f32 %v8286, %v8202
    %v8288 = vadd.f32 %v8287, %v8205
    %v8289 = vadd.f32 %v8288, %v8210
    %v8290 = vadd.f32 %v8289, %v8213
    %v8291 = vadd.f32 %v8290, %v8218
    %v8292 = vadd.f32 %v8291, %v8221
    %v8293 = vadd.f32 %v8292, %v8226
    %v8294 = vadd.f32 %v8293, %v8229
    %v8295 = vadd.f32 %v8294, %v8234
    %v8296 = vadd.f32 %v8295, %v8237
    %v8297 = vadd.f32 %v8296, %v8242
    %v8298 = vadd.f32 %v8297, %v8245
    %v8299 = vadd.f32 %v8298, %v8250
    %v8300 = vadd.f32 %v8299, %v8253
    %v8301 = vadd.f32 %v8300, %v8258
    %v8302 = vadd.f32 %v8301, %v8261
    %v8303 = vadd.f32 %v8302, %v8266
    %v8304 = vadd.f32 %v8303, %v8269
    %v8305 = vrot.slane %v8304, 4
    %v8306 = vadd.f32 %v8304, %v8305
    %v8307 = vrot.slane %v8306, 2
    %v8308 = vadd.f32 %v8306, %v8307
    %v8309 = vrot.slane %v8308, 1
    %v8310 = vadd.f32 %v8308, %v8309
    %v8311 = vmul.f32 %v8310, %v821
    %v8312 = vsub.f32 %v8146, %v8311
    %v8313 = vsub.f32 %v8149, %v8311
    %v8314 = vsub.f32 %v8154, %v8311
    %v8315 = vsub.f32 %v8157, %v8311
    %v8316 = vsub.f32 %v8162, %v8311
    %v8317 = vsub.f32 %v8165, %v8311
    %v8318 = vsub.f32 %v8170, %v8311
    %v8319 = vsub.f32 %v8173, %v8311
    %v8320 = vsub.f32 %v8178, %v8311
    %v8321 = vsub.f32 %v8181, %v8311
    %v8322 = vsub.f32 %v8186, %v8311
    %v8323 = vsub.f32 %v8189, %v8311
    %v8324 = vsub.f32 %v8194, %v8311
    %v8325 = vsub.f32 %v8197, %v8311
    %v8326 = vsub.f32 %v8202, %v8311
    %v8327 = vsub.f32 %v8205, %v8311
    %v8328 = vsub.f32 %v8210, %v8311
    %v8329 = vsub.f32 %v8213, %v8311
    %v8330 = vsub.f32 %v8218, %v8311
    %v8331 = vsub.f32 %v8221, %v8311
    %v8332 = vsub.f32 %v8226, %v8311
    %v8333 = vsub.f32 %v8229, %v8311
    %v8334 = vsub.f32 %v8234, %v8311
    %v8335 = vsub.f32 %v8237, %v8311
    %v8336 = vsub.f32 %v8242, %v8311
    %v8337 = vsub.f32 %v8245, %v8311
    %v8338 = vsub.f32 %v8250, %v8311
    %v8339 = vsub.f32 %v8253, %v8311
    %v8340 = vsub.f32 %v8258, %v8311
    %v8341 = vsub.f32 %v8261, %v8311
    %v8342 = vsub.f32 %v8266, %v8311
    %v8343 = vsub.f32 %v8269, %v8311
    %v8344 = vmul.f32 %v8312, %v8312
    %v8345 = vmul.f32 %v8313, %v8313
    %v8346 = vmul.f32 %v8314, %v8314
    %v8347 = vmul.f32 %v8315, %v8315
    %v8348 = vmul.f32 %v8316, %v8316
    %v8349 = vmul.f32 %v8317, %v8317
    %v8350 = vmul.f32 %v8318, %v8318
    %v8351 = vmul.f32 %v8319, %v8319
    %v8352 = vmul.f32 %v8320, %v8320
    %v8353 = vmul.f32 %v8321, %v8321
    %v8354 = vmul.f32 %v8322, %v8322
    %v8355 = vmul.f32 %v8323, %v8323
    %v8356 = vmul.f32 %v8324, %v8324
    %v8357 = vmul.f32 %v8325, %v8325
    %v8358 = vmul.f32 %v8326, %v8326
    %v8359 = vmul.f32 %v8327, %v8327
    %v8360 = vmul.f32 %v8328, %v8328
    %v8361 = vmul.f32 %v8329, %v8329
    %v8362 = vmul.f32 %v8330, %v8330
    %v8363 = vmul.f32 %v8331, %v8331
    %v8364 = vmul.f32 %v8332, %v8332
    %v8365 = vmul.f32 %v8333, %v8333
    %v8366 = vmul.f32 %v8334, %v8334
    %v8367 = vmul.f32 %v8335, %v8335
    %v8368 = vmul.f32 %v8336, %v8336
    %v8369 = vmul.f32 %v8337, %v8337
    %v8370 = vmul.f32 %v8338, %v8338
    %v8371 = vmul.f32 %v8339, %v8339
    %v8372 = vmul.f32 %v8340, %v8340
    %v8373 = vmul.f32 %v8341, %v8341
    %v8374 = vmul.f32 %v8342, %v8342
    %v8375 = vmul.f32 %v8343, %v8343
    %v8376 = vadd.f32 %v8344, %v8345
    %v8377 = vadd.f32 %v8376, %v8346
    %v8378 = vadd.f32 %v8377, %v8347
    %v8379 = vadd.f32 %v8378, %v8348
    %v8380 = vadd.f32 %v8379, %v8349
    %v8381 = vadd.f32 %v8380, %v8350
    %v8382 = vadd.f32 %v8381, %v8351
    %v8383 = vadd.f32 %v8382, %v8352
    %v8384 = vadd.f32 %v8383, %v8353
    %v8385 = vadd.f32 %v8384, %v8354
    %v8386 = vadd.f32 %v8385, %v8355
    %v8387 = vadd.f32 %v8386, %v8356
    %v8388 = vadd.f32 %v8387, %v8357
    %v8389 = vadd.f32 %v8388, %v8358
    %v8390 = vadd.f32 %v8389, %v8359
    %v8391 = vadd.f32 %v8390, %v8360
    %v8392 = vadd.f32 %v8391, %v8361
    %v8393 = vadd.f32 %v8392, %v8362
    %v8394 = vadd.f32 %v8393, %v8363
    %v8395 = vadd.f32 %v8394, %v8364
    %v8396 = vadd.f32 %v8395, %v8365
    %v8397 = vadd.f32 %v8396, %v8366
    %v8398 = vadd.f32 %v8397, %v8367
    %v8399 = vadd.f32 %v8398, %v8368
    %v8400 = vadd.f32 %v8399, %v8369
    %v8401 = vadd.f32 %v8400, %v8370
    %v8402 = vadd.f32 %v8401, %v8371
    %v8403 = vadd.f32 %v8402, %v8372
    %v8404 = vadd.f32 %v8403, %v8373
    %v8405 = vadd.f32 %v8404, %v8374
    %v8406 = vadd.f32 %v8405, %v8375
    %v8407 = vrot.slane %v8406, 4
    %v8408 = vadd.f32 %v8406, %v8407
    %v8409 = vrot.slane %v8408, 2
    %v8410 = vadd.f32 %v8408, %v8409
    %v8411 = vrot.slane %v8410, 1
    %v8412 = vadd.f32 %v8410, %v8411
    %v8413 = vmul.f32 %v8412, %v821
    %v8414 = vadd.f32 %v8413, 1e-05
    %v8415 = vrsqrt.pop %v8414
    %v8416 = vmul.f32 %v8312, %v8415
    %v8417 = vmul.f32 %v8313, %v8415
    %v8418 = vmul.f32 %v8314, %v8415
    %v8419 = vmul.f32 %v8315, %v8415
    %v8420 = vmul.f32 %v8316, %v8415
    %v8421 = vmul.f32 %v8317, %v8415
    %v8422 = vmul.f32 %v8318, %v8415
    %v8423 = vmul.f32 %v8319, %v8415
    %v8424 = vmul.f32 %v8320, %v8415
    %v8425 = vmul.f32 %v8321, %v8415
    %v8426 = vmul.f32 %v8322, %v8415
    %v8427 = vmul.f32 %v8323, %v8415
    %v8428 = vmul.f32 %v8324, %v8415
    %v8429 = vmul.f32 %v8325, %v8415
    %v8430 = vmul.f32 %v8326, %v8415
    %v8431 = vmul.f32 %v8327, %v8415
    %v8432 = vmul.f32 %v8328, %v8415
    %v8433 = vmul.f32 %v8329, %v8415
    %v8434 = vmul.f32 %v8330, %v8415
    %v8435 = vmul.f32 %v8331, %v8415
    %v8436 = vmul.f32 %v8332, %v8415
    %v8437 = vmul.f32 %v8333, %v8415
    %v8438 = vmul.f32 %v8334, %v8415
    %v8439 = vmul.f32 %v8335, %v8415
    %v8440 = vmul.f32 %v8336, %v8415
    %v8441 = vmul.f32 %v8337, %v8415
    %v8442 = vmul.f32 %v8338, %v8415
    %v8443 = vmul.f32 %v8339, %v8415
    %v8444 = vmul.f32 %v8340, %v8415
    %v8445 = vmul.f32 %v8341, %v8415
    %v8446 = vmul.f32 %v8342, %v8415
    %v8447 = vmul.f32 %v8343, %v8415
    %v8449 = vlaneseq
    %v8450 = vshrl.u32 %v8449, 7
    %v8451 = vsub.s32 0, %v8450
    %v8452 = vrot.slane %v8272, %v8451
    %v8454 = vmul.f32 %v8416, %v8452
    %v8455 = vmul.f32 %v8417, %v8452
    %v8456 = vmul.f32 %v8418, %v8452
    %v8457 = vmul.f32 %v8419, %v8452
    %v8458 = vmul.f32 %v8420, %v8452
    %v8459 = vmul.f32 %v8421, %v8452
    %v8460 = vmul.f32 %v8422, %v8452
    %v8461 = vmul.f32 %v8423, %v8452
    %v8462 = vmul.f32 %v8424, %v8452
    %v8463 = vmul.f32 %v8425, %v8452
    %v8464 = vmul.f32 %v8426, %v8452
    %v8465 = vmul.f32 %v8427, %v8452
    %v8466 = vmul.f32 %v8428, %v8452
    %v8467 = vmul.f32 %v8429, %v8452
    %v8468 = vmul.f32 %v8430, %v8452
    %v8469 = vmul.f32 %v8431, %v8452
    %v8470 = vmul.f32 %v8432, %v8452
    %v8471 = vmul.f32 %v8433, %v8452
    %v8472 = vmul.f32 %v8434, %v8452
    %v8473 = vmul.f32 %v8435, %v8452
    %v8474 = vmul.f32 %v8436, %v8452
    %v8475 = vmul.f32 %v8437, %v8452
    %v8476 = vmul.f32 %v8438, %v8452
    %v8477 = vmul.f32 %v8439, %v8452
    %v8478 = vmul.f32 %v8440, %v8452
    %v8479 = vmul.f32 %v8441, %v8452
    %v8480 = vmul.f32 %v8442, %v8452
    %v8481 = vmul.f32 %v8443, %v8452
    %v8482 = vmul.f32 %v8444, %v8452
    %v8483 = vmul.f32 %v8445, %v8452
    %v8484 = vmul.f32 %v8446, %v8452
    %v8485 = vmul.f32 %v8447, %v8452
    %v8487 = vlaneseq
    %v8488 = vshrl.u32 %v8487, 7
    %v8489 = vsub.s32 0, %v8488
    %v8490 = vrot.slane %v8273, %v8489
    %v8492 = vadd.f32 %v8454, %v8490
    %v8493 = vadd.f32 %v8455, %v8490
    %v8494 = vadd.f32 %v8456, %v8490
    %v8495 = vadd.f32 %v8457, %v8490
    %v8496 = vadd.f32 %v8458, %v8490
    %v8497 = vadd.f32 %v8459, %v8490
    %v8498 = vadd.f32 %v8460, %v8490
    %v8499 = vadd.f32 %v8461, %v8490
    %v8500 = vadd.f32 %v8462, %v8490
    %v8501 = vadd.f32 %v8463, %v8490
    %v8502 = vadd.f32 %v8464, %v8490
    %v8503 = vadd.f32 %v8465, %v8490
    %v8504 = vadd.f32 %v8466, %v8490
    %v8505 = vadd.f32 %v8467, %v8490
    %v8506 = vadd.f32 %v8468, %v8490
    %v8507 = vadd.f32 %v8469, %v8490
    %v8508 = vadd.f32 %v8470, %v8490
    %v8509 = vadd.f32 %v8471, %v8490
    %v8510 = vadd.f32 %v8472, %v8490
    %v8511 = vadd.f32 %v8473, %v8490
    %v8512 = vadd.f32 %v8474, %v8490
    %v8513 = vadd.f32 %v8475, %v8490
    %v8514 = vadd.f32 %v8476, %v8490
    %v8515 = vadd.f32 %v8477, %v8490
    %v8516 = vadd.f32 %v8478, %v8490
    %v8517 = vadd.f32 %v8479, %v8490
    %v8518 = vadd.f32 %v8480, %v8490
    %v8519 = vadd.f32 %v8481, %v8490
    %v8520 = vadd.f32 %v8482, %v8490
    %v8521 = vadd.f32 %v8483, %v8490
    %v8522 = vadd.f32 %v8484, %v8490
    %v8523 = vadd.f32 %v8485, %v8490
    %v8524 = vmax.f32 %v8492, 0.0
    %v8525 = vmax.f32 %v8493, 0.0
    %v8526 = vmax.f32 %v8494, 0.0
    %v8527 = vmax.f32 %v8495, 0.0
    %v8528 = vmax.f32 %v8496, 0.0
    %v8529 = vmax.f32 %v8497, 0.0
    %v8530 = vmax.f32 %v8498, 0.0
    %v8531 = vmax.f32 %v8499, 0.0
    %v8532 = vmax.f32 %v8500, 0.0
    %v8533 = vmax.f32 %v8501, 0.0
    %v8534 = vmax.f32 %v8502, 0.0
    %v8535 = vmax.f32 %v8503, 0.0
    %v8536 = vmax.f32 %v8504, 0.0
    %v8537 = vmax.f32 %v8505, 0.0
    %v8538 = vmax.f32 %v8506, 0.0
    %v8539 = vmax.f32 %v8507, 0.0
    %v8540 = vmax.f32 %v8508, 0.0
    %v8541 = vmax.f32 %v8509, 0.0
    %v8542 = vmax.f32 %v8510, 0.0
    %v8543 = vmax.f32 %v8511, 0.0
    %v8544 = vmax.f32 %v8512, 0.0
    %v8545 = vmax.f32 %v8513, 0.0
    %v8546 = vmax.f32 %v8514, 0.0
    %v8547 = vmax.f32 %v8515, 0.0
    %v8548 = vmax.f32 %v8516, 0.0
    %v8549 = vmax.f32 %v8517, 0.0
    %v8550 = vmax.f32 %v8518, 0.0
    %v8551 = vmax.f32 %v8519, 0.0
    %v8552 = vmax.f32 %v8520, 0.0
    %v8553 = vmax.f32 %v8521, 0.0
    %v8554 = vmax.f32 %v8522, 0.0
    %v8555 = vmax.f32 %v8523, 0.0
    %v8556 = vld [vmem:[%s121] sm:$0xf]
    %v8557 = vld [vmem:[%s121 + $0x4] sm:$0xf]
    %v8558 = vld [vmem:[%s121 + $0x8] sm:$0xf]
    %v8559 = vld [vmem:[%s121 + $0xc] sm:$0xf]
    %v8560 = vld [vmem:[%s121 + $0x10] sm:$0xf]
    %v8561 = vld [vmem:[%s121 + $0x14] sm:$0xf]
    %v8562 = vld [vmem:[%s121 + $0x18] sm:$0xf]
    %v8563 = vld [vmem:[%s121 + $0x1c] sm:$0xf]
    %v8564 = vld [vmem:[%s121 + $0x20] sm:$0xf]
    %v8565 = vld [vmem:[%s121 + $0x24] sm:$0xf]
    %v8566 = vld [vmem:[%s121 + $0x28] sm:$0xf]
    %v8567 = vld [vmem:[%s121 + $0x2c] sm:$0xf]
    %v8568 = vld [vmem:[%s121 + $0x30] sm:$0xf]
    %v8569 = vld [vmem:[%s121 + $0x34] sm:$0xf]
    %v8570 = vld [vmem:[%s121 + $0x38] sm:$0xf]
    %v8571 = vld [vmem:[%s121 + $0x3c] sm:$0xf]
    %v8572 = vpack.c.bf16 %v8525, %v8524
    %v8573 = vpack.c.bf16 %v8527, %v8526
    %v8574 = vpack.c.bf16 %v8529, %v8528
    %v8575 = vpack.c.bf16 %v8531, %v8530
    %v8576 = vpack.c.bf16 %v8533, %v8532
    %v8577 = vpack.c.bf16 %v8535, %v8534
    %v8578 = vpack.c.bf16 %v8537, %v8536
    %v8579 = vpack.c.bf16 %v8539, %v8538
    %v8580 = vpack.c.bf16 %v8541, %v8540
    %v8581 = vpack.c.bf16 %v8543, %v8542
    %v8582 = vpack.c.bf16 %v8545, %v8544
    %v8583 = vpack.c.bf16 %v8547, %v8546
    %v8584 = vpack.c.bf16 %v8549, %v8548
    %v8585 = vpack.c.bf16 %v8551, %v8550
    %v8586 = vpack.c.bf16 %v8553, %v8552
    %v8587 = vpack.c.bf16 %v8555, %v8554
    %v8588 = vld [vmem:[#allocation33] sm:$0x1]
    %v8590 = vlaneseq
    %v8591 = vshrl.u32 %v8590, 7
    %v8592 = vsub.s32 0, %v8591
    %v8593 = vrot.slane %v8588, %v8592
    %v8611 = vunpack.c.l.b16 %v8556
    %v8612 = vunpack.c.l.b16 %v8557
    %v8613 = vunpack.c.l.b16 %v8558
    %v8614 = vunpack.c.l.b16 %v8559
    %v8615 = vunpack.c.l.b16 %v8560
    %v8616 = vunpack.c.l.b16 %v8561
    %v8617 = vunpack.c.l.b16 %v8562
    %v8618 = vunpack.c.l.b16 %v8563
    %v8619 = vunpack.c.l.b16 %v8564
    %v8620 = vunpack.c.l.b16 %v8565
    %v8621 = vunpack.c.l.b16 %v8566
    %v8622 = vunpack.c.l.b16 %v8567
    %v8623 = vunpack.c.l.b16 %v8568
    %v8624 = vunpack.c.l.b16 %v8569
    %v8625 = vunpack.c.l.b16 %v8570
    %v8626 = vunpack.c.l.b16 %v8571
    %v8627 = vpack.c.b16 %v8612, %v8611
    %v8628 = vpack.c.b16 %v8614, %v8613
    %v8629 = vpack.c.b16 %v8616, %v8615
    %v8630 = vpack.c.b16 %v8618, %v8617
    %v8631 = vpack.c.b16 %v8620, %v8619
    %v8632 = vpack.c.b16 %v8622, %v8621
    %v8633 = vpack.c.b16 %v8624, %v8623
    %v8634 = vpack.c.b16 %v8626, %v8625
    %8643 = vmatprep.subr.bf16.mxu0 0
    %8644 = vmatpush1.bf16.msra.mxu0 %v8634
    %8645 = vmatprep.subr.bf16.mxu0 0
    %8646 = vmatpush1.bf16.msra.mxu0 %v8633
    %8647 = vmatprep.subr.bf16.mxu0 0
    %8648 = vmatpush1.bf16.msra.mxu0 %v8632
    %8649 = vmatprep.subr.bf16.mxu0 0
    %8650 = vmatpush1.bf16.msra.mxu0 %v8631
    %8651 = vmatprep.subr.bf16.mxu0 0
    %8652 = vmatpush1.bf16.msra.mxu0 %v8630
    %8653 = vmatprep.subr.bf16.mxu0 0
    %8654 = vmatpush1.bf16.msra.mxu0 %v8629
    %8655 = vmatprep.subr.bf16.mxu0 0
    %8656 = vmatpush1.bf16.msra.mxu0 %v8628
    %8657 = vmatprep.subr.bf16.mxu0 0
    %8658 = vmatpush1.bf16.msra.mxu0 %v8627
    %8659 = vmatprep.subr.bf16.mxu0 0
    %8660 = vmatpush2.bf16.msra.mxu0 0
    %8661 = vmatprep.subr.bf16.mxu0 0
    %8662 = vmatpush2.bf16.msra.mxu0 0
    %8663 = vmatprep.subr.bf16.mxu0 0
    %8664 = vmatpush2.bf16.msra.mxu0 0
    %8665 = vmatprep.subr.bf16.mxu0 0
    %8666 = vmatpush2.bf16.msra.mxu0 0
    %8667 = vmatprep.subr.bf16.mxu0 0
    %8668 = vmatpush2.bf16.msra.mxu0 0
    %8669 = vmatprep.subr.bf16.mxu0 0
    %8670 = vmatpush2.bf16.msra.mxu0 0
    %8671 = vmatprep.subr.bf16.mxu0 0
    %8672 = vmatpush2.bf16.msra.mxu0 0
    %8673 = vmatprep.subr.bf16.mxu0 0
    %8674 = vmatpush2.bf16.msra.mxu0 0
    %8675 = vmatprep.mubr.bf16.mxu0 0
    %8676 = vmatmul.mubr.bf16.gmra.mxu0 %v8572
    %v8677 = vpop.f32.mrf.mxu0
    %v8678 = vadd.f32 %v8593, %v8677
    %v8679 = vpop.f32.mrf.mxu0
    %v8680 = vpop.f32.mrf.mxu0
    %v8681 = vadd.f32 %v8593, %v8680
    %v8682 = vpop.f32.mrf.mxu0
    %8683 = vmatprep.mubr.bf16.mxu0 0
    %8684 = vmatmul.mubr.bf16.gmra.mxu0 %v8573
    %v8685 = vpop.f32.mrf.mxu0
    %v8686 = vadd.f32 %v8593, %v8685
    %v8687 = vpop.f32.mrf.mxu0
    %v8688 = vpop.f32.mrf.mxu0
    %v8689 = vadd.f32 %v8593, %v8688
    %v8690 = vpop.f32.mrf.mxu0
    %8691 = vmatprep.mubr.bf16.mxu0 0
    %8692 = vmatmul.mubr.bf16.gmra.mxu0 %v8574
    %v8693 = vpop.f32.mrf.mxu0
    %v8694 = vadd.f32 %v8593, %v8693
    %v8695 = vpop.f32.mrf.mxu0
    %v8696 = vpop.f32.mrf.mxu0
    %v8697 = vadd.f32 %v8593, %v8696
    %v8698 = vpop.f32.mrf.mxu0
    %8699 = vmatprep.mubr.bf16.mxu0 0
    %8700 = vmatmul.mubr.bf16.gmra.mxu0 %v8575
    %v8701 = vpop.f32.mrf.mxu0
    %v8702 = vadd.f32 %v8593, %v8701
    %v8703 = vpop.f32.mrf.mxu0
    %v8704 = vpop.f32.mrf.mxu0
    %v8705 = vadd.f32 %v8593, %v8704
    %v8706 = vpop.f32.mrf.mxu0
    %8707 = vmatprep.mubr.bf16.mxu0 0
    %8708 = vmatmul.mubr.bf16.gmra.mxu0 %v8576
    %v8709 = vpop.f32.mrf.mxu0
    %v8710 = vadd.f32 %v8593, %v8709
    %v8711 = vpop.f32.mrf.mxu0
    %v8712 = vpop.f32.mrf.mxu0
    %v8713 = vadd.f32 %v8593, %v8712
    %v8714 = vpop.f32.mrf.mxu0
    %8715 = vmatprep.mubr.bf16.mxu0 0
    %8716 = vmatmul.mubr.bf16.gmra.mxu0 %v8577
    %v8717 = vpop.f32.mrf.mxu0
    %v8718 = vadd.f32 %v8593, %v8717
    %v8719 = vpop.f32.mrf.mxu0
    %v8720 = vpop.f32.mrf.mxu0
    %v8721 = vadd.f32 %v8593, %v8720
    %v8722 = vpop.f32.mrf.mxu0
    %8723 = vmatprep.mubr.bf16.mxu0 0
    %8724 = vmatmul.mubr.bf16.gmra.mxu0 %v8578
    %v8725 = vpop.f32.mrf.mxu0
    %v8726 = vadd.f32 %v8593, %v8725
    %v8727 = vpop.f32.mrf.mxu0
    %v8728 = vpop.f32.mrf.mxu0
    %v8729 = vadd.f32 %v8593, %v8728
    %v8730 = vpop.f32.mrf.mxu0
    %8731 = vmatprep.mubr.bf16.mxu0 0
    %8732 = vmatmul.mubr.bf16.gmra.mxu0 %v8579
    %v8733 = vpop.f32.mrf.mxu0
    %v8734 = vadd.f32 %v8593, %v8733
    %v8735 = vpop.f32.mrf.mxu0
    %v8736 = vpop.f32.mrf.mxu0
    %v8737 = vadd.f32 %v8593, %v8736
    %v8738 = vpop.f32.mrf.mxu0
    %8739 = vmatprep.mubr.bf16.mxu0 0
    %8740 = vmatmul.mubr.bf16.gmra.mxu0 %v8580
    %v8741 = vpop.f32.mrf.mxu0
    %v8742 = vadd.f32 %v8593, %v8741
    %v8743 = vpop.f32.mrf.mxu0
    %v8744 = vpop.f32.mrf.mxu0
    %v8745 = vadd.f32 %v8593, %v8744
    %v8746 = vpop.f32.mrf.mxu0
    %8747 = vmatprep.mubr.bf16.mxu0 0
    %8748 = vmatmul.mubr.bf16.gmra.mxu0 %v8581
    %v8749 = vpop.f32.mrf.mxu0
    %v8750 = vadd.f32 %v8593, %v8749
    %v8751 = vpop.f32.mrf.mxu0
    %v8752 = vpop.f32.mrf.mxu0
    %v8753 = vadd.f32 %v8593, %v8752
    %v8754 = vpop.f32.mrf.mxu0
    %8755 = vmatprep.mubr.bf16.mxu0 0
    %8756 = vmatmul.mubr.bf16.gmra.mxu0 %v8582
    %v8757 = vpop.f32.mrf.mxu0
    %v8758 = vadd.f32 %v8593, %v8757
    %v8759 = vpop.f32.mrf.mxu0
    %v8760 = vpop.f32.mrf.mxu0
    %v8761 = vadd.f32 %v8593, %v8760
    %v8762 = vpop.f32.mrf.mxu0
    %8763 = vmatprep.mubr.bf16.mxu0 0
    %8764 = vmatmul.mubr.bf16.gmra.mxu0 %v8583
    %v8765 = vpop.f32.mrf.mxu0
    %v8766 = vadd.f32 %v8593, %v8765
    %v8767 = vpop.f32.mrf.mxu0
    %v8768 = vpop.f32.mrf.mxu0
    %v8769 = vadd.f32 %v8593, %v8768
    %v8770 = vpop.f32.mrf.mxu0
    %8771 = vmatprep.mubr.bf16.mxu0 0
    %8772 = vmatmul.mubr.bf16.gmra.mxu0 %v8584
    %v8773 = vpop.f32.mrf.mxu0
    %v8774 = vadd.f32 %v8593, %v8773
    %v8775 = vpop.f32.mrf.mxu0
    %v8776 = vpop.f32.mrf.mxu0
    %v8777 = vadd.f32 %v8593, %v8776
    %v8778 = vpop.f32.mrf.mxu0
    %8779 = vmatprep.mubr.bf16.mxu0 0
    %8780 = vmatmul.mubr.bf16.gmra.mxu0 %v8585
    %v8781 = vpop.f32.mrf.mxu0
    %v8782 = vadd.f32 %v8593, %v8781
    %v8783 = vpop.f32.mrf.mxu0
    %v8784 = vpop.f32.mrf.mxu0
    %v8785 = vadd.f32 %v8593, %v8784
    %v8786 = vpop.f32.mrf.mxu0
    %8787 = vmatprep.mubr.bf16.mxu0 0
    %8788 = vmatmul.mubr.bf16.gmra.mxu0 %v8586
    %v8789 = vpop.f32.mrf.mxu0
    %v8790 = vadd.f32 %v8593, %v8789
    %v8791 = vpop.f32.mrf.mxu0
    %v8792 = vpop.f32.mrf.mxu0
    %v8793 = vadd.f32 %v8593, %v8792
    %v8794 = vpop.f32.mrf.mxu0
    %8795 = vmatprep.mubr.bf16.mxu0 0
    %8796 = vmatmul.mubr.bf16.gmra.mxu0 %v8587
    %v8797 = vpop.f32.mrf.mxu0
    %v8798 = vadd.f32 %v8593, %v8797
    %v8799 = vpop.f32.mrf.mxu0
    %v8800 = vpop.f32.mrf.mxu0
    %v8801 = vadd.f32 %v8593, %v8800
    %v8802 = vpop.f32.mrf.mxu0
    %8803 = vdwg.mxu0
    %8804 = vst [vmem:[%s125] sm:$0xff] %v8678
    %8805 = vst [vmem:[%s125 + $0x8] sm:$0xff] %v8681
    %8806 = vst [vmem:[%s125 + $0x10] sm:$0xff] %v8686
    %8807 = vst [vmem:[%s125 + $0x18] sm:$0xff] %v8689
    %8808 = vst [vmem:[%s125 + $0x20] sm:$0xff] %v8694
    %8809 = vst [vmem:[%s125 + $0x28] sm:$0xff] %v8697
    %8810 = vst [vmem:[%s125 + $0x30] sm:$0xff] %v8702
    %8811 = vst [vmem:[%s125 + $0x38] sm:$0xff] %v8705
    %8812 = vst [vmem:[%s125 + $0x40] sm:$0xff] %v8710
    %8813 = vst [vmem:[%s125 + $0x48] sm:$0xff] %v8713
    %8814 = vst [vmem:[%s125 + $0x50] sm:$0xff] %v8718
    %8815 = vst [vmem:[%s125 + $0x58] sm:$0xff] %v8721
    %8816 = vst [vmem:[%s125 + $0x60] sm:$0xff] %v8726
    %8817 = vst [vmem:[%s125 + $0x68] sm:$0xff] %v8729
    %8818 = vst [vmem:[%s125 + $0x70] sm:$0xff] %v8734
    %8819 = vst [vmem:[%s125 + $0x78] sm:$0xff] %v8737
    %8820 = vst [vmem:[%s125 + $0x80] sm:$0xff] %v8742
    %8821 = vst [vmem:[%s125 + $0x88] sm:$0xff] %v8745
    %8822 = vst [vmem:[%s125 + $0x90] sm:$0xff] %v8750
    %8823 = vst [vmem:[%s125 + $0x98] sm:$0xff] %v8753
    %8824 = vst [vmem:[%s125 + $0xa0] sm:$0xff] %v8758
    %8825 = vst [vmem:[%s125 + $0xa8] sm:$0xff] %v8761
    %8826 = vst [vmem:[%s125 + $0xb0] sm:$0xff] %v8766
    %8827 = vst [vmem:[%s125 + $0xb8] sm:$0xff] %v8769
    %8828 = vst [vmem:[%s125 + $0xc0] sm:$0xff] %v8774
    %8829 = vst [vmem:[%s125 + $0xc8] sm:$0xff] %v8777
    %8830 = vst [vmem:[%s125 + $0xd0] sm:$0xff] %v8782
    %8831 = vst [vmem:[%s125 + $0xd8] sm:$0xff] %v8785
    %8832 = vst [vmem:[%s125 + $0xe0] sm:$0xff] %v8790
    %8833 = vst [vmem:[%s125 + $0xe8] sm:$0xff] %v8793
    %8834 = vst [vmem:[%s125 + $0xf0] sm:$0xff] %v8798
    %8835 = vst [vmem:[%s125 + $0xf8] sm:$0xff] %v8801
    // Predicated region
    $region334: #{vae_forward.1} parent=1 // pred_check
      _
    $region335: #{vae_forward.1} parent=1 // pred_check_branch
      %8837 = sbr.rel (0) target = $region337
    $region336: #{vae_forward.1} parent=1 // pred_region
      _
    $region337: #{vae_forward.1} parent=1 // pred_fallthru
      _
    // Predicated region
    $region338: #{vae_forward.1} parent=1 // pred_check
      _
    $region339: #{vae_forward.1} parent=1 // pred_check_branch
      %8839 = sbr.rel (0) target = $region341
    $region340: #{vae_forward.1} parent=1 // pred_region
      _
    $region341: #{vae_forward.1} parent=1 // pred_fallthru
      _
    // Predicated region
    $region342: #{vae_forward.1} parent=1 // pred_check
      _
    $region343: #{vae_forward.1} parent=1 // pred_check_branch
      %8841 = sbr.rel (0) target = $region345
    $region344: #{vae_forward.1} parent=1 // pred_region
      _
    $region345: #{vae_forward.1} parent=1 // pred_fallthru
      _
    // Predicated region
    $region346: #{vae_forward.1} parent=1 // pred_check
      _
    $region347: #{vae_forward.1} parent=1 // pred_check_branch
      %8843 = sbr.rel (0) target = $region349
    $region348: #{vae_forward.1} parent=1 // pred_region
      _
    $region349: #{vae_forward.1} parent=1 // pred_fallthru
      _
    // Predicated region
    $region350: #{vae_forward.1} parent=1 // pred_check
      _
    $region351: #{vae_forward.1} parent=1 // pred_check_branch
      %8845 = sbr.rel (0) target = $region353
    $region352: #{vae_forward.1} parent=1 // pred_region
      _
    $region353: #{vae_forward.1} parent=1 // pred_fallthru
      _
    // Predicated region
    $region354: #{vae_forward.1} parent=1 // pred_check
      _
    $region355: #{vae_forward.1} parent=1 // pred_check_branch
      %8847 = sbr.rel (0) target = $region357
    $region356: #{vae_forward.1} parent=1 // pred_region
      _
    $region357: #{vae_forward.1} parent=1 // pred_fallthru
      _
    %8848 = vsyncpa [#allocation3], 1
    %8849 = vsyncpa [#allocation5], 1
    %8850 = vsyncpa [#allocation8], 1
    %8851 = vsyncpa [#allocation11], 1
    %8852 = vsyncpa [#allocation14], 1
    %8853 = vsyncpa [#allocation17], 1
    %8854 = vsyncpa [#allocation20], 1
    %8855 = vsyncpa [#allocation23], 1
    %8856 = vsyncpa [#allocation26], 1
    %8857 = vsyncpa [#allocation29], 1
    %8858 = vsyncpa [#allocation32], 1

</llo_original>
